<compile_context>
chip_gen: v7x
topology: tpu7x:2x2x1
jax: 0.10.0
libtpu: 0.0.40
codegen_flags: <defaults>
</compile_context>

<pallas_src>
import functools

import jax
import jax.numpy as jnp
from jax.experimental import pallas as pl
from jax.experimental.pallas import tpu as pltpu


CPAD = 128       # lane-dense channel padding for all activations / weights
OUT_ROWS = 8     # sublane-aligned row count for per-sample output / dropout blocks

# Border-validity bits, one int32 plane precomputed per pixel in the wrapper.
_UP, _DOWN, _LEFT, _RIGHT = 1, 2, 4, 8


# ------------------------------ fused kernel --------------------------------


def _fused_forward_kernel(x_ref, w_ref, bias_ref, border_ref, drop_ref,
                          out_ref, slab_ref, resid_ref, act_ref,
                          *, h, w, c_stem, c_blk):
    """Whole forward pass for one batch element; everything stays in VMEM."""
    m = h * w

    def conv3x3(src, widx, ci):
        # 3x3 SAME conv as ONE [m,128]@[128,128] bf16 matmul.
        #   - spatial shift of tap (dy,dx): sublane roll by -(dy*w+dx) (XLU)
        #   - border handling: precomputed validity bit plane, full-width select
        #   - tap packing: lane roll moves tap k's channels to lanes [k*ci, ...)
        # Slab is accumulated into a VMEM scratch ref (init from tap 0).
        border = border_ref[...]                       # [m, CPAD] int32
        for k in range(9):
            ky, kx = divmod(k, 3)
            dy, dx = ky - 1, kx - 1
            shift = (-(dy * w + dx)) % m               # row m' sees in[y+dy, x+dx]
            t = pltpu.roll(src, shift, axis=0) if shift else src
            need = ((_UP if dy < 0 else 0) | (_DOWN if dy > 0 else 0) |
                    (_LEFT if dx < 0 else 0) | (_RIGHT if dx > 0 else 0))
            if need:
                t = jnp.where((border & need) == need, t, 0.0)
            if k:                                      # pack tap k into its lane block
                t = pltpu.roll(t, k * ci, axis=1)
            if k == 0:
                slab_ref[...] = t
            else:
                slab_ref[...] += t
        return jnp.dot(slab_ref[...].astype(jnp.bfloat16), w_ref[widx],
                       preferred_element_type=jnp.float32)

    # ---- stem: conv3x3 (BN scale pre-folded into weights) + bias + ReLU -----
    resid_ref[...] = jnp.maximum(
        conv3x3(x_ref[0], 0, c_stem) + bias_ref[0:1, :], 0.0)

    # ---- BasicBlock conv1: conv3x3 + bias + ReLU -----------------------------
    act_ref[...] = jnp.maximum(
        conv3x3(resid_ref[...], 1, c_blk) + bias_ref[1:2, :], 0.0)

    # ---- BasicBlock conv2: conv3x3 + bias + identity add + ReLU --------------
    y = jnp.maximum(
        conv3x3(act_ref[...], 2, c_blk) + bias_ref[2:3, :] + resid_ref[...], 0.0)

    # ---- AdaptiveAvgPool2d(1) + flatten (x.view(N, -1)) ----------------------
    feat = jnp.mean(y, axis=0, keepdims=True)          # [1, CPAD]

    # ---- Dropout (precomputed keep/scale rows) + Linear ----------------------
    featb = jnp.broadcast_to(feat, (OUT_ROWS, CPAD)) * drop_ref[...]
    res = (jnp.dot(featb.astype(jnp.bfloat16), w_ref[3],
                   preferred_element_type=jnp.float32) + bias_ref[3:4, :])
    out_ref[...] = res.reshape(1, OUT_ROWS, CPAD)      # row 0 is the real output


# ------------------------------ JAX wrapper ----------------------------------


def _pad_to(x, shape):
    pads = [(0, t - s) for s, t in zip(x.shape, shape)]
    return jnp.pad(x, pads)


def resnet_with_dropout_forward(x_nchw, params, *, dropout_rate=0.5,
                                training=True, dropout_key=None):
    n, cin, h, w = x_nchw.shape
    feat, num_classes = params["fc_w"].shape
    m = h * w
    assert 9 * cin <= CPAD and 9 * feat <= CPAD, "tap packing needs 9*C <= 128"

    # Activations: NCHW (PyTorch) -> [N, H*W, 128] lane-dense f32 slab.
    x = jnp.transpose(x_nchw, (0, 2, 3, 1)).astype(jnp.float32).reshape(n, m, cin)
    x = _pad_to(x, (n, m, CPAD))

    # Weights: fold BN scale in f32, pack the 9 taps into the contraction dim
    # (rows k*ci .. k*ci+ci-1 of a (128,128) slab), cast to bf16 for the MXU.
    def conv_slab(wname, sname, ci):
        wk = params[wname].astype(jnp.float32) * params[sname].reshape(1, 1, 1, -1)
        return _pad_to(wk.reshape(9 * ci, -1), (CPAD, CPAD))

    w_all = jnp.stack(
        [conv_slab("stem_w", "stem_scale", cin),
         conv_slab("b1_w1", "b1_scale1", feat),
         conv_slab("b1_w2", "b1_scale2", feat),
         _pad_to(params["fc_w"].astype(jnp.float32), (CPAD, CPAD))],
        axis=0).astype(jnp.bfloat16)                                   # (4,128,128)

    # Biases (stem, block1, block2, fc) in one sublane-aligned (8,128) slab.
    bias_all = _pad_to(jnp.concatenate(
        [_pad_to(params["stem_bias"].astype(jnp.float32), (1, CPAD)),
         _pad_to(params["b1_bias1"].astype(jnp.float32), (1, CPAD)),
         _pad_to(params["b1_bias2"].astype(jnp.float32), (1, CPAD)),
         _pad_to(params["fc_b"].astype(jnp.float32), (1, CPAD))], axis=0),
        (OUT_ROWS, CPAD))

    # Per-pixel border-validity bit plane (hoists every conv boundary mask).
    rows = jnp.repeat(jnp.arange(h, dtype=jnp.int32), w)
    cols = jnp.tile(jnp.arange(w, dtype=jnp.int32), h)
    bits = (jnp.where(rows >= 1, _UP, 0) | jnp.where(rows <= h - 2, _DOWN, 0) |
            jnp.where(cols >= 1, _LEFT, 0) | jnp.where(cols <= w - 2, _RIGHT, 0))
    border = jnp.broadcast_to(bits[:, None].astype(jnp.int32), (m, CPAD))

    # Dropout keep/scale rows (nn.Dropout training semantics) with guards.
    # TODO(synk): PyTorch's dropout RNG stream cannot be reproduced bit-exactly.
    if (not training) or dropout_rate <= 0.0:
        drop = jnp.ones((n, CPAD), jnp.float32)
    elif dropout_rate >= 1.0:
        drop = jnp.zeros((n, CPAD), jnp.float32)
    else:
        if dropout_key is None:
            dropout_key = jax.random.PRNGKey(0)
        keep = jax.random.bernoulli(dropout_key, 1.0 - dropout_rate, (n, CPAD))
        drop = keep.astype(jnp.float32) * jnp.float32(1.0 / (1.0 - dropout_rate))
    drop = jnp.broadcast_to(drop[:, None, :], (n, OUT_ROWS, CPAD)).reshape(
        n * OUT_ROWS, CPAD)

    kern = functools.partial(_fused_forward_kernel, h=h, w=w,
                             c_stem=cin, c_blk=feat)
    out = pl.pallas_call(
        kern,
        grid=(n,),
        in_specs=[
            pl.BlockSpec((1, m, CPAD), lambda b: (b, 0, 0)),        # x
            pl.BlockSpec((4, CPAD, CPAD), lambda b: (0, 0, 0)),     # packed weights
            pl.BlockSpec((OUT_ROWS, CPAD), lambda b: (0, 0)),       # biases
            pl.BlockSpec((m, CPAD), lambda b: (0, 0)),              # border bits
            pl.BlockSpec((OUT_ROWS, CPAD), lambda b: (b, 0)),       # dropout rows
        ],
        out_specs=pl.BlockSpec((1, OUT_ROWS, CPAD), lambda b: (b, 0, 0)),
        out_shape=jax.ShapeDtypeStruct((n, OUT_ROWS, CPAD), jnp.float32),
        scratch_shapes=[pltpu.VMEM((m, CPAD), jnp.float32),   # packed im2col slab
                        pltpu.VMEM((m, CPAD), jnp.float32),   # residual (stem out)
                        pltpu.VMEM((m, CPAD), jnp.float32)],  # block activation
        compiler_params=pltpu.CompilerParams(
            dimension_semantics=("parallel",),     # batch across TCs on v7x
            vmem_limit_bytes=32 * 1024 * 1024),
    )(x, w_all, bias_all, border, drop)

    return out[:, 0, :num_classes]


# --------------------------- Model / parameters ------------------------------


def init_params(key, cin=4, feat=8, num_classes=10):
    """Deterministic synthetic parameters (shapes follow the module spec)."""
    ks = jax.random.split(key, 8)

    def conv_w(k, ci, co):
        return 0.1 * jax.random.normal(k, (3, 3, ci, co), jnp.float32)

    def bn(k, co):
        # folded BN: scale = gamma/sqrt(var+eps), bias = beta - mean*scale
        scale = 1.0 + 0.05 * jax.random.normal(k, (1, co), jnp.float32)
        bias = 0.01 * jnp.arange(co, dtype=jnp.float32).reshape(1, co)
        return scale, bias

    p = {}
    p["stem_w"] = conv_w(ks[0], cin, feat)
    p["stem_scale"], p["stem_bias"] = bn(ks[1], feat)
    p["b1_w1"] = conv_w(ks[2], feat, feat)
    p["b1_scale1"], p["b1_bias1"] = bn(ks[3], feat)
    p["b1_w2"] = conv_w(ks[4], feat, feat)
    p["b1_scale2"], p["b1_bias2"] = bn(ks[5], feat)
    # nn.Linear(in_features=feat, out_features=num_classes); stored transposed.
    p["fc_w"] = 0.1 * jax.random.normal(ks[6], (feat, num_classes), jnp.float32)
    p["fc_b"] = 0.01 * jax.random.normal(ks[7], (1, num_classes), jnp.float32)
    return p


# ---------------------------------- main --------------------------------------

if __name__ == "__main__":
    key = jax.random.PRNGKey(0)
    kx, kp, kd = jax.random.split(key, 3)
    x = jax.random.normal(kx, (2, 4, 16, 16), jnp.float32)  # NCHW, like PyTorch
    params = init_params(kp, cin=4, feat=8, num_classes=10)

    out = resnet_with_dropout_forward(
        x, params, dropout_rate=0.5, training=True, dropout_key=kd)
    out = jax.block_until_ready(out)

    assert out.shape == (2, 10), out.shape
    assert out.dtype == jnp.float32
    assert bool(jnp.all(jnp.isfinite(out)))
    print("KERNEL_OK")
</pallas_src>

<mosaic_0001>
module attributes {stable_mosaic.version = 11 : i64} {
  func.func @_fused_forward_kernel(%arg0: i32, %arg1: memref<1x256x128xf32, #tpu.memory_space<vmem>>, %arg2: memref<4x128x128xbf16, #tpu.memory_space<vmem>>, %arg3: memref<8x128xf32, #tpu.memory_space<vmem>>, %arg4: memref<256x128xi32, #tpu.memory_space<vmem>>, %arg5: memref<8x128xf32, #tpu.memory_space<vmem>>, %arg6: memref<1x8x128xf32, #tpu.memory_space<vmem>>, %arg7: memref<256x128xf32, #tpu.memory_space<vmem>>, %arg8: memref<256x128xf32, #tpu.memory_space<vmem>>, %arg9: memref<256x128xf32, #tpu.memory_space<vmem>>) attributes {dimension_semantics = [#tpu.dimension_semantics<parallel>], iteration_bounds = array<i64: 2>, scalar_prefetch = 0 : i64, scratch_operands = 3 : i64, tpu.core_type = #tpu.core_type<tc>, window_params = [{transform_indices = @transform_0, window_bounds = array<i64: 1, 256, 128>}, {pipeline_mode = #tpu.pipeline_mode<synchronous>, transform_indices = @transform_1, window_bounds = array<i64: 4, 128, 128>}, {pipeline_mode = #tpu.pipeline_mode<synchronous>, transform_indices = @transform_2, window_bounds = array<i64: 8, 128>}, {pipeline_mode = #tpu.pipeline_mode<synchronous>, transform_indices = @transform_3, window_bounds = array<i64: 256, 128>}, {transform_indices = @transform_4, window_bounds = array<i64: 8, 128>}, {transform_indices = @transform_5, window_bounds = array<i64: 1, 8, 128>}]} {
    %c0 = arith.constant 0 : index
    %c0_0 = arith.constant 0 : index
    %c0_1 = arith.constant 0 : index
    %0 = vector.load %arg1[%c0, %c0_0, %c0_1] : memref<1x256x128xf32, #tpu.memory_space<vmem>>, vector<1x256x128xf32>
    %1 = vector.shape_cast %0 : vector<1x256x128xf32> to vector<256x128xf32>
    %c0_2 = arith.constant 0 : index
    %c0_3 = arith.constant 0 : index
    %2 = vector.load %arg4[%c0_2, %c0_3] : memref<256x128xi32, #tpu.memory_space<vmem>>, vector<256x128xi32>
    %c17_i32 = arith.constant 17 : i32
    %3 = tpu.dynamic_rotate %1 by %c17_i32 dim 0 : vector<256x128xf32>, i32 -> vector<256x128xf32>
    %c5_i32 = arith.constant 5 : i32
    %4 = vector.broadcast %c5_i32 : i32 to vector<256x128xi32>
    %5 = arith.andi %2, %4 : vector<256x128xi32>
    %c5_i32_4 = arith.constant 5 : i32
    %6 = vector.broadcast %c5_i32_4 : i32 to vector<256x128xi32>
    %7 = arith.cmpi eq, %5, %6 : vector<256x128xi32>
    %cst = arith.constant 0.000000e+00 : f32
    %8 = vector.broadcast %cst : f32 to vector<256x128xf32>
    %9 = arith.select %7, %3, %8 : vector<256x128xi1>, vector<256x128xf32>
    %c0_5 = arith.constant 0 : index
    %c0_6 = arith.constant 0 : index
    %10 = vector.load %arg7[%c0_5, %c0_6] : memref<256x128xf32, #tpu.memory_space<vmem>>, vector<256x128xf32>
    tpu.vector_store %arg7[%c0_5, %c0_6], %9 {strides = array<i32>} : memref<256x128xf32, #tpu.memory_space<vmem>>, vector<256x128xf32>,
    %c16_i32 = arith.constant 16 : i32
    %11 = tpu.dynamic_rotate %1 by %c16_i32 dim 0 : vector<256x128xf32>, i32 -> vector<256x128xf32>
    %c1_i32 = arith.constant 1 : i32
    %12 = vector.broadcast %c1_i32 : i32 to vector<256x128xi32>
    %13 = arith.andi %2, %12 : vector<256x128xi32>
    %c1_i32_7 = arith.constant 1 : i32
    %14 = vector.broadcast %c1_i32_7 : i32 to vector<256x128xi32>
    %15 = arith.cmpi eq, %13, %14 : vector<256x128xi32>
    %cst_8 = arith.constant 0.000000e+00 : f32
    %16 = vector.broadcast %cst_8 : f32 to vector<256x128xf32>
    %17 = arith.select %15, %11, %16 : vector<256x128xi1>, vector<256x128xf32>
    %c4_i32 = arith.constant 4 : i32
    %18 = tpu.dynamic_rotate %17 by %c4_i32 dim 1 : vector<256x128xf32>, i32 -> vector<256x128xf32>
    %c0_9 = arith.constant 0 : index
    %c0_10 = arith.constant 0 : index
    %19 = vector.load %arg7[%c0_9, %c0_10] : memref<256x128xf32, #tpu.memory_space<vmem>>, vector<256x128xf32>
    %20 = arith.addf %19, %18 : vector<256x128xf32>
    %c0_11 = arith.constant 0 : index
    %c0_12 = arith.constant 0 : index
    %21 = vector.load %arg7[%c0_11, %c0_12] : memref<256x128xf32, #tpu.memory_space<vmem>>, vector<256x128xf32>
    tpu.vector_store %arg7[%c0_11, %c0_12], %20 {strides = array<i32>} : memref<256x128xf32, #tpu.memory_space<vmem>>, vector<256x128xf32>,
    %c15_i32 = arith.constant 15 : i32
    %22 = tpu.dynamic_rotate %1 by %c15_i32 dim 0 : vector<256x128xf32>, i32 -> vector<256x128xf32>
    %c9_i32 = arith.constant 9 : i32
    %23 = vector.broadcast %c9_i32 : i32 to vector<256x128xi32>
    %24 = arith.andi %2, %23 : vector<256x128xi32>
    %c9_i32_13 = arith.constant 9 : i32
    %25 = vector.broadcast %c9_i32_13 : i32 to vector<256x128xi32>
    %26 = arith.cmpi eq, %24, %25 : vector<256x128xi32>
    %cst_14 = arith.constant 0.000000e+00 : f32
    %27 = vector.broadcast %cst_14 : f32 to vector<256x128xf32>
    %28 = arith.select %26, %22, %27 : vector<256x128xi1>, vector<256x128xf32>
    %c8_i32 = arith.constant 8 : i32
    %29 = tpu.dynamic_rotate %28 by %c8_i32 dim 1 : vector<256x128xf32>, i32 -> vector<256x128xf32>
    %c0_15 = arith.constant 0 : index
    %c0_16 = arith.constant 0 : index
    %30 = vector.load %arg7[%c0_15, %c0_16] : memref<256x128xf32, #tpu.memory_space<vmem>>, vector<256x128xf32>
    %31 = arith.addf %30, %29 : vector<256x128xf32>
    %c0_17 = arith.constant 0 : index
    %c0_18 = arith.constant 0 : index
    %32 = vector.load %arg7[%c0_17, %c0_18] : memref<256x128xf32, #tpu.memory_space<vmem>>, vector<256x128xf32>
    tpu.vector_store %arg7[%c0_17, %c0_18], %31 {strides = array<i32>} : memref<256x128xf32, #tpu.memory_space<vmem>>, vector<256x128xf32>,
    %c1_i32_19 = arith.constant 1 : i32
    %33 = tpu.dynamic_rotate %1 by %c1_i32_19 dim 0 : vector<256x128xf32>, i32 -> vector<256x128xf32>
    %c4_i32_20 = arith.constant 4 : i32
    %34 = vector.broadcast %c4_i32_20 : i32 to vector<256x128xi32>
    %35 = arith.andi %2, %34 : vector<256x128xi32>
    %c4_i32_21 = arith.constant 4 : i32
    %36 = vector.broadcast %c4_i32_21 : i32 to vector<256x128xi32>
    %37 = arith.cmpi eq, %35, %36 : vector<256x128xi32>
    %cst_22 = arith.constant 0.000000e+00 : f32
    %38 = vector.broadcast %cst_22 : f32 to vector<256x128xf32>
    %39 = arith.select %37, %33, %38 : vector<256x128xi1>, vector<256x128xf32>
    %c12_i32 = arith.constant 12 : i32
    %40 = tpu.dynamic_rotate %39 by %c12_i32 dim 1 : vector<256x128xf32>, i32 -> vector<256x128xf32>
    %c0_23 = arith.constant 0 : index
    %c0_24 = arith.constant 0 : index
    %41 = vector.load %arg7[%c0_23, %c0_24] : memref<256x128xf32, #tpu.memory_space<vmem>>, vector<256x128xf32>
    %42 = arith.addf %41, %40 : vector<256x128xf32>
    %c0_25 = arith.constant 0 : index
    %c0_26 = arith.constant 0 : index
    %43 = vector.load %arg7[%c0_25, %c0_26] : memref<256x128xf32, #tpu.memory_space<vmem>>, vector<256x128xf32>
    tpu.vector_store %arg7[%c0_25, %c0_26], %42 {strides = array<i32>} : memref<256x128xf32, #tpu.memory_space<vmem>>, vector<256x128xf32>,
    %c16_i32_27 = arith.constant 16 : i32
    %44 = tpu.dynamic_rotate %1 by %c16_i32_27 dim 1 : vector<256x128xf32>, i32 -> vector<256x128xf32>
    %c0_28 = arith.constant 0 : index
    %c0_29 = arith.constant 0 : index
    %45 = vector.load %arg7[%c0_28, %c0_29] : memref<256x128xf32, #tpu.memory_space<vmem>>, vector<256x128xf32>
    %46 = arith.addf %45, %44 : vector<256x128xf32>
    %c0_30 = arith.constant 0 : index
    %c0_31 = arith.constant 0 : index
    %47 = vector.load %arg7[%c0_30, %c0_31] : memref<256x128xf32, #tpu.memory_space<vmem>>, vector<256x128xf32>
    tpu.vector_store %arg7[%c0_30, %c0_31], %46 {strides = array<i32>} : memref<256x128xf32, #tpu.memory_space<vmem>>, vector<256x128xf32>,
    %c255_i32 = arith.constant 255 : i32
    %48 = tpu.dynamic_rotate %1 by %c255_i32 dim 0 : vector<256x128xf32>, i32 -> vector<256x128xf32>
    %c8_i32_32 = arith.constant 8 : i32
    %49 = vector.broadcast %c8_i32_32 : i32 to vector<256x128xi32>
    %50 = arith.andi %2, %49 : vector<256x128xi32>
    %c8_i32_33 = arith.constant 8 : i32
    %51 = vector.broadcast %c8_i32_33 : i32 to vector<256x128xi32>
    %52 = arith.cmpi eq, %50, %51 : vector<256x128xi32>
    %cst_34 = arith.constant 0.000000e+00 : f32
    %53 = vector.broadcast %cst_34 : f32 to vector<256x128xf32>
    %54 = arith.select %52, %48, %53 : vector<256x128xi1>, vector<256x128xf32>
    %c20_i32 = arith.constant 20 : i32
    %55 = tpu.dynamic_rotate %54 by %c20_i32 dim 1 : vector<256x128xf32>, i32 -> vector<256x128xf32>
    %c0_35 = arith.constant 0 : index
    %c0_36 = arith.constant 0 : index
    %56 = vector.load %arg7[%c0_35, %c0_36] : memref<256x128xf32, #tpu.memory_space<vmem>>, vector<256x128xf32>
    %57 = arith.addf %56, %55 : vector<256x128xf32>
    %c0_37 = arith.constant 0 : index
    %c0_38 = arith.constant 0 : index
    %58 = vector.load %arg7[%c0_37, %c0_38] : memref<256x128xf32, #tpu.memory_space<vmem>>, vector<256x128xf32>
    tpu.vector_store %arg7[%c0_37, %c0_38], %57 {strides = array<i32>} : memref<256x128xf32, #tpu.memory_space<vmem>>, vector<256x128xf32>,
    %c241_i32 = arith.constant 241 : i32
    %59 = tpu.dynamic_rotate %1 by %c241_i32 dim 0 : vector<256x128xf32>, i32 -> vector<256x128xf32>
    %c6_i32 = arith.constant 6 : i32
    %60 = vector.broadcast %c6_i32 : i32 to vector<256x128xi32>
    %61 = arith.andi %2, %60 : vector<256x128xi32>
    %c6_i32_39 = arith.constant 6 : i32
    %62 = vector.broadcast %c6_i32_39 : i32 to vector<256x128xi32>
    %63 = arith.cmpi eq, %61, %62 : vector<256x128xi32>
    %cst_40 = arith.constant 0.000000e+00 : f32
    %64 = vector.broadcast %cst_40 : f32 to vector<256x128xf32>
    %65 = arith.select %63, %59, %64 : vector<256x128xi1>, vector<256x128xf32>
    %c24_i32 = arith.constant 24 : i32
    %66 = tpu.dynamic_rotate %65 by %c24_i32 dim 1 : vector<256x128xf32>, i32 -> vector<256x128xf32>
    %c0_41 = arith.constant 0 : index
    %c0_42 = arith.constant 0 : index
    %67 = vector.load %arg7[%c0_41, %c0_42] : memref<256x128xf32, #tpu.memory_space<vmem>>, vector<256x128xf32>
    %68 = arith.addf %67, %66 : vector<256x128xf32>
    %c0_43 = arith.constant 0 : index
    %c0_44 = arith.constant 0 : index
    %69 = vector.load %arg7[%c0_43, %c0_44] : memref<256x128xf32, #tpu.memory_space<vmem>>, vector<256x128xf32>
    tpu.vector_store %arg7[%c0_43, %c0_44], %68 {strides = array<i32>} : memref<256x128xf32, #tpu.memory_space<vmem>>, vector<256x128xf32>,
    %c240_i32 = arith.constant 240 : i32
    %70 = tpu.dynamic_rotate %1 by %c240_i32 dim 0 : vector<256x128xf32>, i32 -> vector<256x128xf32>
    %c2_i32 = arith.constant 2 : i32
    %71 = vector.broadcast %c2_i32 : i32 to vector<256x128xi32>
    %72 = arith.andi %2, %71 : vector<256x128xi32>
    %c2_i32_45 = arith.constant 2 : i32
    %73 = vector.broadcast %c2_i32_45 : i32 to vector<256x128xi32>
    %74 = arith.cmpi eq, %72, %73 : vector<256x128xi32>
    %cst_46 = arith.constant 0.000000e+00 : f32
    %75 = vector.broadcast %cst_46 : f32 to vector<256x128xf32>
    %76 = arith.select %74, %70, %75 : vector<256x128xi1>, vector<256x128xf32>
    %c28_i32 = arith.constant 28 : i32
    %77 = tpu.dynamic_rotate %76 by %c28_i32 dim 1 : vector<256x128xf32>, i32 -> vector<256x128xf32>
    %c0_47 = arith.constant 0 : index
    %c0_48 = arith.constant 0 : index
    %78 = vector.load %arg7[%c0_47, %c0_48] : memref<256x128xf32, #tpu.memory_space<vmem>>, vector<256x128xf32>
    %79 = arith.addf %78, %77 : vector<256x128xf32>
    %c0_49 = arith.constant 0 : index
    %c0_50 = arith.constant 0 : index
    %80 = vector.load %arg7[%c0_49, %c0_50] : memref<256x128xf32, #tpu.memory_space<vmem>>, vector<256x128xf32>
    tpu.vector_store %arg7[%c0_49, %c0_50], %79 {strides = array<i32>} : memref<256x128xf32, #tpu.memory_space<vmem>>, vector<256x128xf32>,
    %c239_i32 = arith.constant 239 : i32
    %81 = tpu.dynamic_rotate %1 by %c239_i32 dim 0 : vector<256x128xf32>, i32 -> vector<256x128xf32>
    %c10_i32 = arith.constant 10 : i32
    %82 = vector.broadcast %c10_i32 : i32 to vector<256x128xi32>
    %83 = arith.andi %2, %82 : vector<256x128xi32>
    %c10_i32_51 = arith.constant 10 : i32
    %84 = vector.broadcast %c10_i32_51 : i32 to vector<256x128xi32>
    %85 = arith.cmpi eq, %83, %84 : vector<256x128xi32>
    %cst_52 = arith.constant 0.000000e+00 : f32
    %86 = vector.broadcast %cst_52 : f32 to vector<256x128xf32>
    %87 = arith.select %85, %81, %86 : vector<256x128xi1>, vector<256x128xf32>
    %c32_i32 = arith.constant 32 : i32
    %88 = tpu.dynamic_rotate %87 by %c32_i32 dim 1 : vector<256x128xf32>, i32 -> vector<256x128xf32>
    %c0_53 = arith.constant 0 : index
    %c0_54 = arith.constant 0 : index
    %89 = vector.load %arg7[%c0_53, %c0_54] : memref<256x128xf32, #tpu.memory_space<vmem>>, vector<256x128xf32>
    %90 = arith.addf %89, %88 : vector<256x128xf32>
    %c0_55 = arith.constant 0 : index
    %c0_56 = arith.constant 0 : index
    %91 = vector.load %arg7[%c0_55, %c0_56] : memref<256x128xf32, #tpu.memory_space<vmem>>, vector<256x128xf32>
    tpu.vector_store %arg7[%c0_55, %c0_56], %90 {strides = array<i32>} : memref<256x128xf32, #tpu.memory_space<vmem>>, vector<256x128xf32>,
    %c0_57 = arith.constant 0 : index
    %c0_58 = arith.constant 0 : index
    %92 = vector.load %arg7[%c0_57, %c0_58] : memref<256x128xf32, #tpu.memory_space<vmem>>, vector<256x128xf32>
    %93 = arith.truncf %92 : vector<256x128xf32> to vector<256x128xbf16>
    %c0_59 = arith.constant 0 : index
    %c0_60 = arith.constant 0 : index
    %c0_61 = arith.constant 0 : index
    %94 = vector.load %arg2[%c0_59, %c0_60, %c0_61] : memref<4x128x128xbf16, #tpu.memory_space<vmem>>, vector<1x128x128xbf16>
    %95 = vector.shape_cast %94 : vector<1x128x128xbf16> to vector<128x128xbf16>
    %cst_62 = arith.constant dense<0.000000e+00> : vector<256x128xf32>
    %96 = tpu.matmul %93, %95, %cst_62 {dimension_numbers = #tpu.dot_dimension_numbers<[1], [0], [0], [1], [0, 0, 1, 1], [], []>} : vector<256x128xbf16>, vector<128x128xbf16>, vector<256x128xf32> -> vector<256x128xf32>
    %c0_63 = arith.constant 0 : index
    %c0_64 = arith.constant 0 : index
    %97 = vector.load %arg3[%c0_63, %c0_64] : memref<8x128xf32, #tpu.memory_space<vmem>>, vector<1x128xf32>
    %98 = vector.broadcast %97 : vector<1x128xf32> to vector<256x128xf32>
    %99 = arith.addf %96, %98 : vector<256x128xf32>
    %cst_65 = arith.constant 0.000000e+00 : f32
    %100 = vector.broadcast %cst_65 : f32 to vector<256x128xf32>
    %101 = arith.maximumf %99, %100 : vector<256x128xf32>
    %c0_66 = arith.constant 0 : index
    %c0_67 = arith.constant 0 : index
    %102 = vector.load %arg8[%c0_66, %c0_67] : memref<256x128xf32, #tpu.memory_space<vmem>>, vector<256x128xf32>
    tpu.vector_store %arg8[%c0_66, %c0_67], %101 {strides = array<i32>} : memref<256x128xf32, #tpu.memory_space<vmem>>, vector<256x128xf32>,
    %c0_68 = arith.constant 0 : index
    %c0_69 = arith.constant 0 : index
    %103 = vector.load %arg8[%c0_68, %c0_69] : memref<256x128xf32, #tpu.memory_space<vmem>>, vector<256x128xf32>
    %c0_70 = arith.constant 0 : index
    %c0_71 = arith.constant 0 : index
    %104 = vector.load %arg4[%c0_70, %c0_71] : memref<256x128xi32, #tpu.memory_space<vmem>>, vector<256x128xi32>
    %c17_i32_72 = arith.constant 17 : i32
    %105 = tpu.dynamic_rotate %103 by %c17_i32_72 dim 0 : vector<256x128xf32>, i32 -> vector<256x128xf32>
    %c5_i32_73 = arith.constant 5 : i32
    %106 = vector.broadcast %c5_i32_73 : i32 to vector<256x128xi32>
    %107 = arith.andi %104, %106 : vector<256x128xi32>
    %c5_i32_74 = arith.constant 5 : i32
    %108 = vector.broadcast %c5_i32_74 : i32 to vector<256x128xi32>
    %109 = arith.cmpi eq, %107, %108 : vector<256x128xi32>
    %cst_75 = arith.constant 0.000000e+00 : f32
    %110 = vector.broadcast %cst_75 : f32 to vector<256x128xf32>
    %111 = arith.select %109, %105, %110 : vector<256x128xi1>, vector<256x128xf32>
    %c0_76 = arith.constant 0 : index
    %c0_77 = arith.constant 0 : index
    %112 = vector.load %arg7[%c0_76, %c0_77] : memref<256x128xf32, #tpu.memory_space<vmem>>, vector<256x128xf32>
    tpu.vector_store %arg7[%c0_76, %c0_77], %111 {strides = array<i32>} : memref<256x128xf32, #tpu.memory_space<vmem>>, vector<256x128xf32>,
    %c16_i32_78 = arith.constant 16 : i32
    %113 = tpu.dynamic_rotate %103 by %c16_i32_78 dim 0 : vector<256x128xf32>, i32 -> vector<256x128xf32>
    %c1_i32_79 = arith.constant 1 : i32
    %114 = vector.broadcast %c1_i32_79 : i32 to vector<256x128xi32>
    %115 = arith.andi %104, %114 : vector<256x128xi32>
    %c1_i32_80 = arith.constant 1 : i32
    %116 = vector.broadcast %c1_i32_80 : i32 to vector<256x128xi32>
    %117 = arith.cmpi eq, %115, %116 : vector<256x128xi32>
    %cst_81 = arith.constant 0.000000e+00 : f32
    %118 = vector.broadcast %cst_81 : f32 to vector<256x128xf32>
    %119 = arith.select %117, %113, %118 : vector<256x128xi1>, vector<256x128xf32>
    %c8_i32_82 = arith.constant 8 : i32
    %120 = tpu.dynamic_rotate %119 by %c8_i32_82 dim 1 : vector<256x128xf32>, i32 -> vector<256x128xf32>
    %c0_83 = arith.constant 0 : index
    %c0_84 = arith.constant 0 : index
    %121 = vector.load %arg7[%c0_83, %c0_84] : memref<256x128xf32, #tpu.memory_space<vmem>>, vector<256x128xf32>
    %122 = arith.addf %121, %120 : vector<256x128xf32>
    %c0_85 = arith.constant 0 : index
    %c0_86 = arith.constant 0 : index
    %123 = vector.load %arg7[%c0_85, %c0_86] : memref<256x128xf32, #tpu.memory_space<vmem>>, vector<256x128xf32>
    tpu.vector_store %arg7[%c0_85, %c0_86], %122 {strides = array<i32>} : memref<256x128xf32, #tpu.memory_space<vmem>>, vector<256x128xf32>,
    %c15_i32_87 = arith.constant 15 : i32
    %124 = tpu.dynamic_rotate %103 by %c15_i32_87 dim 0 : vector<256x128xf32>, i32 -> vector<256x128xf32>
    %c9_i32_88 = arith.constant 9 : i32
    %125 = vector.broadcast %c9_i32_88 : i32 to vector<256x128xi32>
    %126 = arith.andi %104, %125 : vector<256x128xi32>
    %c9_i32_89 = arith.constant 9 : i32
    %127 = vector.broadcast %c9_i32_89 : i32 to vector<256x128xi32>
    %128 = arith.cmpi eq, %126, %127 : vector<256x128xi32>
    %cst_90 = arith.constant 0.000000e+00 : f32
    %129 = vector.broadcast %cst_90 : f32 to vector<256x128xf32>
    %130 = arith.select %128, %124, %129 : vector<256x128xi1>, vector<256x128xf32>
    %c16_i32_91 = arith.constant 16 : i32
    %131 = tpu.dynamic_rotate %130 by %c16_i32_91 dim 1 : vector<256x128xf32>, i32 -> vector<256x128xf32>
    %c0_92 = arith.constant 0 : index
    %c0_93 = arith.constant 0 : index
    %132 = vector.load %arg7[%c0_92, %c0_93] : memref<256x128xf32, #tpu.memory_space<vmem>>, vector<256x128xf32>
    %133 = arith.addf %132, %131 : vector<256x128xf32>
    %c0_94 = arith.constant 0 : index
    %c0_95 = arith.constant 0 : index
    %134 = vector.load %arg7[%c0_94, %c0_95] : memref<256x128xf32, #tpu.memory_space<vmem>>, vector<256x128xf32>
    tpu.vector_store %arg7[%c0_94, %c0_95], %133 {strides = array<i32>} : memref<256x128xf32, #tpu.memory_space<vmem>>, vector<256x128xf32>,
    %c1_i32_96 = arith.constant 1 : i32
    %135 = tpu.dynamic_rotate %103 by %c1_i32_96 dim 0 : vector<256x128xf32>, i32 -> vector<256x128xf32>
    %c4_i32_97 = arith.constant 4 : i32
    %136 = vector.broadcast %c4_i32_97 : i32 to vector<256x128xi32>
    %137 = arith.andi %104, %136 : vector<256x128xi32>
    %c4_i32_98 = arith.constant 4 : i32
    %138 = vector.broadcast %c4_i32_98 : i32 to vector<256x128xi32>
    %139 = arith.cmpi eq, %137, %138 : vector<256x128xi32>
    %cst_99 = arith.constant 0.000000e+00 : f32
    %140 = vector.broadcast %cst_99 : f32 to vector<256x128xf32>
    %141 = arith.select %139, %135, %140 : vector<256x128xi1>, vector<256x128xf32>
    %c24_i32_100 = arith.constant 24 : i32
    %142 = tpu.dynamic_rotate %141 by %c24_i32_100 dim 1 : vector<256x128xf32>, i32 -> vector<256x128xf32>
    %c0_101 = arith.constant 0 : index
    %c0_102 = arith.constant 0 : index
    %143 = vector.load %arg7[%c0_101, %c0_102] : memref<256x128xf32, #tpu.memory_space<vmem>>, vector<256x128xf32>
    %144 = arith.addf %143, %142 : vector<256x128xf32>
    %c0_103 = arith.constant 0 : index
    %c0_104 = arith.constant 0 : index
    %145 = vector.load %arg7[%c0_103, %c0_104] : memref<256x128xf32, #tpu.memory_space<vmem>>, vector<256x128xf32>
    tpu.vector_store %arg7[%c0_103, %c0_104], %144 {strides = array<i32>} : memref<256x128xf32, #tpu.memory_space<vmem>>, vector<256x128xf32>,
    %c32_i32_105 = arith.constant 32 : i32
    %146 = tpu.dynamic_rotate %103 by %c32_i32_105 dim 1 : vector<256x128xf32>, i32 -> vector<256x128xf32>
    %c0_106 = arith.constant 0 : index
    %c0_107 = arith.constant 0 : index
    %147 = vector.load %arg7[%c0_106, %c0_107] : memref<256x128xf32, #tpu.memory_space<vmem>>, vector<256x128xf32>
    %148 = arith.addf %147, %146 : vector<256x128xf32>
    %c0_108 = arith.constant 0 : index
    %c0_109 = arith.constant 0 : index
    %149 = vector.load %arg7[%c0_108, %c0_109] : memref<256x128xf32, #tpu.memory_space<vmem>>, vector<256x128xf32>
    tpu.vector_store %arg7[%c0_108, %c0_109], %148 {strides = array<i32>} : memref<256x128xf32, #tpu.memory_space<vmem>>, vector<256x128xf32>,
    %c255_i32_110 = arith.constant 255 : i32
    %150 = tpu.dynamic_rotate %103 by %c255_i32_110 dim 0 : vector<256x128xf32>, i32 -> vector<256x128xf32>
    %c8_i32_111 = arith.constant 8 : i32
    %151 = vector.broadcast %c8_i32_111 : i32 to vector<256x128xi32>
    %152 = arith.andi %104, %151 : vector<256x128xi32>
    %c8_i32_112 = arith.constant 8 : i32
    %153 = vector.broadcast %c8_i32_112 : i32 to vector<256x128xi32>
    %154 = arith.cmpi eq, %152, %153 : vector<256x128xi32>
    %cst_113 = arith.constant 0.000000e+00 : f32
    %155 = vector.broadcast %cst_113 : f32 to vector<256x128xf32>
    %156 = arith.select %154, %150, %155 : vector<256x128xi1>, vector<256x128xf32>
    %c40_i32 = arith.constant 40 : i32
    %157 = tpu.dynamic_rotate %156 by %c40_i32 dim 1 : vector<256x128xf32>, i32 -> vector<256x128xf32>
    %c0_114 = arith.constant 0 : index
    %c0_115 = arith.constant 0 : index
    %158 = vector.load %arg7[%c0_114, %c0_115] : memref<256x128xf32, #tpu.memory_space<vmem>>, vector<256x128xf32>
    %159 = arith.addf %158, %157 : vector<256x128xf32>
    %c0_116 = arith.constant 0 : index
    %c0_117 = arith.constant 0 : index
    %160 = vector.load %arg7[%c0_116, %c0_117] : memref<256x128xf32, #tpu.memory_space<vmem>>, vector<256x128xf32>
    tpu.vector_store %arg7[%c0_116, %c0_117], %159 {strides = array<i32>} : memref<256x128xf32, #tpu.memory_space<vmem>>, vector<256x128xf32>,
    %c241_i32_118 = arith.constant 241 : i32
    %161 = tpu.dynamic_rotate %103 by %c241_i32_118 dim 0 : vector<256x128xf32>, i32 -> vector<256x128xf32>
    %c6_i32_119 = arith.constant 6 : i32
    %162 = vector.broadcast %c6_i32_119 : i32 to vector<256x128xi32>
    %163 = arith.andi %104, %162 : vector<256x128xi32>
    %c6_i32_120 = arith.constant 6 : i32
    %164 = vector.broadcast %c6_i32_120 : i32 to vector<256x128xi32>
    %165 = arith.cmpi eq, %163, %164 : vector<256x128xi32>
    %cst_121 = arith.constant 0.000000e+00 : f32
    %166 = vector.broadcast %cst_121 : f32 to vector<256x128xf32>
    %167 = arith.select %165, %161, %166 : vector<256x128xi1>, vector<256x128xf32>
    %c48_i32 = arith.constant 48 : i32
    %168 = tpu.dynamic_rotate %167 by %c48_i32 dim 1 : vector<256x128xf32>, i32 -> vector<256x128xf32>
    %c0_122 = arith.constant 0 : index
    %c0_123 = arith.constant 0 : index
    %169 = vector.load %arg7[%c0_122, %c0_123] : memref<256x128xf32, #tpu.memory_space<vmem>>, vector<256x128xf32>
    %170 = arith.addf %169, %168 : vector<256x128xf32>
    %c0_124 = arith.constant 0 : index
    %c0_125 = arith.constant 0 : index
    %171 = vector.load %arg7[%c0_124, %c0_125] : memref<256x128xf32, #tpu.memory_space<vmem>>, vector<256x128xf32>
    tpu.vector_store %arg7[%c0_124, %c0_125], %170 {strides = array<i32>} : memref<256x128xf32, #tpu.memory_space<vmem>>, vector<256x128xf32>,
    %c240_i32_126 = arith.constant 240 : i32
    %172 = tpu.dynamic_rotate %103 by %c240_i32_126 dim 0 : vector<256x128xf32>, i32 -> vector<256x128xf32>
    %c2_i32_127 = arith.constant 2 : i32
    %173 = vector.broadcast %c2_i32_127 : i32 to vector<256x128xi32>
    %174 = arith.andi %104, %173 : vector<256x128xi32>
    %c2_i32_128 = arith.constant 2 : i32
    %175 = vector.broadcast %c2_i32_128 : i32 to vector<256x128xi32>
    %176 = arith.cmpi eq, %174, %175 : vector<256x128xi32>
    %cst_129 = arith.constant 0.000000e+00 : f32
    %177 = vector.broadcast %cst_129 : f32 to vector<256x128xf32>
    %178 = arith.select %176, %172, %177 : vector<256x128xi1>, vector<256x128xf32>
    %c56_i32 = arith.constant 56 : i32
    %179 = tpu.dynamic_rotate %178 by %c56_i32 dim 1 : vector<256x128xf32>, i32 -> vector<256x128xf32>
    %c0_130 = arith.constant 0 : index
    %c0_131 = arith.constant 0 : index
    %180 = vector.load %arg7[%c0_130, %c0_131] : memref<256x128xf32, #tpu.memory_space<vmem>>, vector<256x128xf32>
    %181 = arith.addf %180, %179 : vector<256x128xf32>
    %c0_132 = arith.constant 0 : index
    %c0_133 = arith.constant 0 : index
    %182 = vector.load %arg7[%c0_132, %c0_133] : memref<256x128xf32, #tpu.memory_space<vmem>>, vector<256x128xf32>
    tpu.vector_store %arg7[%c0_132, %c0_133], %181 {strides = array<i32>} : memref<256x128xf32, #tpu.memory_space<vmem>>, vector<256x128xf32>,
    %c239_i32_134 = arith.constant 239 : i32
    %183 = tpu.dynamic_rotate %103 by %c239_i32_134 dim 0 : vector<256x128xf32>, i32 -> vector<256x128xf32>
    %c10_i32_135 = arith.constant 10 : i32
    %184 = vector.broadcast %c10_i32_135 : i32 to vector<256x128xi32>
    %185 = arith.andi %104, %184 : vector<256x128xi32>
    %c10_i32_136 = arith.constant 10 : i32
    %186 = vector.broadcast %c10_i32_136 : i32 to vector<256x128xi32>
    %187 = arith.cmpi eq, %185, %186 : vector<256x128xi32>
    %cst_137 = arith.constant 0.000000e+00 : f32
    %188 = vector.broadcast %cst_137 : f32 to vector<256x128xf32>
    %189 = arith.select %187, %183, %188 : vector<256x128xi1>, vector<256x128xf32>
    %c64_i32 = arith.constant 64 : i32
    %190 = tpu.dynamic_rotate %189 by %c64_i32 dim 1 : vector<256x128xf32>, i32 -> vector<256x128xf32>
    %c0_138 = arith.constant 0 : index
    %c0_139 = arith.constant 0 : index
    %191 = vector.load %arg7[%c0_138, %c0_139] : memref<256x128xf32, #tpu.memory_space<vmem>>, vector<256x128xf32>
    %192 = arith.addf %191, %190 : vector<256x128xf32>
    %c0_140 = arith.constant 0 : index
    %c0_141 = arith.constant 0 : index
    %193 = vector.load %arg7[%c0_140, %c0_141] : memref<256x128xf32, #tpu.memory_space<vmem>>, vector<256x128xf32>
    tpu.vector_store %arg7[%c0_140, %c0_141], %192 {strides = array<i32>} : memref<256x128xf32, #tpu.memory_space<vmem>>, vector<256x128xf32>,
    %c0_142 = arith.constant 0 : index
    %c0_143 = arith.constant 0 : index
    %194 = vector.load %arg7[%c0_142, %c0_143] : memref<256x128xf32, #tpu.memory_space<vmem>>, vector<256x128xf32>
    %195 = arith.truncf %194 : vector<256x128xf32> to vector<256x128xbf16>
    %c1 = arith.constant 1 : index
    %c0_144 = arith.constant 0 : index
    %c0_145 = arith.constant 0 : index
    %196 = vector.load %arg2[%c1, %c0_144, %c0_145] : memref<4x128x128xbf16, #tpu.memory_space<vmem>>, vector<1x128x128xbf16>
    %197 = vector.shape_cast %196 : vector<1x128x128xbf16> to vector<128x128xbf16>
    %cst_146 = arith.constant dense<0.000000e+00> : vector<256x128xf32>
    %198 = tpu.matmul %195, %197, %cst_146 {dimension_numbers = #tpu.dot_dimension_numbers<[1], [0], [0], [1], [0, 0, 1, 1], [], []>} : vector<256x128xbf16>, vector<128x128xbf16>, vector<256x128xf32> -> vector<256x128xf32>
    %c1_147 = arith.constant 1 : index
    %c0_148 = arith.constant 0 : index
    %199 = vector.load %arg3[%c1_147, %c0_148] : memref<8x128xf32, #tpu.memory_space<vmem>>, vector<1x128xf32>
    %200 = vector.broadcast %199 : vector<1x128xf32> to vector<256x128xf32>
    %201 = arith.addf %198, %200 : vector<256x128xf32>
    %cst_149 = arith.constant 0.000000e+00 : f32
    %202 = vector.broadcast %cst_149 : f32 to vector<256x128xf32>
    %203 = arith.maximumf %201, %202 : vector<256x128xf32>
    %c0_150 = arith.constant 0 : index
    %c0_151 = arith.constant 0 : index
    %204 = vector.load %arg9[%c0_150, %c0_151] : memref<256x128xf32, #tpu.memory_space<vmem>>, vector<256x128xf32>
    tpu.vector_store %arg9[%c0_150, %c0_151], %203 {strides = array<i32>} : memref<256x128xf32, #tpu.memory_space<vmem>>, vector<256x128xf32>,
    %c0_152 = arith.constant 0 : index
    %c0_153 = arith.constant 0 : index
    %205 = vector.load %arg9[%c0_152, %c0_153] : memref<256x128xf32, #tpu.memory_space<vmem>>, vector<256x128xf32>
    %c0_154 = arith.constant 0 : index
    %c0_155 = arith.constant 0 : index
    %206 = vector.load %arg4[%c0_154, %c0_155] : memref<256x128xi32, #tpu.memory_space<vmem>>, vector<256x128xi32>
    %c17_i32_156 = arith.constant 17 : i32
    %207 = tpu.dynamic_rotate %205 by %c17_i32_156 dim 0 : vector<256x128xf32>, i32 -> vector<256x128xf32>
    %c5_i32_157 = arith.constant 5 : i32
    %208 = vector.broadcast %c5_i32_157 : i32 to vector<256x128xi32>
    %209 = arith.andi %206, %208 : vector<256x128xi32>
    %c5_i32_158 = arith.constant 5 : i32
    %210 = vector.broadcast %c5_i32_158 : i32 to vector<256x128xi32>
    %211 = arith.cmpi eq, %209, %210 : vector<256x128xi32>
    %cst_159 = arith.constant 0.000000e+00 : f32
    %212 = vector.broadcast %cst_159 : f32 to vector<256x128xf32>
    %213 = arith.select %211, %207, %212 : vector<256x128xi1>, vector<256x128xf32>
    %c0_160 = arith.constant 0 : index
    %c0_161 = arith.constant 0 : index
    %214 = vector.load %arg7[%c0_160, %c0_161] : memref<256x128xf32, #tpu.memory_space<vmem>>, vector<256x128xf32>
    tpu.vector_store %arg7[%c0_160, %c0_161], %213 {strides = array<i32>} : memref<256x128xf32, #tpu.memory_space<vmem>>, vector<256x128xf32>,
    %c16_i32_162 = arith.constant 16 : i32
    %215 = tpu.dynamic_rotate %205 by %c16_i32_162 dim 0 : vector<256x128xf32>, i32 -> vector<256x128xf32>
    %c1_i32_163 = arith.constant 1 : i32
    %216 = vector.broadcast %c1_i32_163 : i32 to vector<256x128xi32>
    %217 = arith.andi %206, %216 : vector<256x128xi32>
    %c1_i32_164 = arith.constant 1 : i32
    %218 = vector.broadcast %c1_i32_164 : i32 to vector<256x128xi32>
    %219 = arith.cmpi eq, %217, %218 : vector<256x128xi32>
    %cst_165 = arith.constant 0.000000e+00 : f32
    %220 = vector.broadcast %cst_165 : f32 to vector<256x128xf32>
    %221 = arith.select %219, %215, %220 : vector<256x128xi1>, vector<256x128xf32>
    %c8_i32_166 = arith.constant 8 : i32
    %222 = tpu.dynamic_rotate %221 by %c8_i32_166 dim 1 : vector<256x128xf32>, i32 -> vector<256x128xf32>
    %c0_167 = arith.constant 0 : index
    %c0_168 = arith.constant 0 : index
    %223 = vector.load %arg7[%c0_167, %c0_168] : memref<256x128xf32, #tpu.memory_space<vmem>>, vector<256x128xf32>
    %224 = arith.addf %223, %222 : vector<256x128xf32>
    %c0_169 = arith.constant 0 : index
    %c0_170 = arith.constant 0 : index
    %225 = vector.load %arg7[%c0_169, %c0_170] : memref<256x128xf32, #tpu.memory_space<vmem>>, vector<256x128xf32>
    tpu.vector_store %arg7[%c0_169, %c0_170], %224 {strides = array<i32>} : memref<256x128xf32, #tpu.memory_space<vmem>>, vector<256x128xf32>,
    %c15_i32_171 = arith.constant 15 : i32
    %226 = tpu.dynamic_rotate %205 by %c15_i32_171 dim 0 : vector<256x128xf32>, i32 -> vector<256x128xf32>
    %c9_i32_172 = arith.constant 9 : i32
    %227 = vector.broadcast %c9_i32_172 : i32 to vector<256x128xi32>
    %228 = arith.andi %206, %227 : vector<256x128xi32>
    %c9_i32_173 = arith.constant 9 : i32
    %229 = vector.broadcast %c9_i32_173 : i32 to vector<256x128xi32>
    %230 = arith.cmpi eq, %228, %229 : vector<256x128xi32>
    %cst_174 = arith.constant 0.000000e+00 : f32
    %231 = vector.broadcast %cst_174 : f32 to vector<256x128xf32>
    %232 = arith.select %230, %226, %231 : vector<256x128xi1>, vector<256x128xf32>
    %c16_i32_175 = arith.constant 16 : i32
    %233 = tpu.dynamic_rotate %232 by %c16_i32_175 dim 1 : vector<256x128xf32>, i32 -> vector<256x128xf32>
    %c0_176 = arith.constant 0 : index
    %c0_177 = arith.constant 0 : index
    %234 = vector.load %arg7[%c0_176, %c0_177] : memref<256x128xf32, #tpu.memory_space<vmem>>, vector<256x128xf32>
    %235 = arith.addf %234, %233 : vector<256x128xf32>
    %c0_178 = arith.constant 0 : index
    %c0_179 = arith.constant 0 : index
    %236 = vector.load %arg7[%c0_178, %c0_179] : memref<256x128xf32, #tpu.memory_space<vmem>>, vector<256x128xf32>
    tpu.vector_store %arg7[%c0_178, %c0_179], %235 {strides = array<i32>} : memref<256x128xf32, #tpu.memory_space<vmem>>, vector<256x128xf32>,
    %c1_i32_180 = arith.constant 1 : i32
    %237 = tpu.dynamic_rotate %205 by %c1_i32_180 dim 0 : vector<256x128xf32>, i32 -> vector<256x128xf32>
    %c4_i32_181 = arith.constant 4 : i32
    %238 = vector.broadcast %c4_i32_181 : i32 to vector<256x128xi32>
    %239 = arith.andi %206, %238 : vector<256x128xi32>
    %c4_i32_182 = arith.constant 4 : i32
    %240 = vector.broadcast %c4_i32_182 : i32 to vector<256x128xi32>
    %241 = arith.cmpi eq, %239, %240 : vector<256x128xi32>
    %cst_183 = arith.constant 0.000000e+00 : f32
    %242 = vector.broadcast %cst_183 : f32 to vector<256x128xf32>
    %243 = arith.select %241, %237, %242 : vector<256x128xi1>, vector<256x128xf32>
    %c24_i32_184 = arith.constant 24 : i32
    %244 = tpu.dynamic_rotate %243 by %c24_i32_184 dim 1 : vector<256x128xf32>, i32 -> vector<256x128xf32>
    %c0_185 = arith.constant 0 : index
    %c0_186 = arith.constant 0 : index
    %245 = vector.load %arg7[%c0_185, %c0_186] : memref<256x128xf32, #tpu.memory_space<vmem>>, vector<256x128xf32>
    %246 = arith.addf %245, %244 : vector<256x128xf32>
    %c0_187 = arith.constant 0 : index
    %c0_188 = arith.constant 0 : index
    %247 = vector.load %arg7[%c0_187, %c0_188] : memref<256x128xf32, #tpu.memory_space<vmem>>, vector<256x128xf32>
    tpu.vector_store %arg7[%c0_187, %c0_188], %246 {strides = array<i32>} : memref<256x128xf32, #tpu.memory_space<vmem>>, vector<256x128xf32>,
    %c32_i32_189 = arith.constant 32 : i32
    %248 = tpu.dynamic_rotate %205 by %c32_i32_189 dim 1 : vector<256x128xf32>, i32 -> vector<256x128xf32>
    %c0_190 = arith.constant 0 : index
    %c0_191 = arith.constant 0 : index
    %249 = vector.load %arg7[%c0_190, %c0_191] : memref<256x128xf32, #tpu.memory_space<vmem>>, vector<256x128xf32>
    %250 = arith.addf %249, %248 : vector<256x128xf32>
    %c0_192 = arith.constant 0 : index
    %c0_193 = arith.constant 0 : index
    %251 = vector.load %arg7[%c0_192, %c0_193] : memref<256x128xf32, #tpu.memory_space<vmem>>, vector<256x128xf32>
    tpu.vector_store %arg7[%c0_192, %c0_193], %250 {strides = array<i32>} : memref<256x128xf32, #tpu.memory_space<vmem>>, vector<256x128xf32>,
    %c255_i32_194 = arith.constant 255 : i32
    %252 = tpu.dynamic_rotate %205 by %c255_i32_194 dim 0 : vector<256x128xf32>, i32 -> vector<256x128xf32>
    %c8_i32_195 = arith.constant 8 : i32
    %253 = vector.broadcast %c8_i32_195 : i32 to vector<256x128xi32>
    %254 = arith.andi %206, %253 : vector<256x128xi32>
    %c8_i32_196 = arith.constant 8 : i32
    %255 = vector.broadcast %c8_i32_196 : i32 to vector<256x128xi32>
    %256 = arith.cmpi eq, %254, %255 : vector<256x128xi32>
    %cst_197 = arith.constant 0.000000e+00 : f32
    %257 = vector.broadcast %cst_197 : f32 to vector<256x128xf32>
    %258 = arith.select %256, %252, %257 : vector<256x128xi1>, vector<256x128xf32>
    %c40_i32_198 = arith.constant 40 : i32
    %259 = tpu.dynamic_rotate %258 by %c40_i32_198 dim 1 : vector<256x128xf32>, i32 -> vector<256x128xf32>
    %c0_199 = arith.constant 0 : index
    %c0_200 = arith.constant 0 : index
    %260 = vector.load %arg7[%c0_199, %c0_200] : memref<256x128xf32, #tpu.memory_space<vmem>>, vector<256x128xf32>
    %261 = arith.addf %260, %259 : vector<256x128xf32>
    %c0_201 = arith.constant 0 : index
    %c0_202 = arith.constant 0 : index
    %262 = vector.load %arg7[%c0_201, %c0_202] : memref<256x128xf32, #tpu.memory_space<vmem>>, vector<256x128xf32>
    tpu.vector_store %arg7[%c0_201, %c0_202], %261 {strides = array<i32>} : memref<256x128xf32, #tpu.memory_space<vmem>>, vector<256x128xf32>,
    %c241_i32_203 = arith.constant 241 : i32
    %263 = tpu.dynamic_rotate %205 by %c241_i32_203 dim 0 : vector<256x128xf32>, i32 -> vector<256x128xf32>
    %c6_i32_204 = arith.constant 6 : i32
    %264 = vector.broadcast %c6_i32_204 : i32 to vector<256x128xi32>
    %265 = arith.andi %206, %264 : vector<256x128xi32>
    %c6_i32_205 = arith.constant 6 : i32
    %266 = vector.broadcast %c6_i32_205 : i32 to vector<256x128xi32>
    %267 = arith.cmpi eq, %265, %266 : vector<256x128xi32>
    %cst_206 = arith.constant 0.000000e+00 : f32
    %268 = vector.broadcast %cst_206 : f32 to vector<256x128xf32>
    %269 = arith.select %267, %263, %268 : vector<256x128xi1>, vector<256x128xf32>
    %c48_i32_207 = arith.constant 48 : i32
    %270 = tpu.dynamic_rotate %269 by %c48_i32_207 dim 1 : vector<256x128xf32>, i32 -> vector<256x128xf32>
    %c0_208 = arith.constant 0 : index
    %c0_209 = arith.constant 0 : index
    %271 = vector.load %arg7[%c0_208, %c0_209] : memref<256x128xf32, #tpu.memory_space<vmem>>, vector<256x128xf32>
    %272 = arith.addf %271, %270 : vector<256x128xf32>
    %c0_210 = arith.constant 0 : index
    %c0_211 = arith.constant 0 : index
    %273 = vector.load %arg7[%c0_210, %c0_211] : memref<256x128xf32, #tpu.memory_space<vmem>>, vector<256x128xf32>
    tpu.vector_store %arg7[%c0_210, %c0_211], %272 {strides = array<i32>} : memref<256x128xf32, #tpu.memory_space<vmem>>, vector<256x128xf32>,
    %c240_i32_212 = arith.constant 240 : i32
    %274 = tpu.dynamic_rotate %205 by %c240_i32_212 dim 0 : vector<256x128xf32>, i32 -> vector<256x128xf32>
    %c2_i32_213 = arith.constant 2 : i32
    %275 = vector.broadcast %c2_i32_213 : i32 to vector<256x128xi32>
    %276 = arith.andi %206, %275 : vector<256x128xi32>
    %c2_i32_214 = arith.constant 2 : i32
    %277 = vector.broadcast %c2_i32_214 : i32 to vector<256x128xi32>
    %278 = arith.cmpi eq, %276, %277 : vector<256x128xi32>
    %cst_215 = arith.constant 0.000000e+00 : f32
    %279 = vector.broadcast %cst_215 : f32 to vector<256x128xf32>
    %280 = arith.select %278, %274, %279 : vector<256x128xi1>, vector<256x128xf32>
    %c56_i32_216 = arith.constant 56 : i32
    %281 = tpu.dynamic_rotate %280 by %c56_i32_216 dim 1 : vector<256x128xf32>, i32 -> vector<256x128xf32>
    %c0_217 = arith.constant 0 : index
    %c0_218 = arith.constant 0 : index
    %282 = vector.load %arg7[%c0_217, %c0_218] : memref<256x128xf32, #tpu.memory_space<vmem>>, vector<256x128xf32>
    %283 = arith.addf %282, %281 : vector<256x128xf32>
    %c0_219 = arith.constant 0 : index
    %c0_220 = arith.constant 0 : index
    %284 = vector.load %arg7[%c0_219, %c0_220] : memref<256x128xf32, #tpu.memory_space<vmem>>, vector<256x128xf32>
    tpu.vector_store %arg7[%c0_219, %c0_220], %283 {strides = array<i32>} : memref<256x128xf32, #tpu.memory_space<vmem>>, vector<256x128xf32>,
    %c239_i32_221 = arith.constant 239 : i32
    %285 = tpu.dynamic_rotate %205 by %c239_i32_221 dim 0 : vector<256x128xf32>, i32 -> vector<256x128xf32>
    %c10_i32_222 = arith.constant 10 : i32
    %286 = vector.broadcast %c10_i32_222 : i32 to vector<256x128xi32>
    %287 = arith.andi %206, %286 : vector<256x128xi32>
    %c10_i32_223 = arith.constant 10 : i32
    %288 = vector.broadcast %c10_i32_223 : i32 to vector<256x128xi32>
    %289 = arith.cmpi eq, %287, %288 : vector<256x128xi32>
    %cst_224 = arith.constant 0.000000e+00 : f32
    %290 = vector.broadcast %cst_224 : f32 to vector<256x128xf32>
    %291 = arith.select %289, %285, %290 : vector<256x128xi1>, vector<256x128xf32>
    %c64_i32_225 = arith.constant 64 : i32
    %292 = tpu.dynamic_rotate %291 by %c64_i32_225 dim 1 : vector<256x128xf32>, i32 -> vector<256x128xf32>
    %c0_226 = arith.constant 0 : index
    %c0_227 = arith.constant 0 : index
    %293 = vector.load %arg7[%c0_226, %c0_227] : memref<256x128xf32, #tpu.memory_space<vmem>>, vector<256x128xf32>
    %294 = arith.addf %293, %292 : vector<256x128xf32>
    %c0_228 = arith.constant 0 : index
    %c0_229 = arith.constant 0 : index
    %295 = vector.load %arg7[%c0_228, %c0_229] : memref<256x128xf32, #tpu.memory_space<vmem>>, vector<256x128xf32>
    tpu.vector_store %arg7[%c0_228, %c0_229], %294 {strides = array<i32>} : memref<256x128xf32, #tpu.memory_space<vmem>>, vector<256x128xf32>,
    %c0_230 = arith.constant 0 : index
    %c0_231 = arith.constant 0 : index
    %296 = vector.load %arg7[%c0_230, %c0_231] : memref<256x128xf32, #tpu.memory_space<vmem>>, vector<256x128xf32>
    %297 = arith.truncf %296 : vector<256x128xf32> to vector<256x128xbf16>
    %c2 = arith.constant 2 : index
    %c0_232 = arith.constant 0 : index
    %c0_233 = arith.constant 0 : index
    %298 = vector.load %arg2[%c2, %c0_232, %c0_233] : memref<4x128x128xbf16, #tpu.memory_space<vmem>>, vector<1x128x128xbf16>
    %299 = vector.shape_cast %298 : vector<1x128x128xbf16> to vector<128x128xbf16>
    %cst_234 = arith.constant dense<0.000000e+00> : vector<256x128xf32>
    %300 = tpu.matmul %297, %299, %cst_234 {dimension_numbers = #tpu.dot_dimension_numbers<[1], [0], [0], [1], [0, 0, 1, 1], [], []>} : vector<256x128xbf16>, vector<128x128xbf16>, vector<256x128xf32> -> vector<256x128xf32>
    %c2_235 = arith.constant 2 : index
    %c0_236 = arith.constant 0 : index
    %301 = vector.load %arg3[%c2_235, %c0_236] : memref<8x128xf32, #tpu.memory_space<vmem>>, vector<1x128xf32>
    %302 = vector.broadcast %301 : vector<1x128xf32> to vector<256x128xf32>
    %303 = arith.addf %300, %302 : vector<256x128xf32>
    %c0_237 = arith.constant 0 : index
    %c0_238 = arith.constant 0 : index
    %304 = vector.load %arg8[%c0_237, %c0_238] : memref<256x128xf32, #tpu.memory_space<vmem>>, vector<256x128xf32>
    %305 = arith.addf %303, %304 : vector<256x128xf32>
    %cst_239 = arith.constant 0.000000e+00 : f32
    %306 = vector.broadcast %cst_239 : f32 to vector<256x128xf32>
    %307 = arith.maximumf %305, %306 : vector<256x128xf32>
    %cst_240 = arith.constant dense<0.000000e+00> : vector<128xf32>
    %308 = vector.multi_reduction <add>, %307, %cst_240 [0] : vector<256x128xf32> to vector<128xf32>
    %309 = vector.shape_cast %308 : vector<128xf32> to vector<1x128xf32>
    %cst_241 = arith.constant 2.560000e+02 : f32
    %310 = vector.broadcast %cst_241 : f32 to vector<1x128xf32>
    %311 = arith.divf %309, %310 : vector<1x128xf32>
    %312 = vector.shape_cast %311 : vector<1x128xf32> to vector<1x128xf32>
    %313 = vector.broadcast %312 : vector<1x128xf32> to vector<8x128xf32>
    %c0_242 = arith.constant 0 : index
    %c0_243 = arith.constant 0 : index
    %314 = vector.load %arg5[%c0_242, %c0_243] : memref<8x128xf32, #tpu.memory_space<vmem>>, vector<8x128xf32>
    %315 = arith.mulf %313, %314 : vector<8x128xf32>
    %316 = arith.truncf %315 : vector<8x128xf32> to vector<8x128xbf16>
    %c3 = arith.constant 3 : index
    %c0_244 = arith.constant 0 : index
    %c0_245 = arith.constant 0 : index
    %317 = vector.load %arg2[%c3, %c0_244, %c0_245] : memref<4x128x128xbf16, #tpu.memory_space<vmem>>, vector<1x128x128xbf16>
    %318 = vector.shape_cast %317 : vector<1x128x128xbf16> to vector<128x128xbf16>
    %cst_246 = arith.constant dense<0.000000e+00> : vector<8x128xf32>
    %319 = tpu.matmul %316, %318, %cst_246 {dimension_numbers = #tpu.dot_dimension_numbers<[1], [0], [0], [1], [0, 0, 1, 1], [], []>} : vector<8x128xbf16>, vector<128x128xbf16>, vector<8x128xf32> -> vector<8x128xf32>
    %c3_247 = arith.constant 3 : index
    %c0_248 = arith.constant 0 : index
    %320 = vector.load %arg3[%c3_247, %c0_248] : memref<8x128xf32, #tpu.memory_space<vmem>>, vector<1x128xf32>
    %321 = vector.broadcast %320 : vector<1x128xf32> to vector<8x128xf32>
    %322 = arith.addf %319, %321 : vector<8x128xf32>
    %323 = vector.shape_cast %322 : vector<8x128xf32> to vector<1x8x128xf32>
    %c0_249 = arith.constant 0 : index
    %c0_250 = arith.constant 0 : index
    %c0_251 = arith.constant 0 : index
    %324 = vector.load %arg6[%c0_249, %c0_250, %c0_251] : memref<1x8x128xf32, #tpu.memory_space<vmem>>, vector<1x8x128xf32>
    tpu.vector_store %arg6[%c0_249, %c0_250, %c0_251], %323 {strides = array<i32>} : memref<1x8x128xf32, #tpu.memory_space<vmem>>, vector<1x8x128xf32>,
    return
  }
  func.func @transform_0(%arg0: i32) -> (i32, i32, i32) {
    %c0_i32 = arith.constant 0 : i32
    %c0_i32_0 = arith.constant 0 : i32
    %c0_i32_1 = arith.constant 0 : i32
    return %arg0, %c0_i32, %c0_i32_0 : i32, i32, i32
  }
  func.func @transform_1(%arg0: i32) -> (i32, i32, i32) {
    %c0_i32 = arith.constant 0 : i32
    %c0_i32_0 = arith.constant 0 : i32
    %c0_i32_1 = arith.constant 0 : i32
    %c0_i32_2 = arith.constant 0 : i32
    return %c0_i32, %c0_i32_0, %c0_i32_1 : i32, i32, i32
  }
  func.func @transform_2(%arg0: i32) -> (i32, i32) {
    %c0_i32 = arith.constant 0 : i32
    %c0_i32_0 = arith.constant 0 : i32
    %c0_i32_1 = arith.constant 0 : i32
    return %c0_i32, %c0_i32_0 : i32, i32
  }
  func.func @transform_3(%arg0: i32) -> (i32, i32) {
    %c0_i32 = arith.constant 0 : i32
    %c0_i32_0 = arith.constant 0 : i32
    %c0_i32_1 = arith.constant 0 : i32
    return %c0_i32, %c0_i32_0 : i32, i32
  }
  func.func @transform_4(%arg0: i32) -> (i32, i32) {
    %c0_i32 = arith.constant 0 : i32
    %c0_i32_0 = arith.constant 0 : i32
    return %arg0, %c0_i32 : i32, i32
  }
  func.func @transform_5(%arg0: i32) -> (i32, i32, i32) {
    %c0_i32 = arith.constant 0 : i32
    %c0_i32_0 = arith.constant 0 : i32
    %c0_i32_1 = arith.constant 0 : i32
    return %arg0, %c0_i32, %c0_i32_0 : i32, i32, i32
  }
}

</mosaic_0001>

<llo_original>
// kernel: tpu_custom_call.1
$region0: #{tpu_custom_call.1}
  #allocation0 [shape = 'u32[]', space=smem, size = 0x4, offset = 0x4, fixed_abs, tag = 'smem constant byte address 0x4 - core index']
  #allocation1 [shape = 'u32[144,128]{1,0:T(1,128)}', space=vmem, size = 0x12000, scoped, tag = 'internal scratch']
  #allocation2 [shape = 'f32[256,128]{1,0:T(8,128)}', space=vmem, size = 0x20000, scoped, tag = 'scratch operand']
  #allocation3 [shape = 'f32[256,128]{1,0:T(8,128)}', space=vmem, size = 0x20000, scoped, tag = 'scratch operand']
  #allocation4 [shape = 'f32[256,128]{1,0:T(8,128)}', space=vmem, size = 0x20000, scoped, tag = 'scratch operand']
  %s0 = inlined_call_operand.hbm [shape: f32[2,256,128], index: 0, kind: input, shape index: {}]
  %s1 = inlined_call_operand.hbm [shape: bf16[4,128,128], index: 1, kind: input, shape index: {}]
  %s2 = inlined_call_operand.hbm [shape: f32[8,128], index: 2, kind: input, shape index: {}]
  %s3 = inlined_call_operand.hbm [shape: s32[256,128], index: 3, kind: input, shape index: {}]
  %s4 = inlined_call_operand.hbm [shape: f32[16,128], index: 4, kind: input, shape index: {}]
  %s5 = inlined_call_operand.hbm [shape: f32[2,8,128], index: 5, kind: output, shape index: {}]
  %s6 = sld [smem:[#allocation0]]
  $region73: #{tpu_custom_call.1} parent=0
    _
  %s8 = ssub.s32 1, %s6
  %s9 = scalar_select 0, %s8, %s6
  $region1: #{tpu_custom_call.1} parent=0
    #allocation5 [shape = 'u8[262144]{0}', space=vmem, size = 0x40000, scoped, tag = 'input window, operand 0']
    #allocation6 [shape = 's32[2]{0}', space=sflag, size = 0x8, scoped, tag = 'scoped memory for tpu_custom_call.1']
    #allocation7 [shape = 's32[2]{0}', space=sflag, size = 0x8, scoped, tag = 'scoped memory for tpu_custom_call.1']
    #allocation8 [shape = 'u8[131072]{0}', space=vmem, size = 0x20000, scoped, tag = 'input window, operand 1, single buffered']
    #allocation9 [shape = 's32[1]{0}', space=sflag, size = 0x4, scoped, tag = 'scoped memory for tpu_custom_call.1']
    #allocation10 [shape = 'u8[4096]{0}', space=vmem, size = 0x1000, scoped, tag = 'input window, operand 2, single buffered']
    #allocation11 [shape = 'u8[131072]{0}', space=vmem, size = 0x20000, scoped, tag = 'input window, operand 3, single buffered']
    #allocation12 [shape = 's32[1]{0}', space=sflag, size = 0x4, scoped, tag = 'scoped memory for tpu_custom_call.1']
    #allocation13 [shape = 'u8[8192]{0}', space=vmem, size = 0x2000, scoped, tag = 'input window, operand 4']
    #allocation14 [shape = 'u8[8192]{0}', space=vmem, size = 0x2000, scoped, tag = 'output window, operand 0']
    %10 = vsyncpa [#allocation6], 0
    %s11 = scalar_lea.sflag [#allocation6], 1
    %12 = vsyncpa %s11, 0
    %13 = vsyncpa [#allocation9], 0
    %14 = vsyncpa [#allocation12], 0
    %15 = vsyncpa [#allocation7], 0
    %s16 = scalar_lea.sflag [#allocation7], 1
    %17 = vsyncpa %s16, 0
    loop: start=0, step=1, limit=4
    $region2: #{tpu_custom_call.1} parent=1 // loop_pre_header
      _
    $region3: #{tpu_custom_call.1} parent=1 // loop_header
      %s19 = sphi 0, %s23
      %p20 = scmp.ge.s32.totalorder %s19, 4
      %s29 = sphi 0, %s31
      %s32 = sphi 0, %s29
      %s33 = sphi 0, %s32
      %s49 = sphi 0, %s33
      %s53 = sphi 0, %s53
      %s55 = sphi 0, %s53
      %s56 = sphi 0, %s55
      %s70 = sphi 0, %s56
      %s74 = sphi 0, %s74
      %s76 = sphi 0, %s74
      %s77 = sphi 0, %s76
      %s91 = sphi 0, %s77
      %s95 = sphi 0, %s95
      %s97 = sphi 0, %s95
      %s98 = sphi 0, %s97
      %s112 = sphi 0, %s98
      %s118 = sphi 0, %s120
      %s121 = sphi 0, %s118
      %s122 = sphi 0, %s121
      %s138 = sphi 0, %s122
      %s144 = sphi 0, %s146
      %s147 = sphi 0, %s144
      %s148 = sphi 0, %s147
      %s164 = sphi 0, %s148
    $region4: #{tpu_custom_call.1} parent=1 // loop_header_branch
      %22 = sbr.rel (%p20) target = $region8
    $region5: #{tpu_custom_call.1} parent=1 // loop_body
      %s24 = ssub.s32 %s19, 1
      %s25 = ssub.s32 %s19, 2
      %s26 = sadd.s32 %s19, 1
      %s27 = ssub.s32 %s19, %s26
      %p28 = scmp.eq.s32.totalorder %s27, 0
      %s30 = sadd.s32 %s29, 1
      %s31 = scalar_select %p28, %s29, %s30
      %p34 = pneg %p28
      %p35 = scmp.eq.s32.totalorder %s19, 1
      %p36 = por %p34, %p35
      %p37 = scmp.ne.s32.totalorder %s29, %s32
      %p38 = scmp.eq.s32.totalorder %s19, 0
      %p39 = por %p37, %p38
      %p40 = scmp.ne.s32.totalorder %s29, %s32
      %p41 = scmp.eq.s32.totalorder %s24, 1
      %p42 = por %p40, %p41
      %p43 = scmp.ne.s32.totalorder %s32, %s33
      %p44 = scmp.eq.s32.totalorder %s24, 0
      %p45 = por %p43, %p44
      %p46 = scmp.ne.s32.totalorder %s32, %s33
      %p47 = scmp.eq.s32.totalorder %s25, 1
      %p48 = por %p46, %p47
      %p50 = scmp.ne.s32.totalorder %s33, %s49
      %p51 = scmp.eq.s32.totalorder %s25, 0
      %p52 = por %p50, %p51
      %s54 = sadd.s32 %s53, 1
      %p57 = scmp.eq.s32.totalorder %s19, 1
      %p58 = scmp.ne.s32.totalorder %s53, %s55
      %p59 = scmp.eq.s32.totalorder %s19, 0
      %p60 = por %p58, %p59
      %p61 = scmp.ne.s32.totalorder %s53, %s55
      %p62 = scmp.eq.s32.totalorder %s24, 1
      %p63 = por %p61, %p62
      %p64 = scmp.ne.s32.totalorder %s55, %s56
      %p65 = scmp.eq.s32.totalorder %s24, 0
      %p66 = por %p64, %p65
      %p67 = scmp.ne.s32.totalorder %s55, %s56
      %p68 = scmp.eq.s32.totalorder %s25, 1
      %p69 = por %p67, %p68
      %p71 = scmp.ne.s32.totalorder %s56, %s70
      %p72 = scmp.eq.s32.totalorder %s25, 0
      %p73 = por %p71, %p72
      %s75 = sadd.s32 %s74, 1
      %p78 = scmp.eq.s32.totalorder %s19, 1
      %p79 = scmp.ne.s32.totalorder %s74, %s76
      %p80 = scmp.eq.s32.totalorder %s19, 0
      %p81 = por %p79, %p80
      %p82 = scmp.ne.s32.totalorder %s74, %s76
      %p83 = scmp.eq.s32.totalorder %s24, 1
      %p84 = por %p82, %p83
      %p85 = scmp.ne.s32.totalorder %s76, %s77
      %p86 = scmp.eq.s32.totalorder %s24, 0
      %p87 = por %p85, %p86
      %p88 = scmp.ne.s32.totalorder %s76, %s77
      %p89 = scmp.eq.s32.totalorder %s25, 1
      %p90 = por %p88, %p89
      %p92 = scmp.ne.s32.totalorder %s77, %s91
      %p93 = scmp.eq.s32.totalorder %s25, 0
      %p94 = por %p92, %p93
      %s96 = sadd.s32 %s95, 1
      %p99 = scmp.eq.s32.totalorder %s19, 1
      %p100 = scmp.ne.s32.totalorder %s95, %s97
      %p101 = scmp.eq.s32.totalorder %s19, 0
      %p102 = por %p100, %p101
      %p103 = scmp.ne.s32.totalorder %s95, %s97
      %p104 = scmp.eq.s32.totalorder %s24, 1
      %p105 = por %p103, %p104
      %p106 = scmp.ne.s32.totalorder %s97, %s98
      %p107 = scmp.eq.s32.totalorder %s24, 0
      %p108 = por %p106, %p107
      %p109 = scmp.ne.s32.totalorder %s97, %s98
      %p110 = scmp.eq.s32.totalorder %s25, 1
      %p111 = por %p109, %p110
      %p113 = scmp.ne.s32.totalorder %s98, %s112
      %p114 = scmp.eq.s32.totalorder %s25, 0
      %p115 = por %p113, %p114
      %s116 = ssub.s32 %s19, %s26
      %p117 = scmp.eq.s32.totalorder %s116, 0
      %s119 = sadd.s32 %s118, 1
      %s120 = scalar_select %p117, %s118, %s119
      %p123 = pneg %p117
      %p124 = scmp.eq.s32.totalorder %s19, 1
      %p125 = por %p123, %p124
      %p126 = scmp.ne.s32.totalorder %s118, %s121
      %p127 = scmp.eq.s32.totalorder %s19, 0
      %p128 = por %p126, %p127
      %p129 = scmp.ne.s32.totalorder %s118, %s121
      %p130 = scmp.eq.s32.totalorder %s24, 1
      %p131 = por %p129, %p130
      %p132 = scmp.ne.s32.totalorder %s121, %s122
      %p133 = scmp.eq.s32.totalorder %s24, 0
      %p134 = por %p132, %p133
      %p135 = scmp.ne.s32.totalorder %s121, %s122
      %p136 = scmp.eq.s32.totalorder %s25, 1
      %p137 = por %p135, %p136
      %p139 = scmp.ne.s32.totalorder %s122, %s138
      %p140 = scmp.eq.s32.totalorder %s25, 0
      %p141 = por %p139, %p140
      %s142 = ssub.s32 %s19, %s26
      %p143 = scmp.eq.s32.totalorder %s142, 0
      %s145 = sadd.s32 %s144, 1
      %s146 = scalar_select %p143, %s144, %s145
      %p149 = pneg %p143
      %p150 = scmp.eq.s32.totalorder %s19, 1
      %p151 = por %p149, %p150
      %p152 = scmp.ne.s32.totalorder %s144, %s147
      %p153 = scmp.eq.s32.totalorder %s19, 0
      %p154 = por %p152, %p153
      %p155 = scmp.ne.s32.totalorder %s144, %s147
      %p156 = scmp.eq.s32.totalorder %s24, 1
      %p157 = por %p155, %p156
      %p158 = scmp.ne.s32.totalorder %s147, %s148
      %p159 = scmp.eq.s32.totalorder %s24, 0
      %p160 = por %p158, %p159
      %p161 = scmp.ne.s32.totalorder %s147, %s148
      %p162 = scmp.eq.s32.totalorder %s25, 1
      %p163 = por %p161, %p162
      %p165 = scmp.ne.s32.totalorder %s148, %s164
      %p166 = scmp.eq.s32.totalorder %s25, 0
      %p167 = por %p165, %p166
      %p168 = scmp.le.s32.totalorder 1, %s19
      %p169 = scmp.lt.s32.totalorder %s19, 3
      %p170 = pnand %p168, %p169
      %p171 = pneg %p170
      // Predicated region
      $region9: #{tpu_custom_call.1} parent=5 // pred_check
        _
      $region10: #{tpu_custom_call.1} parent=5 // pred_check_branch
        %173 = sbr.rel (%p170) target = $region12
      $region11: #{tpu_custom_call.1} parent=5 // pred_region
        %s174 = ssub.s32 %s19, 1
        // Predicated region
        $region13: #{tpu_custom_call.1} parent=11 // pred_check
          %p175 = pneg %p66
        $region14: #{tpu_custom_call.1} parent=11 // pred_check_branch
          %177 = sbr.rel (%p175) target = $region16
        $region15: #{tpu_custom_call.1} parent=11 // pred_region
          %s179 = ssub.s32 4096, 4096
          %180 = vsyncadd [#allocation9], %s179
          %s181 = sshll.u32 [#allocation8], 4
          %s182 = int_to_ptr.vmem [resolvable:$true] %s181
          %187 = dma.hbm_to_vmem [thread:$0]  %s1, 4096, %s182, [#allocation9], 64, 64, 4
        $region16: #{tpu_custom_call.1} parent=11 // pred_fallthru
          _
        // Predicated region
        $region17: #{tpu_custom_call.1} parent=11 // pred_check
          %p188 = pneg %p87
        $region18: #{tpu_custom_call.1} parent=11 // pred_check_branch
          %190 = sbr.rel (%p188) target = $region20
        $region19: #{tpu_custom_call.1} parent=11 // pred_region
          %s192 = ssub.s32 128, 128
          %193 = vsyncadd [#allocation9], %s192
          %s195 = sshll.u32 [#allocation10], 4
          %s196 = int_to_ptr.vmem [resolvable:$true] %s195
          %198 = dma.hbm_to_vmem [thread:$0]  %s2, 128, %s196, [#allocation9]
        $region20: #{tpu_custom_call.1} parent=11 // pred_fallthru
          _
        // Predicated region
        $region21: #{tpu_custom_call.1} parent=11 // pred_check
          %p199 = pneg %p108
        $region22: #{tpu_custom_call.1} parent=11 // pred_check_branch
          %201 = sbr.rel (%p199) target = $region24
        $region23: #{tpu_custom_call.1} parent=11 // pred_region
          %s203 = ssub.s32 4096, 4096
          %204 = vsyncadd [#allocation12], %s203
          %s205 = sshll.u32 [#allocation11], 4
          %s206 = int_to_ptr.vmem [resolvable:$true] %s205
          %211 = dma.hbm_to_vmem [thread:$0]  %s3, 4096, %s206, [#allocation12], 128, 128, 8
        $region24: #{tpu_custom_call.1} parent=11 // pred_fallthru
          _
      $region12: #{tpu_custom_call.1} parent=5 // pred_fallthru
        _
      %p212 = scmp.lt.s32.totalorder %s19, 2
      // Predicated region
      $region25: #{tpu_custom_call.1} parent=5 // pred_check
        %p213 = pneg %p212
      $region26: #{tpu_custom_call.1} parent=5 // pred_check_branch
        %215 = sbr.rel (%p213) target = $region28
      $region27: #{tpu_custom_call.1} parent=5 // pred_region
        // Predicated region
        $region29: #{tpu_custom_call.1} parent=27 // pred_check
          %p216 = pneg %p39
        $region30: #{tpu_custom_call.1} parent=27 // pred_check_branch
          %218 = sbr.rel (%p216) target = $region32
        $region31: #{tpu_custom_call.1} parent=27 // pred_region
          %s219 = sand.u32 %s19, 1
          %s220 = scalar_lea.sflag [#allocation6], %s219
          %s221 = sand.u32 %s29, 1
          %s222 = smul.addr %s221, 256
          %s223 = scalar_lea.vmem [#allocation5], %s222
          %s225 = ssub.s32 4096, 4096
          %226 = vsyncadd %s220, %s225
          %s227 = smul.addr %s19, 32
          %s228 = smul.addr %s227, 128
          %s229 = scalar_lea.hbm %s0, %s228
          %s230 = sshll.u32 %s223, 4
          %s231 = int_to_ptr.vmem [resolvable:$true] %s230
          %236 = dma.hbm_to_vmem [thread:$0]  %s229, 4096, %s231, %s220, 128, 128, 8
        $region32: #{tpu_custom_call.1} parent=27 // pred_fallthru
          _
        // Predicated region
        $region33: #{tpu_custom_call.1} parent=27 // pred_check
          %p237 = pneg %p128
        $region34: #{tpu_custom_call.1} parent=27 // pred_check_branch
          %239 = sbr.rel (%p237) target = $region36
        $region35: #{tpu_custom_call.1} parent=27 // pred_region
          %s240 = sand.u32 %s19, 1
          %s241 = scalar_lea.sflag [#allocation6], %s240
          %s242 = sand.u32 %s118, 1
          %s243 = smul.addr %s242, 8
          %s244 = scalar_lea.vmem [#allocation13], %s243
          %s246 = ssub.s32 128, 128
          %247 = vsyncadd %s241, %s246
          %s248 = smul.addr %s19, 128
          %s249 = scalar_lea.hbm %s4, %s248
          %s251 = sshll.u32 %s244, 4
          %s252 = int_to_ptr.vmem [resolvable:$true] %s251
          %254 = dma.hbm_to_vmem [thread:$0]  %s249, 128, %s252, %s241
        $region36: #{tpu_custom_call.1} parent=27 // pred_fallthru
          _
      $region28: #{tpu_custom_call.1} parent=5 // pred_fallthru
        _
      %p255 = scmp.le.s32.totalorder 1, %s19
      %p256 = scmp.lt.s32.totalorder %s19, 3
      %p257 = pnand %p255, %p256
      %p258 = pneg %p257
      // Predicated region
      $region37: #{tpu_custom_call.1} parent=5 // pred_check
        _
      $region38: #{tpu_custom_call.1} parent=5 // pred_check_branch
        %260 = sbr.rel (%p257) target = $region40
      $region39: #{tpu_custom_call.1} parent=5 // pred_region
        %s261 = ssub.s32 %s19, 1
        %s262 = sand.u32 %s24, 1
        %s263 = scalar_lea.sflag [#allocation6], %s262
        %s264 = sand.u32 %s32, 1
        %s265 = smul.addr %s264, 256
        %s266 = scalar_lea.vmem [#allocation5], %s265
        // Predicated region
        $region41: #{tpu_custom_call.1} parent=39 // pred_check
          %p267 = pneg %p45
        $region42: #{tpu_custom_call.1} parent=39 // pred_check_branch
          %269 = sbr.rel (%p267) target = $region44
        $region43: #{tpu_custom_call.1} parent=39 // pred_region
          %270 = dma.done %s263, 4096
        $region44: #{tpu_custom_call.1} parent=39 // pred_fallthru
          _
        // Predicated region
        $region45: #{tpu_custom_call.1} parent=39 // pred_check
          %p271 = pneg %p66
        $region46: #{tpu_custom_call.1} parent=39 // pred_check_branch
          %273 = sbr.rel (%p271) target = $region48
        $region47: #{tpu_custom_call.1} parent=39 // pred_region
          %274 = dma.done [#allocation9], 4096
        $region48: #{tpu_custom_call.1} parent=39 // pred_fallthru
          _
        // Predicated region
        $region49: #{tpu_custom_call.1} parent=39 // pred_check
          %p275 = pneg %p87
        $region50: #{tpu_custom_call.1} parent=39 // pred_check_branch
          %277 = sbr.rel (%p275) target = $region52
        $region51: #{tpu_custom_call.1} parent=39 // pred_region
          %278 = dma.done [#allocation9], 128
        $region52: #{tpu_custom_call.1} parent=39 // pred_fallthru
          _
        // Predicated region
        $region53: #{tpu_custom_call.1} parent=39 // pred_check
          %p279 = pneg %p108
        $region54: #{tpu_custom_call.1} parent=39 // pred_check_branch
          %281 = sbr.rel (%p279) target = $region56
        $region55: #{tpu_custom_call.1} parent=39 // pred_region
          %282 = dma.done [#allocation12], 4096
        $region56: #{tpu_custom_call.1} parent=39 // pred_fallthru
          _
        %s283 = sand.u32 %s24, 1
        %s284 = scalar_lea.sflag [#allocation6], %s283
        %s285 = sand.u32 %s121, 1
        %s286 = smul.addr %s285, 8
        %s287 = scalar_lea.vmem [#allocation13], %s286
        // Predicated region
        $region57: #{tpu_custom_call.1} parent=39 // pred_check
          %p288 = pneg %p134
        $region58: #{tpu_custom_call.1} parent=39 // pred_check_branch
          %290 = sbr.rel (%p288) target = $region60
        $region59: #{tpu_custom_call.1} parent=39 // pred_region
          %291 = dma.done %s284, 128
        $region60: #{tpu_custom_call.1} parent=39 // pred_fallthru
          _
        %s292 = sand.u32 %s24, 1
        %s293 = scalar_lea.sflag [#allocation6], %s292
        %s294 = sand.u32 %s32, 1
        %s295 = smul.addr %s294, 256
        %s296 = scalar_lea.vmem [#allocation5], %s295
        %p297 = pneg %p45
        %p298 = pneg %p42
        %p299 = pneg %p66
        %p300 = pneg %p63
        %p301 = pneg %p87
        %p302 = pneg %p84
        %p303 = pneg %p108
        %p304 = pneg %p105
        %s305 = sand.u32 %s24, 1
        %s306 = scalar_lea.sflag [#allocation6], %s305
        %s307 = sand.u32 %s121, 1
        %s308 = smul.addr %s307, 8
        %s309 = scalar_lea.vmem [#allocation13], %s308
        %p310 = pneg %p134
        %p311 = pneg %p131
        %p312 = pneg %p160
        %p313 = pneg %p157
        %s314 = sand.u32 %s147, 1
        %s315 = scalar_lea.sflag [#allocation7], %s314
        %s316 = sand.u32 %s147, 1
        %s317 = smul.addr %s316, 8
        %s318 = scalar_lea.vmem [#allocation14], %s317
        %v320 = vld [vmem:[%s266] sm:$0xff]
        %v321 = vld [vmem:[%s266 + $0x8] sm:$0xff]
        %v322 = vld [vmem:[%s266 + $0x10] sm:$0xff]
        %v323 = vld [vmem:[%s266 + $0x18] sm:$0xff]
        %v324 = vld [vmem:[%s266 + $0x20] sm:$0xff]
        %v325 = vld [vmem:[%s266 + $0x28] sm:$0xff]
        %v326 = vld [vmem:[%s266 + $0x30] sm:$0xff]
        %v327 = vld [vmem:[%s266 + $0x38] sm:$0xff]
        %v328 = vld [vmem:[%s266 + $0x40] sm:$0xff]
        %v329 = vld [vmem:[%s266 + $0x48] sm:$0xff]
        %v330 = vld [vmem:[%s266 + $0x50] sm:$0xff]
        %v331 = vld [vmem:[%s266 + $0x58] sm:$0xff]
        %v332 = vld [vmem:[%s266 + $0x60] sm:$0xff]
        %v333 = vld [vmem:[%s266 + $0x68] sm:$0xff]
        %v334 = vld [vmem:[%s266 + $0x70] sm:$0xff]
        %v335 = vld [vmem:[%s266 + $0x78] sm:$0xff]
        %v336 = vld [vmem:[%s266 + $0x80] sm:$0xff]
        %v337 = vld [vmem:[%s266 + $0x88] sm:$0xff]
        %v338 = vld [vmem:[%s266 + $0x90] sm:$0xff]
        %v339 = vld [vmem:[%s266 + $0x98] sm:$0xff]
        %v340 = vld [vmem:[%s266 + $0xa0] sm:$0xff]
        %v341 = vld [vmem:[%s266 + $0xa8] sm:$0xff]
        %v342 = vld [vmem:[%s266 + $0xb0] sm:$0xff]
        %v343 = vld [vmem:[%s266 + $0xb8] sm:$0xff]
        %v344 = vld [vmem:[%s266 + $0xc0] sm:$0xff]
        %v345 = vld [vmem:[%s266 + $0xc8] sm:$0xff]
        %v346 = vld [vmem:[%s266 + $0xd0] sm:$0xff]
        %v347 = vld [vmem:[%s266 + $0xd8] sm:$0xff]
        %v348 = vld [vmem:[%s266 + $0xe0] sm:$0xff]
        %v349 = vld [vmem:[%s266 + $0xe8] sm:$0xff]
        %v350 = vld [vmem:[%s266 + $0xf0] sm:$0xff]
        %v351 = vld [vmem:[%s266 + $0xf8] sm:$0xff]
        %v352 = vld [vmem:[#allocation11] sm:$0xff]
        %v353 = vld [vmem:[#allocation11 + $0x8] sm:$0xff]
        %v354 = vld [vmem:[#allocation11 + $0x10] sm:$0xff]
        %v355 = vld [vmem:[#allocation11 + $0x18] sm:$0xff]
        %v356 = vld [vmem:[#allocation11 + $0x20] sm:$0xff]
        %v357 = vld [vmem:[#allocation11 + $0x28] sm:$0xff]
        %v358 = vld [vmem:[#allocation11 + $0x30] sm:$0xff]
        %v359 = vld [vmem:[#allocation11 + $0x38] sm:$0xff]
        %v360 = vld [vmem:[#allocation11 + $0x40] sm:$0xff]
        %v361 = vld [vmem:[#allocation11 + $0x48] sm:$0xff]
        %v362 = vld [vmem:[#allocation11 + $0x50] sm:$0xff]
        %v363 = vld [vmem:[#allocation11 + $0x58] sm:$0xff]
        %v364 = vld [vmem:[#allocation11 + $0x60] sm:$0xff]
        %v365 = vld [vmem:[#allocation11 + $0x68] sm:$0xff]
        %v366 = vld [vmem:[#allocation11 + $0x70] sm:$0xff]
        %v367 = vld [vmem:[#allocation11 + $0x78] sm:$0xff]
        %v368 = vld [vmem:[#allocation11 + $0x80] sm:$0xff]
        %v369 = vld [vmem:[#allocation11 + $0x88] sm:$0xff]
        %v370 = vld [vmem:[#allocation11 + $0x90] sm:$0xff]
        %v371 = vld [vmem:[#allocation11 + $0x98] sm:$0xff]
        %v372 = vld [vmem:[#allocation11 + $0xa0] sm:$0xff]
        %v373 = vld [vmem:[#allocation11 + $0xa8] sm:$0xff]
        %v374 = vld [vmem:[#allocation11 + $0xb0] sm:$0xff]
        %v375 = vld [vmem:[#allocation11 + $0xb8] sm:$0xff]
        %v376 = vld [vmem:[#allocation11 + $0xc0] sm:$0xff]
        %v377 = vld [vmem:[#allocation11 + $0xc8] sm:$0xff]
        %v378 = vld [vmem:[#allocation11 + $0xd0] sm:$0xff]
        %v379 = vld [vmem:[#allocation11 + $0xd8] sm:$0xff]
        %v380 = vld [vmem:[#allocation11 + $0xe0] sm:$0xff]
        %v381 = vld [vmem:[#allocation11 + $0xe8] sm:$0xff]
        %v382 = vld [vmem:[#allocation11 + $0xf0] sm:$0xff]
        %v383 = vld [vmem:[#allocation11 + $0xf8] sm:$0xff]
        %v384 = vrot.slane %v320, 7
        %v385 = vrot.slane %v321, 7
        %v386 = vrot.slane %v322, 7
        %v387 = vrot.slane %v323, 7
        %v388 = vrot.slane %v324, 7
        %v389 = vrot.slane %v325, 7
        %v390 = vrot.slane %v326, 7
        %v391 = vrot.slane %v327, 7
        %v392 = vrot.slane %v328, 7
        %v393 = vrot.slane %v329, 7
        %v394 = vrot.slane %v330, 7
        %v395 = vrot.slane %v331, 7
        %v396 = vrot.slane %v332, 7
        %v397 = vrot.slane %v333, 7
        %v398 = vrot.slane %v334, 7
        %v399 = vrot.slane %v335, 7
        %v400 = vrot.slane %v336, 7
        %v401 = vrot.slane %v337, 7
        %v402 = vrot.slane %v338, 7
        %v403 = vrot.slane %v339, 7
        %v404 = vrot.slane %v340, 7
        %v405 = vrot.slane %v341, 7
        %v406 = vrot.slane %v342, 7
        %v407 = vrot.slane %v343, 7
        %v408 = vrot.slane %v344, 7
        %v409 = vrot.slane %v345, 7
        %v410 = vrot.slane %v346, 7
        %v411 = vrot.slane %v347, 7
        %v412 = vrot.slane %v348, 7
        %v413 = vrot.slane %v349, 7
        %v414 = vrot.slane %v350, 7
        %v415 = vrot.slane %v351, 7
        %v416 = vlaneseq
        %v417 = vshrl.u32 %v416, 7
        %vm418 = vcmp.lt.s32.totalorder %v417, 1
        %v419 = vsel %vm418, %v414, %v415
        %v420 = vsel %vm418, %v413, %v414
        %v421 = vsel %vm418, %v412, %v413
        %v422 = vsel %vm418, %v411, %v412
        %v423 = vsel %vm418, %v410, %v411
        %v424 = vsel %vm418, %v409, %v410
        %v425 = vsel %vm418, %v408, %v409
        %v426 = vsel %vm418, %v407, %v408
        %v427 = vsel %vm418, %v406, %v407
        %v428 = vsel %vm418, %v405, %v406
        %v429 = vsel %vm418, %v404, %v405
        %v430 = vsel %vm418, %v403, %v404
        %v431 = vsel %vm418, %v402, %v403
        %v432 = vsel %vm418, %v401, %v402
        %v433 = vsel %vm418, %v400, %v401
        %v434 = vsel %vm418, %v399, %v400
        %v435 = vsel %vm418, %v398, %v399
        %v436 = vsel %vm418, %v397, %v398
        %v437 = vsel %vm418, %v396, %v397
        %v438 = vsel %vm418, %v395, %v396
        %v439 = vsel %vm418, %v394, %v395
        %v440 = vsel %vm418, %v393, %v394
        %v441 = vsel %vm418, %v392, %v393
        %v442 = vsel %vm418, %v391, %v392
        %v443 = vsel %vm418, %v390, %v391
        %v444 = vsel %vm418, %v389, %v390
        %v445 = vsel %vm418, %v388, %v389
        %v446 = vsel %vm418, %v387, %v388
        %v447 = vsel %vm418, %v386, %v387
        %v448 = vsel %vm418, %v385, %v386
        %v449 = vsel %vm418, %v384, %v385
        %v450 = vsel %vm418, %v415, %v384
        %v451 = vand.u32 %v352, 5
        %v452 = vand.u32 %v353, 5
        %v453 = vand.u32 %v354, 5
        %v454 = vand.u32 %v355, 5
        %v455 = vand.u32 %v356, 5
        %v456 = vand.u32 %v357, 5
        %v457 = vand.u32 %v358, 5
        %v458 = vand.u32 %v359, 5
        %v459 = vand.u32 %v360, 5
        %v460 = vand.u32 %v361, 5
        %v461 = vand.u32 %v362, 5
        %v462 = vand.u32 %v363, 5
        %v463 = vand.u32 %v364, 5
        %v464 = vand.u32 %v365, 5
        %v465 = vand.u32 %v366, 5
        %v466 = vand.u32 %v367, 5
        %v467 = vand.u32 %v368, 5
        %v468 = vand.u32 %v369, 5
        %v469 = vand.u32 %v370, 5
        %v470 = vand.u32 %v371, 5
        %v471 = vand.u32 %v372, 5
        %v472 = vand.u32 %v373, 5
        %v473 = vand.u32 %v374, 5
        %v474 = vand.u32 %v375, 5
        %v475 = vand.u32 %v376, 5
        %v476 = vand.u32 %v377, 5
        %v477 = vand.u32 %v378, 5
        %v478 = vand.u32 %v379, 5
        %v479 = vand.u32 %v380, 5
        %v480 = vand.u32 %v381, 5
        %v481 = vand.u32 %v382, 5
        %v482 = vand.u32 %v383, 5
        %vm483 = vcmp.eq.s32.totalorder %v451, 5
        %vm484 = vcmp.eq.s32.totalorder %v452, 5
        %vm485 = vcmp.eq.s32.totalorder %v453, 5
        %vm486 = vcmp.eq.s32.totalorder %v454, 5
        %vm487 = vcmp.eq.s32.totalorder %v455, 5
        %vm488 = vcmp.eq.s32.totalorder %v456, 5
        %vm489 = vcmp.eq.s32.totalorder %v457, 5
        %vm490 = vcmp.eq.s32.totalorder %v458, 5
        %vm491 = vcmp.eq.s32.totalorder %v459, 5
        %vm492 = vcmp.eq.s32.totalorder %v460, 5
        %vm493 = vcmp.eq.s32.totalorder %v461, 5
        %vm494 = vcmp.eq.s32.totalorder %v462, 5
        %vm495 = vcmp.eq.s32.totalorder %v463, 5
        %vm496 = vcmp.eq.s32.totalorder %v464, 5
        %vm497 = vcmp.eq.s32.totalorder %v465, 5
        %vm498 = vcmp.eq.s32.totalorder %v466, 5
        %vm499 = vcmp.eq.s32.totalorder %v467, 5
        %vm500 = vcmp.eq.s32.totalorder %v468, 5
        %vm501 = vcmp.eq.s32.totalorder %v469, 5
        %vm502 = vcmp.eq.s32.totalorder %v470, 5
        %vm503 = vcmp.eq.s32.totalorder %v471, 5
        %vm504 = vcmp.eq.s32.totalorder %v472, 5
        %vm505 = vcmp.eq.s32.totalorder %v473, 5
        %vm506 = vcmp.eq.s32.totalorder %v474, 5
        %vm507 = vcmp.eq.s32.totalorder %v475, 5
        %vm508 = vcmp.eq.s32.totalorder %v476, 5
        %vm509 = vcmp.eq.s32.totalorder %v477, 5
        %vm510 = vcmp.eq.s32.totalorder %v478, 5
        %vm511 = vcmp.eq.s32.totalorder %v479, 5
        %vm512 = vcmp.eq.s32.totalorder %v480, 5
        %vm513 = vcmp.eq.s32.totalorder %v481, 5
        %vm514 = vcmp.eq.s32.totalorder %v482, 5
        %v515 = vsel %vm483, %v420, 0.0
        %v516 = vsel %vm484, %v419, 0.0
        %v517 = vsel %vm485, %v450, 0.0
        %v518 = vsel %vm486, %v449, 0.0
        %v519 = vsel %vm487, %v448, 0.0
        %v520 = vsel %vm488, %v447, 0.0
        %v521 = vsel %vm489, %v446, 0.0
        %v522 = vsel %vm490, %v445, 0.0
        %v523 = vsel %vm491, %v444, 0.0
        %v524 = vsel %vm492, %v443, 0.0
        %v525 = vsel %vm493, %v442, 0.0
        %v526 = vsel %vm494, %v441, 0.0
        %v527 = vsel %vm495, %v440, 0.0
        %v528 = vsel %vm496, %v439, 0.0
        %v529 = vsel %vm497, %v438, 0.0
        %v530 = vsel %vm498, %v437, 0.0
        %v531 = vsel %vm499, %v436, 0.0
        %v532 = vsel %vm500, %v435, 0.0
        %v533 = vsel %vm501, %v434, 0.0
        %v534 = vsel %vm502, %v433, 0.0
        %v535 = vsel %vm503, %v432, 0.0
        %v536 = vsel %vm504, %v431, 0.0
        %v537 = vsel %vm505, %v430, 0.0
        %v538 = vsel %vm506, %v429, 0.0
        %v539 = vsel %vm507, %v428, 0.0
        %v540 = vsel %vm508, %v427, 0.0
        %v541 = vsel %vm509, %v426, 0.0
        %v542 = vsel %vm510, %v425, 0.0
        %v543 = vsel %vm511, %v424, 0.0
        %v544 = vsel %vm512, %v423, 0.0
        %v545 = vsel %vm513, %v422, 0.0
        %v546 = vsel %vm514, %v421, 0.0
        %547 = vst [vmem:[#allocation2] sm:$0xff] %v515
        %548 = vst [vmem:[#allocation2 + $0x8] sm:$0xff] %v516
        %549 = vst [vmem:[#allocation2 + $0x10] sm:$0xff] %v517
        %550 = vst [vmem:[#allocation2 + $0x18] sm:$0xff] %v518
        %551 = vst [vmem:[#allocation2 + $0x20] sm:$0xff] %v519
        %552 = vst [vmem:[#allocation2 + $0x28] sm:$0xff] %v520
        %553 = vst [vmem:[#allocation2 + $0x30] sm:$0xff] %v521
        %554 = vst [vmem:[#allocation2 + $0x38] sm:$0xff] %v522
        %555 = vst [vmem:[#allocation2 + $0x40] sm:$0xff] %v523
        %556 = vst [vmem:[#allocation2 + $0x48] sm:$0xff] %v524
        %557 = vst [vmem:[#allocation2 + $0x50] sm:$0xff] %v525
        %558 = vst [vmem:[#allocation2 + $0x58] sm:$0xff] %v526
        %559 = vst [vmem:[#allocation2 + $0x60] sm:$0xff] %v527
        %560 = vst [vmem:[#allocation2 + $0x68] sm:$0xff] %v528
        %561 = vst [vmem:[#allocation2 + $0x70] sm:$0xff] %v529
        %562 = vst [vmem:[#allocation2 + $0x78] sm:$0xff] %v530
        %563 = vst [vmem:[#allocation2 + $0x80] sm:$0xff] %v531
        %564 = vst [vmem:[#allocation2 + $0x88] sm:$0xff] %v532
        %565 = vst [vmem:[#allocation2 + $0x90] sm:$0xff] %v533
        %566 = vst [vmem:[#allocation2 + $0x98] sm:$0xff] %v534
        %567 = vst [vmem:[#allocation2 + $0xa0] sm:$0xff] %v535
        %568 = vst [vmem:[#allocation2 + $0xa8] sm:$0xff] %v536
        %569 = vst [vmem:[#allocation2 + $0xb0] sm:$0xff] %v537
        %570 = vst [vmem:[#allocation2 + $0xb8] sm:$0xff] %v538
        %571 = vst [vmem:[#allocation2 + $0xc0] sm:$0xff] %v539
        %572 = vst [vmem:[#allocation2 + $0xc8] sm:$0xff] %v540
        %573 = vst [vmem:[#allocation2 + $0xd0] sm:$0xff] %v541
        %574 = vst [vmem:[#allocation2 + $0xd8] sm:$0xff] %v542
        %575 = vst [vmem:[#allocation2 + $0xe0] sm:$0xff] %v543
        %576 = vst [vmem:[#allocation2 + $0xe8] sm:$0xff] %v544
        %577 = vst [vmem:[#allocation2 + $0xf0] sm:$0xff] %v545
        %578 = vst [vmem:[#allocation2 + $0xf8] sm:$0xff] %v546
        %v579 = vand.u32 %v352, 1
        %v580 = vand.u32 %v353, 1
        %v581 = vand.u32 %v354, 1
        %v582 = vand.u32 %v355, 1
        %v583 = vand.u32 %v356, 1
        %v584 = vand.u32 %v357, 1
        %v585 = vand.u32 %v358, 1
        %v586 = vand.u32 %v359, 1
        %v587 = vand.u32 %v360, 1
        %v588 = vand.u32 %v361, 1
        %v589 = vand.u32 %v362, 1
        %v590 = vand.u32 %v363, 1
        %v591 = vand.u32 %v364, 1
        %v592 = vand.u32 %v365, 1
        %v593 = vand.u32 %v366, 1
        %v594 = vand.u32 %v367, 1
        %v595 = vand.u32 %v368, 1
        %v596 = vand.u32 %v369, 1
        %v597 = vand.u32 %v370, 1
        %v598 = vand.u32 %v371, 1
        %v599 = vand.u32 %v372, 1
        %v600 = vand.u32 %v373, 1
        %v601 = vand.u32 %v374, 1
        %v602 = vand.u32 %v375, 1
        %v603 = vand.u32 %v376, 1
        %v604 = vand.u32 %v377, 1
        %v605 = vand.u32 %v378, 1
        %v606 = vand.u32 %v379, 1
        %v607 = vand.u32 %v380, 1
        %v608 = vand.u32 %v381, 1
        %v609 = vand.u32 %v382, 1
        %v610 = vand.u32 %v383, 1
        %vm611 = vcmp.eq.s32.totalorder %v579, 1
        %vm612 = vcmp.eq.s32.totalorder %v580, 1
        %vm613 = vcmp.eq.s32.totalorder %v581, 1
        %vm614 = vcmp.eq.s32.totalorder %v582, 1
        %vm615 = vcmp.eq.s32.totalorder %v583, 1
        %vm616 = vcmp.eq.s32.totalorder %v584, 1
        %vm617 = vcmp.eq.s32.totalorder %v585, 1
        %vm618 = vcmp.eq.s32.totalorder %v586, 1
        %vm619 = vcmp.eq.s32.totalorder %v587, 1
        %vm620 = vcmp.eq.s32.totalorder %v588, 1
        %vm621 = vcmp.eq.s32.totalorder %v589, 1
        %vm622 = vcmp.eq.s32.totalorder %v590, 1
        %vm623 = vcmp.eq.s32.totalorder %v591, 1
        %vm624 = vcmp.eq.s32.totalorder %v592, 1
        %vm625 = vcmp.eq.s32.totalorder %v593, 1
        %vm626 = vcmp.eq.s32.totalorder %v594, 1
        %vm627 = vcmp.eq.s32.totalorder %v595, 1
        %vm628 = vcmp.eq.s32.totalorder %v596, 1
        %vm629 = vcmp.eq.s32.totalorder %v597, 1
        %vm630 = vcmp.eq.s32.totalorder %v598, 1
        %vm631 = vcmp.eq.s32.totalorder %v599, 1
        %vm632 = vcmp.eq.s32.totalorder %v600, 1
        %vm633 = vcmp.eq.s32.totalorder %v601, 1
        %vm634 = vcmp.eq.s32.totalorder %v602, 1
        %vm635 = vcmp.eq.s32.totalorder %v603, 1
        %vm636 = vcmp.eq.s32.totalorder %v604, 1
        %vm637 = vcmp.eq.s32.totalorder %v605, 1
        %vm638 = vcmp.eq.s32.totalorder %v606, 1
        %vm639 = vcmp.eq.s32.totalorder %v607, 1
        %vm640 = vcmp.eq.s32.totalorder %v608, 1
        %vm641 = vcmp.eq.s32.totalorder %v609, 1
        %vm642 = vcmp.eq.s32.totalorder %v610, 1
        %v643 = vsel %vm611, %v350, 0.0
        %v644 = vsel %vm612, %v351, 0.0
        %v645 = vsel %vm613, %v320, 0.0
        %v646 = vsel %vm614, %v321, 0.0
        %v647 = vsel %vm615, %v322, 0.0
        %v648 = vsel %vm616, %v323, 0.0
        %v649 = vsel %vm617, %v324, 0.0
        %v650 = vsel %vm618, %v325, 0.0
        %v651 = vsel %vm619, %v326, 0.0
        %v652 = vsel %vm620, %v327, 0.0
        %v653 = vsel %vm621, %v328, 0.0
        %v654 = vsel %vm622, %v329, 0.0
        %v655 = vsel %vm623, %v330, 0.0
        %v656 = vsel %vm624, %v331, 0.0
        %v657 = vsel %vm625, %v332, 0.0
        %v658 = vsel %vm626, %v333, 0.0
        %v659 = vsel %vm627, %v334, 0.0
        %v660 = vsel %vm628, %v335, 0.0
        %v661 = vsel %vm629, %v336, 0.0
        %v662 = vsel %vm630, %v337, 0.0
        %v663 = vsel %vm631, %v338, 0.0
        %v664 = vsel %vm632, %v339, 0.0
        %v665 = vsel %vm633, %v340, 0.0
        %v666 = vsel %vm634, %v341, 0.0
        %v667 = vsel %vm635, %v342, 0.0
        %v668 = vsel %vm636, %v343, 0.0
        %v669 = vsel %vm637, %v344, 0.0
        %v670 = vsel %vm638, %v345, 0.0
        %v671 = vsel %vm639, %v346, 0.0
        %v672 = vsel %vm640, %v347, 0.0
        %v673 = vsel %vm641, %v348, 0.0
        %v674 = vsel %vm642, %v349, 0.0
        %675 = vrot.lane.b32.xlu0 %v643, 4
        %v676 = vpop.permute.xlu0 %675
        %677 = vrot.lane.b32.xlu0 %v644, 4
        %v678 = vpop.permute.xlu0 %677
        %679 = vrot.lane.b32.xlu0 %v645, 4
        %v680 = vpop.permute.xlu0 %679
        %681 = vrot.lane.b32.xlu0 %v646, 4
        %v682 = vpop.permute.xlu0 %681
        %683 = vrot.lane.b32.xlu0 %v647, 4
        %v684 = vpop.permute.xlu0 %683
        %685 = vrot.lane.b32.xlu0 %v648, 4
        %v686 = vpop.permute.xlu0 %685
        %687 = vrot.lane.b32.xlu0 %v649, 4
        %v688 = vpop.permute.xlu0 %687
        %689 = vrot.lane.b32.xlu0 %v650, 4
        %v690 = vpop.permute.xlu0 %689
        %691 = vrot.lane.b32.xlu0 %v651, 4
        %v692 = vpop.permute.xlu0 %691
        %693 = vrot.lane.b32.xlu0 %v652, 4
        %v694 = vpop.permute.xlu0 %693
        %695 = vrot.lane.b32.xlu0 %v653, 4
        %v696 = vpop.permute.xlu0 %695
        %697 = vrot.lane.b32.xlu0 %v654, 4
        %v698 = vpop.permute.xlu0 %697
        %699 = vrot.lane.b32.xlu0 %v655, 4
        %v700 = vpop.permute.xlu0 %699
        %701 = vrot.lane.b32.xlu0 %v656, 4
        %v702 = vpop.permute.xlu0 %701
        %703 = vrot.lane.b32.xlu0 %v657, 4
        %v704 = vpop.permute.xlu0 %703
        %705 = vrot.lane.b32.xlu0 %v658, 4
        %v706 = vpop.permute.xlu0 %705
        %707 = vrot.lane.b32.xlu0 %v659, 4
        %v708 = vpop.permute.xlu0 %707
        %709 = vrot.lane.b32.xlu0 %v660, 4
        %v710 = vpop.permute.xlu0 %709
        %711 = vrot.lane.b32.xlu0 %v661, 4
        %v712 = vpop.permute.xlu0 %711
        %713 = vrot.lane.b32.xlu0 %v662, 4
        %v714 = vpop.permute.xlu0 %713
        %715 = vrot.lane.b32.xlu0 %v663, 4
        %v716 = vpop.permute.xlu0 %715
        %717 = vrot.lane.b32.xlu0 %v664, 4
        %v718 = vpop.permute.xlu0 %717
        %719 = vrot.lane.b32.xlu0 %v665, 4
        %v720 = vpop.permute.xlu0 %719
        %721 = vrot.lane.b32.xlu0 %v666, 4
        %v722 = vpop.permute.xlu0 %721
        %723 = vrot.lane.b32.xlu0 %v667, 4
        %v724 = vpop.permute.xlu0 %723
        %725 = vrot.lane.b32.xlu0 %v668, 4
        %v726 = vpop.permute.xlu0 %725
        %727 = vrot.lane.b32.xlu0 %v669, 4
        %v728 = vpop.permute.xlu0 %727
        %729 = vrot.lane.b32.xlu0 %v670, 4
        %v730 = vpop.permute.xlu0 %729
        %731 = vrot.lane.b32.xlu0 %v671, 4
        %v732 = vpop.permute.xlu0 %731
        %733 = vrot.lane.b32.xlu0 %v672, 4
        %v734 = vpop.permute.xlu0 %733
        %735 = vrot.lane.b32.xlu0 %v673, 4
        %v736 = vpop.permute.xlu0 %735
        %737 = vrot.lane.b32.xlu0 %v674, 4
        %v738 = vpop.permute.xlu0 %737
        %v739 = vld [vmem:[#allocation2] sm:$0xff]
        %v740 = vld [vmem:[#allocation2 + $0x8] sm:$0xff]
        %v741 = vld [vmem:[#allocation2 + $0x10] sm:$0xff]
        %v742 = vld [vmem:[#allocation2 + $0x18] sm:$0xff]
        %v743 = vld [vmem:[#allocation2 + $0x20] sm:$0xff]
        %v744 = vld [vmem:[#allocation2 + $0x28] sm:$0xff]
        %v745 = vld [vmem:[#allocation2 + $0x30] sm:$0xff]
        %v746 = vld [vmem:[#allocation2 + $0x38] sm:$0xff]
        %v747 = vld [vmem:[#allocation2 + $0x40] sm:$0xff]
        %v748 = vld [vmem:[#allocation2 + $0x48] sm:$0xff]
        %v749 = vld [vmem:[#allocation2 + $0x50] sm:$0xff]
        %v750 = vld [vmem:[#allocation2 + $0x58] sm:$0xff]
        %v751 = vld [vmem:[#allocation2 + $0x60] sm:$0xff]
        %v752 = vld [vmem:[#allocation2 + $0x68] sm:$0xff]
        %v753 = vld [vmem:[#allocation2 + $0x70] sm:$0xff]
        %v754 = vld [vmem:[#allocation2 + $0x78] sm:$0xff]
        %v755 = vld [vmem:[#allocation2 + $0x80] sm:$0xff]
        %v756 = vld [vmem:[#allocation2 + $0x88] sm:$0xff]
        %v757 = vld [vmem:[#allocation2 + $0x90] sm:$0xff]
        %v758 = vld [vmem:[#allocation2 + $0x98] sm:$0xff]
        %v759 = vld [vmem:[#allocation2 + $0xa0] sm:$0xff]
        %v760 = vld [vmem:[#allocation2 + $0xa8] sm:$0xff]
        %v761 = vld [vmem:[#allocation2 + $0xb0] sm:$0xff]
        %v762 = vld [vmem:[#allocation2 + $0xb8] sm:$0xff]
        %v763 = vld [vmem:[#allocation2 + $0xc0] sm:$0xff]
        %v764 = vld [vmem:[#allocation2 + $0xc8] sm:$0xff]
        %v765 = vld [vmem:[#allocation2 + $0xd0] sm:$0xff]
        %v766 = vld [vmem:[#allocation2 + $0xd8] sm:$0xff]
        %v767 = vld [vmem:[#allocation2 + $0xe0] sm:$0xff]
        %v768 = vld [vmem:[#allocation2 + $0xe8] sm:$0xff]
        %v769 = vld [vmem:[#allocation2 + $0xf0] sm:$0xff]
        %v770 = vld [vmem:[#allocation2 + $0xf8] sm:$0xff]
        %v771 = vadd.f32 %v739, %v676
        %v772 = vadd.f32 %v740, %v678
        %v773 = vadd.f32 %v741, %v680
        %v774 = vadd.f32 %v742, %v682
        %v775 = vadd.f32 %v743, %v684
        %v776 = vadd.f32 %v744, %v686
        %v777 = vadd.f32 %v745, %v688
        %v778 = vadd.f32 %v746, %v690
        %v779 = vadd.f32 %v747, %v692
        %v780 = vadd.f32 %v748, %v694
        %v781 = vadd.f32 %v749, %v696
        %v782 = vadd.f32 %v750, %v698
        %v783 = vadd.f32 %v751, %v700
        %v784 = vadd.f32 %v752, %v702
        %v785 = vadd.f32 %v753, %v704
        %v786 = vadd.f32 %v754, %v706
        %v787 = vadd.f32 %v755, %v708
        %v788 = vadd.f32 %v756, %v710
        %v789 = vadd.f32 %v757, %v712
        %v790 = vadd.f32 %v758, %v714
        %v791 = vadd.f32 %v759, %v716
        %v792 = vadd.f32 %v760, %v718
        %v793 = vadd.f32 %v761, %v720
        %v794 = vadd.f32 %v762, %v722
        %v795 = vadd.f32 %v763, %v724
        %v796 = vadd.f32 %v764, %v726
        %v797 = vadd.f32 %v765, %v728
        %v798 = vadd.f32 %v766, %v730
        %v799 = vadd.f32 %v767, %v732
        %v800 = vadd.f32 %v768, %v734
        %v801 = vadd.f32 %v769, %v736
        %v802 = vadd.f32 %v770, %v738
        %803 = vst [vmem:[#allocation2] sm:$0xff] %v771
        %804 = vst [vmem:[#allocation2 + $0x8] sm:$0xff] %v772
        %805 = vst [vmem:[#allocation2 + $0x10] sm:$0xff] %v773
        %806 = vst [vmem:[#allocation2 + $0x18] sm:$0xff] %v774
        %807 = vst [vmem:[#allocation2 + $0x20] sm:$0xff] %v775
        %808 = vst [vmem:[#allocation2 + $0x28] sm:$0xff] %v776
        %809 = vst [vmem:[#allocation2 + $0x30] sm:$0xff] %v777
        %810 = vst [vmem:[#allocation2 + $0x38] sm:$0xff] %v778
        %811 = vst [vmem:[#allocation2 + $0x40] sm:$0xff] %v779
        %812 = vst [vmem:[#allocation2 + $0x48] sm:$0xff] %v780
        %813 = vst [vmem:[#allocation2 + $0x50] sm:$0xff] %v781
        %814 = vst [vmem:[#allocation2 + $0x58] sm:$0xff] %v782
        %815 = vst [vmem:[#allocation2 + $0x60] sm:$0xff] %v783
        %816 = vst [vmem:[#allocation2 + $0x68] sm:$0xff] %v784
        %817 = vst [vmem:[#allocation2 + $0x70] sm:$0xff] %v785
        %818 = vst [vmem:[#allocation2 + $0x78] sm:$0xff] %v786
        %819 = vst [vmem:[#allocation2 + $0x80] sm:$0xff] %v787
        %820 = vst [vmem:[#allocation2 + $0x88] sm:$0xff] %v788
        %821 = vst [vmem:[#allocation2 + $0x90] sm:$0xff] %v789
        %822 = vst [vmem:[#allocation2 + $0x98] sm:$0xff] %v790
        %823 = vst [vmem:[#allocation2 + $0xa0] sm:$0xff] %v791
        %824 = vst [vmem:[#allocation2 + $0xa8] sm:$0xff] %v792
        %825 = vst [vmem:[#allocation2 + $0xb0] sm:$0xff] %v793
        %826 = vst [vmem:[#allocation2 + $0xb8] sm:$0xff] %v794
        %827 = vst [vmem:[#allocation2 + $0xc0] sm:$0xff] %v795
        %828 = vst [vmem:[#allocation2 + $0xc8] sm:$0xff] %v796
        %829 = vst [vmem:[#allocation2 + $0xd0] sm:$0xff] %v797
        %830 = vst [vmem:[#allocation2 + $0xd8] sm:$0xff] %v798
        %831 = vst [vmem:[#allocation2 + $0xe0] sm:$0xff] %v799
        %832 = vst [vmem:[#allocation2 + $0xe8] sm:$0xff] %v800
        %833 = vst [vmem:[#allocation2 + $0xf0] sm:$0xff] %v801
        %834 = vst [vmem:[#allocation2 + $0xf8] sm:$0xff] %v802
        %v835 = vrot.slane %v320, 1
        %v836 = vrot.slane %v321, 1
        %v837 = vrot.slane %v322, 1
        %v838 = vrot.slane %v323, 1
        %v839 = vrot.slane %v324, 1
        %v840 = vrot.slane %v325, 1
        %v841 = vrot.slane %v326, 1
        %v842 = vrot.slane %v327, 1
        %v843 = vrot.slane %v328, 1
        %v844 = vrot.slane %v329, 1
        %v845 = vrot.slane %v330, 1
        %v846 = vrot.slane %v331, 1
        %v847 = vrot.slane %v332, 1
        %v848 = vrot.slane %v333, 1
        %v849 = vrot.slane %v334, 1
        %v850 = vrot.slane %v335, 1
        %v851 = vrot.slane %v336, 1
        %v852 = vrot.slane %v337, 1
        %v853 = vrot.slane %v338, 1
        %v854 = vrot.slane %v339, 1
        %v855 = vrot.slane %v340, 1
        %v856 = vrot.slane %v341, 1
        %v857 = vrot.slane %v342, 1
        %v858 = vrot.slane %v343, 1
        %v859 = vrot.slane %v344, 1
        %v860 = vrot.slane %v345, 1
        %v861 = vrot.slane %v346, 1
        %v862 = vrot.slane %v347, 1
        %v863 = vrot.slane %v348, 1
        %v864 = vrot.slane %v349, 1
        %v865 = vrot.slane %v350, 1
        %v866 = vrot.slane %v351, 1
        %vm867 = vcmp.lt.s32.totalorder %v417, 7
        %v868 = vsel %vm867, %v865, %v866
        %v869 = vsel %vm867, %v864, %v865
        %v870 = vsel %vm867, %v863, %v864
        %v871 = vsel %vm867, %v862, %v863
        %v872 = vsel %vm867, %v861, %v862
        %v873 = vsel %vm867, %v860, %v861
        %v874 = vsel %vm867, %v859, %v860
        %v875 = vsel %vm867, %v858, %v859
        %v876 = vsel %vm867, %v857, %v858
        %v877 = vsel %vm867, %v856, %v857
        %v878 = vsel %vm867, %v855, %v856
        %v879 = vsel %vm867, %v854, %v855
        %v880 = vsel %vm867, %v853, %v854
        %v881 = vsel %vm867, %v852, %v853
        %v882 = vsel %vm867, %v851, %v852
        %v883 = vsel %vm867, %v850, %v851
        %v884 = vsel %vm867, %v849, %v850
        %v885 = vsel %vm867, %v848, %v849
        %v886 = vsel %vm867, %v847, %v848
        %v887 = vsel %vm867, %v846, %v847
        %v888 = vsel %vm867, %v845, %v846
        %v889 = vsel %vm867, %v844, %v845
        %v890 = vsel %vm867, %v843, %v844
        %v891 = vsel %vm867, %v842, %v843
        %v892 = vsel %vm867, %v841, %v842
        %v893 = vsel %vm867, %v840, %v841
        %v894 = vsel %vm867, %v839, %v840
        %v895 = vsel %vm867, %v838, %v839
        %v896 = vsel %vm867, %v837, %v838
        %v897 = vsel %vm867, %v836, %v837
        %v898 = vsel %vm867, %v835, %v836
        %v899 = vsel %vm867, %v866, %v835
        %v900 = vand.u32 %v352, 9
        %v901 = vand.u32 %v353, 9
        %v902 = vand.u32 %v354, 9
        %v903 = vand.u32 %v355, 9
        %v904 = vand.u32 %v356, 9
        %v905 = vand.u32 %v357, 9
        %v906 = vand.u32 %v358, 9
        %v907 = vand.u32 %v359, 9
        %v908 = vand.u32 %v360, 9
        %v909 = vand.u32 %v361, 9
        %v910 = vand.u32 %v362, 9
        %v911 = vand.u32 %v363, 9
        %v912 = vand.u32 %v364, 9
        %v913 = vand.u32 %v365, 9
        %v914 = vand.u32 %v366, 9
        %v915 = vand.u32 %v367, 9
        %v916 = vand.u32 %v368, 9
        %v917 = vand.u32 %v369, 9
        %v918 = vand.u32 %v370, 9
        %v919 = vand.u32 %v371, 9
        %v920 = vand.u32 %v372, 9
        %v921 = vand.u32 %v373, 9
        %v922 = vand.u32 %v374, 9
        %v923 = vand.u32 %v375, 9
        %v924 = vand.u32 %v376, 9
        %v925 = vand.u32 %v377, 9
        %v926 = vand.u32 %v378, 9
        %v927 = vand.u32 %v379, 9
        %v928 = vand.u32 %v380, 9
        %v929 = vand.u32 %v381, 9
        %v930 = vand.u32 %v382, 9
        %v931 = vand.u32 %v383, 9
        %vm932 = vcmp.eq.s32.totalorder %v900, 9
        %vm933 = vcmp.eq.s32.totalorder %v901, 9
        %vm934 = vcmp.eq.s32.totalorder %v902, 9
        %vm935 = vcmp.eq.s32.totalorder %v903, 9
        %vm936 = vcmp.eq.s32.totalorder %v904, 9
        %vm937 = vcmp.eq.s32.totalorder %v905, 9
        %vm938 = vcmp.eq.s32.totalorder %v906, 9
        %vm939 = vcmp.eq.s32.totalorder %v907, 9
        %vm940 = vcmp.eq.s32.totalorder %v908, 9
        %vm941 = vcmp.eq.s32.totalorder %v909, 9
        %vm942 = vcmp.eq.s32.totalorder %v910, 9
        %vm943 = vcmp.eq.s32.totalorder %v911, 9
        %vm944 = vcmp.eq.s32.totalorder %v912, 9
        %vm945 = vcmp.eq.s32.totalorder %v913, 9
        %vm946 = vcmp.eq.s32.totalorder %v914, 9
        %vm947 = vcmp.eq.s32.totalorder %v915, 9
        %vm948 = vcmp.eq.s32.totalorder %v916, 9
        %vm949 = vcmp.eq.s32.totalorder %v917, 9
        %vm950 = vcmp.eq.s32.totalorder %v918, 9
        %vm951 = vcmp.eq.s32.totalorder %v919, 9
        %vm952 = vcmp.eq.s32.totalorder %v920, 9
        %vm953 = vcmp.eq.s32.totalorder %v921, 9
        %vm954 = vcmp.eq.s32.totalorder %v922, 9
        %vm955 = vcmp.eq.s32.totalorder %v923, 9
        %vm956 = vcmp.eq.s32.totalorder %v924, 9
        %vm957 = vcmp.eq.s32.totalorder %v925, 9
        %vm958 = vcmp.eq.s32.totalorder %v926, 9
        %vm959 = vcmp.eq.s32.totalorder %v927, 9
        %vm960 = vcmp.eq.s32.totalorder %v928, 9
        %vm961 = vcmp.eq.s32.totalorder %v929, 9
        %vm962 = vcmp.eq.s32.totalorder %v930, 9
        %vm963 = vcmp.eq.s32.totalorder %v931, 9
        %v964 = vsel %vm932, %v868, 0.0
        %v965 = vsel %vm933, %v899, 0.0
        %v966 = vsel %vm934, %v898, 0.0
        %v967 = vsel %vm935, %v897, 0.0
        %v968 = vsel %vm936, %v896, 0.0
        %v969 = vsel %vm937, %v895, 0.0
        %v970 = vsel %vm938, %v894, 0.0
        %v971 = vsel %vm939, %v893, 0.0
        %v972 = vsel %vm940, %v892, 0.0
        %v973 = vsel %vm941, %v891, 0.0
        %v974 = vsel %vm942, %v890, 0.0
        %v975 = vsel %vm943, %v889, 0.0
        %v976 = vsel %vm944, %v888, 0.0
        %v977 = vsel %vm945, %v887, 0.0
        %v978 = vsel %vm946, %v886, 0.0
        %v979 = vsel %vm947, %v885, 0.0
        %v980 = vsel %vm948, %v884, 0.0
        %v981 = vsel %vm949, %v883, 0.0
        %v982 = vsel %vm950, %v882, 0.0
        %v983 = vsel %vm951, %v881, 0.0
        %v984 = vsel %vm952, %v880, 0.0
        %v985 = vsel %vm953, %v879, 0.0
        %v986 = vsel %vm954, %v878, 0.0
        %v987 = vsel %vm955, %v877, 0.0
        %v988 = vsel %vm956, %v876, 0.0
        %v989 = vsel %vm957, %v875, 0.0
        %v990 = vsel %vm958, %v874, 0.0
        %v991 = vsel %vm959, %v873, 0.0
        %v992 = vsel %vm960, %v872, 0.0
        %v993 = vsel %vm961, %v871, 0.0
        %v994 = vsel %vm962, %v870, 0.0
        %v995 = vsel %vm963, %v869, 0.0
        %996 = vrot.lane.b32.xlu0 %v964, 8
        %v997 = vpop.permute.xlu0 %996
        %998 = vrot.lane.b32.xlu0 %v965, 8
        %v999 = vpop.permute.xlu0 %998
        %1000 = vrot.lane.b32.xlu0 %v966, 8
        %v1001 = vpop.permute.xlu0 %1000
        %1002 = vrot.lane.b32.xlu0 %v967, 8
        %v1003 = vpop.permute.xlu0 %1002
        %1004 = vrot.lane.b32.xlu0 %v968, 8
        %v1005 = vpop.permute.xlu0 %1004
        %1006 = vrot.lane.b32.xlu0 %v969, 8
        %v1007 = vpop.permute.xlu0 %1006
        %1008 = vrot.lane.b32.xlu0 %v970, 8
        %v1009 = vpop.permute.xlu0 %1008
        %1010 = vrot.lane.b32.xlu0 %v971, 8
        %v1011 = vpop.permute.xlu0 %1010
        %1012 = vrot.lane.b32.xlu0 %v972, 8
        %v1013 = vpop.permute.xlu0 %1012
        %1014 = vrot.lane.b32.xlu0 %v973, 8
        %v1015 = vpop.permute.xlu0 %1014
        %1016 = vrot.lane.b32.xlu0 %v974, 8
        %v1017 = vpop.permute.xlu0 %1016
        %1018 = vrot.lane.b32.xlu0 %v975, 8
        %v1019 = vpop.permute.xlu0 %1018
        %1020 = vrot.lane.b32.xlu0 %v976, 8
        %v1021 = vpop.permute.xlu0 %1020
        %1022 = vrot.lane.b32.xlu0 %v977, 8
        %v1023 = vpop.permute.xlu0 %1022
        %1024 = vrot.lane.b32.xlu0 %v978, 8
        %v1025 = vpop.permute.xlu0 %1024
        %1026 = vrot.lane.b32.xlu0 %v979, 8
        %v1027 = vpop.permute.xlu0 %1026
        %1028 = vrot.lane.b32.xlu0 %v980, 8
        %v1029 = vpop.permute.xlu0 %1028
        %1030 = vrot.lane.b32.xlu0 %v981, 8
        %v1031 = vpop.permute.xlu0 %1030
        %1032 = vrot.lane.b32.xlu0 %v982, 8
        %v1033 = vpop.permute.xlu0 %1032
        %1034 = vrot.lane.b32.xlu0 %v983, 8
        %v1035 = vpop.permute.xlu0 %1034
        %1036 = vrot.lane.b32.xlu0 %v984, 8
        %v1037 = vpop.permute.xlu0 %1036
        %1038 = vrot.lane.b32.xlu0 %v985, 8
        %v1039 = vpop.permute.xlu0 %1038
        %1040 = vrot.lane.b32.xlu0 %v986, 8
        %v1041 = vpop.permute.xlu0 %1040
        %1042 = vrot.lane.b32.xlu0 %v987, 8
        %v1043 = vpop.permute.xlu0 %1042
        %1044 = vrot.lane.b32.xlu0 %v988, 8
        %v1045 = vpop.permute.xlu0 %1044
        %1046 = vrot.lane.b32.xlu0 %v989, 8
        %v1047 = vpop.permute.xlu0 %1046
        %1048 = vrot.lane.b32.xlu0 %v990, 8
        %v1049 = vpop.permute.xlu0 %1048
        %1050 = vrot.lane.b32.xlu0 %v991, 8
        %v1051 = vpop.permute.xlu0 %1050
        %1052 = vrot.lane.b32.xlu0 %v992, 8
        %v1053 = vpop.permute.xlu0 %1052
        %1054 = vrot.lane.b32.xlu0 %v993, 8
        %v1055 = vpop.permute.xlu0 %1054
        %1056 = vrot.lane.b32.xlu0 %v994, 8
        %v1057 = vpop.permute.xlu0 %1056
        %1058 = vrot.lane.b32.xlu0 %v995, 8
        %v1059 = vpop.permute.xlu0 %1058
        %v1060 = vld [vmem:[#allocation2] sm:$0xff]
        %v1061 = vld [vmem:[#allocation2 + $0x8] sm:$0xff]
        %v1062 = vld [vmem:[#allocation2 + $0x10] sm:$0xff]
        %v1063 = vld [vmem:[#allocation2 + $0x18] sm:$0xff]
        %v1064 = vld [vmem:[#allocation2 + $0x20] sm:$0xff]
        %v1065 = vld [vmem:[#allocation2 + $0x28] sm:$0xff]
        %v1066 = vld [vmem:[#allocation2 + $0x30] sm:$0xff]
        %v1067 = vld [vmem:[#allocation2 + $0x38] sm:$0xff]
        %v1068 = vld [vmem:[#allocation2 + $0x40] sm:$0xff]
        %v1069 = vld [vmem:[#allocation2 + $0x48] sm:$0xff]
        %v1070 = vld [vmem:[#allocation2 + $0x50] sm:$0xff]
        %v1071 = vld [vmem:[#allocation2 + $0x58] sm:$0xff]
        %v1072 = vld [vmem:[#allocation2 + $0x60] sm:$0xff]
        %v1073 = vld [vmem:[#allocation2 + $0x68] sm:$0xff]
        %v1074 = vld [vmem:[#allocation2 + $0x70] sm:$0xff]
        %v1075 = vld [vmem:[#allocation2 + $0x78] sm:$0xff]
        %v1076 = vld [vmem:[#allocation2 + $0x80] sm:$0xff]
        %v1077 = vld [vmem:[#allocation2 + $0x88] sm:$0xff]
        %v1078 = vld [vmem:[#allocation2 + $0x90] sm:$0xff]
        %v1079 = vld [vmem:[#allocation2 + $0x98] sm:$0xff]
        %v1080 = vld [vmem:[#allocation2 + $0xa0] sm:$0xff]
        %v1081 = vld [vmem:[#allocation2 + $0xa8] sm:$0xff]
        %v1082 = vld [vmem:[#allocation2 + $0xb0] sm:$0xff]
        %v1083 = vld [vmem:[#allocation2 + $0xb8] sm:$0xff]
        %v1084 = vld [vmem:[#allocation2 + $0xc0] sm:$0xff]
        %v1085 = vld [vmem:[#allocation2 + $0xc8] sm:$0xff]
        %v1086 = vld [vmem:[#allocation2 + $0xd0] sm:$0xff]
        %v1087 = vld [vmem:[#allocation2 + $0xd8] sm:$0xff]
        %v1088 = vld [vmem:[#allocation2 + $0xe0] sm:$0xff]
        %v1089 = vld [vmem:[#allocation2 + $0xe8] sm:$0xff]
        %v1090 = vld [vmem:[#allocation2 + $0xf0] sm:$0xff]
        %v1091 = vld [vmem:[#allocation2 + $0xf8] sm:$0xff]
        %v1092 = vadd.f32 %v1060, %v997
        %v1093 = vadd.f32 %v1061, %v999
        %v1094 = vadd.f32 %v1062, %v1001
        %v1095 = vadd.f32 %v1063, %v1003
        %v1096 = vadd.f32 %v1064, %v1005
        %v1097 = vadd.f32 %v1065, %v1007
        %v1098 = vadd.f32 %v1066, %v1009
        %v1099 = vadd.f32 %v1067, %v1011
        %v1100 = vadd.f32 %v1068, %v1013
        %v1101 = vadd.f32 %v1069, %v1015
        %v1102 = vadd.f32 %v1070, %v1017
        %v1103 = vadd.f32 %v1071, %v1019
        %v1104 = vadd.f32 %v1072, %v1021
        %v1105 = vadd.f32 %v1073, %v1023
        %v1106 = vadd.f32 %v1074, %v1025
        %v1107 = vadd.f32 %v1075, %v1027
        %v1108 = vadd.f32 %v1076, %v1029
        %v1109 = vadd.f32 %v1077, %v1031
        %v1110 = vadd.f32 %v1078, %v1033
        %v1111 = vadd.f32 %v1079, %v1035
        %v1112 = vadd.f32 %v1080, %v1037
        %v1113 = vadd.f32 %v1081, %v1039
        %v1114 = vadd.f32 %v1082, %v1041
        %v1115 = vadd.f32 %v1083, %v1043
        %v1116 = vadd.f32 %v1084, %v1045
        %v1117 = vadd.f32 %v1085, %v1047
        %v1118 = vadd.f32 %v1086, %v1049
        %v1119 = vadd.f32 %v1087, %v1051
        %v1120 = vadd.f32 %v1088, %v1053
        %v1121 = vadd.f32 %v1089, %v1055
        %v1122 = vadd.f32 %v1090, %v1057
        %v1123 = vadd.f32 %v1091, %v1059
        %1124 = vst [vmem:[#allocation2] sm:$0xff] %v1092
        %1125 = vst [vmem:[#allocation2 + $0x8] sm:$0xff] %v1093
        %1126 = vst [vmem:[#allocation2 + $0x10] sm:$0xff] %v1094
        %1127 = vst [vmem:[#allocation2 + $0x18] sm:$0xff] %v1095
        %1128 = vst [vmem:[#allocation2 + $0x20] sm:$0xff] %v1096
        %1129 = vst [vmem:[#allocation2 + $0x28] sm:$0xff] %v1097
        %1130 = vst [vmem:[#allocation2 + $0x30] sm:$0xff] %v1098
        %1131 = vst [vmem:[#allocation2 + $0x38] sm:$0xff] %v1099
        %1132 = vst [vmem:[#allocation2 + $0x40] sm:$0xff] %v1100
        %1133 = vst [vmem:[#allocation2 + $0x48] sm:$0xff] %v1101
        %1134 = vst [vmem:[#allocation2 + $0x50] sm:$0xff] %v1102
        %1135 = vst [vmem:[#allocation2 + $0x58] sm:$0xff] %v1103
        %1136 = vst [vmem:[#allocation2 + $0x60] sm:$0xff] %v1104
        %1137 = vst [vmem:[#allocation2 + $0x68] sm:$0xff] %v1105
        %1138 = vst [vmem:[#allocation2 + $0x70] sm:$0xff] %v1106
        %1139 = vst [vmem:[#allocation2 + $0x78] sm:$0xff] %v1107
        %1140 = vst [vmem:[#allocation2 + $0x80] sm:$0xff] %v1108
        %1141 = vst [vmem:[#allocation2 + $0x88] sm:$0xff] %v1109
        %1142 = vst [vmem:[#allocation2 + $0x90] sm:$0xff] %v1110
        %1143 = vst [vmem:[#allocation2 + $0x98] sm:$0xff] %v1111
        %1144 = vst [vmem:[#allocation2 + $0xa0] sm:$0xff] %v1112
        %1145 = vst [vmem:[#allocation2 + $0xa8] sm:$0xff] %v1113
        %1146 = vst [vmem:[#allocation2 + $0xb0] sm:$0xff] %v1114
        %1147 = vst [vmem:[#allocation2 + $0xb8] sm:$0xff] %v1115
        %1148 = vst [vmem:[#allocation2 + $0xc0] sm:$0xff] %v1116
        %1149 = vst [vmem:[#allocation2 + $0xc8] sm:$0xff] %v1117
        %1150 = vst [vmem:[#allocation2 + $0xd0] sm:$0xff] %v1118
        %1151 = vst [vmem:[#allocation2 + $0xd8] sm:$0xff] %v1119
        %1152 = vst [vmem:[#allocation2 + $0xe0] sm:$0xff] %v1120
        %1153 = vst [vmem:[#allocation2 + $0xe8] sm:$0xff] %v1121
        %1154 = vst [vmem:[#allocation2 + $0xf0] sm:$0xff] %v1122
        %1155 = vst [vmem:[#allocation2 + $0xf8] sm:$0xff] %v1123
        %v1156 = vand.u32 %v352, 4
        %v1157 = vand.u32 %v353, 4
        %v1158 = vand.u32 %v354, 4
        %v1159 = vand.u32 %v355, 4
        %v1160 = vand.u32 %v356, 4
        %v1161 = vand.u32 %v357, 4
        %v1162 = vand.u32 %v358, 4
        %v1163 = vand.u32 %v359, 4
        %v1164 = vand.u32 %v360, 4
        %v1165 = vand.u32 %v361, 4
        %v1166 = vand.u32 %v362, 4
        %v1167 = vand.u32 %v363, 4
        %v1168 = vand.u32 %v364, 4
        %v1169 = vand.u32 %v365, 4
        %v1170 = vand.u32 %v366, 4
        %v1171 = vand.u32 %v367, 4
        %v1172 = vand.u32 %v368, 4
        %v1173 = vand.u32 %v369, 4
        %v1174 = vand.u32 %v370, 4
        %v1175 = vand.u32 %v371, 4
        %v1176 = vand.u32 %v372, 4
        %v1177 = vand.u32 %v373, 4
        %v1178 = vand.u32 %v374, 4
        %v1179 = vand.u32 %v375, 4
        %v1180 = vand.u32 %v376, 4
        %v1181 = vand.u32 %v377, 4
        %v1182 = vand.u32 %v378, 4
        %v1183 = vand.u32 %v379, 4
        %v1184 = vand.u32 %v380, 4
        %v1185 = vand.u32 %v381, 4
        %v1186 = vand.u32 %v382, 4
        %v1187 = vand.u32 %v383, 4
        %vm1188 = vcmp.eq.s32.totalorder %v1156, 4
        %vm1189 = vcmp.eq.s32.totalorder %v1157, 4
        %vm1190 = vcmp.eq.s32.totalorder %v1158, 4
        %vm1191 = vcmp.eq.s32.totalorder %v1159, 4
        %vm1192 = vcmp.eq.s32.totalorder %v1160, 4
        %vm1193 = vcmp.eq.s32.totalorder %v1161, 4
        %vm1194 = vcmp.eq.s32.totalorder %v1162, 4
        %vm1195 = vcmp.eq.s32.totalorder %v1163, 4
        %vm1196 = vcmp.eq.s32.totalorder %v1164, 4
        %vm1197 = vcmp.eq.s32.totalorder %v1165, 4
        %vm1198 = vcmp.eq.s32.totalorder %v1166, 4
        %vm1199 = vcmp.eq.s32.totalorder %v1167, 4
        %vm1200 = vcmp.eq.s32.totalorder %v1168, 4
        %vm1201 = vcmp.eq.s32.totalorder %v1169, 4
        %vm1202 = vcmp.eq.s32.totalorder %v1170, 4
        %vm1203 = vcmp.eq.s32.totalorder %v1171, 4
        %vm1204 = vcmp.eq.s32.totalorder %v1172, 4
        %vm1205 = vcmp.eq.s32.totalorder %v1173, 4
        %vm1206 = vcmp.eq.s32.totalorder %v1174, 4
        %vm1207 = vcmp.eq.s32.totalorder %v1175, 4
        %vm1208 = vcmp.eq.s32.totalorder %v1176, 4
        %vm1209 = vcmp.eq.s32.totalorder %v1177, 4
        %vm1210 = vcmp.eq.s32.totalorder %v1178, 4
        %vm1211 = vcmp.eq.s32.totalorder %v1179, 4
        %vm1212 = vcmp.eq.s32.totalorder %v1180, 4
        %vm1213 = vcmp.eq.s32.totalorder %v1181, 4
        %vm1214 = vcmp.eq.s32.totalorder %v1182, 4
        %vm1215 = vcmp.eq.s32.totalorder %v1183, 4
        %vm1216 = vcmp.eq.s32.totalorder %v1184, 4
        %vm1217 = vcmp.eq.s32.totalorder %v1185, 4
        %vm1218 = vcmp.eq.s32.totalorder %v1186, 4
        %vm1219 = vcmp.eq.s32.totalorder %v1187, 4
        %v1220 = vsel %vm1188, %v450, 0.0
        %v1221 = vsel %vm1189, %v449, 0.0
        %v1222 = vsel %vm1190, %v448, 0.0
        %v1223 = vsel %vm1191, %v447, 0.0
        %v1224 = vsel %vm1192, %v446, 0.0
        %v1225 = vsel %vm1193, %v445, 0.0
        %v1226 = vsel %vm1194, %v444, 0.0
        %v1227 = vsel %vm1195, %v443, 0.0
        %v1228 = vsel %vm1196, %v442, 0.0
        %v1229 = vsel %vm1197, %v441, 0.0
        %v1230 = vsel %vm1198, %v440, 0.0
        %v1231 = vsel %vm1199, %v439, 0.0
        %v1232 = vsel %vm1200, %v438, 0.0
        %v1233 = vsel %vm1201, %v437, 0.0
        %v1234 = vsel %vm1202, %v436, 0.0
        %v1235 = vsel %vm1203, %v435, 0.0
        %v1236 = vsel %vm1204, %v434, 0.0
        %v1237 = vsel %vm1205, %v433, 0.0
        %v1238 = vsel %vm1206, %v432, 0.0
        %v1239 = vsel %vm1207, %v431, 0.0
        %v1240 = vsel %vm1208, %v430, 0.0
        %v1241 = vsel %vm1209, %v429, 0.0
        %v1242 = vsel %vm1210, %v428, 0.0
        %v1243 = vsel %vm1211, %v427, 0.0
        %v1244 = vsel %vm1212, %v426, 0.0
        %v1245 = vsel %vm1213, %v425, 0.0
        %v1246 = vsel %vm1214, %v424, 0.0
        %v1247 = vsel %vm1215, %v423, 0.0
        %v1248 = vsel %vm1216, %v422, 0.0
        %v1249 = vsel %vm1217, %v421, 0.0
        %v1250 = vsel %vm1218, %v420, 0.0
        %v1251 = vsel %vm1219, %v419, 0.0
        %1252 = vrot.lane.b32.xlu0 %v1220, 12
        %v1253 = vpop.permute.xlu0 %1252
        %1254 = vrot.lane.b32.xlu0 %v1221, 12
        %v1255 = vpop.permute.xlu0 %1254
        %1256 = vrot.lane.b32.xlu0 %v1222, 12
        %v1257 = vpop.permute.xlu0 %1256
        %1258 = vrot.lane.b32.xlu0 %v1223, 12
        %v1259 = vpop.permute.xlu0 %1258
        %1260 = vrot.lane.b32.xlu0 %v1224, 12
        %v1261 = vpop.permute.xlu0 %1260
        %1262 = vrot.lane.b32.xlu0 %v1225, 12
        %v1263 = vpop.permute.xlu0 %1262
        %1264 = vrot.lane.b32.xlu0 %v1226, 12
        %v1265 = vpop.permute.xlu0 %1264
        %1266 = vrot.lane.b32.xlu0 %v1227, 12
        %v1267 = vpop.permute.xlu0 %1266
        %1268 = vrot.lane.b32.xlu0 %v1228, 12
        %v1269 = vpop.permute.xlu0 %1268
        %1270 = vrot.lane.b32.xlu0 %v1229, 12
        %v1271 = vpop.permute.xlu0 %1270
        %1272 = vrot.lane.b32.xlu0 %v1230, 12
        %v1273 = vpop.permute.xlu0 %1272
        %1274 = vrot.lane.b32.xlu0 %v1231, 12
        %v1275 = vpop.permute.xlu0 %1274
        %1276 = vrot.lane.b32.xlu0 %v1232, 12
        %v1277 = vpop.permute.xlu0 %1276
        %1278 = vrot.lane.b32.xlu0 %v1233, 12
        %v1279 = vpop.permute.xlu0 %1278
        %1280 = vrot.lane.b32.xlu0 %v1234, 12
        %v1281 = vpop.permute.xlu0 %1280
        %1282 = vrot.lane.b32.xlu0 %v1235, 12
        %v1283 = vpop.permute.xlu0 %1282
        %1284 = vrot.lane.b32.xlu0 %v1236, 12
        %v1285 = vpop.permute.xlu0 %1284
        %1286 = vrot.lane.b32.xlu0 %v1237, 12
        %v1287 = vpop.permute.xlu0 %1286
        %1288 = vrot.lane.b32.xlu0 %v1238, 12
        %v1289 = vpop.permute.xlu0 %1288
        %1290 = vrot.lane.b32.xlu0 %v1239, 12
        %v1291 = vpop.permute.xlu0 %1290
        %1292 = vrot.lane.b32.xlu0 %v1240, 12
        %v1293 = vpop.permute.xlu0 %1292
        %1294 = vrot.lane.b32.xlu0 %v1241, 12
        %v1295 = vpop.permute.xlu0 %1294
        %1296 = vrot.lane.b32.xlu0 %v1242, 12
        %v1297 = vpop.permute.xlu0 %1296
        %1298 = vrot.lane.b32.xlu0 %v1243, 12
        %v1299 = vpop.permute.xlu0 %1298
        %1300 = vrot.lane.b32.xlu0 %v1244, 12
        %v1301 = vpop.permute.xlu0 %1300
        %1302 = vrot.lane.b32.xlu0 %v1245, 12
        %v1303 = vpop.permute.xlu0 %1302
        %1304 = vrot.lane.b32.xlu0 %v1246, 12
        %v1305 = vpop.permute.xlu0 %1304
        %1306 = vrot.lane.b32.xlu0 %v1247, 12
        %v1307 = vpop.permute.xlu0 %1306
        %1308 = vrot.lane.b32.xlu0 %v1248, 12
        %v1309 = vpop.permute.xlu0 %1308
        %1310 = vrot.lane.b32.xlu0 %v1249, 12
        %v1311 = vpop.permute.xlu0 %1310
        %1312 = vrot.lane.b32.xlu0 %v1250, 12
        %v1313 = vpop.permute.xlu0 %1312
        %1314 = vrot.lane.b32.xlu0 %v1251, 12
        %v1315 = vpop.permute.xlu0 %1314
        %v1316 = vld [vmem:[#allocation2] sm:$0xff]
        %v1317 = vld [vmem:[#allocation2 + $0x8] sm:$0xff]
        %v1318 = vld [vmem:[#allocation2 + $0x10] sm:$0xff]
        %v1319 = vld [vmem:[#allocation2 + $0x18] sm:$0xff]
        %v1320 = vld [vmem:[#allocation2 + $0x20] sm:$0xff]
        %v1321 = vld [vmem:[#allocation2 + $0x28] sm:$0xff]
        %v1322 = vld [vmem:[#allocation2 + $0x30] sm:$0xff]
        %v1323 = vld [vmem:[#allocation2 + $0x38] sm:$0xff]
        %v1324 = vld [vmem:[#allocation2 + $0x40] sm:$0xff]
        %v1325 = vld [vmem:[#allocation2 + $0x48] sm:$0xff]
        %v1326 = vld [vmem:[#allocation2 + $0x50] sm:$0xff]
        %v1327 = vld [vmem:[#allocation2 + $0x58] sm:$0xff]
        %v1328 = vld [vmem:[#allocation2 + $0x60] sm:$0xff]
        %v1329 = vld [vmem:[#allocation2 + $0x68] sm:$0xff]
        %v1330 = vld [vmem:[#allocation2 + $0x70] sm:$0xff]
        %v1331 = vld [vmem:[#allocation2 + $0x78] sm:$0xff]
        %v1332 = vld [vmem:[#allocation2 + $0x80] sm:$0xff]
        %v1333 = vld [vmem:[#allocation2 + $0x88] sm:$0xff]
        %v1334 = vld [vmem:[#allocation2 + $0x90] sm:$0xff]
        %v1335 = vld [vmem:[#allocation2 + $0x98] sm:$0xff]
        %v1336 = vld [vmem:[#allocation2 + $0xa0] sm:$0xff]
        %v1337 = vld [vmem:[#allocation2 + $0xa8] sm:$0xff]
        %v1338 = vld [vmem:[#allocation2 + $0xb0] sm:$0xff]
        %v1339 = vld [vmem:[#allocation2 + $0xb8] sm:$0xff]
        %v1340 = vld [vmem:[#allocation2 + $0xc0] sm:$0xff]
        %v1341 = vld [vmem:[#allocation2 + $0xc8] sm:$0xff]
        %v1342 = vld [vmem:[#allocation2 + $0xd0] sm:$0xff]
        %v1343 = vld [vmem:[#allocation2 + $0xd8] sm:$0xff]
        %v1344 = vld [vmem:[#allocation2 + $0xe0] sm:$0xff]
        %v1345 = vld [vmem:[#allocation2 + $0xe8] sm:$0xff]
        %v1346 = vld [vmem:[#allocation2 + $0xf0] sm:$0xff]
        %v1347 = vld [vmem:[#allocation2 + $0xf8] sm:$0xff]
        %v1348 = vadd.f32 %v1316, %v1253
        %v1349 = vadd.f32 %v1317, %v1255
        %v1350 = vadd.f32 %v1318, %v1257
        %v1351 = vadd.f32 %v1319, %v1259
        %v1352 = vadd.f32 %v1320, %v1261
        %v1353 = vadd.f32 %v1321, %v1263
        %v1354 = vadd.f32 %v1322, %v1265
        %v1355 = vadd.f32 %v1323, %v1267
        %v1356 = vadd.f32 %v1324, %v1269
        %v1357 = vadd.f32 %v1325, %v1271
        %v1358 = vadd.f32 %v1326, %v1273
        %v1359 = vadd.f32 %v1327, %v1275
        %v1360 = vadd.f32 %v1328, %v1277
        %v1361 = vadd.f32 %v1329, %v1279
        %v1362 = vadd.f32 %v1330, %v1281
        %v1363 = vadd.f32 %v1331, %v1283
        %v1364 = vadd.f32 %v1332, %v1285
        %v1365 = vadd.f32 %v1333, %v1287
        %v1366 = vadd.f32 %v1334, %v1289
        %v1367 = vadd.f32 %v1335, %v1291
        %v1368 = vadd.f32 %v1336, %v1293
        %v1369 = vadd.f32 %v1337, %v1295
        %v1370 = vadd.f32 %v1338, %v1297
        %v1371 = vadd.f32 %v1339, %v1299
        %v1372 = vadd.f32 %v1340, %v1301
        %v1373 = vadd.f32 %v1341, %v1303
        %v1374 = vadd.f32 %v1342, %v1305
        %v1375 = vadd.f32 %v1343, %v1307
        %v1376 = vadd.f32 %v1344, %v1309
        %v1377 = vadd.f32 %v1345, %v1311
        %v1378 = vadd.f32 %v1346, %v1313
        %v1379 = vadd.f32 %v1347, %v1315
        %1380 = vst [vmem:[#allocation2] sm:$0xff] %v1348
        %1381 = vst [vmem:[#allocation2 + $0x8] sm:$0xff] %v1349
        %1382 = vst [vmem:[#allocation2 + $0x10] sm:$0xff] %v1350
        %1383 = vst [vmem:[#allocation2 + $0x18] sm:$0xff] %v1351
        %1384 = vst [vmem:[#allocation2 + $0x20] sm:$0xff] %v1352
        %1385 = vst [vmem:[#allocation2 + $0x28] sm:$0xff] %v1353
        %1386 = vst [vmem:[#allocation2 + $0x30] sm:$0xff] %v1354
        %1387 = vst [vmem:[#allocation2 + $0x38] sm:$0xff] %v1355
        %1388 = vst [vmem:[#allocation2 + $0x40] sm:$0xff] %v1356
        %1389 = vst [vmem:[#allocation2 + $0x48] sm:$0xff] %v1357
        %1390 = vst [vmem:[#allocation2 + $0x50] sm:$0xff] %v1358
        %1391 = vst [vmem:[#allocation2 + $0x58] sm:$0xff] %v1359
        %1392 = vst [vmem:[#allocation2 + $0x60] sm:$0xff] %v1360
        %1393 = vst [vmem:[#allocation2 + $0x68] sm:$0xff] %v1361
        %1394 = vst [vmem:[#allocation2 + $0x70] sm:$0xff] %v1362
        %1395 = vst [vmem:[#allocation2 + $0x78] sm:$0xff] %v1363
        %1396 = vst [vmem:[#allocation2 + $0x80] sm:$0xff] %v1364
        %1397 = vst [vmem:[#allocation2 + $0x88] sm:$0xff] %v1365
        %1398 = vst [vmem:[#allocation2 + $0x90] sm:$0xff] %v1366
        %1399 = vst [vmem:[#allocation2 + $0x98] sm:$0xff] %v1367
        %1400 = vst [vmem:[#allocation2 + $0xa0] sm:$0xff] %v1368
        %1401 = vst [vmem:[#allocation2 + $0xa8] sm:$0xff] %v1369
        %1402 = vst [vmem:[#allocation2 + $0xb0] sm:$0xff] %v1370
        %1403 = vst [vmem:[#allocation2 + $0xb8] sm:$0xff] %v1371
        %1404 = vst [vmem:[#allocation2 + $0xc0] sm:$0xff] %v1372
        %1405 = vst [vmem:[#allocation2 + $0xc8] sm:$0xff] %v1373
        %1406 = vst [vmem:[#allocation2 + $0xd0] sm:$0xff] %v1374
        %1407 = vst [vmem:[#allocation2 + $0xd8] sm:$0xff] %v1375
        %1408 = vst [vmem:[#allocation2 + $0xe0] sm:$0xff] %v1376
        %1409 = vst [vmem:[#allocation2 + $0xe8] sm:$0xff] %v1377
        %1410 = vst [vmem:[#allocation2 + $0xf0] sm:$0xff] %v1378
        %1411 = vst [vmem:[#allocation2 + $0xf8] sm:$0xff] %v1379
        %1412 = vrot.lane.b32.xlu0 %v320, 16
        %v1413 = vpop.permute.xlu0 %1412
        %1414 = vrot.lane.b32.xlu0 %v321, 16
        %v1415 = vpop.permute.xlu0 %1414
        %1416 = vrot.lane.b32.xlu0 %v322, 16
        %v1417 = vpop.permute.xlu0 %1416
        %1418 = vrot.lane.b32.xlu0 %v323, 16
        %v1419 = vpop.permute.xlu0 %1418
        %1420 = vrot.lane.b32.xlu0 %v324, 16
        %v1421 = vpop.permute.xlu0 %1420
        %1422 = vrot.lane.b32.xlu0 %v325, 16
        %v1423 = vpop.permute.xlu0 %1422
        %1424 = vrot.lane.b32.xlu0 %v326, 16
        %v1425 = vpop.permute.xlu0 %1424
        %1426 = vrot.lane.b32.xlu0 %v327, 16
        %v1427 = vpop.permute.xlu0 %1426
        %1428 = vrot.lane.b32.xlu0 %v328, 16
        %v1429 = vpop.permute.xlu0 %1428
        %1430 = vrot.lane.b32.xlu0 %v329, 16
        %v1431 = vpop.permute.xlu0 %1430
        %1432 = vrot.lane.b32.xlu0 %v330, 16
        %v1433 = vpop.permute.xlu0 %1432
        %1434 = vrot.lane.b32.xlu0 %v331, 16
        %v1435 = vpop.permute.xlu0 %1434
        %1436 = vrot.lane.b32.xlu0 %v332, 16
        %v1437 = vpop.permute.xlu0 %1436
        %1438 = vrot.lane.b32.xlu0 %v333, 16
        %v1439 = vpop.permute.xlu0 %1438
        %1440 = vrot.lane.b32.xlu0 %v334, 16
        %v1441 = vpop.permute.xlu0 %1440
        %1442 = vrot.lane.b32.xlu0 %v335, 16
        %v1443 = vpop.permute.xlu0 %1442
        %1444 = vrot.lane.b32.xlu0 %v336, 16
        %v1445 = vpop.permute.xlu0 %1444
        %1446 = vrot.lane.b32.xlu0 %v337, 16
        %v1447 = vpop.permute.xlu0 %1446
        %1448 = vrot.lane.b32.xlu0 %v338, 16
        %v1449 = vpop.permute.xlu0 %1448
        %1450 = vrot.lane.b32.xlu0 %v339, 16
        %v1451 = vpop.permute.xlu0 %1450
        %1452 = vrot.lane.b32.xlu0 %v340, 16
        %v1453 = vpop.permute.xlu0 %1452
        %1454 = vrot.lane.b32.xlu0 %v341, 16
        %v1455 = vpop.permute.xlu0 %1454
        %1456 = vrot.lane.b32.xlu0 %v342, 16
        %v1457 = vpop.permute.xlu0 %1456
        %1458 = vrot.lane.b32.xlu0 %v343, 16
        %v1459 = vpop.permute.xlu0 %1458
        %1460 = vrot.lane.b32.xlu0 %v344, 16
        %v1461 = vpop.permute.xlu0 %1460
        %1462 = vrot.lane.b32.xlu0 %v345, 16
        %v1463 = vpop.permute.xlu0 %1462
        %1464 = vrot.lane.b32.xlu0 %v346, 16
        %v1465 = vpop.permute.xlu0 %1464
        %1466 = vrot.lane.b32.xlu0 %v347, 16
        %v1467 = vpop.permute.xlu0 %1466
        %1468 = vrot.lane.b32.xlu0 %v348, 16
        %v1469 = vpop.permute.xlu0 %1468
        %1470 = vrot.lane.b32.xlu0 %v349, 16
        %v1471 = vpop.permute.xlu0 %1470
        %1472 = vrot.lane.b32.xlu0 %v350, 16
        %v1473 = vpop.permute.xlu0 %1472
        %1474 = vrot.lane.b32.xlu0 %v351, 16
        %v1475 = vpop.permute.xlu0 %1474
        %v1476 = vld [vmem:[#allocation2] sm:$0xff]
        %v1477 = vld [vmem:[#allocation2 + $0x8] sm:$0xff]
        %v1478 = vld [vmem:[#allocation2 + $0x10] sm:$0xff]
        %v1479 = vld [vmem:[#allocation2 + $0x18] sm:$0xff]
        %v1480 = vld [vmem:[#allocation2 + $0x20] sm:$0xff]
        %v1481 = vld [vmem:[#allocation2 + $0x28] sm:$0xff]
        %v1482 = vld [vmem:[#allocation2 + $0x30] sm:$0xff]
        %v1483 = vld [vmem:[#allocation2 + $0x38] sm:$0xff]
        %v1484 = vld [vmem:[#allocation2 + $0x40] sm:$0xff]
        %v1485 = vld [vmem:[#allocation2 + $0x48] sm:$0xff]
        %v1486 = vld [vmem:[#allocation2 + $0x50] sm:$0xff]
        %v1487 = vld [vmem:[#allocation2 + $0x58] sm:$0xff]
        %v1488 = vld [vmem:[#allocation2 + $0x60] sm:$0xff]
        %v1489 = vld [vmem:[#allocation2 + $0x68] sm:$0xff]
        %v1490 = vld [vmem:[#allocation2 + $0x70] sm:$0xff]
        %v1491 = vld [vmem:[#allocation2 + $0x78] sm:$0xff]
        %v1492 = vld [vmem:[#allocation2 + $0x80] sm:$0xff]
        %v1493 = vld [vmem:[#allocation2 + $0x88] sm:$0xff]
        %v1494 = vld [vmem:[#allocation2 + $0x90] sm:$0xff]
        %v1495 = vld [vmem:[#allocation2 + $0x98] sm:$0xff]
        %v1496 = vld [vmem:[#allocation2 + $0xa0] sm:$0xff]
        %v1497 = vld [vmem:[#allocation2 + $0xa8] sm:$0xff]
        %v1498 = vld [vmem:[#allocation2 + $0xb0] sm:$0xff]
        %v1499 = vld [vmem:[#allocation2 + $0xb8] sm:$0xff]
        %v1500 = vld [vmem:[#allocation2 + $0xc0] sm:$0xff]
        %v1501 = vld [vmem:[#allocation2 + $0xc8] sm:$0xff]
        %v1502 = vld [vmem:[#allocation2 + $0xd0] sm:$0xff]
        %v1503 = vld [vmem:[#allocation2 + $0xd8] sm:$0xff]
        %v1504 = vld [vmem:[#allocation2 + $0xe0] sm:$0xff]
        %v1505 = vld [vmem:[#allocation2 + $0xe8] sm:$0xff]
        %v1506 = vld [vmem:[#allocation2 + $0xf0] sm:$0xff]
        %v1507 = vld [vmem:[#allocation2 + $0xf8] sm:$0xff]
        %v1508 = vadd.f32 %v1476, %v1413
        %v1509 = vadd.f32 %v1477, %v1415
        %v1510 = vadd.f32 %v1478, %v1417
        %v1511 = vadd.f32 %v1479, %v1419
        %v1512 = vadd.f32 %v1480, %v1421
        %v1513 = vadd.f32 %v1481, %v1423
        %v1514 = vadd.f32 %v1482, %v1425
        %v1515 = vadd.f32 %v1483, %v1427
        %v1516 = vadd.f32 %v1484, %v1429
        %v1517 = vadd.f32 %v1485, %v1431
        %v1518 = vadd.f32 %v1486, %v1433
        %v1519 = vadd.f32 %v1487, %v1435
        %v1520 = vadd.f32 %v1488, %v1437
        %v1521 = vadd.f32 %v1489, %v1439
        %v1522 = vadd.f32 %v1490, %v1441
        %v1523 = vadd.f32 %v1491, %v1443
        %v1524 = vadd.f32 %v1492, %v1445
        %v1525 = vadd.f32 %v1493, %v1447
        %v1526 = vadd.f32 %v1494, %v1449
        %v1527 = vadd.f32 %v1495, %v1451
        %v1528 = vadd.f32 %v1496, %v1453
        %v1529 = vadd.f32 %v1497, %v1455
        %v1530 = vadd.f32 %v1498, %v1457
        %v1531 = vadd.f32 %v1499, %v1459
        %v1532 = vadd.f32 %v1500, %v1461
        %v1533 = vadd.f32 %v1501, %v1463
        %v1534 = vadd.f32 %v1502, %v1465
        %v1535 = vadd.f32 %v1503, %v1467
        %v1536 = vadd.f32 %v1504, %v1469
        %v1537 = vadd.f32 %v1505, %v1471
        %v1538 = vadd.f32 %v1506, %v1473
        %v1539 = vadd.f32 %v1507, %v1475
        %1540 = vst [vmem:[#allocation2] sm:$0xff] %v1508
        %1541 = vst [vmem:[#allocation2 + $0x8] sm:$0xff] %v1509
        %1542 = vst [vmem:[#allocation2 + $0x10] sm:$0xff] %v1510
        %1543 = vst [vmem:[#allocation2 + $0x18] sm:$0xff] %v1511
        %1544 = vst [vmem:[#allocation2 + $0x20] sm:$0xff] %v1512
        %1545 = vst [vmem:[#allocation2 + $0x28] sm:$0xff] %v1513
        %1546 = vst [vmem:[#allocation2 + $0x30] sm:$0xff] %v1514
        %1547 = vst [vmem:[#allocation2 + $0x38] sm:$0xff] %v1515
        %1548 = vst [vmem:[#allocation2 + $0x40] sm:$0xff] %v1516
        %1549 = vst [vmem:[#allocation2 + $0x48] sm:$0xff] %v1517
        %1550 = vst [vmem:[#allocation2 + $0x50] sm:$0xff] %v1518
        %1551 = vst [vmem:[#allocation2 + $0x58] sm:$0xff] %v1519
        %1552 = vst [vmem:[#allocation2 + $0x60] sm:$0xff] %v1520
        %1553 = vst [vmem:[#allocation2 + $0x68] sm:$0xff] %v1521
        %1554 = vst [vmem:[#allocation2 + $0x70] sm:$0xff] %v1522
        %1555 = vst [vmem:[#allocation2 + $0x78] sm:$0xff] %v1523
        %1556 = vst [vmem:[#allocation2 + $0x80] sm:$0xff] %v1524
        %1557 = vst [vmem:[#allocation2 + $0x88] sm:$0xff] %v1525
        %1558 = vst [vmem:[#allocation2 + $0x90] sm:$0xff] %v1526
        %1559 = vst [vmem:[#allocation2 + $0x98] sm:$0xff] %v1527
        %1560 = vst [vmem:[#allocation2 + $0xa0] sm:$0xff] %v1528
        %1561 = vst [vmem:[#allocation2 + $0xa8] sm:$0xff] %v1529
        %1562 = vst [vmem:[#allocation2 + $0xb0] sm:$0xff] %v1530
        %1563 = vst [vmem:[#allocation2 + $0xb8] sm:$0xff] %v1531
        %1564 = vst [vmem:[#allocation2 + $0xc0] sm:$0xff] %v1532
        %1565 = vst [vmem:[#allocation2 + $0xc8] sm:$0xff] %v1533
        %1566 = vst [vmem:[#allocation2 + $0xd0] sm:$0xff] %v1534
        %1567 = vst [vmem:[#allocation2 + $0xd8] sm:$0xff] %v1535
        %1568 = vst [vmem:[#allocation2 + $0xe0] sm:$0xff] %v1536
        %1569 = vst [vmem:[#allocation2 + $0xe8] sm:$0xff] %v1537
        %1570 = vst [vmem:[#allocation2 + $0xf0] sm:$0xff] %v1538
        %1571 = vst [vmem:[#allocation2 + $0xf8] sm:$0xff] %v1539
        %v1572 = vand.u32 %v352, 8
        %v1573 = vand.u32 %v353, 8
        %v1574 = vand.u32 %v354, 8
        %v1575 = vand.u32 %v355, 8
        %v1576 = vand.u32 %v356, 8
        %v1577 = vand.u32 %v357, 8
        %v1578 = vand.u32 %v358, 8
        %v1579 = vand.u32 %v359, 8
        %v1580 = vand.u32 %v360, 8
        %v1581 = vand.u32 %v361, 8
        %v1582 = vand.u32 %v362, 8
        %v1583 = vand.u32 %v363, 8
        %v1584 = vand.u32 %v364, 8
        %v1585 = vand.u32 %v365, 8
        %v1586 = vand.u32 %v366, 8
        %v1587 = vand.u32 %v367, 8
        %v1588 = vand.u32 %v368, 8
        %v1589 = vand.u32 %v369, 8
        %v1590 = vand.u32 %v370, 8
        %v1591 = vand.u32 %v371, 8
        %v1592 = vand.u32 %v372, 8
        %v1593 = vand.u32 %v373, 8
        %v1594 = vand.u32 %v374, 8
        %v1595 = vand.u32 %v375, 8
        %v1596 = vand.u32 %v376, 8
        %v1597 = vand.u32 %v377, 8
        %v1598 = vand.u32 %v378, 8
        %v1599 = vand.u32 %v379, 8
        %v1600 = vand.u32 %v380, 8
        %v1601 = vand.u32 %v381, 8
        %v1602 = vand.u32 %v382, 8
        %v1603 = vand.u32 %v383, 8
        %vm1604 = vcmp.eq.s32.totalorder %v1572, 8
        %vm1605 = vcmp.eq.s32.totalorder %v1573, 8
        %vm1606 = vcmp.eq.s32.totalorder %v1574, 8
        %vm1607 = vcmp.eq.s32.totalorder %v1575, 8
        %vm1608 = vcmp.eq.s32.totalorder %v1576, 8
        %vm1609 = vcmp.eq.s32.totalorder %v1577, 8
        %vm1610 = vcmp.eq.s32.totalorder %v1578, 8
        %vm1611 = vcmp.eq.s32.totalorder %v1579, 8
        %vm1612 = vcmp.eq.s32.totalorder %v1580, 8
        %vm1613 = vcmp.eq.s32.totalorder %v1581, 8
        %vm1614 = vcmp.eq.s32.totalorder %v1582, 8
        %vm1615 = vcmp.eq.s32.totalorder %v1583, 8
        %vm1616 = vcmp.eq.s32.totalorder %v1584, 8
        %vm1617 = vcmp.eq.s32.totalorder %v1585, 8
        %vm1618 = vcmp.eq.s32.totalorder %v1586, 8
        %vm1619 = vcmp.eq.s32.totalorder %v1587, 8
        %vm1620 = vcmp.eq.s32.totalorder %v1588, 8
        %vm1621 = vcmp.eq.s32.totalorder %v1589, 8
        %vm1622 = vcmp.eq.s32.totalorder %v1590, 8
        %vm1623 = vcmp.eq.s32.totalorder %v1591, 8
        %vm1624 = vcmp.eq.s32.totalorder %v1592, 8
        %vm1625 = vcmp.eq.s32.totalorder %v1593, 8
        %vm1626 = vcmp.eq.s32.totalorder %v1594, 8
        %vm1627 = vcmp.eq.s32.totalorder %v1595, 8
        %vm1628 = vcmp.eq.s32.totalorder %v1596, 8
        %vm1629 = vcmp.eq.s32.totalorder %v1597, 8
        %vm1630 = vcmp.eq.s32.totalorder %v1598, 8
        %vm1631 = vcmp.eq.s32.totalorder %v1599, 8
        %vm1632 = vcmp.eq.s32.totalorder %v1600, 8
        %vm1633 = vcmp.eq.s32.totalorder %v1601, 8
        %vm1634 = vcmp.eq.s32.totalorder %v1602, 8
        %vm1635 = vcmp.eq.s32.totalorder %v1603, 8
        %v1636 = vsel %vm1604, %v898, 0.0
        %v1637 = vsel %vm1605, %v897, 0.0
        %v1638 = vsel %vm1606, %v896, 0.0
        %v1639 = vsel %vm1607, %v895, 0.0
        %v1640 = vsel %vm1608, %v894, 0.0
        %v1641 = vsel %vm1609, %v893, 0.0
        %v1642 = vsel %vm1610, %v892, 0.0
        %v1643 = vsel %vm1611, %v891, 0.0
        %v1644 = vsel %vm1612, %v890, 0.0
        %v1645 = vsel %vm1613, %v889, 0.0
        %v1646 = vsel %vm1614, %v888, 0.0
        %v1647 = vsel %vm1615, %v887, 0.0
        %v1648 = vsel %vm1616, %v886, 0.0
        %v1649 = vsel %vm1617, %v885, 0.0
        %v1650 = vsel %vm1618, %v884, 0.0
        %v1651 = vsel %vm1619, %v883, 0.0
        %v1652 = vsel %vm1620, %v882, 0.0
        %v1653 = vsel %vm1621, %v881, 0.0
        %v1654 = vsel %vm1622, %v880, 0.0
        %v1655 = vsel %vm1623, %v879, 0.0
        %v1656 = vsel %vm1624, %v878, 0.0
        %v1657 = vsel %vm1625, %v877, 0.0
        %v1658 = vsel %vm1626, %v876, 0.0
        %v1659 = vsel %vm1627, %v875, 0.0
        %v1660 = vsel %vm1628, %v874, 0.0
        %v1661 = vsel %vm1629, %v873, 0.0
        %v1662 = vsel %vm1630, %v872, 0.0
        %v1663 = vsel %vm1631, %v871, 0.0
        %v1664 = vsel %vm1632, %v870, 0.0
        %v1665 = vsel %vm1633, %v869, 0.0
        %v1666 = vsel %vm1634, %v868, 0.0
        %v1667 = vsel %vm1635, %v899, 0.0
        %1668 = vrot.lane.b32.xlu0 %v1636, 20
        %v1669 = vpop.permute.xlu0 %1668
        %1670 = vrot.lane.b32.xlu0 %v1637, 20
        %v1671 = vpop.permute.xlu0 %1670
        %1672 = vrot.lane.b32.xlu0 %v1638, 20
        %v1673 = vpop.permute.xlu0 %1672
        %1674 = vrot.lane.b32.xlu0 %v1639, 20
        %v1675 = vpop.permute.xlu0 %1674
        %1676 = vrot.lane.b32.xlu0 %v1640, 20
        %v1677 = vpop.permute.xlu0 %1676
        %1678 = vrot.lane.b32.xlu0 %v1641, 20
        %v1679 = vpop.permute.xlu0 %1678
        %1680 = vrot.lane.b32.xlu0 %v1642, 20
        %v1681 = vpop.permute.xlu0 %1680
        %1682 = vrot.lane.b32.xlu0 %v1643, 20
        %v1683 = vpop.permute.xlu0 %1682
        %1684 = vrot.lane.b32.xlu0 %v1644, 20
        %v1685 = vpop.permute.xlu0 %1684
        %1686 = vrot.lane.b32.xlu0 %v1645, 20
        %v1687 = vpop.permute.xlu0 %1686
        %1688 = vrot.lane.b32.xlu0 %v1646, 20
        %v1689 = vpop.permute.xlu0 %1688
        %1690 = vrot.lane.b32.xlu0 %v1647, 20
        %v1691 = vpop.permute.xlu0 %1690
        %1692 = vrot.lane.b32.xlu0 %v1648, 20
        %v1693 = vpop.permute.xlu0 %1692
        %1694 = vrot.lane.b32.xlu0 %v1649, 20
        %v1695 = vpop.permute.xlu0 %1694
        %1696 = vrot.lane.b32.xlu0 %v1650, 20
        %v1697 = vpop.permute.xlu0 %1696
        %1698 = vrot.lane.b32.xlu0 %v1651, 20
        %v1699 = vpop.permute.xlu0 %1698
        %1700 = vrot.lane.b32.xlu0 %v1652, 20
        %v1701 = vpop.permute.xlu0 %1700
        %1702 = vrot.lane.b32.xlu0 %v1653, 20
        %v1703 = vpop.permute.xlu0 %1702
        %1704 = vrot.lane.b32.xlu0 %v1654, 20
        %v1705 = vpop.permute.xlu0 %1704
        %1706 = vrot.lane.b32.xlu0 %v1655, 20
        %v1707 = vpop.permute.xlu0 %1706
        %1708 = vrot.lane.b32.xlu0 %v1656, 20
        %v1709 = vpop.permute.xlu0 %1708
        %1710 = vrot.lane.b32.xlu0 %v1657, 20
        %v1711 = vpop.permute.xlu0 %1710
        %1712 = vrot.lane.b32.xlu0 %v1658, 20
        %v1713 = vpop.permute.xlu0 %1712
        %1714 = vrot.lane.b32.xlu0 %v1659, 20
        %v1715 = vpop.permute.xlu0 %1714
        %1716 = vrot.lane.b32.xlu0 %v1660, 20
        %v1717 = vpop.permute.xlu0 %1716
        %1718 = vrot.lane.b32.xlu0 %v1661, 20
        %v1719 = vpop.permute.xlu0 %1718
        %1720 = vrot.lane.b32.xlu0 %v1662, 20
        %v1721 = vpop.permute.xlu0 %1720
        %1722 = vrot.lane.b32.xlu0 %v1663, 20
        %v1723 = vpop.permute.xlu0 %1722
        %1724 = vrot.lane.b32.xlu0 %v1664, 20
        %v1725 = vpop.permute.xlu0 %1724
        %1726 = vrot.lane.b32.xlu0 %v1665, 20
        %v1727 = vpop.permute.xlu0 %1726
        %1728 = vrot.lane.b32.xlu0 %v1666, 20
        %v1729 = vpop.permute.xlu0 %1728
        %1730 = vrot.lane.b32.xlu0 %v1667, 20
        %v1731 = vpop.permute.xlu0 %1730
        %v1732 = vld [vmem:[#allocation2] sm:$0xff]
        %v1733 = vld [vmem:[#allocation2 + $0x8] sm:$0xff]
        %v1734 = vld [vmem:[#allocation2 + $0x10] sm:$0xff]
        %v1735 = vld [vmem:[#allocation2 + $0x18] sm:$0xff]
        %v1736 = vld [vmem:[#allocation2 + $0x20] sm:$0xff]
        %v1737 = vld [vmem:[#allocation2 + $0x28] sm:$0xff]
        %v1738 = vld [vmem:[#allocation2 + $0x30] sm:$0xff]
        %v1739 = vld [vmem:[#allocation2 + $0x38] sm:$0xff]
        %v1740 = vld [vmem:[#allocation2 + $0x40] sm:$0xff]
        %v1741 = vld [vmem:[#allocation2 + $0x48] sm:$0xff]
        %v1742 = vld [vmem:[#allocation2 + $0x50] sm:$0xff]
        %v1743 = vld [vmem:[#allocation2 + $0x58] sm:$0xff]
        %v1744 = vld [vmem:[#allocation2 + $0x60] sm:$0xff]
        %v1745 = vld [vmem:[#allocation2 + $0x68] sm:$0xff]
        %v1746 = vld [vmem:[#allocation2 + $0x70] sm:$0xff]
        %v1747 = vld [vmem:[#allocation2 + $0x78] sm:$0xff]
        %v1748 = vld [vmem:[#allocation2 + $0x80] sm:$0xff]
        %v1749 = vld [vmem:[#allocation2 + $0x88] sm:$0xff]
        %v1750 = vld [vmem:[#allocation2 + $0x90] sm:$0xff]
        %v1751 = vld [vmem:[#allocation2 + $0x98] sm:$0xff]
        %v1752 = vld [vmem:[#allocation2 + $0xa0] sm:$0xff]
        %v1753 = vld [vmem:[#allocation2 + $0xa8] sm:$0xff]
        %v1754 = vld [vmem:[#allocation2 + $0xb0] sm:$0xff]
        %v1755 = vld [vmem:[#allocation2 + $0xb8] sm:$0xff]
        %v1756 = vld [vmem:[#allocation2 + $0xc0] sm:$0xff]
        %v1757 = vld [vmem:[#allocation2 + $0xc8] sm:$0xff]
        %v1758 = vld [vmem:[#allocation2 + $0xd0] sm:$0xff]
        %v1759 = vld [vmem:[#allocation2 + $0xd8] sm:$0xff]
        %v1760 = vld [vmem:[#allocation2 + $0xe0] sm:$0xff]
        %v1761 = vld [vmem:[#allocation2 + $0xe8] sm:$0xff]
        %v1762 = vld [vmem:[#allocation2 + $0xf0] sm:$0xff]
        %v1763 = vld [vmem:[#allocation2 + $0xf8] sm:$0xff]
        %v1764 = vadd.f32 %v1732, %v1669
        %v1765 = vadd.f32 %v1733, %v1671
        %v1766 = vadd.f32 %v1734, %v1673
        %v1767 = vadd.f32 %v1735, %v1675
        %v1768 = vadd.f32 %v1736, %v1677
        %v1769 = vadd.f32 %v1737, %v1679
        %v1770 = vadd.f32 %v1738, %v1681
        %v1771 = vadd.f32 %v1739, %v1683
        %v1772 = vadd.f32 %v1740, %v1685
        %v1773 = vadd.f32 %v1741, %v1687
        %v1774 = vadd.f32 %v1742, %v1689
        %v1775 = vadd.f32 %v1743, %v1691
        %v1776 = vadd.f32 %v1744, %v1693
        %v1777 = vadd.f32 %v1745, %v1695
        %v1778 = vadd.f32 %v1746, %v1697
        %v1779 = vadd.f32 %v1747, %v1699
        %v1780 = vadd.f32 %v1748, %v1701
        %v1781 = vadd.f32 %v1749, %v1703
        %v1782 = vadd.f32 %v1750, %v1705
        %v1783 = vadd.f32 %v1751, %v1707
        %v1784 = vadd.f32 %v1752, %v1709
        %v1785 = vadd.f32 %v1753, %v1711
        %v1786 = vadd.f32 %v1754, %v1713
        %v1787 = vadd.f32 %v1755, %v1715
        %v1788 = vadd.f32 %v1756, %v1717
        %v1789 = vadd.f32 %v1757, %v1719
        %v1790 = vadd.f32 %v1758, %v1721
        %v1791 = vadd.f32 %v1759, %v1723
        %v1792 = vadd.f32 %v1760, %v1725
        %v1793 = vadd.f32 %v1761, %v1727
        %v1794 = vadd.f32 %v1762, %v1729
        %v1795 = vadd.f32 %v1763, %v1731
        %1796 = vst [vmem:[#allocation2] sm:$0xff] %v1764
        %1797 = vst [vmem:[#allocation2 + $0x8] sm:$0xff] %v1765
        %1798 = vst [vmem:[#allocation2 + $0x10] sm:$0xff] %v1766
        %1799 = vst [vmem:[#allocation2 + $0x18] sm:$0xff] %v1767
        %1800 = vst [vmem:[#allocation2 + $0x20] sm:$0xff] %v1768
        %1801 = vst [vmem:[#allocation2 + $0x28] sm:$0xff] %v1769
        %1802 = vst [vmem:[#allocation2 + $0x30] sm:$0xff] %v1770
        %1803 = vst [vmem:[#allocation2 + $0x38] sm:$0xff] %v1771
        %1804 = vst [vmem:[#allocation2 + $0x40] sm:$0xff] %v1772
        %1805 = vst [vmem:[#allocation2 + $0x48] sm:$0xff] %v1773
        %1806 = vst [vmem:[#allocation2 + $0x50] sm:$0xff] %v1774
        %1807 = vst [vmem:[#allocation2 + $0x58] sm:$0xff] %v1775
        %1808 = vst [vmem:[#allocation2 + $0x60] sm:$0xff] %v1776
        %1809 = vst [vmem:[#allocation2 + $0x68] sm:$0xff] %v1777
        %1810 = vst [vmem:[#allocation2 + $0x70] sm:$0xff] %v1778
        %1811 = vst [vmem:[#allocation2 + $0x78] sm:$0xff] %v1779
        %1812 = vst [vmem:[#allocation2 + $0x80] sm:$0xff] %v1780
        %1813 = vst [vmem:[#allocation2 + $0x88] sm:$0xff] %v1781
        %1814 = vst [vmem:[#allocation2 + $0x90] sm:$0xff] %v1782
        %1815 = vst [vmem:[#allocation2 + $0x98] sm:$0xff] %v1783
        %1816 = vst [vmem:[#allocation2 + $0xa0] sm:$0xff] %v1784
        %1817 = vst [vmem:[#allocation2 + $0xa8] sm:$0xff] %v1785
        %1818 = vst [vmem:[#allocation2 + $0xb0] sm:$0xff] %v1786
        %1819 = vst [vmem:[#allocation2 + $0xb8] sm:$0xff] %v1787
        %1820 = vst [vmem:[#allocation2 + $0xc0] sm:$0xff] %v1788
        %1821 = vst [vmem:[#allocation2 + $0xc8] sm:$0xff] %v1789
        %1822 = vst [vmem:[#allocation2 + $0xd0] sm:$0xff] %v1790
        %1823 = vst [vmem:[#allocation2 + $0xd8] sm:$0xff] %v1791
        %1824 = vst [vmem:[#allocation2 + $0xe0] sm:$0xff] %v1792
        %1825 = vst [vmem:[#allocation2 + $0xe8] sm:$0xff] %v1793
        %1826 = vst [vmem:[#allocation2 + $0xf0] sm:$0xff] %v1794
        %1827 = vst [vmem:[#allocation2 + $0xf8] sm:$0xff] %v1795
        %v1828 = vand.u32 %v352, 6
        %v1829 = vand.u32 %v353, 6
        %v1830 = vand.u32 %v354, 6
        %v1831 = vand.u32 %v355, 6
        %v1832 = vand.u32 %v356, 6
        %v1833 = vand.u32 %v357, 6
        %v1834 = vand.u32 %v358, 6
        %v1835 = vand.u32 %v359, 6
        %v1836 = vand.u32 %v360, 6
        %v1837 = vand.u32 %v361, 6
        %v1838 = vand.u32 %v362, 6
        %v1839 = vand.u32 %v363, 6
        %v1840 = vand.u32 %v364, 6
        %v1841 = vand.u32 %v365, 6
        %v1842 = vand.u32 %v366, 6
        %v1843 = vand.u32 %v367, 6
        %v1844 = vand.u32 %v368, 6
        %v1845 = vand.u32 %v369, 6
        %v1846 = vand.u32 %v370, 6
        %v1847 = vand.u32 %v371, 6
        %v1848 = vand.u32 %v372, 6
        %v1849 = vand.u32 %v373, 6
        %v1850 = vand.u32 %v374, 6
        %v1851 = vand.u32 %v375, 6
        %v1852 = vand.u32 %v376, 6
        %v1853 = vand.u32 %v377, 6
        %v1854 = vand.u32 %v378, 6
        %v1855 = vand.u32 %v379, 6
        %v1856 = vand.u32 %v380, 6
        %v1857 = vand.u32 %v381, 6
        %v1858 = vand.u32 %v382, 6
        %v1859 = vand.u32 %v383, 6
        %vm1860 = vcmp.eq.s32.totalorder %v1828, 6
        %vm1861 = vcmp.eq.s32.totalorder %v1829, 6
        %vm1862 = vcmp.eq.s32.totalorder %v1830, 6
        %vm1863 = vcmp.eq.s32.totalorder %v1831, 6
        %vm1864 = vcmp.eq.s32.totalorder %v1832, 6
        %vm1865 = vcmp.eq.s32.totalorder %v1833, 6
        %vm1866 = vcmp.eq.s32.totalorder %v1834, 6
        %vm1867 = vcmp.eq.s32.totalorder %v1835, 6
        %vm1868 = vcmp.eq.s32.totalorder %v1836, 6
        %vm1869 = vcmp.eq.s32.totalorder %v1837, 6
        %vm1870 = vcmp.eq.s32.totalorder %v1838, 6
        %vm1871 = vcmp.eq.s32.totalorder %v1839, 6
        %vm1872 = vcmp.eq.s32.totalorder %v1840, 6
        %vm1873 = vcmp.eq.s32.totalorder %v1841, 6
        %vm1874 = vcmp.eq.s32.totalorder %v1842, 6
        %vm1875 = vcmp.eq.s32.totalorder %v1843, 6
        %vm1876 = vcmp.eq.s32.totalorder %v1844, 6
        %vm1877 = vcmp.eq.s32.totalorder %v1845, 6
        %vm1878 = vcmp.eq.s32.totalorder %v1846, 6
        %vm1879 = vcmp.eq.s32.totalorder %v1847, 6
        %vm1880 = vcmp.eq.s32.totalorder %v1848, 6
        %vm1881 = vcmp.eq.s32.totalorder %v1849, 6
        %vm1882 = vcmp.eq.s32.totalorder %v1850, 6
        %vm1883 = vcmp.eq.s32.totalorder %v1851, 6
        %vm1884 = vcmp.eq.s32.totalorder %v1852, 6
        %vm1885 = vcmp.eq.s32.totalorder %v1853, 6
        %vm1886 = vcmp.eq.s32.totalorder %v1854, 6
        %vm1887 = vcmp.eq.s32.totalorder %v1855, 6
        %vm1888 = vcmp.eq.s32.totalorder %v1856, 6
        %vm1889 = vcmp.eq.s32.totalorder %v1857, 6
        %vm1890 = vcmp.eq.s32.totalorder %v1858, 6
        %vm1891 = vcmp.eq.s32.totalorder %v1859, 6
        %v1892 = vsel %vm1860, %v448, 0.0
        %v1893 = vsel %vm1861, %v447, 0.0
        %v1894 = vsel %vm1862, %v446, 0.0
        %v1895 = vsel %vm1863, %v445, 0.0
        %v1896 = vsel %vm1864, %v444, 0.0
        %v1897 = vsel %vm1865, %v443, 0.0
        %v1898 = vsel %vm1866, %v442, 0.0
        %v1899 = vsel %vm1867, %v441, 0.0
        %v1900 = vsel %vm1868, %v440, 0.0
        %v1901 = vsel %vm1869, %v439, 0.0
        %v1902 = vsel %vm1870, %v438, 0.0
        %v1903 = vsel %vm1871, %v437, 0.0
        %v1904 = vsel %vm1872, %v436, 0.0
        %v1905 = vsel %vm1873, %v435, 0.0
        %v1906 = vsel %vm1874, %v434, 0.0
        %v1907 = vsel %vm1875, %v433, 0.0
        %v1908 = vsel %vm1876, %v432, 0.0
        %v1909 = vsel %vm1877, %v431, 0.0
        %v1910 = vsel %vm1878, %v430, 0.0
        %v1911 = vsel %vm1879, %v429, 0.0
        %v1912 = vsel %vm1880, %v428, 0.0
        %v1913 = vsel %vm1881, %v427, 0.0
        %v1914 = vsel %vm1882, %v426, 0.0
        %v1915 = vsel %vm1883, %v425, 0.0
        %v1916 = vsel %vm1884, %v424, 0.0
        %v1917 = vsel %vm1885, %v423, 0.0
        %v1918 = vsel %vm1886, %v422, 0.0
        %v1919 = vsel %vm1887, %v421, 0.0
        %v1920 = vsel %vm1888, %v420, 0.0
        %v1921 = vsel %vm1889, %v419, 0.0
        %v1922 = vsel %vm1890, %v450, 0.0
        %v1923 = vsel %vm1891, %v449, 0.0
        %1924 = vrot.lane.b32.xlu0 %v1892, 24
        %v1925 = vpop.permute.xlu0 %1924
        %1926 = vrot.lane.b32.xlu0 %v1893, 24
        %v1927 = vpop.permute.xlu0 %1926
        %1928 = vrot.lane.b32.xlu0 %v1894, 24
        %v1929 = vpop.permute.xlu0 %1928
        %1930 = vrot.lane.b32.xlu0 %v1895, 24
        %v1931 = vpop.permute.xlu0 %1930
        %1932 = vrot.lane.b32.xlu0 %v1896, 24
        %v1933 = vpop.permute.xlu0 %1932
        %1934 = vrot.lane.b32.xlu0 %v1897, 24
        %v1935 = vpop.permute.xlu0 %1934
        %1936 = vrot.lane.b32.xlu0 %v1898, 24
        %v1937 = vpop.permute.xlu0 %1936
        %1938 = vrot.lane.b32.xlu0 %v1899, 24
        %v1939 = vpop.permute.xlu0 %1938
        %1940 = vrot.lane.b32.xlu0 %v1900, 24
        %v1941 = vpop.permute.xlu0 %1940
        %1942 = vrot.lane.b32.xlu0 %v1901, 24
        %v1943 = vpop.permute.xlu0 %1942
        %1944 = vrot.lane.b32.xlu0 %v1902, 24
        %v1945 = vpop.permute.xlu0 %1944
        %1946 = vrot.lane.b32.xlu0 %v1903, 24
        %v1947 = vpop.permute.xlu0 %1946
        %1948 = vrot.lane.b32.xlu0 %v1904, 24
        %v1949 = vpop.permute.xlu0 %1948
        %1950 = vrot.lane.b32.xlu0 %v1905, 24
        %v1951 = vpop.permute.xlu0 %1950
        %1952 = vrot.lane.b32.xlu0 %v1906, 24
        %v1953 = vpop.permute.xlu0 %1952
        %1954 = vrot.lane.b32.xlu0 %v1907, 24
        %v1955 = vpop.permute.xlu0 %1954
        %1956 = vrot.lane.b32.xlu0 %v1908, 24
        %v1957 = vpop.permute.xlu0 %1956
        %1958 = vrot.lane.b32.xlu0 %v1909, 24
        %v1959 = vpop.permute.xlu0 %1958
        %1960 = vrot.lane.b32.xlu0 %v1910, 24
        %v1961 = vpop.permute.xlu0 %1960
        %1962 = vrot.lane.b32.xlu0 %v1911, 24
        %v1963 = vpop.permute.xlu0 %1962
        %1964 = vrot.lane.b32.xlu0 %v1912, 24
        %v1965 = vpop.permute.xlu0 %1964
        %1966 = vrot.lane.b32.xlu0 %v1913, 24
        %v1967 = vpop.permute.xlu0 %1966
        %1968 = vrot.lane.b32.xlu0 %v1914, 24
        %v1969 = vpop.permute.xlu0 %1968
        %1970 = vrot.lane.b32.xlu0 %v1915, 24
        %v1971 = vpop.permute.xlu0 %1970
        %1972 = vrot.lane.b32.xlu0 %v1916, 24
        %v1973 = vpop.permute.xlu0 %1972
        %1974 = vrot.lane.b32.xlu0 %v1917, 24
        %v1975 = vpop.permute.xlu0 %1974
        %1976 = vrot.lane.b32.xlu0 %v1918, 24
        %v1977 = vpop.permute.xlu0 %1976
        %1978 = vrot.lane.b32.xlu0 %v1919, 24
        %v1979 = vpop.permute.xlu0 %1978
        %1980 = vrot.lane.b32.xlu0 %v1920, 24
        %v1981 = vpop.permute.xlu0 %1980
        %1982 = vrot.lane.b32.xlu0 %v1921, 24
        %v1983 = vpop.permute.xlu0 %1982
        %1984 = vrot.lane.b32.xlu0 %v1922, 24
        %v1985 = vpop.permute.xlu0 %1984
        %1986 = vrot.lane.b32.xlu0 %v1923, 24
        %v1987 = vpop.permute.xlu0 %1986
        %v1988 = vld [vmem:[#allocation2] sm:$0xff]
        %v1989 = vld [vmem:[#allocation2 + $0x8] sm:$0xff]
        %v1990 = vld [vmem:[#allocation2 + $0x10] sm:$0xff]
        %v1991 = vld [vmem:[#allocation2 + $0x18] sm:$0xff]
        %v1992 = vld [vmem:[#allocation2 + $0x20] sm:$0xff]
        %v1993 = vld [vmem:[#allocation2 + $0x28] sm:$0xff]
        %v1994 = vld [vmem:[#allocation2 + $0x30] sm:$0xff]
        %v1995 = vld [vmem:[#allocation2 + $0x38] sm:$0xff]
        %v1996 = vld [vmem:[#allocation2 + $0x40] sm:$0xff]
        %v1997 = vld [vmem:[#allocation2 + $0x48] sm:$0xff]
        %v1998 = vld [vmem:[#allocation2 + $0x50] sm:$0xff]
        %v1999 = vld [vmem:[#allocation2 + $0x58] sm:$0xff]
        %v2000 = vld [vmem:[#allocation2 + $0x60] sm:$0xff]
        %v2001 = vld [vmem:[#allocation2 + $0x68] sm:$0xff]
        %v2002 = vld [vmem:[#allocation2 + $0x70] sm:$0xff]
        %v2003 = vld [vmem:[#allocation2 + $0x78] sm:$0xff]
        %v2004 = vld [vmem:[#allocation2 + $0x80] sm:$0xff]
        %v2005 = vld [vmem:[#allocation2 + $0x88] sm:$0xff]
        %v2006 = vld [vmem:[#allocation2 + $0x90] sm:$0xff]
        %v2007 = vld [vmem:[#allocation2 + $0x98] sm:$0xff]
        %v2008 = vld [vmem:[#allocation2 + $0xa0] sm:$0xff]
        %v2009 = vld [vmem:[#allocation2 + $0xa8] sm:$0xff]
        %v2010 = vld [vmem:[#allocation2 + $0xb0] sm:$0xff]
        %v2011 = vld [vmem:[#allocation2 + $0xb8] sm:$0xff]
        %v2012 = vld [vmem:[#allocation2 + $0xc0] sm:$0xff]
        %v2013 = vld [vmem:[#allocation2 + $0xc8] sm:$0xff]
        %v2014 = vld [vmem:[#allocation2 + $0xd0] sm:$0xff]
        %v2015 = vld [vmem:[#allocation2 + $0xd8] sm:$0xff]
        %v2016 = vld [vmem:[#allocation2 + $0xe0] sm:$0xff]
        %v2017 = vld [vmem:[#allocation2 + $0xe8] sm:$0xff]
        %v2018 = vld [vmem:[#allocation2 + $0xf0] sm:$0xff]
        %v2019 = vld [vmem:[#allocation2 + $0xf8] sm:$0xff]
        %v2020 = vadd.f32 %v1988, %v1925
        %v2021 = vadd.f32 %v1989, %v1927
        %v2022 = vadd.f32 %v1990, %v1929
        %v2023 = vadd.f32 %v1991, %v1931
        %v2024 = vadd.f32 %v1992, %v1933
        %v2025 = vadd.f32 %v1993, %v1935
        %v2026 = vadd.f32 %v1994, %v1937
        %v2027 = vadd.f32 %v1995, %v1939
        %v2028 = vadd.f32 %v1996, %v1941
        %v2029 = vadd.f32 %v1997, %v1943
        %v2030 = vadd.f32 %v1998, %v1945
        %v2031 = vadd.f32 %v1999, %v1947
        %v2032 = vadd.f32 %v2000, %v1949
        %v2033 = vadd.f32 %v2001, %v1951
        %v2034 = vadd.f32 %v2002, %v1953
        %v2035 = vadd.f32 %v2003, %v1955
        %v2036 = vadd.f32 %v2004, %v1957
        %v2037 = vadd.f32 %v2005, %v1959
        %v2038 = vadd.f32 %v2006, %v1961
        %v2039 = vadd.f32 %v2007, %v1963
        %v2040 = vadd.f32 %v2008, %v1965
        %v2041 = vadd.f32 %v2009, %v1967
        %v2042 = vadd.f32 %v2010, %v1969
        %v2043 = vadd.f32 %v2011, %v1971
        %v2044 = vadd.f32 %v2012, %v1973
        %v2045 = vadd.f32 %v2013, %v1975
        %v2046 = vadd.f32 %v2014, %v1977
        %v2047 = vadd.f32 %v2015, %v1979
        %v2048 = vadd.f32 %v2016, %v1981
        %v2049 = vadd.f32 %v2017, %v1983
        %v2050 = vadd.f32 %v2018, %v1985
        %v2051 = vadd.f32 %v2019, %v1987
        %2052 = vst [vmem:[#allocation2] sm:$0xff] %v2020
        %2053 = vst [vmem:[#allocation2 + $0x8] sm:$0xff] %v2021
        %2054 = vst [vmem:[#allocation2 + $0x10] sm:$0xff] %v2022
        %2055 = vst [vmem:[#allocation2 + $0x18] sm:$0xff] %v2023
        %2056 = vst [vmem:[#allocation2 + $0x20] sm:$0xff] %v2024
        %2057 = vst [vmem:[#allocation2 + $0x28] sm:$0xff] %v2025
        %2058 = vst [vmem:[#allocation2 + $0x30] sm:$0xff] %v2026
        %2059 = vst [vmem:[#allocation2 + $0x38] sm:$0xff] %v2027
        %2060 = vst [vmem:[#allocation2 + $0x40] sm:$0xff] %v2028
        %2061 = vst [vmem:[#allocation2 + $0x48] sm:$0xff] %v2029
        %2062 = vst [vmem:[#allocation2 + $0x50] sm:$0xff] %v2030
        %2063 = vst [vmem:[#allocation2 + $0x58] sm:$0xff] %v2031
        %2064 = vst [vmem:[#allocation2 + $0x60] sm:$0xff] %v2032
        %2065 = vst [vmem:[#allocation2 + $0x68] sm:$0xff] %v2033
        %2066 = vst [vmem:[#allocation2 + $0x70] sm:$0xff] %v2034
        %2067 = vst [vmem:[#allocation2 + $0x78] sm:$0xff] %v2035
        %2068 = vst [vmem:[#allocation2 + $0x80] sm:$0xff] %v2036
        %2069 = vst [vmem:[#allocation2 + $0x88] sm:$0xff] %v2037
        %2070 = vst [vmem:[#allocation2 + $0x90] sm:$0xff] %v2038
        %2071 = vst [vmem:[#allocation2 + $0x98] sm:$0xff] %v2039
        %2072 = vst [vmem:[#allocation2 + $0xa0] sm:$0xff] %v2040
        %2073 = vst [vmem:[#allocation2 + $0xa8] sm:$0xff] %v2041
        %2074 = vst [vmem:[#allocation2 + $0xb0] sm:$0xff] %v2042
        %2075 = vst [vmem:[#allocation2 + $0xb8] sm:$0xff] %v2043
        %2076 = vst [vmem:[#allocation2 + $0xc0] sm:$0xff] %v2044
        %2077 = vst [vmem:[#allocation2 + $0xc8] sm:$0xff] %v2045
        %2078 = vst [vmem:[#allocation2 + $0xd0] sm:$0xff] %v2046
        %2079 = vst [vmem:[#allocation2 + $0xd8] sm:$0xff] %v2047
        %2080 = vst [vmem:[#allocation2 + $0xe0] sm:$0xff] %v2048
        %2081 = vst [vmem:[#allocation2 + $0xe8] sm:$0xff] %v2049
        %2082 = vst [vmem:[#allocation2 + $0xf0] sm:$0xff] %v2050
        %2083 = vst [vmem:[#allocation2 + $0xf8] sm:$0xff] %v2051
        %v2084 = vand.u32 %v352, 2
        %v2085 = vand.u32 %v353, 2
        %v2086 = vand.u32 %v354, 2
        %v2087 = vand.u32 %v355, 2
        %v2088 = vand.u32 %v356, 2
        %v2089 = vand.u32 %v357, 2
        %v2090 = vand.u32 %v358, 2
        %v2091 = vand.u32 %v359, 2
        %v2092 = vand.u32 %v360, 2
        %v2093 = vand.u32 %v361, 2
        %v2094 = vand.u32 %v362, 2
        %v2095 = vand.u32 %v363, 2
        %v2096 = vand.u32 %v364, 2
        %v2097 = vand.u32 %v365, 2
        %v2098 = vand.u32 %v366, 2
        %v2099 = vand.u32 %v367, 2
        %v2100 = vand.u32 %v368, 2
        %v2101 = vand.u32 %v369, 2
        %v2102 = vand.u32 %v370, 2
        %v2103 = vand.u32 %v371, 2
        %v2104 = vand.u32 %v372, 2
        %v2105 = vand.u32 %v373, 2
        %v2106 = vand.u32 %v374, 2
        %v2107 = vand.u32 %v375, 2
        %v2108 = vand.u32 %v376, 2
        %v2109 = vand.u32 %v377, 2
        %v2110 = vand.u32 %v378, 2
        %v2111 = vand.u32 %v379, 2
        %v2112 = vand.u32 %v380, 2
        %v2113 = vand.u32 %v381, 2
        %v2114 = vand.u32 %v382, 2
        %v2115 = vand.u32 %v383, 2
        %vm2116 = vcmp.eq.s32.totalorder %v2084, 2
        %vm2117 = vcmp.eq.s32.totalorder %v2085, 2
        %vm2118 = vcmp.eq.s32.totalorder %v2086, 2
        %vm2119 = vcmp.eq.s32.totalorder %v2087, 2
        %vm2120 = vcmp.eq.s32.totalorder %v2088, 2
        %vm2121 = vcmp.eq.s32.totalorder %v2089, 2
        %vm2122 = vcmp.eq.s32.totalorder %v2090, 2
        %vm2123 = vcmp.eq.s32.totalorder %v2091, 2
        %vm2124 = vcmp.eq.s32.totalorder %v2092, 2
        %vm2125 = vcmp.eq.s32.totalorder %v2093, 2
        %vm2126 = vcmp.eq.s32.totalorder %v2094, 2
        %vm2127 = vcmp.eq.s32.totalorder %v2095, 2
        %vm2128 = vcmp.eq.s32.totalorder %v2096, 2
        %vm2129 = vcmp.eq.s32.totalorder %v2097, 2
        %vm2130 = vcmp.eq.s32.totalorder %v2098, 2
        %vm2131 = vcmp.eq.s32.totalorder %v2099, 2
        %vm2132 = vcmp.eq.s32.totalorder %v2100, 2
        %vm2133 = vcmp.eq.s32.totalorder %v2101, 2
        %vm2134 = vcmp.eq.s32.totalorder %v2102, 2
        %vm2135 = vcmp.eq.s32.totalorder %v2103, 2
        %vm2136 = vcmp.eq.s32.totalorder %v2104, 2
        %vm2137 = vcmp.eq.s32.totalorder %v2105, 2
        %vm2138 = vcmp.eq.s32.totalorder %v2106, 2
        %vm2139 = vcmp.eq.s32.totalorder %v2107, 2
        %vm2140 = vcmp.eq.s32.totalorder %v2108, 2
        %vm2141 = vcmp.eq.s32.totalorder %v2109, 2
        %vm2142 = vcmp.eq.s32.totalorder %v2110, 2
        %vm2143 = vcmp.eq.s32.totalorder %v2111, 2
        %vm2144 = vcmp.eq.s32.totalorder %v2112, 2
        %vm2145 = vcmp.eq.s32.totalorder %v2113, 2
        %vm2146 = vcmp.eq.s32.totalorder %v2114, 2
        %vm2147 = vcmp.eq.s32.totalorder %v2115, 2
        %v2148 = vsel %vm2116, %v322, 0.0
        %v2149 = vsel %vm2117, %v323, 0.0
        %v2150 = vsel %vm2118, %v324, 0.0
        %v2151 = vsel %vm2119, %v325, 0.0
        %v2152 = vsel %vm2120, %v326, 0.0
        %v2153 = vsel %vm2121, %v327, 0.0
        %v2154 = vsel %vm2122, %v328, 0.0
        %v2155 = vsel %vm2123, %v329, 0.0
        %v2156 = vsel %vm2124, %v330, 0.0
        %v2157 = vsel %vm2125, %v331, 0.0
        %v2158 = vsel %vm2126, %v332, 0.0
        %v2159 = vsel %vm2127, %v333, 0.0
        %v2160 = vsel %vm2128, %v334, 0.0
        %v2161 = vsel %vm2129, %v335, 0.0
        %v2162 = vsel %vm2130, %v336, 0.0
        %v2163 = vsel %vm2131, %v337, 0.0
        %v2164 = vsel %vm2132, %v338, 0.0
        %v2165 = vsel %vm2133, %v339, 0.0
        %v2166 = vsel %vm2134, %v340, 0.0
        %v2167 = vsel %vm2135, %v341, 0.0
        %v2168 = vsel %vm2136, %v342, 0.0
        %v2169 = vsel %vm2137, %v343, 0.0
        %v2170 = vsel %vm2138, %v344, 0.0
        %v2171 = vsel %vm2139, %v345, 0.0
        %v2172 = vsel %vm2140, %v346, 0.0
        %v2173 = vsel %vm2141, %v347, 0.0
        %v2174 = vsel %vm2142, %v348, 0.0
        %v2175 = vsel %vm2143, %v349, 0.0
        %v2176 = vsel %vm2144, %v350, 0.0
        %v2177 = vsel %vm2145, %v351, 0.0
        %v2178 = vsel %vm2146, %v320, 0.0
        %v2179 = vsel %vm2147, %v321, 0.0
        %2180 = vrot.lane.b32.xlu0 %v2148, 28
        %v2181 = vpop.permute.xlu0 %2180
        %2182 = vrot.lane.b32.xlu0 %v2149, 28
        %v2183 = vpop.permute.xlu0 %2182
        %2184 = vrot.lane.b32.xlu0 %v2150, 28
        %v2185 = vpop.permute.xlu0 %2184
        %2186 = vrot.lane.b32.xlu0 %v2151, 28
        %v2187 = vpop.permute.xlu0 %2186
        %2188 = vrot.lane.b32.xlu0 %v2152, 28
        %v2189 = vpop.permute.xlu0 %2188
        %2190 = vrot.lane.b32.xlu0 %v2153, 28
        %v2191 = vpop.permute.xlu0 %2190
        %2192 = vrot.lane.b32.xlu0 %v2154, 28
        %v2193 = vpop.permute.xlu0 %2192
        %2194 = vrot.lane.b32.xlu0 %v2155, 28
        %v2195 = vpop.permute.xlu0 %2194
        %2196 = vrot.lane.b32.xlu0 %v2156, 28
        %v2197 = vpop.permute.xlu0 %2196
        %2198 = vrot.lane.b32.xlu0 %v2157, 28
        %v2199 = vpop.permute.xlu0 %2198
        %2200 = vrot.lane.b32.xlu0 %v2158, 28
        %v2201 = vpop.permute.xlu0 %2200
        %2202 = vrot.lane.b32.xlu0 %v2159, 28
        %v2203 = vpop.permute.xlu0 %2202
        %2204 = vrot.lane.b32.xlu0 %v2160, 28
        %v2205 = vpop.permute.xlu0 %2204
        %2206 = vrot.lane.b32.xlu0 %v2161, 28
        %v2207 = vpop.permute.xlu0 %2206
        %2208 = vrot.lane.b32.xlu0 %v2162, 28
        %v2209 = vpop.permute.xlu0 %2208
        %2210 = vrot.lane.b32.xlu0 %v2163, 28
        %v2211 = vpop.permute.xlu0 %2210
        %2212 = vrot.lane.b32.xlu0 %v2164, 28
        %v2213 = vpop.permute.xlu0 %2212
        %2214 = vrot.lane.b32.xlu0 %v2165, 28
        %v2215 = vpop.permute.xlu0 %2214
        %2216 = vrot.lane.b32.xlu0 %v2166, 28
        %v2217 = vpop.permute.xlu0 %2216
        %2218 = vrot.lane.b32.xlu0 %v2167, 28
        %v2219 = vpop.permute.xlu0 %2218
        %2220 = vrot.lane.b32.xlu0 %v2168, 28
        %v2221 = vpop.permute.xlu0 %2220
        %2222 = vrot.lane.b32.xlu0 %v2169, 28
        %v2223 = vpop.permute.xlu0 %2222
        %2224 = vrot.lane.b32.xlu0 %v2170, 28
        %v2225 = vpop.permute.xlu0 %2224
        %2226 = vrot.lane.b32.xlu0 %v2171, 28
        %v2227 = vpop.permute.xlu0 %2226
        %2228 = vrot.lane.b32.xlu0 %v2172, 28
        %v2229 = vpop.permute.xlu0 %2228
        %2230 = vrot.lane.b32.xlu0 %v2173, 28
        %v2231 = vpop.permute.xlu0 %2230
        %2232 = vrot.lane.b32.xlu0 %v2174, 28
        %v2233 = vpop.permute.xlu0 %2232
        %2234 = vrot.lane.b32.xlu0 %v2175, 28
        %v2235 = vpop.permute.xlu0 %2234
        %2236 = vrot.lane.b32.xlu0 %v2176, 28
        %v2237 = vpop.permute.xlu0 %2236
        %2238 = vrot.lane.b32.xlu0 %v2177, 28
        %v2239 = vpop.permute.xlu0 %2238
        %2240 = vrot.lane.b32.xlu0 %v2178, 28
        %v2241 = vpop.permute.xlu0 %2240
        %2242 = vrot.lane.b32.xlu0 %v2179, 28
        %v2243 = vpop.permute.xlu0 %2242
        %v2244 = vld [vmem:[#allocation2] sm:$0xff]
        %v2245 = vld [vmem:[#allocation2 + $0x8] sm:$0xff]
        %v2246 = vld [vmem:[#allocation2 + $0x10] sm:$0xff]
        %v2247 = vld [vmem:[#allocation2 + $0x18] sm:$0xff]
        %v2248 = vld [vmem:[#allocation2 + $0x20] sm:$0xff]
        %v2249 = vld [vmem:[#allocation2 + $0x28] sm:$0xff]
        %v2250 = vld [vmem:[#allocation2 + $0x30] sm:$0xff]
        %v2251 = vld [vmem:[#allocation2 + $0x38] sm:$0xff]
        %v2252 = vld [vmem:[#allocation2 + $0x40] sm:$0xff]
        %v2253 = vld [vmem:[#allocation2 + $0x48] sm:$0xff]
        %v2254 = vld [vmem:[#allocation2 + $0x50] sm:$0xff]
        %v2255 = vld [vmem:[#allocation2 + $0x58] sm:$0xff]
        %v2256 = vld [vmem:[#allocation2 + $0x60] sm:$0xff]
        %v2257 = vld [vmem:[#allocation2 + $0x68] sm:$0xff]
        %v2258 = vld [vmem:[#allocation2 + $0x70] sm:$0xff]
        %v2259 = vld [vmem:[#allocation2 + $0x78] sm:$0xff]
        %v2260 = vld [vmem:[#allocation2 + $0x80] sm:$0xff]
        %v2261 = vld [vmem:[#allocation2 + $0x88] sm:$0xff]
        %v2262 = vld [vmem:[#allocation2 + $0x90] sm:$0xff]
        %v2263 = vld [vmem:[#allocation2 + $0x98] sm:$0xff]
        %v2264 = vld [vmem:[#allocation2 + $0xa0] sm:$0xff]
        %v2265 = vld [vmem:[#allocation2 + $0xa8] sm:$0xff]
        %v2266 = vld [vmem:[#allocation2 + $0xb0] sm:$0xff]
        %v2267 = vld [vmem:[#allocation2 + $0xb8] sm:$0xff]
        %v2268 = vld [vmem:[#allocation2 + $0xc0] sm:$0xff]
        %v2269 = vld [vmem:[#allocation2 + $0xc8] sm:$0xff]
        %v2270 = vld [vmem:[#allocation2 + $0xd0] sm:$0xff]
        %v2271 = vld [vmem:[#allocation2 + $0xd8] sm:$0xff]
        %v2272 = vld [vmem:[#allocation2 + $0xe0] sm:$0xff]
        %v2273 = vld [vmem:[#allocation2 + $0xe8] sm:$0xff]
        %v2274 = vld [vmem:[#allocation2 + $0xf0] sm:$0xff]
        %v2275 = vld [vmem:[#allocation2 + $0xf8] sm:$0xff]
        %v2276 = vadd.f32 %v2244, %v2181
        %v2277 = vadd.f32 %v2245, %v2183
        %v2278 = vadd.f32 %v2246, %v2185
        %v2279 = vadd.f32 %v2247, %v2187
        %v2280 = vadd.f32 %v2248, %v2189
        %v2281 = vadd.f32 %v2249, %v2191
        %v2282 = vadd.f32 %v2250, %v2193
        %v2283 = vadd.f32 %v2251, %v2195
        %v2284 = vadd.f32 %v2252, %v2197
        %v2285 = vadd.f32 %v2253, %v2199
        %v2286 = vadd.f32 %v2254, %v2201
        %v2287 = vadd.f32 %v2255, %v2203
        %v2288 = vadd.f32 %v2256, %v2205
        %v2289 = vadd.f32 %v2257, %v2207
        %v2290 = vadd.f32 %v2258, %v2209
        %v2291 = vadd.f32 %v2259, %v2211
        %v2292 = vadd.f32 %v2260, %v2213
        %v2293 = vadd.f32 %v2261, %v2215
        %v2294 = vadd.f32 %v2262, %v2217
        %v2295 = vadd.f32 %v2263, %v2219
        %v2296 = vadd.f32 %v2264, %v2221
        %v2297 = vadd.f32 %v2265, %v2223
        %v2298 = vadd.f32 %v2266, %v2225
        %v2299 = vadd.f32 %v2267, %v2227
        %v2300 = vadd.f32 %v2268, %v2229
        %v2301 = vadd.f32 %v2269, %v2231
        %v2302 = vadd.f32 %v2270, %v2233
        %v2303 = vadd.f32 %v2271, %v2235
        %v2304 = vadd.f32 %v2272, %v2237
        %v2305 = vadd.f32 %v2273, %v2239
        %v2306 = vadd.f32 %v2274, %v2241
        %v2307 = vadd.f32 %v2275, %v2243
        %2308 = vst [vmem:[#allocation2] sm:$0xff] %v2276
        %2309 = vst [vmem:[#allocation2 + $0x8] sm:$0xff] %v2277
        %2310 = vst [vmem:[#allocation2 + $0x10] sm:$0xff] %v2278
        %2311 = vst [vmem:[#allocation2 + $0x18] sm:$0xff] %v2279
        %2312 = vst [vmem:[#allocation2 + $0x20] sm:$0xff] %v2280
        %2313 = vst [vmem:[#allocation2 + $0x28] sm:$0xff] %v2281
        %2314 = vst [vmem:[#allocation2 + $0x30] sm:$0xff] %v2282
        %2315 = vst [vmem:[#allocation2 + $0x38] sm:$0xff] %v2283
        %2316 = vst [vmem:[#allocation2 + $0x40] sm:$0xff] %v2284
        %2317 = vst [vmem:[#allocation2 + $0x48] sm:$0xff] %v2285
        %2318 = vst [vmem:[#allocation2 + $0x50] sm:$0xff] %v2286
        %2319 = vst [vmem:[#allocation2 + $0x58] sm:$0xff] %v2287
        %2320 = vst [vmem:[#allocation2 + $0x60] sm:$0xff] %v2288
        %2321 = vst [vmem:[#allocation2 + $0x68] sm:$0xff] %v2289
        %2322 = vst [vmem:[#allocation2 + $0x70] sm:$0xff] %v2290
        %2323 = vst [vmem:[#allocation2 + $0x78] sm:$0xff] %v2291
        %2324 = vst [vmem:[#allocation2 + $0x80] sm:$0xff] %v2292
        %2325 = vst [vmem:[#allocation2 + $0x88] sm:$0xff] %v2293
        %2326 = vst [vmem:[#allocation2 + $0x90] sm:$0xff] %v2294
        %2327 = vst [vmem:[#allocation2 + $0x98] sm:$0xff] %v2295
        %2328 = vst [vmem:[#allocation2 + $0xa0] sm:$0xff] %v2296
        %2329 = vst [vmem:[#allocation2 + $0xa8] sm:$0xff] %v2297
        %2330 = vst [vmem:[#allocation2 + $0xb0] sm:$0xff] %v2298
        %2331 = vst [vmem:[#allocation2 + $0xb8] sm:$0xff] %v2299
        %2332 = vst [vmem:[#allocation2 + $0xc0] sm:$0xff] %v2300
        %2333 = vst [vmem:[#allocation2 + $0xc8] sm:$0xff] %v2301
        %2334 = vst [vmem:[#allocation2 + $0xd0] sm:$0xff] %v2302
        %2335 = vst [vmem:[#allocation2 + $0xd8] sm:$0xff] %v2303
        %2336 = vst [vmem:[#allocation2 + $0xe0] sm:$0xff] %v2304
        %2337 = vst [vmem:[#allocation2 + $0xe8] sm:$0xff] %v2305
        %2338 = vst [vmem:[#allocation2 + $0xf0] sm:$0xff] %v2306
        %2339 = vst [vmem:[#allocation2 + $0xf8] sm:$0xff] %v2307
        %v2340 = vand.u32 %v352, 10
        %v2341 = vand.u32 %v353, 10
        %v2342 = vand.u32 %v354, 10
        %v2343 = vand.u32 %v355, 10
        %v2344 = vand.u32 %v356, 10
        %v2345 = vand.u32 %v357, 10
        %v2346 = vand.u32 %v358, 10
        %v2347 = vand.u32 %v359, 10
        %v2348 = vand.u32 %v360, 10
        %v2349 = vand.u32 %v361, 10
        %v2350 = vand.u32 %v362, 10
        %v2351 = vand.u32 %v363, 10
        %v2352 = vand.u32 %v364, 10
        %v2353 = vand.u32 %v365, 10
        %v2354 = vand.u32 %v366, 10
        %v2355 = vand.u32 %v367, 10
        %v2356 = vand.u32 %v368, 10
        %v2357 = vand.u32 %v369, 10
        %v2358 = vand.u32 %v370, 10
        %v2359 = vand.u32 %v371, 10
        %v2360 = vand.u32 %v372, 10
        %v2361 = vand.u32 %v373, 10
        %v2362 = vand.u32 %v374, 10
        %v2363 = vand.u32 %v375, 10
        %v2364 = vand.u32 %v376, 10
        %v2365 = vand.u32 %v377, 10
        %v2366 = vand.u32 %v378, 10
        %v2367 = vand.u32 %v379, 10
        %v2368 = vand.u32 %v380, 10
        %v2369 = vand.u32 %v381, 10
        %v2370 = vand.u32 %v382, 10
        %v2371 = vand.u32 %v383, 10
        %vm2372 = vcmp.eq.s32.totalorder %v2340, 10
        %vm2373 = vcmp.eq.s32.totalorder %v2341, 10
        %vm2374 = vcmp.eq.s32.totalorder %v2342, 10
        %vm2375 = vcmp.eq.s32.totalorder %v2343, 10
        %vm2376 = vcmp.eq.s32.totalorder %v2344, 10
        %vm2377 = vcmp.eq.s32.totalorder %v2345, 10
        %vm2378 = vcmp.eq.s32.totalorder %v2346, 10
        %vm2379 = vcmp.eq.s32.totalorder %v2347, 10
        %vm2380 = vcmp.eq.s32.totalorder %v2348, 10
        %vm2381 = vcmp.eq.s32.totalorder %v2349, 10
        %vm2382 = vcmp.eq.s32.totalorder %v2350, 10
        %vm2383 = vcmp.eq.s32.totalorder %v2351, 10
        %vm2384 = vcmp.eq.s32.totalorder %v2352, 10
        %vm2385 = vcmp.eq.s32.totalorder %v2353, 10
        %vm2386 = vcmp.eq.s32.totalorder %v2354, 10
        %vm2387 = vcmp.eq.s32.totalorder %v2355, 10
        %vm2388 = vcmp.eq.s32.totalorder %v2356, 10
        %vm2389 = vcmp.eq.s32.totalorder %v2357, 10
        %vm2390 = vcmp.eq.s32.totalorder %v2358, 10
        %vm2391 = vcmp.eq.s32.totalorder %v2359, 10
        %vm2392 = vcmp.eq.s32.totalorder %v2360, 10
        %vm2393 = vcmp.eq.s32.totalorder %v2361, 10
        %vm2394 = vcmp.eq.s32.totalorder %v2362, 10
        %vm2395 = vcmp.eq.s32.totalorder %v2363, 10
        %vm2396 = vcmp.eq.s32.totalorder %v2364, 10
        %vm2397 = vcmp.eq.s32.totalorder %v2365, 10
        %vm2398 = vcmp.eq.s32.totalorder %v2366, 10
        %vm2399 = vcmp.eq.s32.totalorder %v2367, 10
        %vm2400 = vcmp.eq.s32.totalorder %v2368, 10
        %vm2401 = vcmp.eq.s32.totalorder %v2369, 10
        %vm2402 = vcmp.eq.s32.totalorder %v2370, 10
        %vm2403 = vcmp.eq.s32.totalorder %v2371, 10
        %v2404 = vsel %vm2372, %v896, 0.0
        %v2405 = vsel %vm2373, %v895, 0.0
        %v2406 = vsel %vm2374, %v894, 0.0
        %v2407 = vsel %vm2375, %v893, 0.0
        %v2408 = vsel %vm2376, %v892, 0.0
        %v2409 = vsel %vm2377, %v891, 0.0
        %v2410 = vsel %vm2378, %v890, 0.0
        %v2411 = vsel %vm2379, %v889, 0.0
        %v2412 = vsel %vm2380, %v888, 0.0
        %v2413 = vsel %vm2381, %v887, 0.0
        %v2414 = vsel %vm2382, %v886, 0.0
        %v2415 = vsel %vm2383, %v885, 0.0
        %v2416 = vsel %vm2384, %v884, 0.0
        %v2417 = vsel %vm2385, %v883, 0.0
        %v2418 = vsel %vm2386, %v882, 0.0
        %v2419 = vsel %vm2387, %v881, 0.0
        %v2420 = vsel %vm2388, %v880, 0.0
        %v2421 = vsel %vm2389, %v879, 0.0
        %v2422 = vsel %vm2390, %v878, 0.0
        %v2423 = vsel %vm2391, %v877, 0.0
        %v2424 = vsel %vm2392, %v876, 0.0
        %v2425 = vsel %vm2393, %v875, 0.0
        %v2426 = vsel %vm2394, %v874, 0.0
        %v2427 = vsel %vm2395, %v873, 0.0
        %v2428 = vsel %vm2396, %v872, 0.0
        %v2429 = vsel %vm2397, %v871, 0.0
        %v2430 = vsel %vm2398, %v870, 0.0
        %v2431 = vsel %vm2399, %v869, 0.0
        %v2432 = vsel %vm2400, %v868, 0.0
        %v2433 = vsel %vm2401, %v899, 0.0
        %v2434 = vsel %vm2402, %v898, 0.0
        %v2435 = vsel %vm2403, %v897, 0.0
        %2436 = vrot.lane.b32.xlu0 %v2404, 32
        %v2437 = vpop.permute.xlu0 %2436
        %2438 = vrot.lane.b32.xlu0 %v2405, 32
        %v2439 = vpop.permute.xlu0 %2438
        %2440 = vrot.lane.b32.xlu0 %v2406, 32
        %v2441 = vpop.permute.xlu0 %2440
        %2442 = vrot.lane.b32.xlu0 %v2407, 32
        %v2443 = vpop.permute.xlu0 %2442
        %2444 = vrot.lane.b32.xlu0 %v2408, 32
        %v2445 = vpop.permute.xlu0 %2444
        %2446 = vrot.lane.b32.xlu0 %v2409, 32
        %v2447 = vpop.permute.xlu0 %2446
        %2448 = vrot.lane.b32.xlu0 %v2410, 32
        %v2449 = vpop.permute.xlu0 %2448
        %2450 = vrot.lane.b32.xlu0 %v2411, 32
        %v2451 = vpop.permute.xlu0 %2450
        %2452 = vrot.lane.b32.xlu0 %v2412, 32
        %v2453 = vpop.permute.xlu0 %2452
        %2454 = vrot.lane.b32.xlu0 %v2413, 32
        %v2455 = vpop.permute.xlu0 %2454
        %2456 = vrot.lane.b32.xlu0 %v2414, 32
        %v2457 = vpop.permute.xlu0 %2456
        %2458 = vrot.lane.b32.xlu0 %v2415, 32
        %v2459 = vpop.permute.xlu0 %2458
        %2460 = vrot.lane.b32.xlu0 %v2416, 32
        %v2461 = vpop.permute.xlu0 %2460
        %2462 = vrot.lane.b32.xlu0 %v2417, 32
        %v2463 = vpop.permute.xlu0 %2462
        %2464 = vrot.lane.b32.xlu0 %v2418, 32
        %v2465 = vpop.permute.xlu0 %2464
        %2466 = vrot.lane.b32.xlu0 %v2419, 32
        %v2467 = vpop.permute.xlu0 %2466
        %2468 = vrot.lane.b32.xlu0 %v2420, 32
        %v2469 = vpop.permute.xlu0 %2468
        %2470 = vrot.lane.b32.xlu0 %v2421, 32
        %v2471 = vpop.permute.xlu0 %2470
        %2472 = vrot.lane.b32.xlu0 %v2422, 32
        %v2473 = vpop.permute.xlu0 %2472
        %2474 = vrot.lane.b32.xlu0 %v2423, 32
        %v2475 = vpop.permute.xlu0 %2474
        %2476 = vrot.lane.b32.xlu0 %v2424, 32
        %v2477 = vpop.permute.xlu0 %2476
        %2478 = vrot.lane.b32.xlu0 %v2425, 32
        %v2479 = vpop.permute.xlu0 %2478
        %2480 = vrot.lane.b32.xlu0 %v2426, 32
        %v2481 = vpop.permute.xlu0 %2480
        %2482 = vrot.lane.b32.xlu0 %v2427, 32
        %v2483 = vpop.permute.xlu0 %2482
        %2484 = vrot.lane.b32.xlu0 %v2428, 32
        %v2485 = vpop.permute.xlu0 %2484
        %2486 = vrot.lane.b32.xlu0 %v2429, 32
        %v2487 = vpop.permute.xlu0 %2486
        %2488 = vrot.lane.b32.xlu0 %v2430, 32
        %v2489 = vpop.permute.xlu0 %2488
        %2490 = vrot.lane.b32.xlu0 %v2431, 32
        %v2491 = vpop.permute.xlu0 %2490
        %2492 = vrot.lane.b32.xlu0 %v2432, 32
        %v2493 = vpop.permute.xlu0 %2492
        %2494 = vrot.lane.b32.xlu0 %v2433, 32
        %v2495 = vpop.permute.xlu0 %2494
        %2496 = vrot.lane.b32.xlu0 %v2434, 32
        %v2497 = vpop.permute.xlu0 %2496
        %2498 = vrot.lane.b32.xlu0 %v2435, 32
        %v2499 = vpop.permute.xlu0 %2498
        %v2500 = vld [vmem:[#allocation2] sm:$0xff]
        %v2501 = vld [vmem:[#allocation2 + $0x8] sm:$0xff]
        %v2502 = vld [vmem:[#allocation2 + $0x10] sm:$0xff]
        %v2503 = vld [vmem:[#allocation2 + $0x18] sm:$0xff]
        %v2504 = vld [vmem:[#allocation2 + $0x20] sm:$0xff]
        %v2505 = vld [vmem:[#allocation2 + $0x28] sm:$0xff]
        %v2506 = vld [vmem:[#allocation2 + $0x30] sm:$0xff]
        %v2507 = vld [vmem:[#allocation2 + $0x38] sm:$0xff]
        %v2508 = vld [vmem:[#allocation2 + $0x40] sm:$0xff]
        %v2509 = vld [vmem:[#allocation2 + $0x48] sm:$0xff]
        %v2510 = vld [vmem:[#allocation2 + $0x50] sm:$0xff]
        %v2511 = vld [vmem:[#allocation2 + $0x58] sm:$0xff]
        %v2512 = vld [vmem:[#allocation2 + $0x60] sm:$0xff]
        %v2513 = vld [vmem:[#allocation2 + $0x68] sm:$0xff]
        %v2514 = vld [vmem:[#allocation2 + $0x70] sm:$0xff]
        %v2515 = vld [vmem:[#allocation2 + $0x78] sm:$0xff]
        %v2516 = vld [vmem:[#allocation2 + $0x80] sm:$0xff]
        %v2517 = vld [vmem:[#allocation2 + $0x88] sm:$0xff]
        %v2518 = vld [vmem:[#allocation2 + $0x90] sm:$0xff]
        %v2519 = vld [vmem:[#allocation2 + $0x98] sm:$0xff]
        %v2520 = vld [vmem:[#allocation2 + $0xa0] sm:$0xff]
        %v2521 = vld [vmem:[#allocation2 + $0xa8] sm:$0xff]
        %v2522 = vld [vmem:[#allocation2 + $0xb0] sm:$0xff]
        %v2523 = vld [vmem:[#allocation2 + $0xb8] sm:$0xff]
        %v2524 = vld [vmem:[#allocation2 + $0xc0] sm:$0xff]
        %v2525 = vld [vmem:[#allocation2 + $0xc8] sm:$0xff]
        %v2526 = vld [vmem:[#allocation2 + $0xd0] sm:$0xff]
        %v2527 = vld [vmem:[#allocation2 + $0xd8] sm:$0xff]
        %v2528 = vld [vmem:[#allocation2 + $0xe0] sm:$0xff]
        %v2529 = vld [vmem:[#allocation2 + $0xe8] sm:$0xff]
        %v2530 = vld [vmem:[#allocation2 + $0xf0] sm:$0xff]
        %v2531 = vld [vmem:[#allocation2 + $0xf8] sm:$0xff]
        %v2532 = vadd.f32 %v2500, %v2437
        %v2533 = vadd.f32 %v2501, %v2439
        %v2534 = vadd.f32 %v2502, %v2441
        %v2535 = vadd.f32 %v2503, %v2443
        %v2536 = vadd.f32 %v2504, %v2445
        %v2537 = vadd.f32 %v2505, %v2447
        %v2538 = vadd.f32 %v2506, %v2449
        %v2539 = vadd.f32 %v2507, %v2451
        %v2540 = vadd.f32 %v2508, %v2453
        %v2541 = vadd.f32 %v2509, %v2455
        %v2542 = vadd.f32 %v2510, %v2457
        %v2543 = vadd.f32 %v2511, %v2459
        %v2544 = vadd.f32 %v2512, %v2461
        %v2545 = vadd.f32 %v2513, %v2463
        %v2546 = vadd.f32 %v2514, %v2465
        %v2547 = vadd.f32 %v2515, %v2467
        %v2548 = vadd.f32 %v2516, %v2469
        %v2549 = vadd.f32 %v2517, %v2471
        %v2550 = vadd.f32 %v2518, %v2473
        %v2551 = vadd.f32 %v2519, %v2475
        %v2552 = vadd.f32 %v2520, %v2477
        %v2553 = vadd.f32 %v2521, %v2479
        %v2554 = vadd.f32 %v2522, %v2481
        %v2555 = vadd.f32 %v2523, %v2483
        %v2556 = vadd.f32 %v2524, %v2485
        %v2557 = vadd.f32 %v2525, %v2487
        %v2558 = vadd.f32 %v2526, %v2489
        %v2559 = vadd.f32 %v2527, %v2491
        %v2560 = vadd.f32 %v2528, %v2493
        %v2561 = vadd.f32 %v2529, %v2495
        %v2562 = vadd.f32 %v2530, %v2497
        %v2563 = vadd.f32 %v2531, %v2499
        %2564 = vst [vmem:[#allocation2] sm:$0xff] %v2532
        %2565 = vst [vmem:[#allocation2 + $0x8] sm:$0xff] %v2533
        %2566 = vst [vmem:[#allocation2 + $0x10] sm:$0xff] %v2534
        %2567 = vst [vmem:[#allocation2 + $0x18] sm:$0xff] %v2535
        %2568 = vst [vmem:[#allocation2 + $0x20] sm:$0xff] %v2536
        %2569 = vst [vmem:[#allocation2 + $0x28] sm:$0xff] %v2537
        %2570 = vst [vmem:[#allocation2 + $0x30] sm:$0xff] %v2538
        %2571 = vst [vmem:[#allocation2 + $0x38] sm:$0xff] %v2539
        %2572 = vst [vmem:[#allocation2 + $0x40] sm:$0xff] %v2540
        %2573 = vst [vmem:[#allocation2 + $0x48] sm:$0xff] %v2541
        %2574 = vst [vmem:[#allocation2 + $0x50] sm:$0xff] %v2542
        %2575 = vst [vmem:[#allocation2 + $0x58] sm:$0xff] %v2543
        %2576 = vst [vmem:[#allocation2 + $0x60] sm:$0xff] %v2544
        %2577 = vst [vmem:[#allocation2 + $0x68] sm:$0xff] %v2545
        %2578 = vst [vmem:[#allocation2 + $0x70] sm:$0xff] %v2546
        %2579 = vst [vmem:[#allocation2 + $0x78] sm:$0xff] %v2547
        %2580 = vst [vmem:[#allocation2 + $0x80] sm:$0xff] %v2548
        %2581 = vst [vmem:[#allocation2 + $0x88] sm:$0xff] %v2549
        %2582 = vst [vmem:[#allocation2 + $0x90] sm:$0xff] %v2550
        %2583 = vst [vmem:[#allocation2 + $0x98] sm:$0xff] %v2551
        %2584 = vst [vmem:[#allocation2 + $0xa0] sm:$0xff] %v2552
        %2585 = vst [vmem:[#allocation2 + $0xa8] sm:$0xff] %v2553
        %2586 = vst [vmem:[#allocation2 + $0xb0] sm:$0xff] %v2554
        %2587 = vst [vmem:[#allocation2 + $0xb8] sm:$0xff] %v2555
        %2588 = vst [vmem:[#allocation2 + $0xc0] sm:$0xff] %v2556
        %2589 = vst [vmem:[#allocation2 + $0xc8] sm:$0xff] %v2557
        %2590 = vst [vmem:[#allocation2 + $0xd0] sm:$0xff] %v2558
        %2591 = vst [vmem:[#allocation2 + $0xd8] sm:$0xff] %v2559
        %2592 = vst [vmem:[#allocation2 + $0xe0] sm:$0xff] %v2560
        %2593 = vst [vmem:[#allocation2 + $0xe8] sm:$0xff] %v2561
        %2594 = vst [vmem:[#allocation2 + $0xf0] sm:$0xff] %v2562
        %2595 = vst [vmem:[#allocation2 + $0xf8] sm:$0xff] %v2563
        %v2596 = vld [vmem:[#allocation2] sm:$0xff]
        %v2597 = vld [vmem:[#allocation2 + $0x8] sm:$0xff]
        %v2598 = vld [vmem:[#allocation2 + $0x10] sm:$0xff]
        %v2599 = vld [vmem:[#allocation2 + $0x18] sm:$0xff]
        %v2600 = vld [vmem:[#allocation2 + $0x20] sm:$0xff]
        %v2601 = vld [vmem:[#allocation2 + $0x28] sm:$0xff]
        %v2602 = vld [vmem:[#allocation2 + $0x30] sm:$0xff]
        %v2603 = vld [vmem:[#allocation2 + $0x38] sm:$0xff]
        %v2604 = vld [vmem:[#allocation2 + $0x40] sm:$0xff]
        %v2605 = vld [vmem:[#allocation2 + $0x48] sm:$0xff]
        %v2606 = vld [vmem:[#allocation2 + $0x50] sm:$0xff]
        %v2607 = vld [vmem:[#allocation2 + $0x58] sm:$0xff]
        %v2608 = vld [vmem:[#allocation2 + $0x60] sm:$0xff]
        %v2609 = vld [vmem:[#allocation2 + $0x68] sm:$0xff]
        %v2610 = vld [vmem:[#allocation2 + $0x70] sm:$0xff]
        %v2611 = vld [vmem:[#allocation2 + $0x78] sm:$0xff]
        %v2612 = vld [vmem:[#allocation2 + $0x80] sm:$0xff]
        %v2613 = vld [vmem:[#allocation2 + $0x88] sm:$0xff]
        %v2614 = vld [vmem:[#allocation2 + $0x90] sm:$0xff]
        %v2615 = vld [vmem:[#allocation2 + $0x98] sm:$0xff]
        %v2616 = vld [vmem:[#allocation2 + $0xa0] sm:$0xff]
        %v2617 = vld [vmem:[#allocation2 + $0xa8] sm:$0xff]
        %v2618 = vld [vmem:[#allocation2 + $0xb0] sm:$0xff]
        %v2619 = vld [vmem:[#allocation2 + $0xb8] sm:$0xff]
        %v2620 = vld [vmem:[#allocation2 + $0xc0] sm:$0xff]
        %v2621 = vld [vmem:[#allocation2 + $0xc8] sm:$0xff]
        %v2622 = vld [vmem:[#allocation2 + $0xd0] sm:$0xff]
        %v2623 = vld [vmem:[#allocation2 + $0xd8] sm:$0xff]
        %v2624 = vld [vmem:[#allocation2 + $0xe0] sm:$0xff]
        %v2625 = vld [vmem:[#allocation2 + $0xe8] sm:$0xff]
        %v2626 = vld [vmem:[#allocation2 + $0xf0] sm:$0xff]
        %v2627 = vld [vmem:[#allocation2 + $0xf8] sm:$0xff]
        %v2628 = vpack.c.bf16 %v2597, %v2596
        %v2629 = vpack.c.bf16 %v2599, %v2598
        %v2630 = vpack.c.bf16 %v2601, %v2600
        %v2631 = vpack.c.bf16 %v2603, %v2602
        %v2632 = vpack.c.bf16 %v2605, %v2604
        %v2633 = vpack.c.bf16 %v2607, %v2606
        %v2634 = vpack.c.bf16 %v2609, %v2608
        %v2635 = vpack.c.bf16 %v2611, %v2610
        %v2636 = vpack.c.bf16 %v2613, %v2612
        %v2637 = vpack.c.bf16 %v2615, %v2614
        %v2638 = vpack.c.bf16 %v2617, %v2616
        %v2639 = vpack.c.bf16 %v2619, %v2618
        %v2640 = vpack.c.bf16 %v2621, %v2620
        %v2641 = vpack.c.bf16 %v2623, %v2622
        %v2642 = vpack.c.bf16 %v2625, %v2624
        %v2643 = vpack.c.bf16 %v2627, %v2626
        %v2644 = vld [vmem:[#allocation8] sm:$0xf]
        %v2645 = vld [vmem:[#allocation8 + $0x4] sm:$0xf]
        %v2646 = vld [vmem:[#allocation8 + $0x8] sm:$0xf]
        %v2647 = vld [vmem:[#allocation8 + $0xc] sm:$0xf]
        %v2648 = vld [vmem:[#allocation8 + $0x10] sm:$0xf]
        %v2649 = vld [vmem:[#allocation8 + $0x14] sm:$0xf]
        %v2650 = vld [vmem:[#allocation8 + $0x18] sm:$0xf]
        %v2651 = vld [vmem:[#allocation8 + $0x1c] sm:$0xf]
        %v2652 = vld [vmem:[#allocation8 + $0x20] sm:$0xf]
        %v2653 = vld [vmem:[#allocation8 + $0x24] sm:$0xf]
        %v2654 = vld [vmem:[#allocation8 + $0x28] sm:$0xf]
        %v2655 = vld [vmem:[#allocation8 + $0x2c] sm:$0xf]
        %v2656 = vld [vmem:[#allocation8 + $0x30] sm:$0xf]
        %v2657 = vld [vmem:[#allocation8 + $0x34] sm:$0xf]
        %v2658 = vld [vmem:[#allocation8 + $0x38] sm:$0xf]
        %v2659 = vld [vmem:[#allocation8 + $0x3c] sm:$0xf]
        %v2660 = vld [vmem:[#allocation10] sm:$0x1]
        %v2661 = vlaneseq
        %v2662 = vshrl.u32 %v2661, 7
        %v2663 = vsub.s32 0, %v2662
        %v2664 = vrot.slane %v2660, %v2663
        %v2681 = vunpack.c.l.b16 %v2644
        %v2682 = vunpack.c.l.b16 %v2645
        %v2683 = vunpack.c.l.b16 %v2646
        %v2684 = vunpack.c.l.b16 %v2647
        %v2685 = vunpack.c.l.b16 %v2648
        %v2686 = vunpack.c.l.b16 %v2649
        %v2687 = vunpack.c.l.b16 %v2650
        %v2688 = vunpack.c.l.b16 %v2651
        %v2689 = vunpack.c.l.b16 %v2652
        %v2690 = vunpack.c.l.b16 %v2653
        %v2691 = vunpack.c.l.b16 %v2654
        %v2692 = vunpack.c.l.b16 %v2655
        %v2693 = vunpack.c.l.b16 %v2656
        %v2694 = vunpack.c.l.b16 %v2657
        %v2695 = vunpack.c.l.b16 %v2658
        %v2696 = vunpack.c.l.b16 %v2659
        %v2697 = vpack.c.b16 %v2682, %v2681
        %v2698 = vpack.c.b16 %v2684, %v2683
        %v2699 = vpack.c.b16 %v2686, %v2685
        %v2700 = vpack.c.b16 %v2688, %v2687
        %v2701 = vpack.c.b16 %v2690, %v2689
        %v2702 = vpack.c.b16 %v2692, %v2691
        %v2703 = vpack.c.b16 %v2694, %v2693
        %v2704 = vpack.c.b16 %v2696, %v2695
        %2713 = vmatprep.subr.bf16.mxu0 0
        %2714 = vmatpush1.bf16.msra.mxu0 %v2697
        %2715 = vmatprep.subr.bf16.mxu0 0
        %2716 = vmatpush1.bf16.msra.mxu0 %v2698
        %2717 = vmatprep.subr.bf16.mxu0 0
        %2718 = vmatpush1.bf16.msra.mxu0 %v2699
        %2719 = vmatprep.subr.bf16.mxu0 0
        %2720 = vmatpush1.bf16.msra.mxu0 %v2700
        %2721 = vmatprep.subr.bf16.mxu0 0
        %2722 = vmatpush1.bf16.msra.mxu0 %v2701
        %2723 = vmatprep.subr.bf16.mxu0 0
        %2724 = vmatpush1.bf16.msra.mxu0 %v2702
        %2725 = vmatprep.subr.bf16.mxu0 0
        %2726 = vmatpush1.bf16.msra.mxu0 %v2703
        %2727 = vmatprep.subr.bf16.mxu0 0
        %2728 = vmatpush1.bf16.msra.mxu0 %v2704
        %2729 = vmatprep.subr.bf16.mxu0 0
        %2730 = vmatpush1.bf16.msra.mxu0 0
        %2731 = vmatprep.subr.bf16.mxu0 0
        %2732 = vmatpush1.bf16.msra.mxu0 0
        %2733 = vmatprep.subr.bf16.mxu0 0
        %2734 = vmatpush1.bf16.msra.mxu0 0
        %2735 = vmatprep.subr.bf16.mxu0 0
        %2736 = vmatpush1.bf16.msra.mxu0 0
        %2737 = vmatprep.subr.bf16.mxu0 0
        %2738 = vmatpush1.bf16.msra.mxu0 0
        %2739 = vmatprep.subr.bf16.mxu0 0
        %2740 = vmatpush1.bf16.msra.mxu0 0
        %2741 = vmatprep.subr.bf16.mxu0 0
        %2742 = vmatpush1.bf16.msra.mxu0 0
        %2743 = vmatprep.subr.bf16.mxu0 0
        %2744 = vmatpush1.bf16.msra.mxu0 0
        %2745 = vmatprep.mubr.bf16.mxu0 0
        %2746 = vmatmul.mubr.bf16.gmra.mrb[0].mxu0 %v2628
        %v2747 = vpop.f32.mrb[0].mxu0
        %v2748 = vadd.f32 %v2664, %v2747
        %v2749 = vpop.f32.mrb[0].mxu0
        %v2750 = vpop.f32.mrb[0].mxu0
        %v2751 = vadd.f32 %v2664, %v2750
        %v2752 = vpop.f32.mrb[0].mxu0
        %2753 = vmatprep.mubr.bf16.mxu0 0
        %2754 = vmatmul.mubr.bf16.gmra.mrb[0].mxu0 %v2629
        %v2755 = vpop.f32.mrb[0].mxu0
        %v2756 = vadd.f32 %v2664, %v2755
        %v2757 = vpop.f32.mrb[0].mxu0
        %v2758 = vpop.f32.mrb[0].mxu0
        %v2759 = vadd.f32 %v2664, %v2758
        %v2760 = vpop.f32.mrb[0].mxu0
        %2761 = vmatprep.mubr.bf16.mxu0 0
        %2762 = vmatmul.mubr.bf16.gmra.mrb[0].mxu0 %v2630
        %v2763 = vpop.f32.mrb[0].mxu0
        %v2764 = vadd.f32 %v2664, %v2763
        %v2765 = vpop.f32.mrb[0].mxu0
        %v2766 = vpop.f32.mrb[0].mxu0
        %v2767 = vadd.f32 %v2664, %v2766
        %v2768 = vpop.f32.mrb[0].mxu0
        %2769 = vmatprep.mubr.bf16.mxu0 0
        %2770 = vmatmul.mubr.bf16.gmra.mrb[0].mxu0 %v2631
        %v2771 = vpop.f32.mrb[0].mxu0
        %v2772 = vadd.f32 %v2664, %v2771
        %v2773 = vpop.f32.mrb[0].mxu0
        %v2774 = vpop.f32.mrb[0].mxu0
        %v2775 = vadd.f32 %v2664, %v2774
        %v2776 = vpop.f32.mrb[0].mxu0
        %2777 = vmatprep.mubr.bf16.mxu0 0
        %2778 = vmatmul.mubr.bf16.gmra.mrb[0].mxu0 %v2632
        %v2779 = vpop.f32.mrb[0].mxu0
        %v2780 = vadd.f32 %v2664, %v2779
        %v2781 = vpop.f32.mrb[0].mxu0
        %v2782 = vpop.f32.mrb[0].mxu0
        %v2783 = vadd.f32 %v2664, %v2782
        %v2784 = vpop.f32.mrb[0].mxu0
        %2785 = vmatprep.mubr.bf16.mxu0 0
        %2786 = vmatmul.mubr.bf16.gmra.mrb[0].mxu0 %v2633
        %v2787 = vpop.f32.mrb[0].mxu0
        %v2788 = vadd.f32 %v2664, %v2787
        %v2789 = vpop.f32.mrb[0].mxu0
        %v2790 = vpop.f32.mrb[0].mxu0
        %v2791 = vadd.f32 %v2664, %v2790
        %v2792 = vpop.f32.mrb[0].mxu0
        %2793 = vmatprep.mubr.bf16.mxu0 0
        %2794 = vmatmul.mubr.bf16.gmra.mrb[0].mxu0 %v2634
        %v2795 = vpop.f32.mrb[0].mxu0
        %v2796 = vadd.f32 %v2664, %v2795
        %v2797 = vpop.f32.mrb[0].mxu0
        %v2798 = vpop.f32.mrb[0].mxu0
        %v2799 = vadd.f32 %v2664, %v2798
        %v2800 = vpop.f32.mrb[0].mxu0
        %2801 = vmatprep.mubr.bf16.mxu0 0
        %2802 = vmatmul.mubr.bf16.gmra.mrb[0].mxu0 %v2635
        %v2803 = vpop.f32.mrb[0].mxu0
        %v2804 = vadd.f32 %v2664, %v2803
        %v2805 = vpop.f32.mrb[0].mxu0
        %v2806 = vpop.f32.mrb[0].mxu0
        %v2807 = vadd.f32 %v2664, %v2806
        %v2808 = vpop.f32.mrb[0].mxu0
        %2809 = vmatprep.mubr.bf16.mxu0 0
        %2810 = vmatmul.mubr.bf16.gmra.mrb[0].mxu0 %v2636
        %v2811 = vpop.f32.mrb[0].mxu0
        %v2812 = vadd.f32 %v2664, %v2811
        %v2813 = vpop.f32.mrb[0].mxu0
        %v2814 = vpop.f32.mrb[0].mxu0
        %v2815 = vadd.f32 %v2664, %v2814
        %v2816 = vpop.f32.mrb[0].mxu0
        %2817 = vmatprep.mubr.bf16.mxu0 0
        %2818 = vmatmul.mubr.bf16.gmra.mrb[0].mxu0 %v2637
        %v2819 = vpop.f32.mrb[0].mxu0
        %v2820 = vadd.f32 %v2664, %v2819
        %v2821 = vpop.f32.mrb[0].mxu0
        %v2822 = vpop.f32.mrb[0].mxu0
        %v2823 = vadd.f32 %v2664, %v2822
        %v2824 = vpop.f32.mrb[0].mxu0
        %2825 = vmatprep.mubr.bf16.mxu0 0
        %2826 = vmatmul.mubr.bf16.gmra.mrb[0].mxu0 %v2638
        %v2827 = vpop.f32.mrb[0].mxu0
        %v2828 = vadd.f32 %v2664, %v2827
        %v2829 = vpop.f32.mrb[0].mxu0
        %v2830 = vpop.f32.mrb[0].mxu0
        %v2831 = vadd.f32 %v2664, %v2830
        %v2832 = vpop.f32.mrb[0].mxu0
        %2833 = vmatprep.mubr.bf16.mxu0 0
        %2834 = vmatmul.mubr.bf16.gmra.mrb[0].mxu0 %v2639
        %v2835 = vpop.f32.mrb[0].mxu0
        %v2836 = vadd.f32 %v2664, %v2835
        %v2837 = vpop.f32.mrb[0].mxu0
        %v2838 = vpop.f32.mrb[0].mxu0
        %v2839 = vadd.f32 %v2664, %v2838
        %v2840 = vpop.f32.mrb[0].mxu0
        %2841 = vmatprep.mubr.bf16.mxu0 0
        %2842 = vmatmul.mubr.bf16.gmra.mrb[0].mxu0 %v2640
        %v2843 = vpop.f32.mrb[0].mxu0
        %v2844 = vadd.f32 %v2664, %v2843
        %v2845 = vpop.f32.mrb[0].mxu0
        %v2846 = vpop.f32.mrb[0].mxu0
        %v2847 = vadd.f32 %v2664, %v2846
        %v2848 = vpop.f32.mrb[0].mxu0
        %2849 = vmatprep.mubr.bf16.mxu0 0
        %2850 = vmatmul.mubr.bf16.gmra.mrb[0].mxu0 %v2641
        %v2851 = vpop.f32.mrb[0].mxu0
        %v2852 = vadd.f32 %v2664, %v2851
        %v2853 = vpop.f32.mrb[0].mxu0
        %v2854 = vpop.f32.mrb[0].mxu0
        %v2855 = vadd.f32 %v2664, %v2854
        %v2856 = vpop.f32.mrb[0].mxu0
        %2857 = vmatprep.mubr.bf16.mxu0 0
        %2858 = vmatmul.mubr.bf16.gmra.mrb[0].mxu0 %v2642
        %v2859 = vpop.f32.mrb[0].mxu0
        %v2860 = vadd.f32 %v2664, %v2859
        %v2861 = vpop.f32.mrb[0].mxu0
        %v2862 = vpop.f32.mrb[0].mxu0
        %v2863 = vadd.f32 %v2664, %v2862
        %v2864 = vpop.f32.mrb[0].mxu0
        %2865 = vmatprep.mubr.bf16.mxu0 0
        %2866 = vmatmul.mubr.bf16.gmra.mrb[0].mxu0 %v2643
        %v2867 = vpop.f32.mrb[0].mxu0
        %v2868 = vadd.f32 %v2664, %v2867
        %v2869 = vpop.f32.mrb[0].mxu0
        %v2870 = vpop.f32.mrb[0].mxu0
        %v2871 = vadd.f32 %v2664, %v2870
        %v2872 = vpop.f32.mrb[0].mxu0
        %2873 = vdwg.mxu0
        %v2874 = vmax.f32 %v2748, 0.0
        %v2875 = vmax.f32 %v2751, 0.0
        %v2876 = vmax.f32 %v2756, 0.0
        %v2877 = vmax.f32 %v2759, 0.0
        %v2878 = vmax.f32 %v2764, 0.0
        %v2879 = vmax.f32 %v2767, 0.0
        %v2880 = vmax.f32 %v2772, 0.0
        %v2881 = vmax.f32 %v2775, 0.0
        %v2882 = vmax.f32 %v2780, 0.0
        %v2883 = vmax.f32 %v2783, 0.0
        %v2884 = vmax.f32 %v2788, 0.0
        %v2885 = vmax.f32 %v2791, 0.0
        %v2886 = vmax.f32 %v2796, 0.0
        %v2887 = vmax.f32 %v2799, 0.0
        %v2888 = vmax.f32 %v2804, 0.0
        %v2889 = vmax.f32 %v2807, 0.0
        %v2890 = vmax.f32 %v2812, 0.0
        %v2891 = vmax.f32 %v2815, 0.0
        %v2892 = vmax.f32 %v2820, 0.0
        %v2893 = vmax.f32 %v2823, 0.0
        %v2894 = vmax.f32 %v2828, 0.0
        %v2895 = vmax.f32 %v2831, 0.0
        %v2896 = vmax.f32 %v2836, 0.0
        %v2897 = vmax.f32 %v2839, 0.0
        %v2898 = vmax.f32 %v2844, 0.0
        %v2899 = vmax.f32 %v2847, 0.0
        %v2900 = vmax.f32 %v2852, 0.0
        %v2901 = vmax.f32 %v2855, 0.0
        %v2902 = vmax.f32 %v2860, 0.0
        %v2903 = vmax.f32 %v2863, 0.0
        %v2904 = vmax.f32 %v2868, 0.0
        %v2905 = vmax.f32 %v2871, 0.0
        %2906 = vst [vmem:[#allocation3] sm:$0xff] %v2874
        %2907 = vst [vmem:[#allocation3 + $0x8] sm:$0xff] %v2875
        %2908 = vst [vmem:[#allocation3 + $0x10] sm:$0xff] %v2876
        %2909 = vst [vmem:[#allocation3 + $0x18] sm:$0xff] %v2877
        %2910 = vst [vmem:[#allocation3 + $0x20] sm:$0xff] %v2878
        %2911 = vst [vmem:[#allocation3 + $0x28] sm:$0xff] %v2879
        %2912 = vst [vmem:[#allocation3 + $0x30] sm:$0xff] %v2880
        %2913 = vst [vmem:[#allocation3 + $0x38] sm:$0xff] %v2881
        %2914 = vst [vmem:[#allocation3 + $0x40] sm:$0xff] %v2882
        %2915 = vst [vmem:[#allocation3 + $0x48] sm:$0xff] %v2883
        %2916 = vst [vmem:[#allocation3 + $0x50] sm:$0xff] %v2884
        %2917 = vst [vmem:[#allocation3 + $0x58] sm:$0xff] %v2885
        %2918 = vst [vmem:[#allocation3 + $0x60] sm:$0xff] %v2886
        %2919 = vst [vmem:[#allocation3 + $0x68] sm:$0xff] %v2887
        %2920 = vst [vmem:[#allocation3 + $0x70] sm:$0xff] %v2888
        %2921 = vst [vmem:[#allocation3 + $0x78] sm:$0xff] %v2889
        %2922 = vst [vmem:[#allocation3 + $0x80] sm:$0xff] %v2890
        %2923 = vst [vmem:[#allocation3 + $0x88] sm:$0xff] %v2891
        %2924 = vst [vmem:[#allocation3 + $0x90] sm:$0xff] %v2892
        %2925 = vst [vmem:[#allocation3 + $0x98] sm:$0xff] %v2893
        %2926 = vst [vmem:[#allocation3 + $0xa0] sm:$0xff] %v2894
        %2927 = vst [vmem:[#allocation3 + $0xa8] sm:$0xff] %v2895
        %2928 = vst [vmem:[#allocation3 + $0xb0] sm:$0xff] %v2896
        %2929 = vst [vmem:[#allocation3 + $0xb8] sm:$0xff] %v2897
        %2930 = vst [vmem:[#allocation3 + $0xc0] sm:$0xff] %v2898
        %2931 = vst [vmem:[#allocation3 + $0xc8] sm:$0xff] %v2899
        %2932 = vst [vmem:[#allocation3 + $0xd0] sm:$0xff] %v2900
        %2933 = vst [vmem:[#allocation3 + $0xd8] sm:$0xff] %v2901
        %2934 = vst [vmem:[#allocation3 + $0xe0] sm:$0xff] %v2902
        %2935 = vst [vmem:[#allocation3 + $0xe8] sm:$0xff] %v2903
        %2936 = vst [vmem:[#allocation3 + $0xf0] sm:$0xff] %v2904
        %2937 = vst [vmem:[#allocation3 + $0xf8] sm:$0xff] %v2905
        %v2938 = vld [vmem:[#allocation3] sm:$0xff]
        %v2939 = vld [vmem:[#allocation3 + $0x8] sm:$0xff]
        %v2940 = vld [vmem:[#allocation3 + $0x10] sm:$0xff]
        %v2941 = vld [vmem:[#allocation3 + $0x18] sm:$0xff]
        %v2942 = vld [vmem:[#allocation3 + $0x20] sm:$0xff]
        %v2943 = vld [vmem:[#allocation3 + $0x28] sm:$0xff]
        %v2944 = vld [vmem:[#allocation3 + $0x30] sm:$0xff]
        %v2945 = vld [vmem:[#allocation3 + $0x38] sm:$0xff]
        %v2946 = vld [vmem:[#allocation3 + $0x40] sm:$0xff]
        %v2947 = vld [vmem:[#allocation3 + $0x48] sm:$0xff]
        %v2948 = vld [vmem:[#allocation3 + $0x50] sm:$0xff]
        %v2949 = vld [vmem:[#allocation3 + $0x58] sm:$0xff]
        %v2950 = vld [vmem:[#allocation3 + $0x60] sm:$0xff]
        %v2951 = vld [vmem:[#allocation3 + $0x68] sm:$0xff]
        %v2952 = vld [vmem:[#allocation3 + $0x70] sm:$0xff]
        %v2953 = vld [vmem:[#allocation3 + $0x78] sm:$0xff]
        %v2954 = vld [vmem:[#allocation3 + $0x80] sm:$0xff]
        %v2955 = vld [vmem:[#allocation3 + $0x88] sm:$0xff]
        %v2956 = vld [vmem:[#allocation3 + $0x90] sm:$0xff]
        %v2957 = vld [vmem:[#allocation3 + $0x98] sm:$0xff]
        %v2958 = vld [vmem:[#allocation3 + $0xa0] sm:$0xff]
        %v2959 = vld [vmem:[#allocation3 + $0xa8] sm:$0xff]
        %v2960 = vld [vmem:[#allocation3 + $0xb0] sm:$0xff]
        %v2961 = vld [vmem:[#allocation3 + $0xb8] sm:$0xff]
        %v2962 = vld [vmem:[#allocation3 + $0xc0] sm:$0xff]
        %v2963 = vld [vmem:[#allocation3 + $0xc8] sm:$0xff]
        %v2964 = vld [vmem:[#allocation3 + $0xd0] sm:$0xff]
        %v2965 = vld [vmem:[#allocation3 + $0xd8] sm:$0xff]
        %v2966 = vld [vmem:[#allocation3 + $0xe0] sm:$0xff]
        %v2967 = vld [vmem:[#allocation3 + $0xe8] sm:$0xff]
        %v2968 = vld [vmem:[#allocation3 + $0xf0] sm:$0xff]
        %v2969 = vld [vmem:[#allocation3 + $0xf8] sm:$0xff]
        %v2970 = vld [vmem:[#allocation11] sm:$0xff]
        %v2971 = vld [vmem:[#allocation11 + $0x8] sm:$0xff]
        %v2972 = vld [vmem:[#allocation11 + $0x10] sm:$0xff]
        %v2973 = vld [vmem:[#allocation11 + $0x18] sm:$0xff]
        %v2974 = vld [vmem:[#allocation11 + $0x20] sm:$0xff]
        %v2975 = vld [vmem:[#allocation11 + $0x28] sm:$0xff]
        %v2976 = vld [vmem:[#allocation11 + $0x30] sm:$0xff]
        %v2977 = vld [vmem:[#allocation11 + $0x38] sm:$0xff]
        %v2978 = vld [vmem:[#allocation11 + $0x40] sm:$0xff]
        %v2979 = vld [vmem:[#allocation11 + $0x48] sm:$0xff]
        %v2980 = vld [vmem:[#allocation11 + $0x50] sm:$0xff]
        %v2981 = vld [vmem:[#allocation11 + $0x58] sm:$0xff]
        %v2982 = vld [vmem:[#allocation11 + $0x60] sm:$0xff]
        %v2983 = vld [vmem:[#allocation11 + $0x68] sm:$0xff]
        %v2984 = vld [vmem:[#allocation11 + $0x70] sm:$0xff]
        %v2985 = vld [vmem:[#allocation11 + $0x78] sm:$0xff]
        %v2986 = vld [vmem:[#allocation11 + $0x80] sm:$0xff]
        %v2987 = vld [vmem:[#allocation11 + $0x88] sm:$0xff]
        %v2988 = vld [vmem:[#allocation11 + $0x90] sm:$0xff]
        %v2989 = vld [vmem:[#allocation11 + $0x98] sm:$0xff]
        %v2990 = vld [vmem:[#allocation11 + $0xa0] sm:$0xff]
        %v2991 = vld [vmem:[#allocation11 + $0xa8] sm:$0xff]
        %v2992 = vld [vmem:[#allocation11 + $0xb0] sm:$0xff]
        %v2993 = vld [vmem:[#allocation11 + $0xb8] sm:$0xff]
        %v2994 = vld [vmem:[#allocation11 + $0xc0] sm:$0xff]
        %v2995 = vld [vmem:[#allocation11 + $0xc8] sm:$0xff]
        %v2996 = vld [vmem:[#allocation11 + $0xd0] sm:$0xff]
        %v2997 = vld [vmem:[#allocation11 + $0xd8] sm:$0xff]
        %v2998 = vld [vmem:[#allocation11 + $0xe0] sm:$0xff]
        %v2999 = vld [vmem:[#allocation11 + $0xe8] sm:$0xff]
        %v3000 = vld [vmem:[#allocation11 + $0xf0] sm:$0xff]
        %v3001 = vld [vmem:[#allocation11 + $0xf8] sm:$0xff]
        %v3002 = vrot.slane %v2938, 7
        %v3003 = vrot.slane %v2939, 7
        %v3004 = vrot.slane %v2940, 7
        %v3005 = vrot.slane %v2941, 7
        %v3006 = vrot.slane %v2942, 7
        %v3007 = vrot.slane %v2943, 7
        %v3008 = vrot.slane %v2944, 7
        %v3009 = vrot.slane %v2945, 7
        %v3010 = vrot.slane %v2946, 7
        %v3011 = vrot.slane %v2947, 7
        %v3012 = vrot.slane %v2948, 7
        %v3013 = vrot.slane %v2949, 7
        %v3014 = vrot.slane %v2950, 7
        %v3015 = vrot.slane %v2951, 7
        %v3016 = vrot.slane %v2952, 7
        %v3017 = vrot.slane %v2953, 7
        %v3018 = vrot.slane %v2954, 7
        %v3019 = vrot.slane %v2955, 7
        %v3020 = vrot.slane %v2956, 7
        %v3021 = vrot.slane %v2957, 7
        %v3022 = vrot.slane %v2958, 7
        %v3023 = vrot.slane %v2959, 7
        %v3024 = vrot.slane %v2960, 7
        %v3025 = vrot.slane %v2961, 7
        %v3026 = vrot.slane %v2962, 7
        %v3027 = vrot.slane %v2963, 7
        %v3028 = vrot.slane %v2964, 7
        %v3029 = vrot.slane %v2965, 7
        %v3030 = vrot.slane %v2966, 7
        %v3031 = vrot.slane %v2967, 7
        %v3032 = vrot.slane %v2968, 7
        %v3033 = vrot.slane %v2969, 7
        %v3034 = vsel %vm418, %v3032, %v3033
        %v3035 = vsel %vm418, %v3031, %v3032
        %v3036 = vsel %vm418, %v3030, %v3031
        %v3037 = vsel %vm418, %v3029, %v3030
        %v3038 = vsel %vm418, %v3028, %v3029
        %v3039 = vsel %vm418, %v3027, %v3028
        %v3040 = vsel %vm418, %v3026, %v3027
        %v3041 = vsel %vm418, %v3025, %v3026
        %v3042 = vsel %vm418, %v3024, %v3025
        %v3043 = vsel %vm418, %v3023, %v3024
        %v3044 = vsel %vm418, %v3022, %v3023
        %v3045 = vsel %vm418, %v3021, %v3022
        %v3046 = vsel %vm418, %v3020, %v3021
        %v3047 = vsel %vm418, %v3019, %v3020
        %v3048 = vsel %vm418, %v3018, %v3019
        %v3049 = vsel %vm418, %v3017, %v3018
        %v3050 = vsel %vm418, %v3016, %v3017
        %v3051 = vsel %vm418, %v3015, %v3016
        %v3052 = vsel %vm418, %v3014, %v3015
        %v3053 = vsel %vm418, %v3013, %v3014
        %v3054 = vsel %vm418, %v3012, %v3013
        %v3055 = vsel %vm418, %v3011, %v3012
        %v3056 = vsel %vm418, %v3010, %v3011
        %v3057 = vsel %vm418, %v3009, %v3010
        %v3058 = vsel %vm418, %v3008, %v3009
        %v3059 = vsel %vm418, %v3007, %v3008
        %v3060 = vsel %vm418, %v3006, %v3007
        %v3061 = vsel %vm418, %v3005, %v3006
        %v3062 = vsel %vm418, %v3004, %v3005
        %v3063 = vsel %vm418, %v3003, %v3004
        %v3064 = vsel %vm418, %v3002, %v3003
        %v3065 = vsel %vm418, %v3033, %v3002
        %v3066 = vand.u32 %v2970, 5
        %v3067 = vand.u32 %v2971, 5
        %v3068 = vand.u32 %v2972, 5
        %v3069 = vand.u32 %v2973, 5
        %v3070 = vand.u32 %v2974, 5
        %v3071 = vand.u32 %v2975, 5
        %v3072 = vand.u32 %v2976, 5
        %v3073 = vand.u32 %v2977, 5
        %v3074 = vand.u32 %v2978, 5
        %v3075 = vand.u32 %v2979, 5
        %v3076 = vand.u32 %v2980, 5
        %v3077 = vand.u32 %v2981, 5
        %v3078 = vand.u32 %v2982, 5
        %v3079 = vand.u32 %v2983, 5
        %v3080 = vand.u32 %v2984, 5
        %v3081 = vand.u32 %v2985, 5
        %v3082 = vand.u32 %v2986, 5
        %v3083 = vand.u32 %v2987, 5
        %v3084 = vand.u32 %v2988, 5
        %v3085 = vand.u32 %v2989, 5
        %v3086 = vand.u32 %v2990, 5
        %v3087 = vand.u32 %v2991, 5
        %v3088 = vand.u32 %v2992, 5
        %v3089 = vand.u32 %v2993, 5
        %v3090 = vand.u32 %v2994, 5
        %v3091 = vand.u32 %v2995, 5
        %v3092 = vand.u32 %v2996, 5
        %v3093 = vand.u32 %v2997, 5
        %v3094 = vand.u32 %v2998, 5
        %v3095 = vand.u32 %v2999, 5
        %v3096 = vand.u32 %v3000, 5
        %v3097 = vand.u32 %v3001, 5
        %vm3098 = vcmp.eq.s32.totalorder %v3066, 5
        %vm3099 = vcmp.eq.s32.totalorder %v3067, 5
        %vm3100 = vcmp.eq.s32.totalorder %v3068, 5
        %vm3101 = vcmp.eq.s32.totalorder %v3069, 5
        %vm3102 = vcmp.eq.s32.totalorder %v3070, 5
        %vm3103 = vcmp.eq.s32.totalorder %v3071, 5
        %vm3104 = vcmp.eq.s32.totalorder %v3072, 5
        %vm3105 = vcmp.eq.s32.totalorder %v3073, 5
        %vm3106 = vcmp.eq.s32.totalorder %v3074, 5
        %vm3107 = vcmp.eq.s32.totalorder %v3075, 5
        %vm3108 = vcmp.eq.s32.totalorder %v3076, 5
        %vm3109 = vcmp.eq.s32.totalorder %v3077, 5
        %vm3110 = vcmp.eq.s32.totalorder %v3078, 5
        %vm3111 = vcmp.eq.s32.totalorder %v3079, 5
        %vm3112 = vcmp.eq.s32.totalorder %v3080, 5
        %vm3113 = vcmp.eq.s32.totalorder %v3081, 5
        %vm3114 = vcmp.eq.s32.totalorder %v3082, 5
        %vm3115 = vcmp.eq.s32.totalorder %v3083, 5
        %vm3116 = vcmp.eq.s32.totalorder %v3084, 5
        %vm3117 = vcmp.eq.s32.totalorder %v3085, 5
        %vm3118 = vcmp.eq.s32.totalorder %v3086, 5
        %vm3119 = vcmp.eq.s32.totalorder %v3087, 5
        %vm3120 = vcmp.eq.s32.totalorder %v3088, 5
        %vm3121 = vcmp.eq.s32.totalorder %v3089, 5
        %vm3122 = vcmp.eq.s32.totalorder %v3090, 5
        %vm3123 = vcmp.eq.s32.totalorder %v3091, 5
        %vm3124 = vcmp.eq.s32.totalorder %v3092, 5
        %vm3125 = vcmp.eq.s32.totalorder %v3093, 5
        %vm3126 = vcmp.eq.s32.totalorder %v3094, 5
        %vm3127 = vcmp.eq.s32.totalorder %v3095, 5
        %vm3128 = vcmp.eq.s32.totalorder %v3096, 5
        %vm3129 = vcmp.eq.s32.totalorder %v3097, 5
        %v3130 = vsel %vm3098, %v3035, 0.0
        %v3131 = vsel %vm3099, %v3034, 0.0
        %v3132 = vsel %vm3100, %v3065, 0.0
        %v3133 = vsel %vm3101, %v3064, 0.0
        %v3134 = vsel %vm3102, %v3063, 0.0
        %v3135 = vsel %vm3103, %v3062, 0.0
        %v3136 = vsel %vm3104, %v3061, 0.0
        %v3137 = vsel %vm3105, %v3060, 0.0
        %v3138 = vsel %vm3106, %v3059, 0.0
        %v3139 = vsel %vm3107, %v3058, 0.0
        %v3140 = vsel %vm3108, %v3057, 0.0
        %v3141 = vsel %vm3109, %v3056, 0.0
        %v3142 = vsel %vm3110, %v3055, 0.0
        %v3143 = vsel %vm3111, %v3054, 0.0
        %v3144 = vsel %vm3112, %v3053, 0.0
        %v3145 = vsel %vm3113, %v3052, 0.0
        %v3146 = vsel %vm3114, %v3051, 0.0
        %v3147 = vsel %vm3115, %v3050, 0.0
        %v3148 = vsel %vm3116, %v3049, 0.0
        %v3149 = vsel %vm3117, %v3048, 0.0
        %v3150 = vsel %vm3118, %v3047, 0.0
        %v3151 = vsel %vm3119, %v3046, 0.0
        %v3152 = vsel %vm3120, %v3045, 0.0
        %v3153 = vsel %vm3121, %v3044, 0.0
        %v3154 = vsel %vm3122, %v3043, 0.0
        %v3155 = vsel %vm3123, %v3042, 0.0
        %v3156 = vsel %vm3124, %v3041, 0.0
        %v3157 = vsel %vm3125, %v3040, 0.0
        %v3158 = vsel %vm3126, %v3039, 0.0
        %v3159 = vsel %vm3127, %v3038, 0.0
        %v3160 = vsel %vm3128, %v3037, 0.0
        %v3161 = vsel %vm3129, %v3036, 0.0
        %3162 = vst [vmem:[#allocation2] sm:$0xff] %v3130
        %3163 = vst [vmem:[#allocation2 + $0x8] sm:$0xff] %v3131
        %3164 = vst [vmem:[#allocation2 + $0x10] sm:$0xff] %v3132
        %3165 = vst [vmem:[#allocation2 + $0x18] sm:$0xff] %v3133
        %3166 = vst [vmem:[#allocation2 + $0x20] sm:$0xff] %v3134
        %3167 = vst [vmem:[#allocation2 + $0x28] sm:$0xff] %v3135
        %3168 = vst [vmem:[#allocation2 + $0x30] sm:$0xff] %v3136
        %3169 = vst [vmem:[#allocation2 + $0x38] sm:$0xff] %v3137
        %3170 = vst [vmem:[#allocation2 + $0x40] sm:$0xff] %v3138
        %3171 = vst [vmem:[#allocation2 + $0x48] sm:$0xff] %v3139
        %3172 = vst [vmem:[#allocation2 + $0x50] sm:$0xff] %v3140
        %3173 = vst [vmem:[#allocation2 + $0x58] sm:$0xff] %v3141
        %3174 = vst [vmem:[#allocation2 + $0x60] sm:$0xff] %v3142
        %3175 = vst [vmem:[#allocation2 + $0x68] sm:$0xff] %v3143
        %3176 = vst [vmem:[#allocation2 + $0x70] sm:$0xff] %v3144
        %3177 = vst [vmem:[#allocation2 + $0x78] sm:$0xff] %v3145
        %3178 = vst [vmem:[#allocation2 + $0x80] sm:$0xff] %v3146
        %3179 = vst [vmem:[#allocation2 + $0x88] sm:$0xff] %v3147
        %3180 = vst [vmem:[#allocation2 + $0x90] sm:$0xff] %v3148
        %3181 = vst [vmem:[#allocation2 + $0x98] sm:$0xff] %v3149
        %3182 = vst [vmem:[#allocation2 + $0xa0] sm:$0xff] %v3150
        %3183 = vst [vmem:[#allocation2 + $0xa8] sm:$0xff] %v3151
        %3184 = vst [vmem:[#allocation2 + $0xb0] sm:$0xff] %v3152
        %3185 = vst [vmem:[#allocation2 + $0xb8] sm:$0xff] %v3153
        %3186 = vst [vmem:[#allocation2 + $0xc0] sm:$0xff] %v3154
        %3187 = vst [vmem:[#allocation2 + $0xc8] sm:$0xff] %v3155
        %3188 = vst [vmem:[#allocation2 + $0xd0] sm:$0xff] %v3156
        %3189 = vst [vmem:[#allocation2 + $0xd8] sm:$0xff] %v3157
        %3190 = vst [vmem:[#allocation2 + $0xe0] sm:$0xff] %v3158
        %3191 = vst [vmem:[#allocation2 + $0xe8] sm:$0xff] %v3159
        %3192 = vst [vmem:[#allocation2 + $0xf0] sm:$0xff] %v3160
        %3193 = vst [vmem:[#allocation2 + $0xf8] sm:$0xff] %v3161
        %v3194 = vand.u32 %v2970, 1
        %v3195 = vand.u32 %v2971, 1
        %v3196 = vand.u32 %v2972, 1
        %v3197 = vand.u32 %v2973, 1
        %v3198 = vand.u32 %v2974, 1
        %v3199 = vand.u32 %v2975, 1
        %v3200 = vand.u32 %v2976, 1
        %v3201 = vand.u32 %v2977, 1
        %v3202 = vand.u32 %v2978, 1
        %v3203 = vand.u32 %v2979, 1
        %v3204 = vand.u32 %v2980, 1
        %v3205 = vand.u32 %v2981, 1
        %v3206 = vand.u32 %v2982, 1
        %v3207 = vand.u32 %v2983, 1
        %v3208 = vand.u32 %v2984, 1
        %v3209 = vand.u32 %v2985, 1
        %v3210 = vand.u32 %v2986, 1
        %v3211 = vand.u32 %v2987, 1
        %v3212 = vand.u32 %v2988, 1
        %v3213 = vand.u32 %v2989, 1
        %v3214 = vand.u32 %v2990, 1
        %v3215 = vand.u32 %v2991, 1
        %v3216 = vand.u32 %v2992, 1
        %v3217 = vand.u32 %v2993, 1
        %v3218 = vand.u32 %v2994, 1
        %v3219 = vand.u32 %v2995, 1
        %v3220 = vand.u32 %v2996, 1
        %v3221 = vand.u32 %v2997, 1
        %v3222 = vand.u32 %v2998, 1
        %v3223 = vand.u32 %v2999, 1
        %v3224 = vand.u32 %v3000, 1
        %v3225 = vand.u32 %v3001, 1
        %vm3226 = vcmp.eq.s32.totalorder %v3194, 1
        %vm3227 = vcmp.eq.s32.totalorder %v3195, 1
        %vm3228 = vcmp.eq.s32.totalorder %v3196, 1
        %vm3229 = vcmp.eq.s32.totalorder %v3197, 1
        %vm3230 = vcmp.eq.s32.totalorder %v3198, 1
        %vm3231 = vcmp.eq.s32.totalorder %v3199, 1
        %vm3232 = vcmp.eq.s32.totalorder %v3200, 1
        %vm3233 = vcmp.eq.s32.totalorder %v3201, 1
        %vm3234 = vcmp.eq.s32.totalorder %v3202, 1
        %vm3235 = vcmp.eq.s32.totalorder %v3203, 1
        %vm3236 = vcmp.eq.s32.totalorder %v3204, 1
        %vm3237 = vcmp.eq.s32.totalorder %v3205, 1
        %vm3238 = vcmp.eq.s32.totalorder %v3206, 1
        %vm3239 = vcmp.eq.s32.totalorder %v3207, 1
        %vm3240 = vcmp.eq.s32.totalorder %v3208, 1
        %vm3241 = vcmp.eq.s32.totalorder %v3209, 1
        %vm3242 = vcmp.eq.s32.totalorder %v3210, 1
        %vm3243 = vcmp.eq.s32.totalorder %v3211, 1
        %vm3244 = vcmp.eq.s32.totalorder %v3212, 1
        %vm3245 = vcmp.eq.s32.totalorder %v3213, 1
        %vm3246 = vcmp.eq.s32.totalorder %v3214, 1
        %vm3247 = vcmp.eq.s32.totalorder %v3215, 1
        %vm3248 = vcmp.eq.s32.totalorder %v3216, 1
        %vm3249 = vcmp.eq.s32.totalorder %v3217, 1
        %vm3250 = vcmp.eq.s32.totalorder %v3218, 1
        %vm3251 = vcmp.eq.s32.totalorder %v3219, 1
        %vm3252 = vcmp.eq.s32.totalorder %v3220, 1
        %vm3253 = vcmp.eq.s32.totalorder %v3221, 1
        %vm3254 = vcmp.eq.s32.totalorder %v3222, 1
        %vm3255 = vcmp.eq.s32.totalorder %v3223, 1
        %vm3256 = vcmp.eq.s32.totalorder %v3224, 1
        %vm3257 = vcmp.eq.s32.totalorder %v3225, 1
        %v3258 = vsel %vm3226, %v2968, 0.0
        %v3259 = vsel %vm3227, %v2969, 0.0
        %v3260 = vsel %vm3228, %v2938, 0.0
        %v3261 = vsel %vm3229, %v2939, 0.0
        %v3262 = vsel %vm3230, %v2940, 0.0
        %v3263 = vsel %vm3231, %v2941, 0.0
        %v3264 = vsel %vm3232, %v2942, 0.0
        %v3265 = vsel %vm3233, %v2943, 0.0
        %v3266 = vsel %vm3234, %v2944, 0.0
        %v3267 = vsel %vm3235, %v2945, 0.0
        %v3268 = vsel %vm3236, %v2946, 0.0
        %v3269 = vsel %vm3237, %v2947, 0.0
        %v3270 = vsel %vm3238, %v2948, 0.0
        %v3271 = vsel %vm3239, %v2949, 0.0
        %v3272 = vsel %vm3240, %v2950, 0.0
        %v3273 = vsel %vm3241, %v2951, 0.0
        %v3274 = vsel %vm3242, %v2952, 0.0
        %v3275 = vsel %vm3243, %v2953, 0.0
        %v3276 = vsel %vm3244, %v2954, 0.0
        %v3277 = vsel %vm3245, %v2955, 0.0
        %v3278 = vsel %vm3246, %v2956, 0.0
        %v3279 = vsel %vm3247, %v2957, 0.0
        %v3280 = vsel %vm3248, %v2958, 0.0
        %v3281 = vsel %vm3249, %v2959, 0.0
        %v3282 = vsel %vm3250, %v2960, 0.0
        %v3283 = vsel %vm3251, %v2961, 0.0
        %v3284 = vsel %vm3252, %v2962, 0.0
        %v3285 = vsel %vm3253, %v2963, 0.0
        %v3286 = vsel %vm3254, %v2964, 0.0
        %v3287 = vsel %vm3255, %v2965, 0.0
        %v3288 = vsel %vm3256, %v2966, 0.0
        %v3289 = vsel %vm3257, %v2967, 0.0
        %3290 = vrot.lane.b32.xlu0 %v3258, 8
        %v3291 = vpop.permute.xlu0 %3290
        %3292 = vrot.lane.b32.xlu0 %v3259, 8
        %v3293 = vpop.permute.xlu0 %3292
        %3294 = vrot.lane.b32.xlu0 %v3260, 8
        %v3295 = vpop.permute.xlu0 %3294
        %3296 = vrot.lane.b32.xlu0 %v3261, 8
        %v3297 = vpop.permute.xlu0 %3296
        %3298 = vrot.lane.b32.xlu0 %v3262, 8
        %v3299 = vpop.permute.xlu0 %3298
        %3300 = vrot.lane.b32.xlu0 %v3263, 8
        %v3301 = vpop.permute.xlu0 %3300
        %3302 = vrot.lane.b32.xlu0 %v3264, 8
        %v3303 = vpop.permute.xlu0 %3302
        %3304 = vrot.lane.b32.xlu0 %v3265, 8
        %v3305 = vpop.permute.xlu0 %3304
        %3306 = vrot.lane.b32.xlu0 %v3266, 8
        %v3307 = vpop.permute.xlu0 %3306
        %3308 = vrot.lane.b32.xlu0 %v3267, 8
        %v3309 = vpop.permute.xlu0 %3308
        %3310 = vrot.lane.b32.xlu0 %v3268, 8
        %v3311 = vpop.permute.xlu0 %3310
        %3312 = vrot.lane.b32.xlu0 %v3269, 8
        %v3313 = vpop.permute.xlu0 %3312
        %3314 = vrot.lane.b32.xlu0 %v3270, 8
        %v3315 = vpop.permute.xlu0 %3314
        %3316 = vrot.lane.b32.xlu0 %v3271, 8
        %v3317 = vpop.permute.xlu0 %3316
        %3318 = vrot.lane.b32.xlu0 %v3272, 8
        %v3319 = vpop.permute.xlu0 %3318
        %3320 = vrot.lane.b32.xlu0 %v3273, 8
        %v3321 = vpop.permute.xlu0 %3320
        %3322 = vrot.lane.b32.xlu0 %v3274, 8
        %v3323 = vpop.permute.xlu0 %3322
        %3324 = vrot.lane.b32.xlu0 %v3275, 8
        %v3325 = vpop.permute.xlu0 %3324
        %3326 = vrot.lane.b32.xlu0 %v3276, 8
        %v3327 = vpop.permute.xlu0 %3326
        %3328 = vrot.lane.b32.xlu0 %v3277, 8
        %v3329 = vpop.permute.xlu0 %3328
        %3330 = vrot.lane.b32.xlu0 %v3278, 8
        %v3331 = vpop.permute.xlu0 %3330
        %3332 = vrot.lane.b32.xlu0 %v3279, 8
        %v3333 = vpop.permute.xlu0 %3332
        %3334 = vrot.lane.b32.xlu0 %v3280, 8
        %v3335 = vpop.permute.xlu0 %3334
        %3336 = vrot.lane.b32.xlu0 %v3281, 8
        %v3337 = vpop.permute.xlu0 %3336
        %3338 = vrot.lane.b32.xlu0 %v3282, 8
        %v3339 = vpop.permute.xlu0 %3338
        %3340 = vrot.lane.b32.xlu0 %v3283, 8
        %v3341 = vpop.permute.xlu0 %3340
        %3342 = vrot.lane.b32.xlu0 %v3284, 8
        %v3343 = vpop.permute.xlu0 %3342
        %3344 = vrot.lane.b32.xlu0 %v3285, 8
        %v3345 = vpop.permute.xlu0 %3344
        %3346 = vrot.lane.b32.xlu0 %v3286, 8
        %v3347 = vpop.permute.xlu0 %3346
        %3348 = vrot.lane.b32.xlu0 %v3287, 8
        %v3349 = vpop.permute.xlu0 %3348
        %3350 = vrot.lane.b32.xlu0 %v3288, 8
        %v3351 = vpop.permute.xlu0 %3350
        %3352 = vrot.lane.b32.xlu0 %v3289, 8
        %v3353 = vpop.permute.xlu0 %3352
        %v3354 = vld [vmem:[#allocation2] sm:$0xff]
        %v3355 = vld [vmem:[#allocation2 + $0x8] sm:$0xff]
        %v3356 = vld [vmem:[#allocation2 + $0x10] sm:$0xff]
        %v3357 = vld [vmem:[#allocation2 + $0x18] sm:$0xff]
        %v3358 = vld [vmem:[#allocation2 + $0x20] sm:$0xff]
        %v3359 = vld [vmem:[#allocation2 + $0x28] sm:$0xff]
        %v3360 = vld [vmem:[#allocation2 + $0x30] sm:$0xff]
        %v3361 = vld [vmem:[#allocation2 + $0x38] sm:$0xff]
        %v3362 = vld [vmem:[#allocation2 + $0x40] sm:$0xff]
        %v3363 = vld [vmem:[#allocation2 + $0x48] sm:$0xff]
        %v3364 = vld [vmem:[#allocation2 + $0x50] sm:$0xff]
        %v3365 = vld [vmem:[#allocation2 + $0x58] sm:$0xff]
        %v3366 = vld [vmem:[#allocation2 + $0x60] sm:$0xff]
        %v3367 = vld [vmem:[#allocation2 + $0x68] sm:$0xff]
        %v3368 = vld [vmem:[#allocation2 + $0x70] sm:$0xff]
        %v3369 = vld [vmem:[#allocation2 + $0x78] sm:$0xff]
        %v3370 = vld [vmem:[#allocation2 + $0x80] sm:$0xff]
        %v3371 = vld [vmem:[#allocation2 + $0x88] sm:$0xff]
        %v3372 = vld [vmem:[#allocation2 + $0x90] sm:$0xff]
        %v3373 = vld [vmem:[#allocation2 + $0x98] sm:$0xff]
        %v3374 = vld [vmem:[#allocation2 + $0xa0] sm:$0xff]
        %v3375 = vld [vmem:[#allocation2 + $0xa8] sm:$0xff]
        %v3376 = vld [vmem:[#allocation2 + $0xb0] sm:$0xff]
        %v3377 = vld [vmem:[#allocation2 + $0xb8] sm:$0xff]
        %v3378 = vld [vmem:[#allocation2 + $0xc0] sm:$0xff]
        %v3379 = vld [vmem:[#allocation2 + $0xc8] sm:$0xff]
        %v3380 = vld [vmem:[#allocation2 + $0xd0] sm:$0xff]
        %v3381 = vld [vmem:[#allocation2 + $0xd8] sm:$0xff]
        %v3382 = vld [vmem:[#allocation2 + $0xe0] sm:$0xff]
        %v3383 = vld [vmem:[#allocation2 + $0xe8] sm:$0xff]
        %v3384 = vld [vmem:[#allocation2 + $0xf0] sm:$0xff]
        %v3385 = vld [vmem:[#allocation2 + $0xf8] sm:$0xff]
        %v3386 = vadd.f32 %v3354, %v3291
        %v3387 = vadd.f32 %v3355, %v3293
        %v3388 = vadd.f32 %v3356, %v3295
        %v3389 = vadd.f32 %v3357, %v3297
        %v3390 = vadd.f32 %v3358, %v3299
        %v3391 = vadd.f32 %v3359, %v3301
        %v3392 = vadd.f32 %v3360, %v3303
        %v3393 = vadd.f32 %v3361, %v3305
        %v3394 = vadd.f32 %v3362, %v3307
        %v3395 = vadd.f32 %v3363, %v3309
        %v3396 = vadd.f32 %v3364, %v3311
        %v3397 = vadd.f32 %v3365, %v3313
        %v3398 = vadd.f32 %v3366, %v3315
        %v3399 = vadd.f32 %v3367, %v3317
        %v3400 = vadd.f32 %v3368, %v3319
        %v3401 = vadd.f32 %v3369, %v3321
        %v3402 = vadd.f32 %v3370, %v3323
        %v3403 = vadd.f32 %v3371, %v3325
        %v3404 = vadd.f32 %v3372, %v3327
        %v3405 = vadd.f32 %v3373, %v3329
        %v3406 = vadd.f32 %v3374, %v3331
        %v3407 = vadd.f32 %v3375, %v3333
        %v3408 = vadd.f32 %v3376, %v3335
        %v3409 = vadd.f32 %v3377, %v3337
        %v3410 = vadd.f32 %v3378, %v3339
        %v3411 = vadd.f32 %v3379, %v3341
        %v3412 = vadd.f32 %v3380, %v3343
        %v3413 = vadd.f32 %v3381, %v3345
        %v3414 = vadd.f32 %v3382, %v3347
        %v3415 = vadd.f32 %v3383, %v3349
        %v3416 = vadd.f32 %v3384, %v3351
        %v3417 = vadd.f32 %v3385, %v3353
        %3418 = vst [vmem:[#allocation2] sm:$0xff] %v3386
        %3419 = vst [vmem:[#allocation2 + $0x8] sm:$0xff] %v3387
        %3420 = vst [vmem:[#allocation2 + $0x10] sm:$0xff] %v3388
        %3421 = vst [vmem:[#allocation2 + $0x18] sm:$0xff] %v3389
        %3422 = vst [vmem:[#allocation2 + $0x20] sm:$0xff] %v3390
        %3423 = vst [vmem:[#allocation2 + $0x28] sm:$0xff] %v3391
        %3424 = vst [vmem:[#allocation2 + $0x30] sm:$0xff] %v3392
        %3425 = vst [vmem:[#allocation2 + $0x38] sm:$0xff] %v3393
        %3426 = vst [vmem:[#allocation2 + $0x40] sm:$0xff] %v3394
        %3427 = vst [vmem:[#allocation2 + $0x48] sm:$0xff] %v3395
        %3428 = vst [vmem:[#allocation2 + $0x50] sm:$0xff] %v3396
        %3429 = vst [vmem:[#allocation2 + $0x58] sm:$0xff] %v3397
        %3430 = vst [vmem:[#allocation2 + $0x60] sm:$0xff] %v3398
        %3431 = vst [vmem:[#allocation2 + $0x68] sm:$0xff] %v3399
        %3432 = vst [vmem:[#allocation2 + $0x70] sm:$0xff] %v3400
        %3433 = vst [vmem:[#allocation2 + $0x78] sm:$0xff] %v3401
        %3434 = vst [vmem:[#allocation2 + $0x80] sm:$0xff] %v3402
        %3435 = vst [vmem:[#allocation2 + $0x88] sm:$0xff] %v3403
        %3436 = vst [vmem:[#allocation2 + $0x90] sm:$0xff] %v3404
        %3437 = vst [vmem:[#allocation2 + $0x98] sm:$0xff] %v3405
        %3438 = vst [vmem:[#allocation2 + $0xa0] sm:$0xff] %v3406
        %3439 = vst [vmem:[#allocation2 + $0xa8] sm:$0xff] %v3407
        %3440 = vst [vmem:[#allocation2 + $0xb0] sm:$0xff] %v3408
        %3441 = vst [vmem:[#allocation2 + $0xb8] sm:$0xff] %v3409
        %3442 = vst [vmem:[#allocation2 + $0xc0] sm:$0xff] %v3410
        %3443 = vst [vmem:[#allocation2 + $0xc8] sm:$0xff] %v3411
        %3444 = vst [vmem:[#allocation2 + $0xd0] sm:$0xff] %v3412
        %3445 = vst [vmem:[#allocation2 + $0xd8] sm:$0xff] %v3413
        %3446 = vst [vmem:[#allocation2 + $0xe0] sm:$0xff] %v3414
        %3447 = vst [vmem:[#allocation2 + $0xe8] sm:$0xff] %v3415
        %3448 = vst [vmem:[#allocation2 + $0xf0] sm:$0xff] %v3416
        %3449 = vst [vmem:[#allocation2 + $0xf8] sm:$0xff] %v3417
        %v3450 = vrot.slane %v2938, 1
        %v3451 = vrot.slane %v2939, 1
        %v3452 = vrot.slane %v2940, 1
        %v3453 = vrot.slane %v2941, 1
        %v3454 = vrot.slane %v2942, 1
        %v3455 = vrot.slane %v2943, 1
        %v3456 = vrot.slane %v2944, 1
        %v3457 = vrot.slane %v2945, 1
        %v3458 = vrot.slane %v2946, 1
        %v3459 = vrot.slane %v2947, 1
        %v3460 = vrot.slane %v2948, 1
        %v3461 = vrot.slane %v2949, 1
        %v3462 = vrot.slane %v2950, 1
        %v3463 = vrot.slane %v2951, 1
        %v3464 = vrot.slane %v2952, 1
        %v3465 = vrot.slane %v2953, 1
        %v3466 = vrot.slane %v2954, 1
        %v3467 = vrot.slane %v2955, 1
        %v3468 = vrot.slane %v2956, 1
        %v3469 = vrot.slane %v2957, 1
        %v3470 = vrot.slane %v2958, 1
        %v3471 = vrot.slane %v2959, 1
        %v3472 = vrot.slane %v2960, 1
        %v3473 = vrot.slane %v2961, 1
        %v3474 = vrot.slane %v2962, 1
        %v3475 = vrot.slane %v2963, 1
        %v3476 = vrot.slane %v2964, 1
        %v3477 = vrot.slane %v2965, 1
        %v3478 = vrot.slane %v2966, 1
        %v3479 = vrot.slane %v2967, 1
        %v3480 = vrot.slane %v2968, 1
        %v3481 = vrot.slane %v2969, 1
        %v3482 = vsel %vm867, %v3480, %v3481
        %v3483 = vsel %vm867, %v3479, %v3480
        %v3484 = vsel %vm867, %v3478, %v3479
        %v3485 = vsel %vm867, %v3477, %v3478
        %v3486 = vsel %vm867, %v3476, %v3477
        %v3487 = vsel %vm867, %v3475, %v3476
        %v3488 = vsel %vm867, %v3474, %v3475
        %v3489 = vsel %vm867, %v3473, %v3474
        %v3490 = vsel %vm867, %v3472, %v3473
        %v3491 = vsel %vm867, %v3471, %v3472
        %v3492 = vsel %vm867, %v3470, %v3471
        %v3493 = vsel %vm867, %v3469, %v3470
        %v3494 = vsel %vm867, %v3468, %v3469
        %v3495 = vsel %vm867, %v3467, %v3468
        %v3496 = vsel %vm867, %v3466, %v3467
        %v3497 = vsel %vm867, %v3465, %v3466
        %v3498 = vsel %vm867, %v3464, %v3465
        %v3499 = vsel %vm867, %v3463, %v3464
        %v3500 = vsel %vm867, %v3462, %v3463
        %v3501 = vsel %vm867, %v3461, %v3462
        %v3502 = vsel %vm867, %v3460, %v3461
        %v3503 = vsel %vm867, %v3459, %v3460
        %v3504 = vsel %vm867, %v3458, %v3459
        %v3505 = vsel %vm867, %v3457, %v3458
        %v3506 = vsel %vm867, %v3456, %v3457
        %v3507 = vsel %vm867, %v3455, %v3456
        %v3508 = vsel %vm867, %v3454, %v3455
        %v3509 = vsel %vm867, %v3453, %v3454
        %v3510 = vsel %vm867, %v3452, %v3453
        %v3511 = vsel %vm867, %v3451, %v3452
        %v3512 = vsel %vm867, %v3450, %v3451
        %v3513 = vsel %vm867, %v3481, %v3450
        %v3514 = vand.u32 %v2970, 9
        %v3515 = vand.u32 %v2971, 9
        %v3516 = vand.u32 %v2972, 9
        %v3517 = vand.u32 %v2973, 9
        %v3518 = vand.u32 %v2974, 9
        %v3519 = vand.u32 %v2975, 9
        %v3520 = vand.u32 %v2976, 9
        %v3521 = vand.u32 %v2977, 9
        %v3522 = vand.u32 %v2978, 9
        %v3523 = vand.u32 %v2979, 9
        %v3524 = vand.u32 %v2980, 9
        %v3525 = vand.u32 %v2981, 9
        %v3526 = vand.u32 %v2982, 9
        %v3527 = vand.u32 %v2983, 9
        %v3528 = vand.u32 %v2984, 9
        %v3529 = vand.u32 %v2985, 9
        %v3530 = vand.u32 %v2986, 9
        %v3531 = vand.u32 %v2987, 9
        %v3532 = vand.u32 %v2988, 9
        %v3533 = vand.u32 %v2989, 9
        %v3534 = vand.u32 %v2990, 9
        %v3535 = vand.u32 %v2991, 9
        %v3536 = vand.u32 %v2992, 9
        %v3537 = vand.u32 %v2993, 9
        %v3538 = vand.u32 %v2994, 9
        %v3539 = vand.u32 %v2995, 9
        %v3540 = vand.u32 %v2996, 9
        %v3541 = vand.u32 %v2997, 9
        %v3542 = vand.u32 %v2998, 9
        %v3543 = vand.u32 %v2999, 9
        %v3544 = vand.u32 %v3000, 9
        %v3545 = vand.u32 %v3001, 9
        %vm3546 = vcmp.eq.s32.totalorder %v3514, 9
        %vm3547 = vcmp.eq.s32.totalorder %v3515, 9
        %vm3548 = vcmp.eq.s32.totalorder %v3516, 9
        %vm3549 = vcmp.eq.s32.totalorder %v3517, 9
        %vm3550 = vcmp.eq.s32.totalorder %v3518, 9
        %vm3551 = vcmp.eq.s32.totalorder %v3519, 9
        %vm3552 = vcmp.eq.s32.totalorder %v3520, 9
        %vm3553 = vcmp.eq.s32.totalorder %v3521, 9
        %vm3554 = vcmp.eq.s32.totalorder %v3522, 9
        %vm3555 = vcmp.eq.s32.totalorder %v3523, 9
        %vm3556 = vcmp.eq.s32.totalorder %v3524, 9
        %vm3557 = vcmp.eq.s32.totalorder %v3525, 9
        %vm3558 = vcmp.eq.s32.totalorder %v3526, 9
        %vm3559 = vcmp.eq.s32.totalorder %v3527, 9
        %vm3560 = vcmp.eq.s32.totalorder %v3528, 9
        %vm3561 = vcmp.eq.s32.totalorder %v3529, 9
        %vm3562 = vcmp.eq.s32.totalorder %v3530, 9
        %vm3563 = vcmp.eq.s32.totalorder %v3531, 9
        %vm3564 = vcmp.eq.s32.totalorder %v3532, 9
        %vm3565 = vcmp.eq.s32.totalorder %v3533, 9
        %vm3566 = vcmp.eq.s32.totalorder %v3534, 9
        %vm3567 = vcmp.eq.s32.totalorder %v3535, 9
        %vm3568 = vcmp.eq.s32.totalorder %v3536, 9
        %vm3569 = vcmp.eq.s32.totalorder %v3537, 9
        %vm3570 = vcmp.eq.s32.totalorder %v3538, 9
        %vm3571 = vcmp.eq.s32.totalorder %v3539, 9
        %vm3572 = vcmp.eq.s32.totalorder %v3540, 9
        %vm3573 = vcmp.eq.s32.totalorder %v3541, 9
        %vm3574 = vcmp.eq.s32.totalorder %v3542, 9
        %vm3575 = vcmp.eq.s32.totalorder %v3543, 9
        %vm3576 = vcmp.eq.s32.totalorder %v3544, 9
        %vm3577 = vcmp.eq.s32.totalorder %v3545, 9
        %v3578 = vsel %vm3546, %v3482, 0.0
        %v3579 = vsel %vm3547, %v3513, 0.0
        %v3580 = vsel %vm3548, %v3512, 0.0
        %v3581 = vsel %vm3549, %v3511, 0.0
        %v3582 = vsel %vm3550, %v3510, 0.0
        %v3583 = vsel %vm3551, %v3509, 0.0
        %v3584 = vsel %vm3552, %v3508, 0.0
        %v3585 = vsel %vm3553, %v3507, 0.0
        %v3586 = vsel %vm3554, %v3506, 0.0
        %v3587 = vsel %vm3555, %v3505, 0.0
        %v3588 = vsel %vm3556, %v3504, 0.0
        %v3589 = vsel %vm3557, %v3503, 0.0
        %v3590 = vsel %vm3558, %v3502, 0.0
        %v3591 = vsel %vm3559, %v3501, 0.0
        %v3592 = vsel %vm3560, %v3500, 0.0
        %v3593 = vsel %vm3561, %v3499, 0.0
        %v3594 = vsel %vm3562, %v3498, 0.0
        %v3595 = vsel %vm3563, %v3497, 0.0
        %v3596 = vsel %vm3564, %v3496, 0.0
        %v3597 = vsel %vm3565, %v3495, 0.0
        %v3598 = vsel %vm3566, %v3494, 0.0
        %v3599 = vsel %vm3567, %v3493, 0.0
        %v3600 = vsel %vm3568, %v3492, 0.0
        %v3601 = vsel %vm3569, %v3491, 0.0
        %v3602 = vsel %vm3570, %v3490, 0.0
        %v3603 = vsel %vm3571, %v3489, 0.0
        %v3604 = vsel %vm3572, %v3488, 0.0
        %v3605 = vsel %vm3573, %v3487, 0.0
        %v3606 = vsel %vm3574, %v3486, 0.0
        %v3607 = vsel %vm3575, %v3485, 0.0
        %v3608 = vsel %vm3576, %v3484, 0.0
        %v3609 = vsel %vm3577, %v3483, 0.0
        %3610 = vrot.lane.b32.xlu0 %v3578, 16
        %v3611 = vpop.permute.xlu0 %3610
        %3612 = vrot.lane.b32.xlu0 %v3579, 16
        %v3613 = vpop.permute.xlu0 %3612
        %3614 = vrot.lane.b32.xlu0 %v3580, 16
        %v3615 = vpop.permute.xlu0 %3614
        %3616 = vrot.lane.b32.xlu0 %v3581, 16
        %v3617 = vpop.permute.xlu0 %3616
        %3618 = vrot.lane.b32.xlu0 %v3582, 16
        %v3619 = vpop.permute.xlu0 %3618
        %3620 = vrot.lane.b32.xlu0 %v3583, 16
        %v3621 = vpop.permute.xlu0 %3620
        %3622 = vrot.lane.b32.xlu0 %v3584, 16
        %v3623 = vpop.permute.xlu0 %3622
        %3624 = vrot.lane.b32.xlu0 %v3585, 16
        %v3625 = vpop.permute.xlu0 %3624
        %3626 = vrot.lane.b32.xlu0 %v3586, 16
        %v3627 = vpop.permute.xlu0 %3626
        %3628 = vrot.lane.b32.xlu0 %v3587, 16
        %v3629 = vpop.permute.xlu0 %3628
        %3630 = vrot.lane.b32.xlu0 %v3588, 16
        %v3631 = vpop.permute.xlu0 %3630
        %3632 = vrot.lane.b32.xlu0 %v3589, 16
        %v3633 = vpop.permute.xlu0 %3632
        %3634 = vrot.lane.b32.xlu0 %v3590, 16
        %v3635 = vpop.permute.xlu0 %3634
        %3636 = vrot.lane.b32.xlu0 %v3591, 16
        %v3637 = vpop.permute.xlu0 %3636
        %3638 = vrot.lane.b32.xlu0 %v3592, 16
        %v3639 = vpop.permute.xlu0 %3638
        %3640 = vrot.lane.b32.xlu0 %v3593, 16
        %v3641 = vpop.permute.xlu0 %3640
        %3642 = vrot.lane.b32.xlu0 %v3594, 16
        %v3643 = vpop.permute.xlu0 %3642
        %3644 = vrot.lane.b32.xlu0 %v3595, 16
        %v3645 = vpop.permute.xlu0 %3644
        %3646 = vrot.lane.b32.xlu0 %v3596, 16
        %v3647 = vpop.permute.xlu0 %3646
        %3648 = vrot.lane.b32.xlu0 %v3597, 16
        %v3649 = vpop.permute.xlu0 %3648
        %3650 = vrot.lane.b32.xlu0 %v3598, 16
        %v3651 = vpop.permute.xlu0 %3650
        %3652 = vrot.lane.b32.xlu0 %v3599, 16
        %v3653 = vpop.permute.xlu0 %3652
        %3654 = vrot.lane.b32.xlu0 %v3600, 16
        %v3655 = vpop.permute.xlu0 %3654
        %3656 = vrot.lane.b32.xlu0 %v3601, 16
        %v3657 = vpop.permute.xlu0 %3656
        %3658 = vrot.lane.b32.xlu0 %v3602, 16
        %v3659 = vpop.permute.xlu0 %3658
        %3660 = vrot.lane.b32.xlu0 %v3603, 16
        %v3661 = vpop.permute.xlu0 %3660
        %3662 = vrot.lane.b32.xlu0 %v3604, 16
        %v3663 = vpop.permute.xlu0 %3662
        %3664 = vrot.lane.b32.xlu0 %v3605, 16
        %v3665 = vpop.permute.xlu0 %3664
        %3666 = vrot.lane.b32.xlu0 %v3606, 16
        %v3667 = vpop.permute.xlu0 %3666
        %3668 = vrot.lane.b32.xlu0 %v3607, 16
        %v3669 = vpop.permute.xlu0 %3668
        %3670 = vrot.lane.b32.xlu0 %v3608, 16
        %v3671 = vpop.permute.xlu0 %3670
        %3672 = vrot.lane.b32.xlu0 %v3609, 16
        %v3673 = vpop.permute.xlu0 %3672
        %v3674 = vld [vmem:[#allocation2] sm:$0xff]
        %v3675 = vld [vmem:[#allocation2 + $0x8] sm:$0xff]
        %v3676 = vld [vmem:[#allocation2 + $0x10] sm:$0xff]
        %v3677 = vld [vmem:[#allocation2 + $0x18] sm:$0xff]
        %v3678 = vld [vmem:[#allocation2 + $0x20] sm:$0xff]
        %v3679 = vld [vmem:[#allocation2 + $0x28] sm:$0xff]
        %v3680 = vld [vmem:[#allocation2 + $0x30] sm:$0xff]
        %v3681 = vld [vmem:[#allocation2 + $0x38] sm:$0xff]
        %v3682 = vld [vmem:[#allocation2 + $0x40] sm:$0xff]
        %v3683 = vld [vmem:[#allocation2 + $0x48] sm:$0xff]
        %v3684 = vld [vmem:[#allocation2 + $0x50] sm:$0xff]
        %v3685 = vld [vmem:[#allocation2 + $0x58] sm:$0xff]
        %v3686 = vld [vmem:[#allocation2 + $0x60] sm:$0xff]
        %v3687 = vld [vmem:[#allocation2 + $0x68] sm:$0xff]
        %v3688 = vld [vmem:[#allocation2 + $0x70] sm:$0xff]
        %v3689 = vld [vmem:[#allocation2 + $0x78] sm:$0xff]
        %v3690 = vld [vmem:[#allocation2 + $0x80] sm:$0xff]
        %v3691 = vld [vmem:[#allocation2 + $0x88] sm:$0xff]
        %v3692 = vld [vmem:[#allocation2 + $0x90] sm:$0xff]
        %v3693 = vld [vmem:[#allocation2 + $0x98] sm:$0xff]
        %v3694 = vld [vmem:[#allocation2 + $0xa0] sm:$0xff]
        %v3695 = vld [vmem:[#allocation2 + $0xa8] sm:$0xff]
        %v3696 = vld [vmem:[#allocation2 + $0xb0] sm:$0xff]
        %v3697 = vld [vmem:[#allocation2 + $0xb8] sm:$0xff]
        %v3698 = vld [vmem:[#allocation2 + $0xc0] sm:$0xff]
        %v3699 = vld [vmem:[#allocation2 + $0xc8] sm:$0xff]
        %v3700 = vld [vmem:[#allocation2 + $0xd0] sm:$0xff]
        %v3701 = vld [vmem:[#allocation2 + $0xd8] sm:$0xff]
        %v3702 = vld [vmem:[#allocation2 + $0xe0] sm:$0xff]
        %v3703 = vld [vmem:[#allocation2 + $0xe8] sm:$0xff]
        %v3704 = vld [vmem:[#allocation2 + $0xf0] sm:$0xff]
        %v3705 = vld [vmem:[#allocation2 + $0xf8] sm:$0xff]
        %v3706 = vadd.f32 %v3674, %v3611
        %v3707 = vadd.f32 %v3675, %v3613
        %v3708 = vadd.f32 %v3676, %v3615
        %v3709 = vadd.f32 %v3677, %v3617
        %v3710 = vadd.f32 %v3678, %v3619
        %v3711 = vadd.f32 %v3679, %v3621
        %v3712 = vadd.f32 %v3680, %v3623
        %v3713 = vadd.f32 %v3681, %v3625
        %v3714 = vadd.f32 %v3682, %v3627
        %v3715 = vadd.f32 %v3683, %v3629
        %v3716 = vadd.f32 %v3684, %v3631
        %v3717 = vadd.f32 %v3685, %v3633
        %v3718 = vadd.f32 %v3686, %v3635
        %v3719 = vadd.f32 %v3687, %v3637
        %v3720 = vadd.f32 %v3688, %v3639
        %v3721 = vadd.f32 %v3689, %v3641
        %v3722 = vadd.f32 %v3690, %v3643
        %v3723 = vadd.f32 %v3691, %v3645
        %v3724 = vadd.f32 %v3692, %v3647
        %v3725 = vadd.f32 %v3693, %v3649
        %v3726 = vadd.f32 %v3694, %v3651
        %v3727 = vadd.f32 %v3695, %v3653
        %v3728 = vadd.f32 %v3696, %v3655
        %v3729 = vadd.f32 %v3697, %v3657
        %v3730 = vadd.f32 %v3698, %v3659
        %v3731 = vadd.f32 %v3699, %v3661
        %v3732 = vadd.f32 %v3700, %v3663
        %v3733 = vadd.f32 %v3701, %v3665
        %v3734 = vadd.f32 %v3702, %v3667
        %v3735 = vadd.f32 %v3703, %v3669
        %v3736 = vadd.f32 %v3704, %v3671
        %v3737 = vadd.f32 %v3705, %v3673
        %3738 = vst [vmem:[#allocation2] sm:$0xff] %v3706
        %3739 = vst [vmem:[#allocation2 + $0x8] sm:$0xff] %v3707
        %3740 = vst [vmem:[#allocation2 + $0x10] sm:$0xff] %v3708
        %3741 = vst [vmem:[#allocation2 + $0x18] sm:$0xff] %v3709
        %3742 = vst [vmem:[#allocation2 + $0x20] sm:$0xff] %v3710
        %3743 = vst [vmem:[#allocation2 + $0x28] sm:$0xff] %v3711
        %3744 = vst [vmem:[#allocation2 + $0x30] sm:$0xff] %v3712
        %3745 = vst [vmem:[#allocation2 + $0x38] sm:$0xff] %v3713
        %3746 = vst [vmem:[#allocation2 + $0x40] sm:$0xff] %v3714
        %3747 = vst [vmem:[#allocation2 + $0x48] sm:$0xff] %v3715
        %3748 = vst [vmem:[#allocation2 + $0x50] sm:$0xff] %v3716
        %3749 = vst [vmem:[#allocation2 + $0x58] sm:$0xff] %v3717
        %3750 = vst [vmem:[#allocation2 + $0x60] sm:$0xff] %v3718
        %3751 = vst [vmem:[#allocation2 + $0x68] sm:$0xff] %v3719
        %3752 = vst [vmem:[#allocation2 + $0x70] sm:$0xff] %v3720
        %3753 = vst [vmem:[#allocation2 + $0x78] sm:$0xff] %v3721
        %3754 = vst [vmem:[#allocation2 + $0x80] sm:$0xff] %v3722
        %3755 = vst [vmem:[#allocation2 + $0x88] sm:$0xff] %v3723
        %3756 = vst [vmem:[#allocation2 + $0x90] sm:$0xff] %v3724
        %3757 = vst [vmem:[#allocation2 + $0x98] sm:$0xff] %v3725
        %3758 = vst [vmem:[#allocation2 + $0xa0] sm:$0xff] %v3726
        %3759 = vst [vmem:[#allocation2 + $0xa8] sm:$0xff] %v3727
        %3760 = vst [vmem:[#allocation2 + $0xb0] sm:$0xff] %v3728
        %3761 = vst [vmem:[#allocation2 + $0xb8] sm:$0xff] %v3729
        %3762 = vst [vmem:[#allocation2 + $0xc0] sm:$0xff] %v3730
        %3763 = vst [vmem:[#allocation2 + $0xc8] sm:$0xff] %v3731
        %3764 = vst [vmem:[#allocation2 + $0xd0] sm:$0xff] %v3732
        %3765 = vst [vmem:[#allocation2 + $0xd8] sm:$0xff] %v3733
        %3766 = vst [vmem:[#allocation2 + $0xe0] sm:$0xff] %v3734
        %3767 = vst [vmem:[#allocation2 + $0xe8] sm:$0xff] %v3735
        %3768 = vst [vmem:[#allocation2 + $0xf0] sm:$0xff] %v3736
        %3769 = vst [vmem:[#allocation2 + $0xf8] sm:$0xff] %v3737
        %v3770 = vand.u32 %v2970, 4
        %v3771 = vand.u32 %v2971, 4
        %v3772 = vand.u32 %v2972, 4
        %v3773 = vand.u32 %v2973, 4
        %v3774 = vand.u32 %v2974, 4
        %v3775 = vand.u32 %v2975, 4
        %v3776 = vand.u32 %v2976, 4
        %v3777 = vand.u32 %v2977, 4
        %v3778 = vand.u32 %v2978, 4
        %v3779 = vand.u32 %v2979, 4
        %v3780 = vand.u32 %v2980, 4
        %v3781 = vand.u32 %v2981, 4
        %v3782 = vand.u32 %v2982, 4
        %v3783 = vand.u32 %v2983, 4
        %v3784 = vand.u32 %v2984, 4
        %v3785 = vand.u32 %v2985, 4
        %v3786 = vand.u32 %v2986, 4
        %v3787 = vand.u32 %v2987, 4
        %v3788 = vand.u32 %v2988, 4
        %v3789 = vand.u32 %v2989, 4
        %v3790 = vand.u32 %v2990, 4
        %v3791 = vand.u32 %v2991, 4
        %v3792 = vand.u32 %v2992, 4
        %v3793 = vand.u32 %v2993, 4
        %v3794 = vand.u32 %v2994, 4
        %v3795 = vand.u32 %v2995, 4
        %v3796 = vand.u32 %v2996, 4
        %v3797 = vand.u32 %v2997, 4
        %v3798 = vand.u32 %v2998, 4
        %v3799 = vand.u32 %v2999, 4
        %v3800 = vand.u32 %v3000, 4
        %v3801 = vand.u32 %v3001, 4
        %vm3802 = vcmp.eq.s32.totalorder %v3770, 4
        %vm3803 = vcmp.eq.s32.totalorder %v3771, 4
        %vm3804 = vcmp.eq.s32.totalorder %v3772, 4
        %vm3805 = vcmp.eq.s32.totalorder %v3773, 4
        %vm3806 = vcmp.eq.s32.totalorder %v3774, 4
        %vm3807 = vcmp.eq.s32.totalorder %v3775, 4
        %vm3808 = vcmp.eq.s32.totalorder %v3776, 4
        %vm3809 = vcmp.eq.s32.totalorder %v3777, 4
        %vm3810 = vcmp.eq.s32.totalorder %v3778, 4
        %vm3811 = vcmp.eq.s32.totalorder %v3779, 4
        %vm3812 = vcmp.eq.s32.totalorder %v3780, 4
        %vm3813 = vcmp.eq.s32.totalorder %v3781, 4
        %vm3814 = vcmp.eq.s32.totalorder %v3782, 4
        %vm3815 = vcmp.eq.s32.totalorder %v3783, 4
        %vm3816 = vcmp.eq.s32.totalorder %v3784, 4
        %vm3817 = vcmp.eq.s32.totalorder %v3785, 4
        %vm3818 = vcmp.eq.s32.totalorder %v3786, 4
        %vm3819 = vcmp.eq.s32.totalorder %v3787, 4
        %vm3820 = vcmp.eq.s32.totalorder %v3788, 4
        %vm3821 = vcmp.eq.s32.totalorder %v3789, 4
        %vm3822 = vcmp.eq.s32.totalorder %v3790, 4
        %vm3823 = vcmp.eq.s32.totalorder %v3791, 4
        %vm3824 = vcmp.eq.s32.totalorder %v3792, 4
        %vm3825 = vcmp.eq.s32.totalorder %v3793, 4
        %vm3826 = vcmp.eq.s32.totalorder %v3794, 4
        %vm3827 = vcmp.eq.s32.totalorder %v3795, 4
        %vm3828 = vcmp.eq.s32.totalorder %v3796, 4
        %vm3829 = vcmp.eq.s32.totalorder %v3797, 4
        %vm3830 = vcmp.eq.s32.totalorder %v3798, 4
        %vm3831 = vcmp.eq.s32.totalorder %v3799, 4
        %vm3832 = vcmp.eq.s32.totalorder %v3800, 4
        %vm3833 = vcmp.eq.s32.totalorder %v3801, 4
        %v3834 = vsel %vm3802, %v3065, 0.0
        %v3835 = vsel %vm3803, %v3064, 0.0
        %v3836 = vsel %vm3804, %v3063, 0.0
        %v3837 = vsel %vm3805, %v3062, 0.0
        %v3838 = vsel %vm3806, %v3061, 0.0
        %v3839 = vsel %vm3807, %v3060, 0.0
        %v3840 = vsel %vm3808, %v3059, 0.0
        %v3841 = vsel %vm3809, %v3058, 0.0
        %v3842 = vsel %vm3810, %v3057, 0.0
        %v3843 = vsel %vm3811, %v3056, 0.0
        %v3844 = vsel %vm3812, %v3055, 0.0
        %v3845 = vsel %vm3813, %v3054, 0.0
        %v3846 = vsel %vm3814, %v3053, 0.0
        %v3847 = vsel %vm3815, %v3052, 0.0
        %v3848 = vsel %vm3816, %v3051, 0.0
        %v3849 = vsel %vm3817, %v3050, 0.0
        %v3850 = vsel %vm3818, %v3049, 0.0
        %v3851 = vsel %vm3819, %v3048, 0.0
        %v3852 = vsel %vm3820, %v3047, 0.0
        %v3853 = vsel %vm3821, %v3046, 0.0
        %v3854 = vsel %vm3822, %v3045, 0.0
        %v3855 = vsel %vm3823, %v3044, 0.0
        %v3856 = vsel %vm3824, %v3043, 0.0
        %v3857 = vsel %vm3825, %v3042, 0.0
        %v3858 = vsel %vm3826, %v3041, 0.0
        %v3859 = vsel %vm3827, %v3040, 0.0
        %v3860 = vsel %vm3828, %v3039, 0.0
        %v3861 = vsel %vm3829, %v3038, 0.0
        %v3862 = vsel %vm3830, %v3037, 0.0
        %v3863 = vsel %vm3831, %v3036, 0.0
        %v3864 = vsel %vm3832, %v3035, 0.0
        %v3865 = vsel %vm3833, %v3034, 0.0
        %3866 = vrot.lane.b32.xlu0 %v3834, 24
        %v3867 = vpop.permute.xlu0 %3866
        %3868 = vrot.lane.b32.xlu0 %v3835, 24
        %v3869 = vpop.permute.xlu0 %3868
        %3870 = vrot.lane.b32.xlu0 %v3836, 24
        %v3871 = vpop.permute.xlu0 %3870
        %3872 = vrot.lane.b32.xlu0 %v3837, 24
        %v3873 = vpop.permute.xlu0 %3872
        %3874 = vrot.lane.b32.xlu0 %v3838, 24
        %v3875 = vpop.permute.xlu0 %3874
        %3876 = vrot.lane.b32.xlu0 %v3839, 24
        %v3877 = vpop.permute.xlu0 %3876
        %3878 = vrot.lane.b32.xlu0 %v3840, 24
        %v3879 = vpop.permute.xlu0 %3878
        %3880 = vrot.lane.b32.xlu0 %v3841, 24
        %v3881 = vpop.permute.xlu0 %3880
        %3882 = vrot.lane.b32.xlu0 %v3842, 24
        %v3883 = vpop.permute.xlu0 %3882
        %3884 = vrot.lane.b32.xlu0 %v3843, 24
        %v3885 = vpop.permute.xlu0 %3884
        %3886 = vrot.lane.b32.xlu0 %v3844, 24
        %v3887 = vpop.permute.xlu0 %3886
        %3888 = vrot.lane.b32.xlu0 %v3845, 24
        %v3889 = vpop.permute.xlu0 %3888
        %3890 = vrot.lane.b32.xlu0 %v3846, 24
        %v3891 = vpop.permute.xlu0 %3890
        %3892 = vrot.lane.b32.xlu0 %v3847, 24
        %v3893 = vpop.permute.xlu0 %3892
        %3894 = vrot.lane.b32.xlu0 %v3848, 24
        %v3895 = vpop.permute.xlu0 %3894
        %3896 = vrot.lane.b32.xlu0 %v3849, 24
        %v3897 = vpop.permute.xlu0 %3896
        %3898 = vrot.lane.b32.xlu0 %v3850, 24
        %v3899 = vpop.permute.xlu0 %3898
        %3900 = vrot.lane.b32.xlu0 %v3851, 24
        %v3901 = vpop.permute.xlu0 %3900
        %3902 = vrot.lane.b32.xlu0 %v3852, 24
        %v3903 = vpop.permute.xlu0 %3902
        %3904 = vrot.lane.b32.xlu0 %v3853, 24
        %v3905 = vpop.permute.xlu0 %3904
        %3906 = vrot.lane.b32.xlu0 %v3854, 24
        %v3907 = vpop.permute.xlu0 %3906
        %3908 = vrot.lane.b32.xlu0 %v3855, 24
        %v3909 = vpop.permute.xlu0 %3908
        %3910 = vrot.lane.b32.xlu0 %v3856, 24
        %v3911 = vpop.permute.xlu0 %3910
        %3912 = vrot.lane.b32.xlu0 %v3857, 24
        %v3913 = vpop.permute.xlu0 %3912
        %3914 = vrot.lane.b32.xlu0 %v3858, 24
        %v3915 = vpop.permute.xlu0 %3914
        %3916 = vrot.lane.b32.xlu0 %v3859, 24
        %v3917 = vpop.permute.xlu0 %3916
        %3918 = vrot.lane.b32.xlu0 %v3860, 24
        %v3919 = vpop.permute.xlu0 %3918
        %3920 = vrot.lane.b32.xlu0 %v3861, 24
        %v3921 = vpop.permute.xlu0 %3920
        %3922 = vrot.lane.b32.xlu0 %v3862, 24
        %v3923 = vpop.permute.xlu0 %3922
        %3924 = vrot.lane.b32.xlu0 %v3863, 24
        %v3925 = vpop.permute.xlu0 %3924
        %3926 = vrot.lane.b32.xlu0 %v3864, 24
        %v3927 = vpop.permute.xlu0 %3926
        %3928 = vrot.lane.b32.xlu0 %v3865, 24
        %v3929 = vpop.permute.xlu0 %3928
        %v3930 = vld [vmem:[#allocation2] sm:$0xff]
        %v3931 = vld [vmem:[#allocation2 + $0x8] sm:$0xff]
        %v3932 = vld [vmem:[#allocation2 + $0x10] sm:$0xff]
        %v3933 = vld [vmem:[#allocation2 + $0x18] sm:$0xff]
        %v3934 = vld [vmem:[#allocation2 + $0x20] sm:$0xff]
        %v3935 = vld [vmem:[#allocation2 + $0x28] sm:$0xff]
        %v3936 = vld [vmem:[#allocation2 + $0x30] sm:$0xff]
        %v3937 = vld [vmem:[#allocation2 + $0x38] sm:$0xff]
        %v3938 = vld [vmem:[#allocation2 + $0x40] sm:$0xff]
        %v3939 = vld [vmem:[#allocation2 + $0x48] sm:$0xff]
        %v3940 = vld [vmem:[#allocation2 + $0x50] sm:$0xff]
        %v3941 = vld [vmem:[#allocation2 + $0x58] sm:$0xff]
        %v3942 = vld [vmem:[#allocation2 + $0x60] sm:$0xff]
        %v3943 = vld [vmem:[#allocation2 + $0x68] sm:$0xff]
        %v3944 = vld [vmem:[#allocation2 + $0x70] sm:$0xff]
        %v3945 = vld [vmem:[#allocation2 + $0x78] sm:$0xff]
        %v3946 = vld [vmem:[#allocation2 + $0x80] sm:$0xff]
        %v3947 = vld [vmem:[#allocation2 + $0x88] sm:$0xff]
        %v3948 = vld [vmem:[#allocation2 + $0x90] sm:$0xff]
        %v3949 = vld [vmem:[#allocation2 + $0x98] sm:$0xff]
        %v3950 = vld [vmem:[#allocation2 + $0xa0] sm:$0xff]
        %v3951 = vld [vmem:[#allocation2 + $0xa8] sm:$0xff]
        %v3952 = vld [vmem:[#allocation2 + $0xb0] sm:$0xff]
        %v3953 = vld [vmem:[#allocation2 + $0xb8] sm:$0xff]
        %v3954 = vld [vmem:[#allocation2 + $0xc0] sm:$0xff]
        %v3955 = vld [vmem:[#allocation2 + $0xc8] sm:$0xff]
        %v3956 = vld [vmem:[#allocation2 + $0xd0] sm:$0xff]
        %v3957 = vld [vmem:[#allocation2 + $0xd8] sm:$0xff]
        %v3958 = vld [vmem:[#allocation2 + $0xe0] sm:$0xff]
        %v3959 = vld [vmem:[#allocation2 + $0xe8] sm:$0xff]
        %v3960 = vld [vmem:[#allocation2 + $0xf0] sm:$0xff]
        %v3961 = vld [vmem:[#allocation2 + $0xf8] sm:$0xff]
        %v3962 = vadd.f32 %v3930, %v3867
        %v3963 = vadd.f32 %v3931, %v3869
        %v3964 = vadd.f32 %v3932, %v3871
        %v3965 = vadd.f32 %v3933, %v3873
        %v3966 = vadd.f32 %v3934, %v3875
        %v3967 = vadd.f32 %v3935, %v3877
        %v3968 = vadd.f32 %v3936, %v3879
        %v3969 = vadd.f32 %v3937, %v3881
        %v3970 = vadd.f32 %v3938, %v3883
        %v3971 = vadd.f32 %v3939, %v3885
        %v3972 = vadd.f32 %v3940, %v3887
        %v3973 = vadd.f32 %v3941, %v3889
        %v3974 = vadd.f32 %v3942, %v3891
        %v3975 = vadd.f32 %v3943, %v3893
        %v3976 = vadd.f32 %v3944, %v3895
        %v3977 = vadd.f32 %v3945, %v3897
        %v3978 = vadd.f32 %v3946, %v3899
        %v3979 = vadd.f32 %v3947, %v3901
        %v3980 = vadd.f32 %v3948, %v3903
        %v3981 = vadd.f32 %v3949, %v3905
        %v3982 = vadd.f32 %v3950, %v3907
        %v3983 = vadd.f32 %v3951, %v3909
        %v3984 = vadd.f32 %v3952, %v3911
        %v3985 = vadd.f32 %v3953, %v3913
        %v3986 = vadd.f32 %v3954, %v3915
        %v3987 = vadd.f32 %v3955, %v3917
        %v3988 = vadd.f32 %v3956, %v3919
        %v3989 = vadd.f32 %v3957, %v3921
        %v3990 = vadd.f32 %v3958, %v3923
        %v3991 = vadd.f32 %v3959, %v3925
        %v3992 = vadd.f32 %v3960, %v3927
        %v3993 = vadd.f32 %v3961, %v3929
        %3994 = vst [vmem:[#allocation2] sm:$0xff] %v3962
        %3995 = vst [vmem:[#allocation2 + $0x8] sm:$0xff] %v3963
        %3996 = vst [vmem:[#allocation2 + $0x10] sm:$0xff] %v3964
        %3997 = vst [vmem:[#allocation2 + $0x18] sm:$0xff] %v3965
        %3998 = vst [vmem:[#allocation2 + $0x20] sm:$0xff] %v3966
        %3999 = vst [vmem:[#allocation2 + $0x28] sm:$0xff] %v3967
        %4000 = vst [vmem:[#allocation2 + $0x30] sm:$0xff] %v3968
        %4001 = vst [vmem:[#allocation2 + $0x38] sm:$0xff] %v3969
        %4002 = vst [vmem:[#allocation2 + $0x40] sm:$0xff] %v3970
        %4003 = vst [vmem:[#allocation2 + $0x48] sm:$0xff] %v3971
        %4004 = vst [vmem:[#allocation2 + $0x50] sm:$0xff] %v3972
        %4005 = vst [vmem:[#allocation2 + $0x58] sm:$0xff] %v3973
        %4006 = vst [vmem:[#allocation2 + $0x60] sm:$0xff] %v3974
        %4007 = vst [vmem:[#allocation2 + $0x68] sm:$0xff] %v3975
        %4008 = vst [vmem:[#allocation2 + $0x70] sm:$0xff] %v3976
        %4009 = vst [vmem:[#allocation2 + $0x78] sm:$0xff] %v3977
        %4010 = vst [vmem:[#allocation2 + $0x80] sm:$0xff] %v3978
        %4011 = vst [vmem:[#allocation2 + $0x88] sm:$0xff] %v3979
        %4012 = vst [vmem:[#allocation2 + $0x90] sm:$0xff] %v3980
        %4013 = vst [vmem:[#allocation2 + $0x98] sm:$0xff] %v3981
        %4014 = vst [vmem:[#allocation2 + $0xa0] sm:$0xff] %v3982
        %4015 = vst [vmem:[#allocation2 + $0xa8] sm:$0xff] %v3983
        %4016 = vst [vmem:[#allocation2 + $0xb0] sm:$0xff] %v3984
        %4017 = vst [vmem:[#allocation2 + $0xb8] sm:$0xff] %v3985
        %4018 = vst [vmem:[#allocation2 + $0xc0] sm:$0xff] %v3986
        %4019 = vst [vmem:[#allocation2 + $0xc8] sm:$0xff] %v3987
        %4020 = vst [vmem:[#allocation2 + $0xd0] sm:$0xff] %v3988
        %4021 = vst [vmem:[#allocation2 + $0xd8] sm:$0xff] %v3989
        %4022 = vst [vmem:[#allocation2 + $0xe0] sm:$0xff] %v3990
        %4023 = vst [vmem:[#allocation2 + $0xe8] sm:$0xff] %v3991
        %4024 = vst [vmem:[#allocation2 + $0xf0] sm:$0xff] %v3992
        %4025 = vst [vmem:[#allocation2 + $0xf8] sm:$0xff] %v3993
        %4026 = vrot.lane.b32.xlu0 %v2938, 32
        %v4027 = vpop.permute.xlu0 %4026
        %4028 = vrot.lane.b32.xlu0 %v2939, 32
        %v4029 = vpop.permute.xlu0 %4028
        %4030 = vrot.lane.b32.xlu0 %v2940, 32
        %v4031 = vpop.permute.xlu0 %4030
        %4032 = vrot.lane.b32.xlu0 %v2941, 32
        %v4033 = vpop.permute.xlu0 %4032
        %4034 = vrot.lane.b32.xlu0 %v2942, 32
        %v4035 = vpop.permute.xlu0 %4034
        %4036 = vrot.lane.b32.xlu0 %v2943, 32
        %v4037 = vpop.permute.xlu0 %4036
        %4038 = vrot.lane.b32.xlu0 %v2944, 32
        %v4039 = vpop.permute.xlu0 %4038
        %4040 = vrot.lane.b32.xlu0 %v2945, 32
        %v4041 = vpop.permute.xlu0 %4040
        %4042 = vrot.lane.b32.xlu0 %v2946, 32
        %v4043 = vpop.permute.xlu0 %4042
        %4044 = vrot.lane.b32.xlu0 %v2947, 32
        %v4045 = vpop.permute.xlu0 %4044
        %4046 = vrot.lane.b32.xlu0 %v2948, 32
        %v4047 = vpop.permute.xlu0 %4046
        %4048 = vrot.lane.b32.xlu0 %v2949, 32
        %v4049 = vpop.permute.xlu0 %4048
        %4050 = vrot.lane.b32.xlu0 %v2950, 32
        %v4051 = vpop.permute.xlu0 %4050
        %4052 = vrot.lane.b32.xlu0 %v2951, 32
        %v4053 = vpop.permute.xlu0 %4052
        %4054 = vrot.lane.b32.xlu0 %v2952, 32
        %v4055 = vpop.permute.xlu0 %4054
        %4056 = vrot.lane.b32.xlu0 %v2953, 32
        %v4057 = vpop.permute.xlu0 %4056
        %4058 = vrot.lane.b32.xlu0 %v2954, 32
        %v4059 = vpop.permute.xlu0 %4058
        %4060 = vrot.lane.b32.xlu0 %v2955, 32
        %v4061 = vpop.permute.xlu0 %4060
        %4062 = vrot.lane.b32.xlu0 %v2956, 32
        %v4063 = vpop.permute.xlu0 %4062
        %4064 = vrot.lane.b32.xlu0 %v2957, 32
        %v4065 = vpop.permute.xlu0 %4064
        %4066 = vrot.lane.b32.xlu0 %v2958, 32
        %v4067 = vpop.permute.xlu0 %4066
        %4068 = vrot.lane.b32.xlu0 %v2959, 32
        %v4069 = vpop.permute.xlu0 %4068
        %4070 = vrot.lane.b32.xlu0 %v2960, 32
        %v4071 = vpop.permute.xlu0 %4070
        %4072 = vrot.lane.b32.xlu0 %v2961, 32
        %v4073 = vpop.permute.xlu0 %4072
        %4074 = vrot.lane.b32.xlu0 %v2962, 32
        %v4075 = vpop.permute.xlu0 %4074
        %4076 = vrot.lane.b32.xlu0 %v2963, 32
        %v4077 = vpop.permute.xlu0 %4076
        %4078 = vrot.lane.b32.xlu0 %v2964, 32
        %v4079 = vpop.permute.xlu0 %4078
        %4080 = vrot.lane.b32.xlu0 %v2965, 32
        %v4081 = vpop.permute.xlu0 %4080
        %4082 = vrot.lane.b32.xlu0 %v2966, 32
        %v4083 = vpop.permute.xlu0 %4082
        %4084 = vrot.lane.b32.xlu0 %v2967, 32
        %v4085 = vpop.permute.xlu0 %4084
        %4086 = vrot.lane.b32.xlu0 %v2968, 32
        %v4087 = vpop.permute.xlu0 %4086
        %4088 = vrot.lane.b32.xlu0 %v2969, 32
        %v4089 = vpop.permute.xlu0 %4088
        %v4090 = vld [vmem:[#allocation2] sm:$0xff]
        %v4091 = vld [vmem:[#allocation2 + $0x8] sm:$0xff]
        %v4092 = vld [vmem:[#allocation2 + $0x10] sm:$0xff]
        %v4093 = vld [vmem:[#allocation2 + $0x18] sm:$0xff]
        %v4094 = vld [vmem:[#allocation2 + $0x20] sm:$0xff]
        %v4095 = vld [vmem:[#allocation2 + $0x28] sm:$0xff]
        %v4096 = vld [vmem:[#allocation2 + $0x30] sm:$0xff]
        %v4097 = vld [vmem:[#allocation2 + $0x38] sm:$0xff]
        %v4098 = vld [vmem:[#allocation2 + $0x40] sm:$0xff]
        %v4099 = vld [vmem:[#allocation2 + $0x48] sm:$0xff]
        %v4100 = vld [vmem:[#allocation2 + $0x50] sm:$0xff]
        %v4101 = vld [vmem:[#allocation2 + $0x58] sm:$0xff]
        %v4102 = vld [vmem:[#allocation2 + $0x60] sm:$0xff]
        %v4103 = vld [vmem:[#allocation2 + $0x68] sm:$0xff]
        %v4104 = vld [vmem:[#allocation2 + $0x70] sm:$0xff]
        %v4105 = vld [vmem:[#allocation2 + $0x78] sm:$0xff]
        %v4106 = vld [vmem:[#allocation2 + $0x80] sm:$0xff]
        %v4107 = vld [vmem:[#allocation2 + $0x88] sm:$0xff]
        %v4108 = vld [vmem:[#allocation2 + $0x90] sm:$0xff]
        %v4109 = vld [vmem:[#allocation2 + $0x98] sm:$0xff]
        %v4110 = vld [vmem:[#allocation2 + $0xa0] sm:$0xff]
        %v4111 = vld [vmem:[#allocation2 + $0xa8] sm:$0xff]
        %v4112 = vld [vmem:[#allocation2 + $0xb0] sm:$0xff]
        %v4113 = vld [vmem:[#allocation2 + $0xb8] sm:$0xff]
        %v4114 = vld [vmem:[#allocation2 + $0xc0] sm:$0xff]
        %v4115 = vld [vmem:[#allocation2 + $0xc8] sm:$0xff]
        %v4116 = vld [vmem:[#allocation2 + $0xd0] sm:$0xff]
        %v4117 = vld [vmem:[#allocation2 + $0xd8] sm:$0xff]
        %v4118 = vld [vmem:[#allocation2 + $0xe0] sm:$0xff]
        %v4119 = vld [vmem:[#allocation2 + $0xe8] sm:$0xff]
        %v4120 = vld [vmem:[#allocation2 + $0xf0] sm:$0xff]
        %v4121 = vld [vmem:[#allocation2 + $0xf8] sm:$0xff]
        %v4122 = vadd.f32 %v4090, %v4027
        %v4123 = vadd.f32 %v4091, %v4029
        %v4124 = vadd.f32 %v4092, %v4031
        %v4125 = vadd.f32 %v4093, %v4033
        %v4126 = vadd.f32 %v4094, %v4035
        %v4127 = vadd.f32 %v4095, %v4037
        %v4128 = vadd.f32 %v4096, %v4039
        %v4129 = vadd.f32 %v4097, %v4041
        %v4130 = vadd.f32 %v4098, %v4043
        %v4131 = vadd.f32 %v4099, %v4045
        %v4132 = vadd.f32 %v4100, %v4047
        %v4133 = vadd.f32 %v4101, %v4049
        %v4134 = vadd.f32 %v4102, %v4051
        %v4135 = vadd.f32 %v4103, %v4053
        %v4136 = vadd.f32 %v4104, %v4055
        %v4137 = vadd.f32 %v4105, %v4057
        %v4138 = vadd.f32 %v4106, %v4059
        %v4139 = vadd.f32 %v4107, %v4061
        %v4140 = vadd.f32 %v4108, %v4063
        %v4141 = vadd.f32 %v4109, %v4065
        %v4142 = vadd.f32 %v4110, %v4067
        %v4143 = vadd.f32 %v4111, %v4069
        %v4144 = vadd.f32 %v4112, %v4071
        %v4145 = vadd.f32 %v4113, %v4073
        %v4146 = vadd.f32 %v4114, %v4075
        %v4147 = vadd.f32 %v4115, %v4077
        %v4148 = vadd.f32 %v4116, %v4079
        %v4149 = vadd.f32 %v4117, %v4081
        %v4150 = vadd.f32 %v4118, %v4083
        %v4151 = vadd.f32 %v4119, %v4085
        %v4152 = vadd.f32 %v4120, %v4087
        %v4153 = vadd.f32 %v4121, %v4089
        %4154 = vst [vmem:[#allocation2] sm:$0xff] %v4122
        %4155 = vst [vmem:[#allocation2 + $0x8] sm:$0xff] %v4123
        %4156 = vst [vmem:[#allocation2 + $0x10] sm:$0xff] %v4124
        %4157 = vst [vmem:[#allocation2 + $0x18] sm:$0xff] %v4125
        %4158 = vst [vmem:[#allocation2 + $0x20] sm:$0xff] %v4126
        %4159 = vst [vmem:[#allocation2 + $0x28] sm:$0xff] %v4127
        %4160 = vst [vmem:[#allocation2 + $0x30] sm:$0xff] %v4128
        %4161 = vst [vmem:[#allocation2 + $0x38] sm:$0xff] %v4129
        %4162 = vst [vmem:[#allocation2 + $0x40] sm:$0xff] %v4130
        %4163 = vst [vmem:[#allocation2 + $0x48] sm:$0xff] %v4131
        %4164 = vst [vmem:[#allocation2 + $0x50] sm:$0xff] %v4132
        %4165 = vst [vmem:[#allocation2 + $0x58] sm:$0xff] %v4133
        %4166 = vst [vmem:[#allocation2 + $0x60] sm:$0xff] %v4134
        %4167 = vst [vmem:[#allocation2 + $0x68] sm:$0xff] %v4135
        %4168 = vst [vmem:[#allocation2 + $0x70] sm:$0xff] %v4136
        %4169 = vst [vmem:[#allocation2 + $0x78] sm:$0xff] %v4137
        %4170 = vst [vmem:[#allocation2 + $0x80] sm:$0xff] %v4138
        %4171 = vst [vmem:[#allocation2 + $0x88] sm:$0xff] %v4139
        %4172 = vst [vmem:[#allocation2 + $0x90] sm:$0xff] %v4140
        %4173 = vst [vmem:[#allocation2 + $0x98] sm:$0xff] %v4141
        %4174 = vst [vmem:[#allocation2 + $0xa0] sm:$0xff] %v4142
        %4175 = vst [vmem:[#allocation2 + $0xa8] sm:$0xff] %v4143
        %4176 = vst [vmem:[#allocation2 + $0xb0] sm:$0xff] %v4144
        %4177 = vst [vmem:[#allocation2 + $0xb8] sm:$0xff] %v4145
        %4178 = vst [vmem:[#allocation2 + $0xc0] sm:$0xff] %v4146
        %4179 = vst [vmem:[#allocation2 + $0xc8] sm:$0xff] %v4147
        %4180 = vst [vmem:[#allocation2 + $0xd0] sm:$0xff] %v4148
        %4181 = vst [vmem:[#allocation2 + $0xd8] sm:$0xff] %v4149
        %4182 = vst [vmem:[#allocation2 + $0xe0] sm:$0xff] %v4150
        %4183 = vst [vmem:[#allocation2 + $0xe8] sm:$0xff] %v4151
        %4184 = vst [vmem:[#allocation2 + $0xf0] sm:$0xff] %v4152
        %4185 = vst [vmem:[#allocation2 + $0xf8] sm:$0xff] %v4153
        %v4186 = vand.u32 %v2970, 8
        %v4187 = vand.u32 %v2971, 8
        %v4188 = vand.u32 %v2972, 8
        %v4189 = vand.u32 %v2973, 8
        %v4190 = vand.u32 %v2974, 8
        %v4191 = vand.u32 %v2975, 8
        %v4192 = vand.u32 %v2976, 8
        %v4193 = vand.u32 %v2977, 8
        %v4194 = vand.u32 %v2978, 8
        %v4195 = vand.u32 %v2979, 8
        %v4196 = vand.u32 %v2980, 8
        %v4197 = vand.u32 %v2981, 8
        %v4198 = vand.u32 %v2982, 8
        %v4199 = vand.u32 %v2983, 8
        %v4200 = vand.u32 %v2984, 8
        %v4201 = vand.u32 %v2985, 8
        %v4202 = vand.u32 %v2986, 8
        %v4203 = vand.u32 %v2987, 8
        %v4204 = vand.u32 %v2988, 8
        %v4205 = vand.u32 %v2989, 8
        %v4206 = vand.u32 %v2990, 8
        %v4207 = vand.u32 %v2991, 8
        %v4208 = vand.u32 %v2992, 8
        %v4209 = vand.u32 %v2993, 8
        %v4210 = vand.u32 %v2994, 8
        %v4211 = vand.u32 %v2995, 8
        %v4212 = vand.u32 %v2996, 8
        %v4213 = vand.u32 %v2997, 8
        %v4214 = vand.u32 %v2998, 8
        %v4215 = vand.u32 %v2999, 8
        %v4216 = vand.u32 %v3000, 8
        %v4217 = vand.u32 %v3001, 8
        %vm4218 = vcmp.eq.s32.totalorder %v4186, 8
        %vm4219 = vcmp.eq.s32.totalorder %v4187, 8
        %vm4220 = vcmp.eq.s32.totalorder %v4188, 8
        %vm4221 = vcmp.eq.s32.totalorder %v4189, 8
        %vm4222 = vcmp.eq.s32.totalorder %v4190, 8
        %vm4223 = vcmp.eq.s32.totalorder %v4191, 8
        %vm4224 = vcmp.eq.s32.totalorder %v4192, 8
        %vm4225 = vcmp.eq.s32.totalorder %v4193, 8
        %vm4226 = vcmp.eq.s32.totalorder %v4194, 8
        %vm4227 = vcmp.eq.s32.totalorder %v4195, 8
        %vm4228 = vcmp.eq.s32.totalorder %v4196, 8
        %vm4229 = vcmp.eq.s32.totalorder %v4197, 8
        %vm4230 = vcmp.eq.s32.totalorder %v4198, 8
        %vm4231 = vcmp.eq.s32.totalorder %v4199, 8
        %vm4232 = vcmp.eq.s32.totalorder %v4200, 8
        %vm4233 = vcmp.eq.s32.totalorder %v4201, 8
        %vm4234 = vcmp.eq.s32.totalorder %v4202, 8
        %vm4235 = vcmp.eq.s32.totalorder %v4203, 8
        %vm4236 = vcmp.eq.s32.totalorder %v4204, 8
        %vm4237 = vcmp.eq.s32.totalorder %v4205, 8
        %vm4238 = vcmp.eq.s32.totalorder %v4206, 8
        %vm4239 = vcmp.eq.s32.totalorder %v4207, 8
        %vm4240 = vcmp.eq.s32.totalorder %v4208, 8
        %vm4241 = vcmp.eq.s32.totalorder %v4209, 8
        %vm4242 = vcmp.eq.s32.totalorder %v4210, 8
        %vm4243 = vcmp.eq.s32.totalorder %v4211, 8
        %vm4244 = vcmp.eq.s32.totalorder %v4212, 8
        %vm4245 = vcmp.eq.s32.totalorder %v4213, 8
        %vm4246 = vcmp.eq.s32.totalorder %v4214, 8
        %vm4247 = vcmp.eq.s32.totalorder %v4215, 8
        %vm4248 = vcmp.eq.s32.totalorder %v4216, 8
        %vm4249 = vcmp.eq.s32.totalorder %v4217, 8
        %v4250 = vsel %vm4218, %v3512, 0.0
        %v4251 = vsel %vm4219, %v3511, 0.0
        %v4252 = vsel %vm4220, %v3510, 0.0
        %v4253 = vsel %vm4221, %v3509, 0.0
        %v4254 = vsel %vm4222, %v3508, 0.0
        %v4255 = vsel %vm4223, %v3507, 0.0
        %v4256 = vsel %vm4224, %v3506, 0.0
        %v4257 = vsel %vm4225, %v3505, 0.0
        %v4258 = vsel %vm4226, %v3504, 0.0
        %v4259 = vsel %vm4227, %v3503, 0.0
        %v4260 = vsel %vm4228, %v3502, 0.0
        %v4261 = vsel %vm4229, %v3501, 0.0
        %v4262 = vsel %vm4230, %v3500, 0.0
        %v4263 = vsel %vm4231, %v3499, 0.0
        %v4264 = vsel %vm4232, %v3498, 0.0
        %v4265 = vsel %vm4233, %v3497, 0.0
        %v4266 = vsel %vm4234, %v3496, 0.0
        %v4267 = vsel %vm4235, %v3495, 0.0
        %v4268 = vsel %vm4236, %v3494, 0.0
        %v4269 = vsel %vm4237, %v3493, 0.0
        %v4270 = vsel %vm4238, %v3492, 0.0
        %v4271 = vsel %vm4239, %v3491, 0.0
        %v4272 = vsel %vm4240, %v3490, 0.0
        %v4273 = vsel %vm4241, %v3489, 0.0
        %v4274 = vsel %vm4242, %v3488, 0.0
        %v4275 = vsel %vm4243, %v3487, 0.0
        %v4276 = vsel %vm4244, %v3486, 0.0
        %v4277 = vsel %vm4245, %v3485, 0.0
        %v4278 = vsel %vm4246, %v3484, 0.0
        %v4279 = vsel %vm4247, %v3483, 0.0
        %v4280 = vsel %vm4248, %v3482, 0.0
        %v4281 = vsel %vm4249, %v3513, 0.0
        %4282 = vrot.lane.b32.xlu0 %v4250, 40
        %v4283 = vpop.permute.xlu0 %4282
        %4284 = vrot.lane.b32.xlu0 %v4251, 40
        %v4285 = vpop.permute.xlu0 %4284
        %4286 = vrot.lane.b32.xlu0 %v4252, 40
        %v4287 = vpop.permute.xlu0 %4286
        %4288 = vrot.lane.b32.xlu0 %v4253, 40
        %v4289 = vpop.permute.xlu0 %4288
        %4290 = vrot.lane.b32.xlu0 %v4254, 40
        %v4291 = vpop.permute.xlu0 %4290
        %4292 = vrot.lane.b32.xlu0 %v4255, 40
        %v4293 = vpop.permute.xlu0 %4292
        %4294 = vrot.lane.b32.xlu0 %v4256, 40
        %v4295 = vpop.permute.xlu0 %4294
        %4296 = vrot.lane.b32.xlu0 %v4257, 40
        %v4297 = vpop.permute.xlu0 %4296
        %4298 = vrot.lane.b32.xlu0 %v4258, 40
        %v4299 = vpop.permute.xlu0 %4298
        %4300 = vrot.lane.b32.xlu0 %v4259, 40
        %v4301 = vpop.permute.xlu0 %4300
        %4302 = vrot.lane.b32.xlu0 %v4260, 40
        %v4303 = vpop.permute.xlu0 %4302
        %4304 = vrot.lane.b32.xlu0 %v4261, 40
        %v4305 = vpop.permute.xlu0 %4304
        %4306 = vrot.lane.b32.xlu0 %v4262, 40
        %v4307 = vpop.permute.xlu0 %4306
        %4308 = vrot.lane.b32.xlu0 %v4263, 40
        %v4309 = vpop.permute.xlu0 %4308
        %4310 = vrot.lane.b32.xlu0 %v4264, 40
        %v4311 = vpop.permute.xlu0 %4310
        %4312 = vrot.lane.b32.xlu0 %v4265, 40
        %v4313 = vpop.permute.xlu0 %4312
        %4314 = vrot.lane.b32.xlu0 %v4266, 40
        %v4315 = vpop.permute.xlu0 %4314
        %4316 = vrot.lane.b32.xlu0 %v4267, 40
        %v4317 = vpop.permute.xlu0 %4316
        %4318 = vrot.lane.b32.xlu0 %v4268, 40
        %v4319 = vpop.permute.xlu0 %4318
        %4320 = vrot.lane.b32.xlu0 %v4269, 40
        %v4321 = vpop.permute.xlu0 %4320
        %4322 = vrot.lane.b32.xlu0 %v4270, 40
        %v4323 = vpop.permute.xlu0 %4322
        %4324 = vrot.lane.b32.xlu0 %v4271, 40
        %v4325 = vpop.permute.xlu0 %4324
        %4326 = vrot.lane.b32.xlu0 %v4272, 40
        %v4327 = vpop.permute.xlu0 %4326
        %4328 = vrot.lane.b32.xlu0 %v4273, 40
        %v4329 = vpop.permute.xlu0 %4328
        %4330 = vrot.lane.b32.xlu0 %v4274, 40
        %v4331 = vpop.permute.xlu0 %4330
        %4332 = vrot.lane.b32.xlu0 %v4275, 40
        %v4333 = vpop.permute.xlu0 %4332
        %4334 = vrot.lane.b32.xlu0 %v4276, 40
        %v4335 = vpop.permute.xlu0 %4334
        %4336 = vrot.lane.b32.xlu0 %v4277, 40
        %v4337 = vpop.permute.xlu0 %4336
        %4338 = vrot.lane.b32.xlu0 %v4278, 40
        %v4339 = vpop.permute.xlu0 %4338
        %4340 = vrot.lane.b32.xlu0 %v4279, 40
        %v4341 = vpop.permute.xlu0 %4340
        %4342 = vrot.lane.b32.xlu0 %v4280, 40
        %v4343 = vpop.permute.xlu0 %4342
        %4344 = vrot.lane.b32.xlu0 %v4281, 40
        %v4345 = vpop.permute.xlu0 %4344
        %v4346 = vld [vmem:[#allocation2] sm:$0xff]
        %v4347 = vld [vmem:[#allocation2 + $0x8] sm:$0xff]
        %v4348 = vld [vmem:[#allocation2 + $0x10] sm:$0xff]
        %v4349 = vld [vmem:[#allocation2 + $0x18] sm:$0xff]
        %v4350 = vld [vmem:[#allocation2 + $0x20] sm:$0xff]
        %v4351 = vld [vmem:[#allocation2 + $0x28] sm:$0xff]
        %v4352 = vld [vmem:[#allocation2 + $0x30] sm:$0xff]
        %v4353 = vld [vmem:[#allocation2 + $0x38] sm:$0xff]
        %v4354 = vld [vmem:[#allocation2 + $0x40] sm:$0xff]
        %v4355 = vld [vmem:[#allocation2 + $0x48] sm:$0xff]
        %v4356 = vld [vmem:[#allocation2 + $0x50] sm:$0xff]
        %v4357 = vld [vmem:[#allocation2 + $0x58] sm:$0xff]
        %v4358 = vld [vmem:[#allocation2 + $0x60] sm:$0xff]
        %v4359 = vld [vmem:[#allocation2 + $0x68] sm:$0xff]
        %v4360 = vld [vmem:[#allocation2 + $0x70] sm:$0xff]
        %v4361 = vld [vmem:[#allocation2 + $0x78] sm:$0xff]
        %v4362 = vld [vmem:[#allocation2 + $0x80] sm:$0xff]
        %v4363 = vld [vmem:[#allocation2 + $0x88] sm:$0xff]
        %v4364 = vld [vmem:[#allocation2 + $0x90] sm:$0xff]
        %v4365 = vld [vmem:[#allocation2 + $0x98] sm:$0xff]
        %v4366 = vld [vmem:[#allocation2 + $0xa0] sm:$0xff]
        %v4367 = vld [vmem:[#allocation2 + $0xa8] sm:$0xff]
        %v4368 = vld [vmem:[#allocation2 + $0xb0] sm:$0xff]
        %v4369 = vld [vmem:[#allocation2 + $0xb8] sm:$0xff]
        %v4370 = vld [vmem:[#allocation2 + $0xc0] sm:$0xff]
        %v4371 = vld [vmem:[#allocation2 + $0xc8] sm:$0xff]
        %v4372 = vld [vmem:[#allocation2 + $0xd0] sm:$0xff]
        %v4373 = vld [vmem:[#allocation2 + $0xd8] sm:$0xff]
        %v4374 = vld [vmem:[#allocation2 + $0xe0] sm:$0xff]
        %v4375 = vld [vmem:[#allocation2 + $0xe8] sm:$0xff]
        %v4376 = vld [vmem:[#allocation2 + $0xf0] sm:$0xff]
        %v4377 = vld [vmem:[#allocation2 + $0xf8] sm:$0xff]
        %v4378 = vadd.f32 %v4346, %v4283
        %v4379 = vadd.f32 %v4347, %v4285
        %v4380 = vadd.f32 %v4348, %v4287
        %v4381 = vadd.f32 %v4349, %v4289
        %v4382 = vadd.f32 %v4350, %v4291
        %v4383 = vadd.f32 %v4351, %v4293
        %v4384 = vadd.f32 %v4352, %v4295
        %v4385 = vadd.f32 %v4353, %v4297
        %v4386 = vadd.f32 %v4354, %v4299
        %v4387 = vadd.f32 %v4355, %v4301
        %v4388 = vadd.f32 %v4356, %v4303
        %v4389 = vadd.f32 %v4357, %v4305
        %v4390 = vadd.f32 %v4358, %v4307
        %v4391 = vadd.f32 %v4359, %v4309
        %v4392 = vadd.f32 %v4360, %v4311
        %v4393 = vadd.f32 %v4361, %v4313
        %v4394 = vadd.f32 %v4362, %v4315
        %v4395 = vadd.f32 %v4363, %v4317
        %v4396 = vadd.f32 %v4364, %v4319
        %v4397 = vadd.f32 %v4365, %v4321
        %v4398 = vadd.f32 %v4366, %v4323
        %v4399 = vadd.f32 %v4367, %v4325
        %v4400 = vadd.f32 %v4368, %v4327
        %v4401 = vadd.f32 %v4369, %v4329
        %v4402 = vadd.f32 %v4370, %v4331
        %v4403 = vadd.f32 %v4371, %v4333
        %v4404 = vadd.f32 %v4372, %v4335
        %v4405 = vadd.f32 %v4373, %v4337
        %v4406 = vadd.f32 %v4374, %v4339
        %v4407 = vadd.f32 %v4375, %v4341
        %v4408 = vadd.f32 %v4376, %v4343
        %v4409 = vadd.f32 %v4377, %v4345
        %4410 = vst [vmem:[#allocation2] sm:$0xff] %v4378
        %4411 = vst [vmem:[#allocation2 + $0x8] sm:$0xff] %v4379
        %4412 = vst [vmem:[#allocation2 + $0x10] sm:$0xff] %v4380
        %4413 = vst [vmem:[#allocation2 + $0x18] sm:$0xff] %v4381
        %4414 = vst [vmem:[#allocation2 + $0x20] sm:$0xff] %v4382
        %4415 = vst [vmem:[#allocation2 + $0x28] sm:$0xff] %v4383
        %4416 = vst [vmem:[#allocation2 + $0x30] sm:$0xff] %v4384
        %4417 = vst [vmem:[#allocation2 + $0x38] sm:$0xff] %v4385
        %4418 = vst [vmem:[#allocation2 + $0x40] sm:$0xff] %v4386
        %4419 = vst [vmem:[#allocation2 + $0x48] sm:$0xff] %v4387
        %4420 = vst [vmem:[#allocation2 + $0x50] sm:$0xff] %v4388
        %4421 = vst [vmem:[#allocation2 + $0x58] sm:$0xff] %v4389
        %4422 = vst [vmem:[#allocation2 + $0x60] sm:$0xff] %v4390
        %4423 = vst [vmem:[#allocation2 + $0x68] sm:$0xff] %v4391
        %4424 = vst [vmem:[#allocation2 + $0x70] sm:$0xff] %v4392
        %4425 = vst [vmem:[#allocation2 + $0x78] sm:$0xff] %v4393
        %4426 = vst [vmem:[#allocation2 + $0x80] sm:$0xff] %v4394
        %4427 = vst [vmem:[#allocation2 + $0x88] sm:$0xff] %v4395
        %4428 = vst [vmem:[#allocation2 + $0x90] sm:$0xff] %v4396
        %4429 = vst [vmem:[#allocation2 + $0x98] sm:$0xff] %v4397
        %4430 = vst [vmem:[#allocation2 + $0xa0] sm:$0xff] %v4398
        %4431 = vst [vmem:[#allocation2 + $0xa8] sm:$0xff] %v4399
        %4432 = vst [vmem:[#allocation2 + $0xb0] sm:$0xff] %v4400
        %4433 = vst [vmem:[#allocation2 + $0xb8] sm:$0xff] %v4401
        %4434 = vst [vmem:[#allocation2 + $0xc0] sm:$0xff] %v4402
        %4435 = vst [vmem:[#allocation2 + $0xc8] sm:$0xff] %v4403
        %4436 = vst [vmem:[#allocation2 + $0xd0] sm:$0xff] %v4404
        %4437 = vst [vmem:[#allocation2 + $0xd8] sm:$0xff] %v4405
        %4438 = vst [vmem:[#allocation2 + $0xe0] sm:$0xff] %v4406
        %4439 = vst [vmem:[#allocation2 + $0xe8] sm:$0xff] %v4407
        %4440 = vst [vmem:[#allocation2 + $0xf0] sm:$0xff] %v4408
        %4441 = vst [vmem:[#allocation2 + $0xf8] sm:$0xff] %v4409
        %v4442 = vand.u32 %v2970, 6
        %v4443 = vand.u32 %v2971, 6
        %v4444 = vand.u32 %v2972, 6
        %v4445 = vand.u32 %v2973, 6
        %v4446 = vand.u32 %v2974, 6
        %v4447 = vand.u32 %v2975, 6
        %v4448 = vand.u32 %v2976, 6
        %v4449 = vand.u32 %v2977, 6
        %v4450 = vand.u32 %v2978, 6
        %v4451 = vand.u32 %v2979, 6
        %v4452 = vand.u32 %v2980, 6
        %v4453 = vand.u32 %v2981, 6
        %v4454 = vand.u32 %v2982, 6
        %v4455 = vand.u32 %v2983, 6
        %v4456 = vand.u32 %v2984, 6
        %v4457 = vand.u32 %v2985, 6
        %v4458 = vand.u32 %v2986, 6
        %v4459 = vand.u32 %v2987, 6
        %v4460 = vand.u32 %v2988, 6
        %v4461 = vand.u32 %v2989, 6
        %v4462 = vand.u32 %v2990, 6
        %v4463 = vand.u32 %v2991, 6
        %v4464 = vand.u32 %v2992, 6
        %v4465 = vand.u32 %v2993, 6
        %v4466 = vand.u32 %v2994, 6
        %v4467 = vand.u32 %v2995, 6
        %v4468 = vand.u32 %v2996, 6
        %v4469 = vand.u32 %v2997, 6
        %v4470 = vand.u32 %v2998, 6
        %v4471 = vand.u32 %v2999, 6
        %v4472 = vand.u32 %v3000, 6
        %v4473 = vand.u32 %v3001, 6
        %vm4474 = vcmp.eq.s32.totalorder %v4442, 6
        %vm4475 = vcmp.eq.s32.totalorder %v4443, 6
        %vm4476 = vcmp.eq.s32.totalorder %v4444, 6
        %vm4477 = vcmp.eq.s32.totalorder %v4445, 6
        %vm4478 = vcmp.eq.s32.totalorder %v4446, 6
        %vm4479 = vcmp.eq.s32.totalorder %v4447, 6
        %vm4480 = vcmp.eq.s32.totalorder %v4448, 6
        %vm4481 = vcmp.eq.s32.totalorder %v4449, 6
        %vm4482 = vcmp.eq.s32.totalorder %v4450, 6
        %vm4483 = vcmp.eq.s32.totalorder %v4451, 6
        %vm4484 = vcmp.eq.s32.totalorder %v4452, 6
        %vm4485 = vcmp.eq.s32.totalorder %v4453, 6
        %vm4486 = vcmp.eq.s32.totalorder %v4454, 6
        %vm4487 = vcmp.eq.s32.totalorder %v4455, 6
        %vm4488 = vcmp.eq.s32.totalorder %v4456, 6
        %vm4489 = vcmp.eq.s32.totalorder %v4457, 6
        %vm4490 = vcmp.eq.s32.totalorder %v4458, 6
        %vm4491 = vcmp.eq.s32.totalorder %v4459, 6
        %vm4492 = vcmp.eq.s32.totalorder %v4460, 6
        %vm4493 = vcmp.eq.s32.totalorder %v4461, 6
        %vm4494 = vcmp.eq.s32.totalorder %v4462, 6
        %vm4495 = vcmp.eq.s32.totalorder %v4463, 6
        %vm4496 = vcmp.eq.s32.totalorder %v4464, 6
        %vm4497 = vcmp.eq.s32.totalorder %v4465, 6
        %vm4498 = vcmp.eq.s32.totalorder %v4466, 6
        %vm4499 = vcmp.eq.s32.totalorder %v4467, 6
        %vm4500 = vcmp.eq.s32.totalorder %v4468, 6
        %vm4501 = vcmp.eq.s32.totalorder %v4469, 6
        %vm4502 = vcmp.eq.s32.totalorder %v4470, 6
        %vm4503 = vcmp.eq.s32.totalorder %v4471, 6
        %vm4504 = vcmp.eq.s32.totalorder %v4472, 6
        %vm4505 = vcmp.eq.s32.totalorder %v4473, 6
        %v4506 = vsel %vm4474, %v3063, 0.0
        %v4507 = vsel %vm4475, %v3062, 0.0
        %v4508 = vsel %vm4476, %v3061, 0.0
        %v4509 = vsel %vm4477, %v3060, 0.0
        %v4510 = vsel %vm4478, %v3059, 0.0
        %v4511 = vsel %vm4479, %v3058, 0.0
        %v4512 = vsel %vm4480, %v3057, 0.0
        %v4513 = vsel %vm4481, %v3056, 0.0
        %v4514 = vsel %vm4482, %v3055, 0.0
        %v4515 = vsel %vm4483, %v3054, 0.0
        %v4516 = vsel %vm4484, %v3053, 0.0
        %v4517 = vsel %vm4485, %v3052, 0.0
        %v4518 = vsel %vm4486, %v3051, 0.0
        %v4519 = vsel %vm4487, %v3050, 0.0
        %v4520 = vsel %vm4488, %v3049, 0.0
        %v4521 = vsel %vm4489, %v3048, 0.0
        %v4522 = vsel %vm4490, %v3047, 0.0
        %v4523 = vsel %vm4491, %v3046, 0.0
        %v4524 = vsel %vm4492, %v3045, 0.0
        %v4525 = vsel %vm4493, %v3044, 0.0
        %v4526 = vsel %vm4494, %v3043, 0.0
        %v4527 = vsel %vm4495, %v3042, 0.0
        %v4528 = vsel %vm4496, %v3041, 0.0
        %v4529 = vsel %vm4497, %v3040, 0.0
        %v4530 = vsel %vm4498, %v3039, 0.0
        %v4531 = vsel %vm4499, %v3038, 0.0
        %v4532 = vsel %vm4500, %v3037, 0.0
        %v4533 = vsel %vm4501, %v3036, 0.0
        %v4534 = vsel %vm4502, %v3035, 0.0
        %v4535 = vsel %vm4503, %v3034, 0.0
        %v4536 = vsel %vm4504, %v3065, 0.0
        %v4537 = vsel %vm4505, %v3064, 0.0
        %4538 = vrot.lane.b32.xlu0 %v4506, 48
        %v4539 = vpop.permute.xlu0 %4538
        %4540 = vrot.lane.b32.xlu0 %v4507, 48
        %v4541 = vpop.permute.xlu0 %4540
        %4542 = vrot.lane.b32.xlu0 %v4508, 48
        %v4543 = vpop.permute.xlu0 %4542
        %4544 = vrot.lane.b32.xlu0 %v4509, 48
        %v4545 = vpop.permute.xlu0 %4544
        %4546 = vrot.lane.b32.xlu0 %v4510, 48
        %v4547 = vpop.permute.xlu0 %4546
        %4548 = vrot.lane.b32.xlu0 %v4511, 48
        %v4549 = vpop.permute.xlu0 %4548
        %4550 = vrot.lane.b32.xlu0 %v4512, 48
        %v4551 = vpop.permute.xlu0 %4550
        %4552 = vrot.lane.b32.xlu0 %v4513, 48
        %v4553 = vpop.permute.xlu0 %4552
        %4554 = vrot.lane.b32.xlu0 %v4514, 48
        %v4555 = vpop.permute.xlu0 %4554
        %4556 = vrot.lane.b32.xlu0 %v4515, 48
        %v4557 = vpop.permute.xlu0 %4556
        %4558 = vrot.lane.b32.xlu0 %v4516, 48
        %v4559 = vpop.permute.xlu0 %4558
        %4560 = vrot.lane.b32.xlu0 %v4517, 48
        %v4561 = vpop.permute.xlu0 %4560
        %4562 = vrot.lane.b32.xlu0 %v4518, 48
        %v4563 = vpop.permute.xlu0 %4562
        %4564 = vrot.lane.b32.xlu0 %v4519, 48
        %v4565 = vpop.permute.xlu0 %4564
        %4566 = vrot.lane.b32.xlu0 %v4520, 48
        %v4567 = vpop.permute.xlu0 %4566
        %4568 = vrot.lane.b32.xlu0 %v4521, 48
        %v4569 = vpop.permute.xlu0 %4568
        %4570 = vrot.lane.b32.xlu0 %v4522, 48
        %v4571 = vpop.permute.xlu0 %4570
        %4572 = vrot.lane.b32.xlu0 %v4523, 48
        %v4573 = vpop.permute.xlu0 %4572
        %4574 = vrot.lane.b32.xlu0 %v4524, 48
        %v4575 = vpop.permute.xlu0 %4574
        %4576 = vrot.lane.b32.xlu0 %v4525, 48
        %v4577 = vpop.permute.xlu0 %4576
        %4578 = vrot.lane.b32.xlu0 %v4526, 48
        %v4579 = vpop.permute.xlu0 %4578
        %4580 = vrot.lane.b32.xlu0 %v4527, 48
        %v4581 = vpop.permute.xlu0 %4580
        %4582 = vrot.lane.b32.xlu0 %v4528, 48
        %v4583 = vpop.permute.xlu0 %4582
        %4584 = vrot.lane.b32.xlu0 %v4529, 48
        %v4585 = vpop.permute.xlu0 %4584
        %4586 = vrot.lane.b32.xlu0 %v4530, 48
        %v4587 = vpop.permute.xlu0 %4586
        %4588 = vrot.lane.b32.xlu0 %v4531, 48
        %v4589 = vpop.permute.xlu0 %4588
        %4590 = vrot.lane.b32.xlu0 %v4532, 48
        %v4591 = vpop.permute.xlu0 %4590
        %4592 = vrot.lane.b32.xlu0 %v4533, 48
        %v4593 = vpop.permute.xlu0 %4592
        %4594 = vrot.lane.b32.xlu0 %v4534, 48
        %v4595 = vpop.permute.xlu0 %4594
        %4596 = vrot.lane.b32.xlu0 %v4535, 48
        %v4597 = vpop.permute.xlu0 %4596
        %4598 = vrot.lane.b32.xlu0 %v4536, 48
        %v4599 = vpop.permute.xlu0 %4598
        %4600 = vrot.lane.b32.xlu0 %v4537, 48
        %v4601 = vpop.permute.xlu0 %4600
        %v4602 = vld [vmem:[#allocation2] sm:$0xff]
        %v4603 = vld [vmem:[#allocation2 + $0x8] sm:$0xff]
        %v4604 = vld [vmem:[#allocation2 + $0x10] sm:$0xff]
        %v4605 = vld [vmem:[#allocation2 + $0x18] sm:$0xff]
        %v4606 = vld [vmem:[#allocation2 + $0x20] sm:$0xff]
        %v4607 = vld [vmem:[#allocation2 + $0x28] sm:$0xff]
        %v4608 = vld [vmem:[#allocation2 + $0x30] sm:$0xff]
        %v4609 = vld [vmem:[#allocation2 + $0x38] sm:$0xff]
        %v4610 = vld [vmem:[#allocation2 + $0x40] sm:$0xff]
        %v4611 = vld [vmem:[#allocation2 + $0x48] sm:$0xff]
        %v4612 = vld [vmem:[#allocation2 + $0x50] sm:$0xff]
        %v4613 = vld [vmem:[#allocation2 + $0x58] sm:$0xff]
        %v4614 = vld [vmem:[#allocation2 + $0x60] sm:$0xff]
        %v4615 = vld [vmem:[#allocation2 + $0x68] sm:$0xff]
        %v4616 = vld [vmem:[#allocation2 + $0x70] sm:$0xff]
        %v4617 = vld [vmem:[#allocation2 + $0x78] sm:$0xff]
        %v4618 = vld [vmem:[#allocation2 + $0x80] sm:$0xff]
        %v4619 = vld [vmem:[#allocation2 + $0x88] sm:$0xff]
        %v4620 = vld [vmem:[#allocation2 + $0x90] sm:$0xff]
        %v4621 = vld [vmem:[#allocation2 + $0x98] sm:$0xff]
        %v4622 = vld [vmem:[#allocation2 + $0xa0] sm:$0xff]
        %v4623 = vld [vmem:[#allocation2 + $0xa8] sm:$0xff]
        %v4624 = vld [vmem:[#allocation2 + $0xb0] sm:$0xff]
        %v4625 = vld [vmem:[#allocation2 + $0xb8] sm:$0xff]
        %v4626 = vld [vmem:[#allocation2 + $0xc0] sm:$0xff]
        %v4627 = vld [vmem:[#allocation2 + $0xc8] sm:$0xff]
        %v4628 = vld [vmem:[#allocation2 + $0xd0] sm:$0xff]
        %v4629 = vld [vmem:[#allocation2 + $0xd8] sm:$0xff]
        %v4630 = vld [vmem:[#allocation2 + $0xe0] sm:$0xff]
        %v4631 = vld [vmem:[#allocation2 + $0xe8] sm:$0xff]
        %v4632 = vld [vmem:[#allocation2 + $0xf0] sm:$0xff]
        %v4633 = vld [vmem:[#allocation2 + $0xf8] sm:$0xff]
        %v4634 = vadd.f32 %v4602, %v4539
        %v4635 = vadd.f32 %v4603, %v4541
        %v4636 = vadd.f32 %v4604, %v4543
        %v4637 = vadd.f32 %v4605, %v4545
        %v4638 = vadd.f32 %v4606, %v4547
        %v4639 = vadd.f32 %v4607, %v4549
        %v4640 = vadd.f32 %v4608, %v4551
        %v4641 = vadd.f32 %v4609, %v4553
        %v4642 = vadd.f32 %v4610, %v4555
        %v4643 = vadd.f32 %v4611, %v4557
        %v4644 = vadd.f32 %v4612, %v4559
        %v4645 = vadd.f32 %v4613, %v4561
        %v4646 = vadd.f32 %v4614, %v4563
        %v4647 = vadd.f32 %v4615, %v4565
        %v4648 = vadd.f32 %v4616, %v4567
        %v4649 = vadd.f32 %v4617, %v4569
        %v4650 = vadd.f32 %v4618, %v4571
        %v4651 = vadd.f32 %v4619, %v4573
        %v4652 = vadd.f32 %v4620, %v4575
        %v4653 = vadd.f32 %v4621, %v4577
        %v4654 = vadd.f32 %v4622, %v4579
        %v4655 = vadd.f32 %v4623, %v4581
        %v4656 = vadd.f32 %v4624, %v4583
        %v4657 = vadd.f32 %v4625, %v4585
        %v4658 = vadd.f32 %v4626, %v4587
        %v4659 = vadd.f32 %v4627, %v4589
        %v4660 = vadd.f32 %v4628, %v4591
        %v4661 = vadd.f32 %v4629, %v4593
        %v4662 = vadd.f32 %v4630, %v4595
        %v4663 = vadd.f32 %v4631, %v4597
        %v4664 = vadd.f32 %v4632, %v4599
        %v4665 = vadd.f32 %v4633, %v4601
        %4666 = vst [vmem:[#allocation2] sm:$0xff] %v4634
        %4667 = vst [vmem:[#allocation2 + $0x8] sm:$0xff] %v4635
        %4668 = vst [vmem:[#allocation2 + $0x10] sm:$0xff] %v4636
        %4669 = vst [vmem:[#allocation2 + $0x18] sm:$0xff] %v4637
        %4670 = vst [vmem:[#allocation2 + $0x20] sm:$0xff] %v4638
        %4671 = vst [vmem:[#allocation2 + $0x28] sm:$0xff] %v4639
        %4672 = vst [vmem:[#allocation2 + $0x30] sm:$0xff] %v4640
        %4673 = vst [vmem:[#allocation2 + $0x38] sm:$0xff] %v4641
        %4674 = vst [vmem:[#allocation2 + $0x40] sm:$0xff] %v4642
        %4675 = vst [vmem:[#allocation2 + $0x48] sm:$0xff] %v4643
        %4676 = vst [vmem:[#allocation2 + $0x50] sm:$0xff] %v4644
        %4677 = vst [vmem:[#allocation2 + $0x58] sm:$0xff] %v4645
        %4678 = vst [vmem:[#allocation2 + $0x60] sm:$0xff] %v4646
        %4679 = vst [vmem:[#allocation2 + $0x68] sm:$0xff] %v4647
        %4680 = vst [vmem:[#allocation2 + $0x70] sm:$0xff] %v4648
        %4681 = vst [vmem:[#allocation2 + $0x78] sm:$0xff] %v4649
        %4682 = vst [vmem:[#allocation2 + $0x80] sm:$0xff] %v4650
        %4683 = vst [vmem:[#allocation2 + $0x88] sm:$0xff] %v4651
        %4684 = vst [vmem:[#allocation2 + $0x90] sm:$0xff] %v4652
        %4685 = vst [vmem:[#allocation2 + $0x98] sm:$0xff] %v4653
        %4686 = vst [vmem:[#allocation2 + $0xa0] sm:$0xff] %v4654
        %4687 = vst [vmem:[#allocation2 + $0xa8] sm:$0xff] %v4655
        %4688 = vst [vmem:[#allocation2 + $0xb0] sm:$0xff] %v4656
        %4689 = vst [vmem:[#allocation2 + $0xb8] sm:$0xff] %v4657
        %4690 = vst [vmem:[#allocation2 + $0xc0] sm:$0xff] %v4658
        %4691 = vst [vmem:[#allocation2 + $0xc8] sm:$0xff] %v4659
        %4692 = vst [vmem:[#allocation2 + $0xd0] sm:$0xff] %v4660
        %4693 = vst [vmem:[#allocation2 + $0xd8] sm:$0xff] %v4661
        %4694 = vst [vmem:[#allocation2 + $0xe0] sm:$0xff] %v4662
        %4695 = vst [vmem:[#allocation2 + $0xe8] sm:$0xff] %v4663
        %4696 = vst [vmem:[#allocation2 + $0xf0] sm:$0xff] %v4664
        %4697 = vst [vmem:[#allocation2 + $0xf8] sm:$0xff] %v4665
        %v4698 = vand.u32 %v2970, 2
        %v4699 = vand.u32 %v2971, 2
        %v4700 = vand.u32 %v2972, 2
        %v4701 = vand.u32 %v2973, 2
        %v4702 = vand.u32 %v2974, 2
        %v4703 = vand.u32 %v2975, 2
        %v4704 = vand.u32 %v2976, 2
        %v4705 = vand.u32 %v2977, 2
        %v4706 = vand.u32 %v2978, 2
        %v4707 = vand.u32 %v2979, 2
        %v4708 = vand.u32 %v2980, 2
        %v4709 = vand.u32 %v2981, 2
        %v4710 = vand.u32 %v2982, 2
        %v4711 = vand.u32 %v2983, 2
        %v4712 = vand.u32 %v2984, 2
        %v4713 = vand.u32 %v2985, 2
        %v4714 = vand.u32 %v2986, 2
        %v4715 = vand.u32 %v2987, 2
        %v4716 = vand.u32 %v2988, 2
        %v4717 = vand.u32 %v2989, 2
        %v4718 = vand.u32 %v2990, 2
        %v4719 = vand.u32 %v2991, 2
        %v4720 = vand.u32 %v2992, 2
        %v4721 = vand.u32 %v2993, 2
        %v4722 = vand.u32 %v2994, 2
        %v4723 = vand.u32 %v2995, 2
        %v4724 = vand.u32 %v2996, 2
        %v4725 = vand.u32 %v2997, 2
        %v4726 = vand.u32 %v2998, 2
        %v4727 = vand.u32 %v2999, 2
        %v4728 = vand.u32 %v3000, 2
        %v4729 = vand.u32 %v3001, 2
        %vm4730 = vcmp.eq.s32.totalorder %v4698, 2
        %vm4731 = vcmp.eq.s32.totalorder %v4699, 2
        %vm4732 = vcmp.eq.s32.totalorder %v4700, 2
        %vm4733 = vcmp.eq.s32.totalorder %v4701, 2
        %vm4734 = vcmp.eq.s32.totalorder %v4702, 2
        %vm4735 = vcmp.eq.s32.totalorder %v4703, 2
        %vm4736 = vcmp.eq.s32.totalorder %v4704, 2
        %vm4737 = vcmp.eq.s32.totalorder %v4705, 2
        %vm4738 = vcmp.eq.s32.totalorder %v4706, 2
        %vm4739 = vcmp.eq.s32.totalorder %v4707, 2
        %vm4740 = vcmp.eq.s32.totalorder %v4708, 2
        %vm4741 = vcmp.eq.s32.totalorder %v4709, 2
        %vm4742 = vcmp.eq.s32.totalorder %v4710, 2
        %vm4743 = vcmp.eq.s32.totalorder %v4711, 2
        %vm4744 = vcmp.eq.s32.totalorder %v4712, 2
        %vm4745 = vcmp.eq.s32.totalorder %v4713, 2
        %vm4746 = vcmp.eq.s32.totalorder %v4714, 2
        %vm4747 = vcmp.eq.s32.totalorder %v4715, 2
        %vm4748 = vcmp.eq.s32.totalorder %v4716, 2
        %vm4749 = vcmp.eq.s32.totalorder %v4717, 2
        %vm4750 = vcmp.eq.s32.totalorder %v4718, 2
        %vm4751 = vcmp.eq.s32.totalorder %v4719, 2
        %vm4752 = vcmp.eq.s32.totalorder %v4720, 2
        %vm4753 = vcmp.eq.s32.totalorder %v4721, 2
        %vm4754 = vcmp.eq.s32.totalorder %v4722, 2
        %vm4755 = vcmp.eq.s32.totalorder %v4723, 2
        %vm4756 = vcmp.eq.s32.totalorder %v4724, 2
        %vm4757 = vcmp.eq.s32.totalorder %v4725, 2
        %vm4758 = vcmp.eq.s32.totalorder %v4726, 2
        %vm4759 = vcmp.eq.s32.totalorder %v4727, 2
        %vm4760 = vcmp.eq.s32.totalorder %v4728, 2
        %vm4761 = vcmp.eq.s32.totalorder %v4729, 2
        %v4762 = vsel %vm4730, %v2940, 0.0
        %v4763 = vsel %vm4731, %v2941, 0.0
        %v4764 = vsel %vm4732, %v2942, 0.0
        %v4765 = vsel %vm4733, %v2943, 0.0
        %v4766 = vsel %vm4734, %v2944, 0.0
        %v4767 = vsel %vm4735, %v2945, 0.0
        %v4768 = vsel %vm4736, %v2946, 0.0
        %v4769 = vsel %vm4737, %v2947, 0.0
        %v4770 = vsel %vm4738, %v2948, 0.0
        %v4771 = vsel %vm4739, %v2949, 0.0
        %v4772 = vsel %vm4740, %v2950, 0.0
        %v4773 = vsel %vm4741, %v2951, 0.0
        %v4774 = vsel %vm4742, %v2952, 0.0
        %v4775 = vsel %vm4743, %v2953, 0.0
        %v4776 = vsel %vm4744, %v2954, 0.0
        %v4777 = vsel %vm4745, %v2955, 0.0
        %v4778 = vsel %vm4746, %v2956, 0.0
        %v4779 = vsel %vm4747, %v2957, 0.0
        %v4780 = vsel %vm4748, %v2958, 0.0
        %v4781 = vsel %vm4749, %v2959, 0.0
        %v4782 = vsel %vm4750, %v2960, 0.0
        %v4783 = vsel %vm4751, %v2961, 0.0
        %v4784 = vsel %vm4752, %v2962, 0.0
        %v4785 = vsel %vm4753, %v2963, 0.0
        %v4786 = vsel %vm4754, %v2964, 0.0
        %v4787 = vsel %vm4755, %v2965, 0.0
        %v4788 = vsel %vm4756, %v2966, 0.0
        %v4789 = vsel %vm4757, %v2967, 0.0
        %v4790 = vsel %vm4758, %v2968, 0.0
        %v4791 = vsel %vm4759, %v2969, 0.0
        %v4792 = vsel %vm4760, %v2938, 0.0
        %v4793 = vsel %vm4761, %v2939, 0.0
        %4794 = vrot.lane.b32.xlu0 %v4762, 56
        %v4795 = vpop.permute.xlu0 %4794
        %4796 = vrot.lane.b32.xlu0 %v4763, 56
        %v4797 = vpop.permute.xlu0 %4796
        %4798 = vrot.lane.b32.xlu0 %v4764, 56
        %v4799 = vpop.permute.xlu0 %4798
        %4800 = vrot.lane.b32.xlu0 %v4765, 56
        %v4801 = vpop.permute.xlu0 %4800
        %4802 = vrot.lane.b32.xlu0 %v4766, 56
        %v4803 = vpop.permute.xlu0 %4802
        %4804 = vrot.lane.b32.xlu0 %v4767, 56
        %v4805 = vpop.permute.xlu0 %4804
        %4806 = vrot.lane.b32.xlu0 %v4768, 56
        %v4807 = vpop.permute.xlu0 %4806
        %4808 = vrot.lane.b32.xlu0 %v4769, 56
        %v4809 = vpop.permute.xlu0 %4808
        %4810 = vrot.lane.b32.xlu0 %v4770, 56
        %v4811 = vpop.permute.xlu0 %4810
        %4812 = vrot.lane.b32.xlu0 %v4771, 56
        %v4813 = vpop.permute.xlu0 %4812
        %4814 = vrot.lane.b32.xlu0 %v4772, 56
        %v4815 = vpop.permute.xlu0 %4814
        %4816 = vrot.lane.b32.xlu0 %v4773, 56
        %v4817 = vpop.permute.xlu0 %4816
        %4818 = vrot.lane.b32.xlu0 %v4774, 56
        %v4819 = vpop.permute.xlu0 %4818
        %4820 = vrot.lane.b32.xlu0 %v4775, 56
        %v4821 = vpop.permute.xlu0 %4820
        %4822 = vrot.lane.b32.xlu0 %v4776, 56
        %v4823 = vpop.permute.xlu0 %4822
        %4824 = vrot.lane.b32.xlu0 %v4777, 56
        %v4825 = vpop.permute.xlu0 %4824
        %4826 = vrot.lane.b32.xlu0 %v4778, 56
        %v4827 = vpop.permute.xlu0 %4826
        %4828 = vrot.lane.b32.xlu0 %v4779, 56
        %v4829 = vpop.permute.xlu0 %4828
        %4830 = vrot.lane.b32.xlu0 %v4780, 56
        %v4831 = vpop.permute.xlu0 %4830
        %4832 = vrot.lane.b32.xlu0 %v4781, 56
        %v4833 = vpop.permute.xlu0 %4832
        %4834 = vrot.lane.b32.xlu0 %v4782, 56
        %v4835 = vpop.permute.xlu0 %4834
        %4836 = vrot.lane.b32.xlu0 %v4783, 56
        %v4837 = vpop.permute.xlu0 %4836
        %4838 = vrot.lane.b32.xlu0 %v4784, 56
        %v4839 = vpop.permute.xlu0 %4838
        %4840 = vrot.lane.b32.xlu0 %v4785, 56
        %v4841 = vpop.permute.xlu0 %4840
        %4842 = vrot.lane.b32.xlu0 %v4786, 56
        %v4843 = vpop.permute.xlu0 %4842
        %4844 = vrot.lane.b32.xlu0 %v4787, 56
        %v4845 = vpop.permute.xlu0 %4844
        %4846 = vrot.lane.b32.xlu0 %v4788, 56
        %v4847 = vpop.permute.xlu0 %4846
        %4848 = vrot.lane.b32.xlu0 %v4789, 56
        %v4849 = vpop.permute.xlu0 %4848
        %4850 = vrot.lane.b32.xlu0 %v4790, 56
        %v4851 = vpop.permute.xlu0 %4850
        %4852 = vrot.lane.b32.xlu0 %v4791, 56
        %v4853 = vpop.permute.xlu0 %4852
        %4854 = vrot.lane.b32.xlu0 %v4792, 56
        %v4855 = vpop.permute.xlu0 %4854
        %4856 = vrot.lane.b32.xlu0 %v4793, 56
        %v4857 = vpop.permute.xlu0 %4856
        %v4858 = vld [vmem:[#allocation2] sm:$0xff]
        %v4859 = vld [vmem:[#allocation2 + $0x8] sm:$0xff]
        %v4860 = vld [vmem:[#allocation2 + $0x10] sm:$0xff]
        %v4861 = vld [vmem:[#allocation2 + $0x18] sm:$0xff]
        %v4862 = vld [vmem:[#allocation2 + $0x20] sm:$0xff]
        %v4863 = vld [vmem:[#allocation2 + $0x28] sm:$0xff]
        %v4864 = vld [vmem:[#allocation2 + $0x30] sm:$0xff]
        %v4865 = vld [vmem:[#allocation2 + $0x38] sm:$0xff]
        %v4866 = vld [vmem:[#allocation2 + $0x40] sm:$0xff]
        %v4867 = vld [vmem:[#allocation2 + $0x48] sm:$0xff]
        %v4868 = vld [vmem:[#allocation2 + $0x50] sm:$0xff]
        %v4869 = vld [vmem:[#allocation2 + $0x58] sm:$0xff]
        %v4870 = vld [vmem:[#allocation2 + $0x60] sm:$0xff]
        %v4871 = vld [vmem:[#allocation2 + $0x68] sm:$0xff]
        %v4872 = vld [vmem:[#allocation2 + $0x70] sm:$0xff]
        %v4873 = vld [vmem:[#allocation2 + $0x78] sm:$0xff]
        %v4874 = vld [vmem:[#allocation2 + $0x80] sm:$0xff]
        %v4875 = vld [vmem:[#allocation2 + $0x88] sm:$0xff]
        %v4876 = vld [vmem:[#allocation2 + $0x90] sm:$0xff]
        %v4877 = vld [vmem:[#allocation2 + $0x98] sm:$0xff]
        %v4878 = vld [vmem:[#allocation2 + $0xa0] sm:$0xff]
        %v4879 = vld [vmem:[#allocation2 + $0xa8] sm:$0xff]
        %v4880 = vld [vmem:[#allocation2 + $0xb0] sm:$0xff]
        %v4881 = vld [vmem:[#allocation2 + $0xb8] sm:$0xff]
        %v4882 = vld [vmem:[#allocation2 + $0xc0] sm:$0xff]
        %v4883 = vld [vmem:[#allocation2 + $0xc8] sm:$0xff]
        %v4884 = vld [vmem:[#allocation2 + $0xd0] sm:$0xff]
        %v4885 = vld [vmem:[#allocation2 + $0xd8] sm:$0xff]
        %v4886 = vld [vmem:[#allocation2 + $0xe0] sm:$0xff]
        %v4887 = vld [vmem:[#allocation2 + $0xe8] sm:$0xff]
        %v4888 = vld [vmem:[#allocation2 + $0xf0] sm:$0xff]
        %v4889 = vld [vmem:[#allocation2 + $0xf8] sm:$0xff]
        %v4890 = vadd.f32 %v4858, %v4795
        %v4891 = vadd.f32 %v4859, %v4797
        %v4892 = vadd.f32 %v4860, %v4799
        %v4893 = vadd.f32 %v4861, %v4801
        %v4894 = vadd.f32 %v4862, %v4803
        %v4895 = vadd.f32 %v4863, %v4805
        %v4896 = vadd.f32 %v4864, %v4807
        %v4897 = vadd.f32 %v4865, %v4809
        %v4898 = vadd.f32 %v4866, %v4811
        %v4899 = vadd.f32 %v4867, %v4813
        %v4900 = vadd.f32 %v4868, %v4815
        %v4901 = vadd.f32 %v4869, %v4817
        %v4902 = vadd.f32 %v4870, %v4819
        %v4903 = vadd.f32 %v4871, %v4821
        %v4904 = vadd.f32 %v4872, %v4823
        %v4905 = vadd.f32 %v4873, %v4825
        %v4906 = vadd.f32 %v4874, %v4827
        %v4907 = vadd.f32 %v4875, %v4829
        %v4908 = vadd.f32 %v4876, %v4831
        %v4909 = vadd.f32 %v4877, %v4833
        %v4910 = vadd.f32 %v4878, %v4835
        %v4911 = vadd.f32 %v4879, %v4837
        %v4912 = vadd.f32 %v4880, %v4839
        %v4913 = vadd.f32 %v4881, %v4841
        %v4914 = vadd.f32 %v4882, %v4843
        %v4915 = vadd.f32 %v4883, %v4845
        %v4916 = vadd.f32 %v4884, %v4847
        %v4917 = vadd.f32 %v4885, %v4849
        %v4918 = vadd.f32 %v4886, %v4851
        %v4919 = vadd.f32 %v4887, %v4853
        %v4920 = vadd.f32 %v4888, %v4855
        %v4921 = vadd.f32 %v4889, %v4857
        %4922 = vst [vmem:[#allocation2] sm:$0xff] %v4890
        %4923 = vst [vmem:[#allocation2 + $0x8] sm:$0xff] %v4891
        %4924 = vst [vmem:[#allocation2 + $0x10] sm:$0xff] %v4892
        %4925 = vst [vmem:[#allocation2 + $0x18] sm:$0xff] %v4893
        %4926 = vst [vmem:[#allocation2 + $0x20] sm:$0xff] %v4894
        %4927 = vst [vmem:[#allocation2 + $0x28] sm:$0xff] %v4895
        %4928 = vst [vmem:[#allocation2 + $0x30] sm:$0xff] %v4896
        %4929 = vst [vmem:[#allocation2 + $0x38] sm:$0xff] %v4897
        %4930 = vst [vmem:[#allocation2 + $0x40] sm:$0xff] %v4898
        %4931 = vst [vmem:[#allocation2 + $0x48] sm:$0xff] %v4899
        %4932 = vst [vmem:[#allocation2 + $0x50] sm:$0xff] %v4900
        %4933 = vst [vmem:[#allocation2 + $0x58] sm:$0xff] %v4901
        %4934 = vst [vmem:[#allocation2 + $0x60] sm:$0xff] %v4902
        %4935 = vst [vmem:[#allocation2 + $0x68] sm:$0xff] %v4903
        %4936 = vst [vmem:[#allocation2 + $0x70] sm:$0xff] %v4904
        %4937 = vst [vmem:[#allocation2 + $0x78] sm:$0xff] %v4905
        %4938 = vst [vmem:[#allocation2 + $0x80] sm:$0xff] %v4906
        %4939 = vst [vmem:[#allocation2 + $0x88] sm:$0xff] %v4907
        %4940 = vst [vmem:[#allocation2 + $0x90] sm:$0xff] %v4908
        %4941 = vst [vmem:[#allocation2 + $0x98] sm:$0xff] %v4909
        %4942 = vst [vmem:[#allocation2 + $0xa0] sm:$0xff] %v4910
        %4943 = vst [vmem:[#allocation2 + $0xa8] sm:$0xff] %v4911
        %4944 = vst [vmem:[#allocation2 + $0xb0] sm:$0xff] %v4912
        %4945 = vst [vmem:[#allocation2 + $0xb8] sm:$0xff] %v4913
        %4946 = vst [vmem:[#allocation2 + $0xc0] sm:$0xff] %v4914
        %4947 = vst [vmem:[#allocation2 + $0xc8] sm:$0xff] %v4915
        %4948 = vst [vmem:[#allocation2 + $0xd0] sm:$0xff] %v4916
        %4949 = vst [vmem:[#allocation2 + $0xd8] sm:$0xff] %v4917
        %4950 = vst [vmem:[#allocation2 + $0xe0] sm:$0xff] %v4918
        %4951 = vst [vmem:[#allocation2 + $0xe8] sm:$0xff] %v4919
        %4952 = vst [vmem:[#allocation2 + $0xf0] sm:$0xff] %v4920
        %4953 = vst [vmem:[#allocation2 + $0xf8] sm:$0xff] %v4921
        %v4954 = vand.u32 %v2970, 10
        %v4955 = vand.u32 %v2971, 10
        %v4956 = vand.u32 %v2972, 10
        %v4957 = vand.u32 %v2973, 10
        %v4958 = vand.u32 %v2974, 10
        %v4959 = vand.u32 %v2975, 10
        %v4960 = vand.u32 %v2976, 10
        %v4961 = vand.u32 %v2977, 10
        %v4962 = vand.u32 %v2978, 10
        %v4963 = vand.u32 %v2979, 10
        %v4964 = vand.u32 %v2980, 10
        %v4965 = vand.u32 %v2981, 10
        %v4966 = vand.u32 %v2982, 10
        %v4967 = vand.u32 %v2983, 10
        %v4968 = vand.u32 %v2984, 10
        %v4969 = vand.u32 %v2985, 10
        %v4970 = vand.u32 %v2986, 10
        %v4971 = vand.u32 %v2987, 10
        %v4972 = vand.u32 %v2988, 10
        %v4973 = vand.u32 %v2989, 10
        %v4974 = vand.u32 %v2990, 10
        %v4975 = vand.u32 %v2991, 10
        %v4976 = vand.u32 %v2992, 10
        %v4977 = vand.u32 %v2993, 10
        %v4978 = vand.u32 %v2994, 10
        %v4979 = vand.u32 %v2995, 10
        %v4980 = vand.u32 %v2996, 10
        %v4981 = vand.u32 %v2997, 10
        %v4982 = vand.u32 %v2998, 10
        %v4983 = vand.u32 %v2999, 10
        %v4984 = vand.u32 %v3000, 10
        %v4985 = vand.u32 %v3001, 10
        %vm4986 = vcmp.eq.s32.totalorder %v4954, 10
        %vm4987 = vcmp.eq.s32.totalorder %v4955, 10
        %vm4988 = vcmp.eq.s32.totalorder %v4956, 10
        %vm4989 = vcmp.eq.s32.totalorder %v4957, 10
        %vm4990 = vcmp.eq.s32.totalorder %v4958, 10
        %vm4991 = vcmp.eq.s32.totalorder %v4959, 10
        %vm4992 = vcmp.eq.s32.totalorder %v4960, 10
        %vm4993 = vcmp.eq.s32.totalorder %v4961, 10
        %vm4994 = vcmp.eq.s32.totalorder %v4962, 10
        %vm4995 = vcmp.eq.s32.totalorder %v4963, 10
        %vm4996 = vcmp.eq.s32.totalorder %v4964, 10
        %vm4997 = vcmp.eq.s32.totalorder %v4965, 10
        %vm4998 = vcmp.eq.s32.totalorder %v4966, 10
        %vm4999 = vcmp.eq.s32.totalorder %v4967, 10
        %vm5000 = vcmp.eq.s32.totalorder %v4968, 10
        %vm5001 = vcmp.eq.s32.totalorder %v4969, 10
        %vm5002 = vcmp.eq.s32.totalorder %v4970, 10
        %vm5003 = vcmp.eq.s32.totalorder %v4971, 10
        %vm5004 = vcmp.eq.s32.totalorder %v4972, 10
        %vm5005 = vcmp.eq.s32.totalorder %v4973, 10
        %vm5006 = vcmp.eq.s32.totalorder %v4974, 10
        %vm5007 = vcmp.eq.s32.totalorder %v4975, 10
        %vm5008 = vcmp.eq.s32.totalorder %v4976, 10
        %vm5009 = vcmp.eq.s32.totalorder %v4977, 10
        %vm5010 = vcmp.eq.s32.totalorder %v4978, 10
        %vm5011 = vcmp.eq.s32.totalorder %v4979, 10
        %vm5012 = vcmp.eq.s32.totalorder %v4980, 10
        %vm5013 = vcmp.eq.s32.totalorder %v4981, 10
        %vm5014 = vcmp.eq.s32.totalorder %v4982, 10
        %vm5015 = vcmp.eq.s32.totalorder %v4983, 10
        %vm5016 = vcmp.eq.s32.totalorder %v4984, 10
        %vm5017 = vcmp.eq.s32.totalorder %v4985, 10
        %v5018 = vsel %vm4986, %v3510, 0.0
        %v5019 = vsel %vm4987, %v3509, 0.0
        %v5020 = vsel %vm4988, %v3508, 0.0
        %v5021 = vsel %vm4989, %v3507, 0.0
        %v5022 = vsel %vm4990, %v3506, 0.0
        %v5023 = vsel %vm4991, %v3505, 0.0
        %v5024 = vsel %vm4992, %v3504, 0.0
        %v5025 = vsel %vm4993, %v3503, 0.0
        %v5026 = vsel %vm4994, %v3502, 0.0
        %v5027 = vsel %vm4995, %v3501, 0.0
        %v5028 = vsel %vm4996, %v3500, 0.0
        %v5029 = vsel %vm4997, %v3499, 0.0
        %v5030 = vsel %vm4998, %v3498, 0.0
        %v5031 = vsel %vm4999, %v3497, 0.0
        %v5032 = vsel %vm5000, %v3496, 0.0
        %v5033 = vsel %vm5001, %v3495, 0.0
        %v5034 = vsel %vm5002, %v3494, 0.0
        %v5035 = vsel %vm5003, %v3493, 0.0
        %v5036 = vsel %vm5004, %v3492, 0.0
        %v5037 = vsel %vm5005, %v3491, 0.0
        %v5038 = vsel %vm5006, %v3490, 0.0
        %v5039 = vsel %vm5007, %v3489, 0.0
        %v5040 = vsel %vm5008, %v3488, 0.0
        %v5041 = vsel %vm5009, %v3487, 0.0
        %v5042 = vsel %vm5010, %v3486, 0.0
        %v5043 = vsel %vm5011, %v3485, 0.0
        %v5044 = vsel %vm5012, %v3484, 0.0
        %v5045 = vsel %vm5013, %v3483, 0.0
        %v5046 = vsel %vm5014, %v3482, 0.0
        %v5047 = vsel %vm5015, %v3513, 0.0
        %v5048 = vsel %vm5016, %v3512, 0.0
        %v5049 = vsel %vm5017, %v3511, 0.0
        %5050 = vrot.lane.b32.xlu0 %v5018, 64
        %v5051 = vpop.permute.xlu0 %5050
        %5052 = vrot.lane.b32.xlu0 %v5019, 64
        %v5053 = vpop.permute.xlu0 %5052
        %5054 = vrot.lane.b32.xlu0 %v5020, 64
        %v5055 = vpop.permute.xlu0 %5054
        %5056 = vrot.lane.b32.xlu0 %v5021, 64
        %v5057 = vpop.permute.xlu0 %5056
        %5058 = vrot.lane.b32.xlu0 %v5022, 64
        %v5059 = vpop.permute.xlu0 %5058
        %5060 = vrot.lane.b32.xlu0 %v5023, 64
        %v5061 = vpop.permute.xlu0 %5060
        %5062 = vrot.lane.b32.xlu0 %v5024, 64
        %v5063 = vpop.permute.xlu0 %5062
        %5064 = vrot.lane.b32.xlu0 %v5025, 64
        %v5065 = vpop.permute.xlu0 %5064
        %5066 = vrot.lane.b32.xlu0 %v5026, 64
        %v5067 = vpop.permute.xlu0 %5066
        %5068 = vrot.lane.b32.xlu0 %v5027, 64
        %v5069 = vpop.permute.xlu0 %5068
        %5070 = vrot.lane.b32.xlu0 %v5028, 64
        %v5071 = vpop.permute.xlu0 %5070
        %5072 = vrot.lane.b32.xlu0 %v5029, 64
        %v5073 = vpop.permute.xlu0 %5072
        %5074 = vrot.lane.b32.xlu0 %v5030, 64
        %v5075 = vpop.permute.xlu0 %5074
        %5076 = vrot.lane.b32.xlu0 %v5031, 64
        %v5077 = vpop.permute.xlu0 %5076
        %5078 = vrot.lane.b32.xlu0 %v5032, 64
        %v5079 = vpop.permute.xlu0 %5078
        %5080 = vrot.lane.b32.xlu0 %v5033, 64
        %v5081 = vpop.permute.xlu0 %5080
        %5082 = vrot.lane.b32.xlu0 %v5034, 64
        %v5083 = vpop.permute.xlu0 %5082
        %5084 = vrot.lane.b32.xlu0 %v5035, 64
        %v5085 = vpop.permute.xlu0 %5084
        %5086 = vrot.lane.b32.xlu0 %v5036, 64
        %v5087 = vpop.permute.xlu0 %5086
        %5088 = vrot.lane.b32.xlu0 %v5037, 64
        %v5089 = vpop.permute.xlu0 %5088
        %5090 = vrot.lane.b32.xlu0 %v5038, 64
        %v5091 = vpop.permute.xlu0 %5090
        %5092 = vrot.lane.b32.xlu0 %v5039, 64
        %v5093 = vpop.permute.xlu0 %5092
        %5094 = vrot.lane.b32.xlu0 %v5040, 64
        %v5095 = vpop.permute.xlu0 %5094
        %5096 = vrot.lane.b32.xlu0 %v5041, 64
        %v5097 = vpop.permute.xlu0 %5096
        %5098 = vrot.lane.b32.xlu0 %v5042, 64
        %v5099 = vpop.permute.xlu0 %5098
        %5100 = vrot.lane.b32.xlu0 %v5043, 64
        %v5101 = vpop.permute.xlu0 %5100
        %5102 = vrot.lane.b32.xlu0 %v5044, 64
        %v5103 = vpop.permute.xlu0 %5102
        %5104 = vrot.lane.b32.xlu0 %v5045, 64
        %v5105 = vpop.permute.xlu0 %5104
        %5106 = vrot.lane.b32.xlu0 %v5046, 64
        %v5107 = vpop.permute.xlu0 %5106
        %5108 = vrot.lane.b32.xlu0 %v5047, 64
        %v5109 = vpop.permute.xlu0 %5108
        %5110 = vrot.lane.b32.xlu0 %v5048, 64
        %v5111 = vpop.permute.xlu0 %5110
        %5112 = vrot.lane.b32.xlu0 %v5049, 64
        %v5113 = vpop.permute.xlu0 %5112
        %v5114 = vld [vmem:[#allocation2] sm:$0xff]
        %v5115 = vld [vmem:[#allocation2 + $0x8] sm:$0xff]
        %v5116 = vld [vmem:[#allocation2 + $0x10] sm:$0xff]
        %v5117 = vld [vmem:[#allocation2 + $0x18] sm:$0xff]
        %v5118 = vld [vmem:[#allocation2 + $0x20] sm:$0xff]
        %v5119 = vld [vmem:[#allocation2 + $0x28] sm:$0xff]
        %v5120 = vld [vmem:[#allocation2 + $0x30] sm:$0xff]
        %v5121 = vld [vmem:[#allocation2 + $0x38] sm:$0xff]
        %v5122 = vld [vmem:[#allocation2 + $0x40] sm:$0xff]
        %v5123 = vld [vmem:[#allocation2 + $0x48] sm:$0xff]
        %v5124 = vld [vmem:[#allocation2 + $0x50] sm:$0xff]
        %v5125 = vld [vmem:[#allocation2 + $0x58] sm:$0xff]
        %v5126 = vld [vmem:[#allocation2 + $0x60] sm:$0xff]
        %v5127 = vld [vmem:[#allocation2 + $0x68] sm:$0xff]
        %v5128 = vld [vmem:[#allocation2 + $0x70] sm:$0xff]
        %v5129 = vld [vmem:[#allocation2 + $0x78] sm:$0xff]
        %v5130 = vld [vmem:[#allocation2 + $0x80] sm:$0xff]
        %v5131 = vld [vmem:[#allocation2 + $0x88] sm:$0xff]
        %v5132 = vld [vmem:[#allocation2 + $0x90] sm:$0xff]
        %v5133 = vld [vmem:[#allocation2 + $0x98] sm:$0xff]
        %v5134 = vld [vmem:[#allocation2 + $0xa0] sm:$0xff]
        %v5135 = vld [vmem:[#allocation2 + $0xa8] sm:$0xff]
        %v5136 = vld [vmem:[#allocation2 + $0xb0] sm:$0xff]
        %v5137 = vld [vmem:[#allocation2 + $0xb8] sm:$0xff]
        %v5138 = vld [vmem:[#allocation2 + $0xc0] sm:$0xff]
        %v5139 = vld [vmem:[#allocation2 + $0xc8] sm:$0xff]
        %v5140 = vld [vmem:[#allocation2 + $0xd0] sm:$0xff]
        %v5141 = vld [vmem:[#allocation2 + $0xd8] sm:$0xff]
        %v5142 = vld [vmem:[#allocation2 + $0xe0] sm:$0xff]
        %v5143 = vld [vmem:[#allocation2 + $0xe8] sm:$0xff]
        %v5144 = vld [vmem:[#allocation2 + $0xf0] sm:$0xff]
        %v5145 = vld [vmem:[#allocation2 + $0xf8] sm:$0xff]
        %v5146 = vadd.f32 %v5114, %v5051
        %v5147 = vadd.f32 %v5115, %v5053
        %v5148 = vadd.f32 %v5116, %v5055
        %v5149 = vadd.f32 %v5117, %v5057
        %v5150 = vadd.f32 %v5118, %v5059
        %v5151 = vadd.f32 %v5119, %v5061
        %v5152 = vadd.f32 %v5120, %v5063
        %v5153 = vadd.f32 %v5121, %v5065
        %v5154 = vadd.f32 %v5122, %v5067
        %v5155 = vadd.f32 %v5123, %v5069
        %v5156 = vadd.f32 %v5124, %v5071
        %v5157 = vadd.f32 %v5125, %v5073
        %v5158 = vadd.f32 %v5126, %v5075
        %v5159 = vadd.f32 %v5127, %v5077
        %v5160 = vadd.f32 %v5128, %v5079
        %v5161 = vadd.f32 %v5129, %v5081
        %v5162 = vadd.f32 %v5130, %v5083
        %v5163 = vadd.f32 %v5131, %v5085
        %v5164 = vadd.f32 %v5132, %v5087
        %v5165 = vadd.f32 %v5133, %v5089
        %v5166 = vadd.f32 %v5134, %v5091
        %v5167 = vadd.f32 %v5135, %v5093
        %v5168 = vadd.f32 %v5136, %v5095
        %v5169 = vadd.f32 %v5137, %v5097
        %v5170 = vadd.f32 %v5138, %v5099
        %v5171 = vadd.f32 %v5139, %v5101
        %v5172 = vadd.f32 %v5140, %v5103
        %v5173 = vadd.f32 %v5141, %v5105
        %v5174 = vadd.f32 %v5142, %v5107
        %v5175 = vadd.f32 %v5143, %v5109
        %v5176 = vadd.f32 %v5144, %v5111
        %v5177 = vadd.f32 %v5145, %v5113
        %5178 = vst [vmem:[#allocation2] sm:$0xff] %v5146
        %5179 = vst [vmem:[#allocation2 + $0x8] sm:$0xff] %v5147
        %5180 = vst [vmem:[#allocation2 + $0x10] sm:$0xff] %v5148
        %5181 = vst [vmem:[#allocation2 + $0x18] sm:$0xff] %v5149
        %5182 = vst [vmem:[#allocation2 + $0x20] sm:$0xff] %v5150
        %5183 = vst [vmem:[#allocation2 + $0x28] sm:$0xff] %v5151
        %5184 = vst [vmem:[#allocation2 + $0x30] sm:$0xff] %v5152
        %5185 = vst [vmem:[#allocation2 + $0x38] sm:$0xff] %v5153
        %5186 = vst [vmem:[#allocation2 + $0x40] sm:$0xff] %v5154
        %5187 = vst [vmem:[#allocation2 + $0x48] sm:$0xff] %v5155
        %5188 = vst [vmem:[#allocation2 + $0x50] sm:$0xff] %v5156
        %5189 = vst [vmem:[#allocation2 + $0x58] sm:$0xff] %v5157
        %5190 = vst [vmem:[#allocation2 + $0x60] sm:$0xff] %v5158
        %5191 = vst [vmem:[#allocation2 + $0x68] sm:$0xff] %v5159
        %5192 = vst [vmem:[#allocation2 + $0x70] sm:$0xff] %v5160
        %5193 = vst [vmem:[#allocation2 + $0x78] sm:$0xff] %v5161
        %5194 = vst [vmem:[#allocation2 + $0x80] sm:$0xff] %v5162
        %5195 = vst [vmem:[#allocation2 + $0x88] sm:$0xff] %v5163
        %5196 = vst [vmem:[#allocation2 + $0x90] sm:$0xff] %v5164
        %5197 = vst [vmem:[#allocation2 + $0x98] sm:$0xff] %v5165
        %5198 = vst [vmem:[#allocation2 + $0xa0] sm:$0xff] %v5166
        %5199 = vst [vmem:[#allocation2 + $0xa8] sm:$0xff] %v5167
        %5200 = vst [vmem:[#allocation2 + $0xb0] sm:$0xff] %v5168
        %5201 = vst [vmem:[#allocation2 + $0xb8] sm:$0xff] %v5169
        %5202 = vst [vmem:[#allocation2 + $0xc0] sm:$0xff] %v5170
        %5203 = vst [vmem:[#allocation2 + $0xc8] sm:$0xff] %v5171
        %5204 = vst [vmem:[#allocation2 + $0xd0] sm:$0xff] %v5172
        %5205 = vst [vmem:[#allocation2 + $0xd8] sm:$0xff] %v5173
        %5206 = vst [vmem:[#allocation2 + $0xe0] sm:$0xff] %v5174
        %5207 = vst [vmem:[#allocation2 + $0xe8] sm:$0xff] %v5175
        %5208 = vst [vmem:[#allocation2 + $0xf0] sm:$0xff] %v5176
        %5209 = vst [vmem:[#allocation2 + $0xf8] sm:$0xff] %v5177
        %v5210 = vld [vmem:[#allocation2] sm:$0xff]
        %v5211 = vld [vmem:[#allocation2 + $0x8] sm:$0xff]
        %v5212 = vld [vmem:[#allocation2 + $0x10] sm:$0xff]
        %v5213 = vld [vmem:[#allocation2 + $0x18] sm:$0xff]
        %v5214 = vld [vmem:[#allocation2 + $0x20] sm:$0xff]
        %v5215 = vld [vmem:[#allocation2 + $0x28] sm:$0xff]
        %v5216 = vld [vmem:[#allocation2 + $0x30] sm:$0xff]
        %v5217 = vld [vmem:[#allocation2 + $0x38] sm:$0xff]
        %v5218 = vld [vmem:[#allocation2 + $0x40] sm:$0xff]
        %v5219 = vld [vmem:[#allocation2 + $0x48] sm:$0xff]
        %v5220 = vld [vmem:[#allocation2 + $0x50] sm:$0xff]
        %v5221 = vld [vmem:[#allocation2 + $0x58] sm:$0xff]
        %v5222 = vld [vmem:[#allocation2 + $0x60] sm:$0xff]
        %v5223 = vld [vmem:[#allocation2 + $0x68] sm:$0xff]
        %v5224 = vld [vmem:[#allocation2 + $0x70] sm:$0xff]
        %v5225 = vld [vmem:[#allocation2 + $0x78] sm:$0xff]
        %v5226 = vld [vmem:[#allocation2 + $0x80] sm:$0xff]
        %v5227 = vld [vmem:[#allocation2 + $0x88] sm:$0xff]
        %v5228 = vld [vmem:[#allocation2 + $0x90] sm:$0xff]
        %v5229 = vld [vmem:[#allocation2 + $0x98] sm:$0xff]
        %v5230 = vld [vmem:[#allocation2 + $0xa0] sm:$0xff]
        %v5231 = vld [vmem:[#allocation2 + $0xa8] sm:$0xff]
        %v5232 = vld [vmem:[#allocation2 + $0xb0] sm:$0xff]
        %v5233 = vld [vmem:[#allocation2 + $0xb8] sm:$0xff]
        %v5234 = vld [vmem:[#allocation2 + $0xc0] sm:$0xff]
        %v5235 = vld [vmem:[#allocation2 + $0xc8] sm:$0xff]
        %v5236 = vld [vmem:[#allocation2 + $0xd0] sm:$0xff]
        %v5237 = vld [vmem:[#allocation2 + $0xd8] sm:$0xff]
        %v5238 = vld [vmem:[#allocation2 + $0xe0] sm:$0xff]
        %v5239 = vld [vmem:[#allocation2 + $0xe8] sm:$0xff]
        %v5240 = vld [vmem:[#allocation2 + $0xf0] sm:$0xff]
        %v5241 = vld [vmem:[#allocation2 + $0xf8] sm:$0xff]
        %v5242 = vpack.c.bf16 %v5211, %v5210
        %v5243 = vpack.c.bf16 %v5213, %v5212
        %v5244 = vpack.c.bf16 %v5215, %v5214
        %v5245 = vpack.c.bf16 %v5217, %v5216
        %v5246 = vpack.c.bf16 %v5219, %v5218
        %v5247 = vpack.c.bf16 %v5221, %v5220
        %v5248 = vpack.c.bf16 %v5223, %v5222
        %v5249 = vpack.c.bf16 %v5225, %v5224
        %v5250 = vpack.c.bf16 %v5227, %v5226
        %v5251 = vpack.c.bf16 %v5229, %v5228
        %v5252 = vpack.c.bf16 %v5231, %v5230
        %v5253 = vpack.c.bf16 %v5233, %v5232
        %v5254 = vpack.c.bf16 %v5235, %v5234
        %v5255 = vpack.c.bf16 %v5237, %v5236
        %v5256 = vpack.c.bf16 %v5239, %v5238
        %v5257 = vpack.c.bf16 %v5241, %v5240
        %s5258 = scalar_lea.vmem [#allocation8], 64
        %v5259 = vld [vmem:[%s5258] sm:$0xf]
        %v5260 = vld [vmem:[%s5258 + $0x4] sm:$0xf]
        %v5261 = vld [vmem:[%s5258 + $0x8] sm:$0xf]
        %v5262 = vld [vmem:[%s5258 + $0xc] sm:$0xf]
        %v5263 = vld [vmem:[%s5258 + $0x10] sm:$0xf]
        %v5264 = vld [vmem:[%s5258 + $0x14] sm:$0xf]
        %v5265 = vld [vmem:[%s5258 + $0x18] sm:$0xf]
        %v5266 = vld [vmem:[%s5258 + $0x1c] sm:$0xf]
        %v5267 = vld [vmem:[%s5258 + $0x20] sm:$0xf]
        %v5268 = vld [vmem:[%s5258 + $0x24] sm:$0xf]
        %v5269 = vld [vmem:[%s5258 + $0x28] sm:$0xf]
        %v5270 = vld [vmem:[%s5258 + $0x2c] sm:$0xf]
        %v5271 = vld [vmem:[%s5258 + $0x30] sm:$0xf]
        %v5272 = vld [vmem:[%s5258 + $0x34] sm:$0xf]
        %v5273 = vld [vmem:[%s5258 + $0x38] sm:$0xf]
        %v5274 = vld [vmem:[%s5258 + $0x3c] sm:$0xf]
        %v5275 = vld [vmem:[#allocation10 + $0x1] sm:$0x1]
        %v5276 = vlaneseq
        %v5277 = vshrl.u32 %v5276, 7
        %v5278 = vsub.s32 0, %v5277
        %v5279 = vrot.slane %v5275, %v5278
        %v5296 = vunpack.c.l.b16 %v5259
        %v5297 = vunpack.c.l.b16 %v5260
        %v5298 = vunpack.c.l.b16 %v5261
        %v5299 = vunpack.c.l.b16 %v5262
        %v5300 = vunpack.c.l.b16 %v5263
        %v5301 = vunpack.c.l.b16 %v5264
        %v5302 = vunpack.c.l.b16 %v5265
        %v5303 = vunpack.c.l.b16 %v5266
        %v5304 = vunpack.c.l.b16 %v5267
        %v5305 = vunpack.c.l.b16 %v5268
        %v5306 = vunpack.c.l.b16 %v5269
        %v5307 = vunpack.c.l.b16 %v5270
        %v5308 = vunpack.c.l.b16 %v5271
        %v5309 = vunpack.c.l.b16 %v5272
        %v5310 = vunpack.c.l.b16 %v5273
        %v5311 = vunpack.c.l.b16 %v5274
        %v5312 = vpack.c.b16 %v5297, %v5296
        %v5313 = vpack.c.b16 %v5299, %v5298
        %v5314 = vpack.c.b16 %v5301, %v5300
        %v5315 = vpack.c.b16 %v5303, %v5302
        %v5316 = vpack.c.b16 %v5305, %v5304
        %v5317 = vpack.c.b16 %v5307, %v5306
        %v5318 = vpack.c.b16 %v5309, %v5308
        %v5319 = vpack.c.b16 %v5311, %v5310
        %5328 = vmatprep.subr.bf16.mxu0 0
        %5329 = vmatpush1.bf16.msra.mxu0 %v5312
        %5330 = vmatprep.subr.bf16.mxu0 0
        %5331 = vmatpush1.bf16.msra.mxu0 %v5313
        %5332 = vmatprep.subr.bf16.mxu0 0
        %5333 = vmatpush1.bf16.msra.mxu0 %v5314
        %5334 = vmatprep.subr.bf16.mxu0 0
        %5335 = vmatpush1.bf16.msra.mxu0 %v5315
        %5336 = vmatprep.subr.bf16.mxu0 0
        %5337 = vmatpush1.bf16.msra.mxu0 %v5316
        %5338 = vmatprep.subr.bf16.mxu0 0
        %5339 = vmatpush1.bf16.msra.mxu0 %v5317
        %5340 = vmatprep.subr.bf16.mxu0 0
        %5341 = vmatpush1.bf16.msra.mxu0 %v5318
        %5342 = vmatprep.subr.bf16.mxu0 0
        %5343 = vmatpush1.bf16.msra.mxu0 %v5319
        %5344 = vmatprep.subr.bf16.mxu0 0
        %5345 = vmatpush1.bf16.msra.mxu0 0
        %5346 = vmatprep.subr.bf16.mxu0 0
        %5347 = vmatpush1.bf16.msra.mxu0 0
        %5348 = vmatprep.subr.bf16.mxu0 0
        %5349 = vmatpush1.bf16.msra.mxu0 0
        %5350 = vmatprep.subr.bf16.mxu0 0
        %5351 = vmatpush1.bf16.msra.mxu0 0
        %5352 = vmatprep.subr.bf16.mxu0 0
        %5353 = vmatpush1.bf16.msra.mxu0 0
        %5354 = vmatprep.subr.bf16.mxu0 0
        %5355 = vmatpush1.bf16.msra.mxu0 0
        %5356 = vmatprep.subr.bf16.mxu0 0
        %5357 = vmatpush1.bf16.msra.mxu0 0
        %5358 = vmatprep.subr.bf16.mxu0 0
        %5359 = vmatpush1.bf16.msra.mxu0 0
        %5360 = vmatprep.mubr.bf16.mxu0 0
        %5361 = vmatmul.mubr.bf16.gmra.mrb[0].mxu0 %v5242
        %v5362 = vpop.f32.mrb[0].mxu0
        %v5363 = vadd.f32 %v5279, %v5362
        %v5364 = vpop.f32.mrb[0].mxu0
        %v5365 = vpop.f32.mrb[0].mxu0
        %v5366 = vadd.f32 %v5279, %v5365
        %v5367 = vpop.f32.mrb[0].mxu0
        %5368 = vmatprep.mubr.bf16.mxu0 0
        %5369 = vmatmul.mubr.bf16.gmra.mrb[0].mxu0 %v5243
        %v5370 = vpop.f32.mrb[0].mxu0
        %v5371 = vadd.f32 %v5279, %v5370
        %v5372 = vpop.f32.mrb[0].mxu0
        %v5373 = vpop.f32.mrb[0].mxu0
        %v5374 = vadd.f32 %v5279, %v5373
        %v5375 = vpop.f32.mrb[0].mxu0
        %5376 = vmatprep.mubr.bf16.mxu0 0
        %5377 = vmatmul.mubr.bf16.gmra.mrb[0].mxu0 %v5244
        %v5378 = vpop.f32.mrb[0].mxu0
        %v5379 = vadd.f32 %v5279, %v5378
        %v5380 = vpop.f32.mrb[0].mxu0
        %v5381 = vpop.f32.mrb[0].mxu0
        %v5382 = vadd.f32 %v5279, %v5381
        %v5383 = vpop.f32.mrb[0].mxu0
        %5384 = vmatprep.mubr.bf16.mxu0 0
        %5385 = vmatmul.mubr.bf16.gmra.mrb[0].mxu0 %v5245
        %v5386 = vpop.f32.mrb[0].mxu0
        %v5387 = vadd.f32 %v5279, %v5386
        %v5388 = vpop.f32.mrb[0].mxu0
        %v5389 = vpop.f32.mrb[0].mxu0
        %v5390 = vadd.f32 %v5279, %v5389
        %v5391 = vpop.f32.mrb[0].mxu0
        %5392 = vmatprep.mubr.bf16.mxu0 0
        %5393 = vmatmul.mubr.bf16.gmra.mrb[0].mxu0 %v5246
        %v5394 = vpop.f32.mrb[0].mxu0
        %v5395 = vadd.f32 %v5279, %v5394
        %v5396 = vpop.f32.mrb[0].mxu0
        %v5397 = vpop.f32.mrb[0].mxu0
        %v5398 = vadd.f32 %v5279, %v5397
        %v5399 = vpop.f32.mrb[0].mxu0
        %5400 = vmatprep.mubr.bf16.mxu0 0
        %5401 = vmatmul.mubr.bf16.gmra.mrb[0].mxu0 %v5247
        %v5402 = vpop.f32.mrb[0].mxu0
        %v5403 = vadd.f32 %v5279, %v5402
        %v5404 = vpop.f32.mrb[0].mxu0
        %v5405 = vpop.f32.mrb[0].mxu0
        %v5406 = vadd.f32 %v5279, %v5405
        %v5407 = vpop.f32.mrb[0].mxu0
        %5408 = vmatprep.mubr.bf16.mxu0 0
        %5409 = vmatmul.mubr.bf16.gmra.mrb[0].mxu0 %v5248
        %v5410 = vpop.f32.mrb[0].mxu0
        %v5411 = vadd.f32 %v5279, %v5410
        %v5412 = vpop.f32.mrb[0].mxu0
        %v5413 = vpop.f32.mrb[0].mxu0
        %v5414 = vadd.f32 %v5279, %v5413
        %v5415 = vpop.f32.mrb[0].mxu0
        %5416 = vmatprep.mubr.bf16.mxu0 0
        %5417 = vmatmul.mubr.bf16.gmra.mrb[0].mxu0 %v5249
        %v5418 = vpop.f32.mrb[0].mxu0
        %v5419 = vadd.f32 %v5279, %v5418
        %v5420 = vpop.f32.mrb[0].mxu0
        %v5421 = vpop.f32.mrb[0].mxu0
        %v5422 = vadd.f32 %v5279, %v5421
        %v5423 = vpop.f32.mrb[0].mxu0
        %5424 = vmatprep.mubr.bf16.mxu0 0
        %5425 = vmatmul.mubr.bf16.gmra.mrb[0].mxu0 %v5250
        %v5426 = vpop.f32.mrb[0].mxu0
        %v5427 = vadd.f32 %v5279, %v5426
        %v5428 = vpop.f32.mrb[0].mxu0
        %v5429 = vpop.f32.mrb[0].mxu0
        %v5430 = vadd.f32 %v5279, %v5429
        %v5431 = vpop.f32.mrb[0].mxu0
        %5432 = vmatprep.mubr.bf16.mxu0 0
        %5433 = vmatmul.mubr.bf16.gmra.mrb[0].mxu0 %v5251
        %v5434 = vpop.f32.mrb[0].mxu0
        %v5435 = vadd.f32 %v5279, %v5434
        %v5436 = vpop.f32.mrb[0].mxu0
        %v5437 = vpop.f32.mrb[0].mxu0
        %v5438 = vadd.f32 %v5279, %v5437
        %v5439 = vpop.f32.mrb[0].mxu0
        %5440 = vmatprep.mubr.bf16.mxu0 0
        %5441 = vmatmul.mubr.bf16.gmra.mrb[0].mxu0 %v5252
        %v5442 = vpop.f32.mrb[0].mxu0
        %v5443 = vadd.f32 %v5279, %v5442
        %v5444 = vpop.f32.mrb[0].mxu0
        %v5445 = vpop.f32.mrb[0].mxu0
        %v5446 = vadd.f32 %v5279, %v5445
        %v5447 = vpop.f32.mrb[0].mxu0
        %5448 = vmatprep.mubr.bf16.mxu0 0
        %5449 = vmatmul.mubr.bf16.gmra.mrb[0].mxu0 %v5253
        %v5450 = vpop.f32.mrb[0].mxu0
        %v5451 = vadd.f32 %v5279, %v5450
        %v5452 = vpop.f32.mrb[0].mxu0
        %v5453 = vpop.f32.mrb[0].mxu0
        %v5454 = vadd.f32 %v5279, %v5453
        %v5455 = vpop.f32.mrb[0].mxu0
        %5456 = vmatprep.mubr.bf16.mxu0 0
        %5457 = vmatmul.mubr.bf16.gmra.mrb[0].mxu0 %v5254
        %v5458 = vpop.f32.mrb[0].mxu0
        %v5459 = vadd.f32 %v5279, %v5458
        %v5460 = vpop.f32.mrb[0].mxu0
        %v5461 = vpop.f32.mrb[0].mxu0
        %v5462 = vadd.f32 %v5279, %v5461
        %v5463 = vpop.f32.mrb[0].mxu0
        %5464 = vmatprep.mubr.bf16.mxu0 0
        %5465 = vmatmul.mubr.bf16.gmra.mrb[0].mxu0 %v5255
        %v5466 = vpop.f32.mrb[0].mxu0
        %v5467 = vadd.f32 %v5279, %v5466
        %v5468 = vpop.f32.mrb[0].mxu0
        %v5469 = vpop.f32.mrb[0].mxu0
        %v5470 = vadd.f32 %v5279, %v5469
        %v5471 = vpop.f32.mrb[0].mxu0
        %5472 = vmatprep.mubr.bf16.mxu0 0
        %5473 = vmatmul.mubr.bf16.gmra.mrb[0].mxu0 %v5256
        %v5474 = vpop.f32.mrb[0].mxu0
        %v5475 = vadd.f32 %v5279, %v5474
        %v5476 = vpop.f32.mrb[0].mxu0
        %v5477 = vpop.f32.mrb[0].mxu0
        %v5478 = vadd.f32 %v5279, %v5477
        %v5479 = vpop.f32.mrb[0].mxu0
        %5480 = vmatprep.mubr.bf16.mxu0 0
        %5481 = vmatmul.mubr.bf16.gmra.mrb[0].mxu0 %v5257
        %v5482 = vpop.f32.mrb[0].mxu0
        %v5483 = vadd.f32 %v5279, %v5482
        %v5484 = vpop.f32.mrb[0].mxu0
        %v5485 = vpop.f32.mrb[0].mxu0
        %v5486 = vadd.f32 %v5279, %v5485
        %v5487 = vpop.f32.mrb[0].mxu0
        %5488 = vdwg.mxu0
        %v5489 = vmax.f32 %v5363, 0.0
        %v5490 = vmax.f32 %v5366, 0.0
        %v5491 = vmax.f32 %v5371, 0.0
        %v5492 = vmax.f32 %v5374, 0.0
        %v5493 = vmax.f32 %v5379, 0.0
        %v5494 = vmax.f32 %v5382, 0.0
        %v5495 = vmax.f32 %v5387, 0.0
        %v5496 = vmax.f32 %v5390, 0.0
        %v5497 = vmax.f32 %v5395, 0.0
        %v5498 = vmax.f32 %v5398, 0.0
        %v5499 = vmax.f32 %v5403, 0.0
        %v5500 = vmax.f32 %v5406, 0.0
        %v5501 = vmax.f32 %v5411, 0.0
        %v5502 = vmax.f32 %v5414, 0.0
        %v5503 = vmax.f32 %v5419, 0.0
        %v5504 = vmax.f32 %v5422, 0.0
        %v5505 = vmax.f32 %v5427, 0.0
        %v5506 = vmax.f32 %v5430, 0.0
        %v5507 = vmax.f32 %v5435, 0.0
        %v5508 = vmax.f32 %v5438, 0.0
        %v5509 = vmax.f32 %v5443, 0.0
        %v5510 = vmax.f32 %v5446, 0.0
        %v5511 = vmax.f32 %v5451, 0.0
        %v5512 = vmax.f32 %v5454, 0.0
        %v5513 = vmax.f32 %v5459, 0.0
        %v5514 = vmax.f32 %v5462, 0.0
        %v5515 = vmax.f32 %v5467, 0.0
        %v5516 = vmax.f32 %v5470, 0.0
        %v5517 = vmax.f32 %v5475, 0.0
        %v5518 = vmax.f32 %v5478, 0.0
        %v5519 = vmax.f32 %v5483, 0.0
        %v5520 = vmax.f32 %v5486, 0.0
        %5521 = vst [vmem:[#allocation4] sm:$0xff] %v5489
        %5522 = vst [vmem:[#allocation4 + $0x8] sm:$0xff] %v5490
        %5523 = vst [vmem:[#allocation4 + $0x10] sm:$0xff] %v5491
        %5524 = vst [vmem:[#allocation4 + $0x18] sm:$0xff] %v5492
        %5525 = vst [vmem:[#allocation4 + $0x20] sm:$0xff] %v5493
        %5526 = vst [vmem:[#allocation4 + $0x28] sm:$0xff] %v5494
        %5527 = vst [vmem:[#allocation4 + $0x30] sm:$0xff] %v5495
        %5528 = vst [vmem:[#allocation4 + $0x38] sm:$0xff] %v5496
        %5529 = vst [vmem:[#allocation4 + $0x40] sm:$0xff] %v5497
        %5530 = vst [vmem:[#allocation4 + $0x48] sm:$0xff] %v5498
        %5531 = vst [vmem:[#allocation4 + $0x50] sm:$0xff] %v5499
        %5532 = vst [vmem:[#allocation4 + $0x58] sm:$0xff] %v5500
        %5533 = vst [vmem:[#allocation4 + $0x60] sm:$0xff] %v5501
        %5534 = vst [vmem:[#allocation4 + $0x68] sm:$0xff] %v5502
        %5535 = vst [vmem:[#allocation4 + $0x70] sm:$0xff] %v5503
        %5536 = vst [vmem:[#allocation4 + $0x78] sm:$0xff] %v5504
        %5537 = vst [vmem:[#allocation4 + $0x80] sm:$0xff] %v5505
        %5538 = vst [vmem:[#allocation4 + $0x88] sm:$0xff] %v5506
        %5539 = vst [vmem:[#allocation4 + $0x90] sm:$0xff] %v5507
        %5540 = vst [vmem:[#allocation4 + $0x98] sm:$0xff] %v5508
        %5541 = vst [vmem:[#allocation4 + $0xa0] sm:$0xff] %v5509
        %5542 = vst [vmem:[#allocation4 + $0xa8] sm:$0xff] %v5510
        %5543 = vst [vmem:[#allocation4 + $0xb0] sm:$0xff] %v5511
        %5544 = vst [vmem:[#allocation4 + $0xb8] sm:$0xff] %v5512
        %5545 = vst [vmem:[#allocation4 + $0xc0] sm:$0xff] %v5513
        %5546 = vst [vmem:[#allocation4 + $0xc8] sm:$0xff] %v5514
        %5547 = vst [vmem:[#allocation4 + $0xd0] sm:$0xff] %v5515
        %5548 = vst [vmem:[#allocation4 + $0xd8] sm:$0xff] %v5516
        %5549 = vst [vmem:[#allocation4 + $0xe0] sm:$0xff] %v5517
        %5550 = vst [vmem:[#allocation4 + $0xe8] sm:$0xff] %v5518
        %5551 = vst [vmem:[#allocation4 + $0xf0] sm:$0xff] %v5519
        %5552 = vst [vmem:[#allocation4 + $0xf8] sm:$0xff] %v5520
        %v5553 = vld [vmem:[#allocation4] sm:$0xff]
        %v5554 = vld [vmem:[#allocation4 + $0x8] sm:$0xff]
        %v5555 = vld [vmem:[#allocation4 + $0x10] sm:$0xff]
        %v5556 = vld [vmem:[#allocation4 + $0x18] sm:$0xff]
        %v5557 = vld [vmem:[#allocation4 + $0x20] sm:$0xff]
        %v5558 = vld [vmem:[#allocation4 + $0x28] sm:$0xff]
        %v5559 = vld [vmem:[#allocation4 + $0x30] sm:$0xff]
        %v5560 = vld [vmem:[#allocation4 + $0x38] sm:$0xff]
        %v5561 = vld [vmem:[#allocation4 + $0x40] sm:$0xff]
        %v5562 = vld [vmem:[#allocation4 + $0x48] sm:$0xff]
        %v5563 = vld [vmem:[#allocation4 + $0x50] sm:$0xff]
        %v5564 = vld [vmem:[#allocation4 + $0x58] sm:$0xff]
        %v5565 = vld [vmem:[#allocation4 + $0x60] sm:$0xff]
        %v5566 = vld [vmem:[#allocation4 + $0x68] sm:$0xff]
        %v5567 = vld [vmem:[#allocation4 + $0x70] sm:$0xff]
        %v5568 = vld [vmem:[#allocation4 + $0x78] sm:$0xff]
        %v5569 = vld [vmem:[#allocation4 + $0x80] sm:$0xff]
        %v5570 = vld [vmem:[#allocation4 + $0x88] sm:$0xff]
        %v5571 = vld [vmem:[#allocation4 + $0x90] sm:$0xff]
        %v5572 = vld [vmem:[#allocation4 + $0x98] sm:$0xff]
        %v5573 = vld [vmem:[#allocation4 + $0xa0] sm:$0xff]
        %v5574 = vld [vmem:[#allocation4 + $0xa8] sm:$0xff]
        %v5575 = vld [vmem:[#allocation4 + $0xb0] sm:$0xff]
        %v5576 = vld [vmem:[#allocation4 + $0xb8] sm:$0xff]
        %v5577 = vld [vmem:[#allocation4 + $0xc0] sm:$0xff]
        %v5578 = vld [vmem:[#allocation4 + $0xc8] sm:$0xff]
        %v5579 = vld [vmem:[#allocation4 + $0xd0] sm:$0xff]
        %v5580 = vld [vmem:[#allocation4 + $0xd8] sm:$0xff]
        %v5581 = vld [vmem:[#allocation4 + $0xe0] sm:$0xff]
        %v5582 = vld [vmem:[#allocation4 + $0xe8] sm:$0xff]
        %v5583 = vld [vmem:[#allocation4 + $0xf0] sm:$0xff]
        %v5584 = vld [vmem:[#allocation4 + $0xf8] sm:$0xff]
        %v5585 = vld [vmem:[#allocation11] sm:$0xff]
        %v5586 = vld [vmem:[#allocation11 + $0x8] sm:$0xff]
        %v5587 = vld [vmem:[#allocation11 + $0x10] sm:$0xff]
        %v5588 = vld [vmem:[#allocation11 + $0x18] sm:$0xff]
        %v5589 = vld [vmem:[#allocation11 + $0x20] sm:$0xff]
        %v5590 = vld [vmem:[#allocation11 + $0x28] sm:$0xff]
        %v5591 = vld [vmem:[#allocation11 + $0x30] sm:$0xff]
        %v5592 = vld [vmem:[#allocation11 + $0x38] sm:$0xff]
        %v5593 = vld [vmem:[#allocation11 + $0x40] sm:$0xff]
        %v5594 = vld [vmem:[#allocation11 + $0x48] sm:$0xff]
        %v5595 = vld [vmem:[#allocation11 + $0x50] sm:$0xff]
        %v5596 = vld [vmem:[#allocation11 + $0x58] sm:$0xff]
        %v5597 = vld [vmem:[#allocation11 + $0x60] sm:$0xff]
        %v5598 = vld [vmem:[#allocation11 + $0x68] sm:$0xff]
        %v5599 = vld [vmem:[#allocation11 + $0x70] sm:$0xff]
        %v5600 = vld [vmem:[#allocation11 + $0x78] sm:$0xff]
        %v5601 = vld [vmem:[#allocation11 + $0x80] sm:$0xff]
        %v5602 = vld [vmem:[#allocation11 + $0x88] sm:$0xff]
        %v5603 = vld [vmem:[#allocation11 + $0x90] sm:$0xff]
        %v5604 = vld [vmem:[#allocation11 + $0x98] sm:$0xff]
        %v5605 = vld [vmem:[#allocation11 + $0xa0] sm:$0xff]
        %v5606 = vld [vmem:[#allocation11 + $0xa8] sm:$0xff]
        %v5607 = vld [vmem:[#allocation11 + $0xb0] sm:$0xff]
        %v5608 = vld [vmem:[#allocation11 + $0xb8] sm:$0xff]
        %v5609 = vld [vmem:[#allocation11 + $0xc0] sm:$0xff]
        %v5610 = vld [vmem:[#allocation11 + $0xc8] sm:$0xff]
        %v5611 = vld [vmem:[#allocation11 + $0xd0] sm:$0xff]
        %v5612 = vld [vmem:[#allocation11 + $0xd8] sm:$0xff]
        %v5613 = vld [vmem:[#allocation11 + $0xe0] sm:$0xff]
        %v5614 = vld [vmem:[#allocation11 + $0xe8] sm:$0xff]
        %v5615 = vld [vmem:[#allocation11 + $0xf0] sm:$0xff]
        %v5616 = vld [vmem:[#allocation11 + $0xf8] sm:$0xff]
        %v5617 = vrot.slane %v5553, 7
        %v5618 = vrot.slane %v5554, 7
        %v5619 = vrot.slane %v5555, 7
        %v5620 = vrot.slane %v5556, 7
        %v5621 = vrot.slane %v5557, 7
        %v5622 = vrot.slane %v5558, 7
        %v5623 = vrot.slane %v5559, 7
        %v5624 = vrot.slane %v5560, 7
        %v5625 = vrot.slane %v5561, 7
        %v5626 = vrot.slane %v5562, 7
        %v5627 = vrot.slane %v5563, 7
        %v5628 = vrot.slane %v5564, 7
        %v5629 = vrot.slane %v5565, 7
        %v5630 = vrot.slane %v5566, 7
        %v5631 = vrot.slane %v5567, 7
        %v5632 = vrot.slane %v5568, 7
        %v5633 = vrot.slane %v5569, 7
        %v5634 = vrot.slane %v5570, 7
        %v5635 = vrot.slane %v5571, 7
        %v5636 = vrot.slane %v5572, 7
        %v5637 = vrot.slane %v5573, 7
        %v5638 = vrot.slane %v5574, 7
        %v5639 = vrot.slane %v5575, 7
        %v5640 = vrot.slane %v5576, 7
        %v5641 = vrot.slane %v5577, 7
        %v5642 = vrot.slane %v5578, 7
        %v5643 = vrot.slane %v5579, 7
        %v5644 = vrot.slane %v5580, 7
        %v5645 = vrot.slane %v5581, 7
        %v5646 = vrot.slane %v5582, 7
        %v5647 = vrot.slane %v5583, 7
        %v5648 = vrot.slane %v5584, 7
        %v5649 = vsel %vm418, %v5647, %v5648
        %v5650 = vsel %vm418, %v5646, %v5647
        %v5651 = vsel %vm418, %v5645, %v5646
        %v5652 = vsel %vm418, %v5644, %v5645
        %v5653 = vsel %vm418, %v5643, %v5644
        %v5654 = vsel %vm418, %v5642, %v5643
        %v5655 = vsel %vm418, %v5641, %v5642
        %v5656 = vsel %vm418, %v5640, %v5641
        %v5657 = vsel %vm418, %v5639, %v5640
        %v5658 = vsel %vm418, %v5638, %v5639
        %v5659 = vsel %vm418, %v5637, %v5638
        %v5660 = vsel %vm418, %v5636, %v5637
        %v5661 = vsel %vm418, %v5635, %v5636
        %v5662 = vsel %vm418, %v5634, %v5635
        %v5663 = vsel %vm418, %v5633, %v5634
        %v5664 = vsel %vm418, %v5632, %v5633
        %v5665 = vsel %vm418, %v5631, %v5632
        %v5666 = vsel %vm418, %v5630, %v5631
        %v5667 = vsel %vm418, %v5629, %v5630
        %v5668 = vsel %vm418, %v5628, %v5629
        %v5669 = vsel %vm418, %v5627, %v5628
        %v5670 = vsel %vm418, %v5626, %v5627
        %v5671 = vsel %vm418, %v5625, %v5626
        %v5672 = vsel %vm418, %v5624, %v5625
        %v5673 = vsel %vm418, %v5623, %v5624
        %v5674 = vsel %vm418, %v5622, %v5623
        %v5675 = vsel %vm418, %v5621, %v5622
        %v5676 = vsel %vm418, %v5620, %v5621
        %v5677 = vsel %vm418, %v5619, %v5620
        %v5678 = vsel %vm418, %v5618, %v5619
        %v5679 = vsel %vm418, %v5617, %v5618
        %v5680 = vsel %vm418, %v5648, %v5617
        %v5681 = vand.u32 %v5585, 5
        %v5682 = vand.u32 %v5586, 5
        %v5683 = vand.u32 %v5587, 5
        %v5684 = vand.u32 %v5588, 5
        %v5685 = vand.u32 %v5589, 5
        %v5686 = vand.u32 %v5590, 5
        %v5687 = vand.u32 %v5591, 5
        %v5688 = vand.u32 %v5592, 5
        %v5689 = vand.u32 %v5593, 5
        %v5690 = vand.u32 %v5594, 5
        %v5691 = vand.u32 %v5595, 5
        %v5692 = vand.u32 %v5596, 5
        %v5693 = vand.u32 %v5597, 5
        %v5694 = vand.u32 %v5598, 5
        %v5695 = vand.u32 %v5599, 5
        %v5696 = vand.u32 %v5600, 5
        %v5697 = vand.u32 %v5601, 5
        %v5698 = vand.u32 %v5602, 5
        %v5699 = vand.u32 %v5603, 5
        %v5700 = vand.u32 %v5604, 5
        %v5701 = vand.u32 %v5605, 5
        %v5702 = vand.u32 %v5606, 5
        %v5703 = vand.u32 %v5607, 5
        %v5704 = vand.u32 %v5608, 5
        %v5705 = vand.u32 %v5609, 5
        %v5706 = vand.u32 %v5610, 5
        %v5707 = vand.u32 %v5611, 5
        %v5708 = vand.u32 %v5612, 5
        %v5709 = vand.u32 %v5613, 5
        %v5710 = vand.u32 %v5614, 5
        %v5711 = vand.u32 %v5615, 5
        %v5712 = vand.u32 %v5616, 5
        %vm5713 = vcmp.eq.s32.totalorder %v5681, 5
        %vm5714 = vcmp.eq.s32.totalorder %v5682, 5
        %vm5715 = vcmp.eq.s32.totalorder %v5683, 5
        %vm5716 = vcmp.eq.s32.totalorder %v5684, 5
        %vm5717 = vcmp.eq.s32.totalorder %v5685, 5
        %vm5718 = vcmp.eq.s32.totalorder %v5686, 5
        %vm5719 = vcmp.eq.s32.totalorder %v5687, 5
        %vm5720 = vcmp.eq.s32.totalorder %v5688, 5
        %vm5721 = vcmp.eq.s32.totalorder %v5689, 5
        %vm5722 = vcmp.eq.s32.totalorder %v5690, 5
        %vm5723 = vcmp.eq.s32.totalorder %v5691, 5
        %vm5724 = vcmp.eq.s32.totalorder %v5692, 5
        %vm5725 = vcmp.eq.s32.totalorder %v5693, 5
        %vm5726 = vcmp.eq.s32.totalorder %v5694, 5
        %vm5727 = vcmp.eq.s32.totalorder %v5695, 5
        %vm5728 = vcmp.eq.s32.totalorder %v5696, 5
        %vm5729 = vcmp.eq.s32.totalorder %v5697, 5
        %vm5730 = vcmp.eq.s32.totalorder %v5698, 5
        %vm5731 = vcmp.eq.s32.totalorder %v5699, 5
        %vm5732 = vcmp.eq.s32.totalorder %v5700, 5
        %vm5733 = vcmp.eq.s32.totalorder %v5701, 5
        %vm5734 = vcmp.eq.s32.totalorder %v5702, 5
        %vm5735 = vcmp.eq.s32.totalorder %v5703, 5
        %vm5736 = vcmp.eq.s32.totalorder %v5704, 5
        %vm5737 = vcmp.eq.s32.totalorder %v5705, 5
        %vm5738 = vcmp.eq.s32.totalorder %v5706, 5
        %vm5739 = vcmp.eq.s32.totalorder %v5707, 5
        %vm5740 = vcmp.eq.s32.totalorder %v5708, 5
        %vm5741 = vcmp.eq.s32.totalorder %v5709, 5
        %vm5742 = vcmp.eq.s32.totalorder %v5710, 5
        %vm5743 = vcmp.eq.s32.totalorder %v5711, 5
        %vm5744 = vcmp.eq.s32.totalorder %v5712, 5
        %v5745 = vsel %vm5713, %v5650, 0.0
        %v5746 = vsel %vm5714, %v5649, 0.0
        %v5747 = vsel %vm5715, %v5680, 0.0
        %v5748 = vsel %vm5716, %v5679, 0.0
        %v5749 = vsel %vm5717, %v5678, 0.0
        %v5750 = vsel %vm5718, %v5677, 0.0
        %v5751 = vsel %vm5719, %v5676, 0.0
        %v5752 = vsel %vm5720, %v5675, 0.0
        %v5753 = vsel %vm5721, %v5674, 0.0
        %v5754 = vsel %vm5722, %v5673, 0.0
        %v5755 = vsel %vm5723, %v5672, 0.0
        %v5756 = vsel %vm5724, %v5671, 0.0
        %v5757 = vsel %vm5725, %v5670, 0.0
        %v5758 = vsel %vm5726, %v5669, 0.0
        %v5759 = vsel %vm5727, %v5668, 0.0
        %v5760 = vsel %vm5728, %v5667, 0.0
        %v5761 = vsel %vm5729, %v5666, 0.0
        %v5762 = vsel %vm5730, %v5665, 0.0
        %v5763 = vsel %vm5731, %v5664, 0.0
        %v5764 = vsel %vm5732, %v5663, 0.0
        %v5765 = vsel %vm5733, %v5662, 0.0
        %v5766 = vsel %vm5734, %v5661, 0.0
        %v5767 = vsel %vm5735, %v5660, 0.0
        %v5768 = vsel %vm5736, %v5659, 0.0
        %v5769 = vsel %vm5737, %v5658, 0.0
        %v5770 = vsel %vm5738, %v5657, 0.0
        %v5771 = vsel %vm5739, %v5656, 0.0
        %v5772 = vsel %vm5740, %v5655, 0.0
        %v5773 = vsel %vm5741, %v5654, 0.0
        %v5774 = vsel %vm5742, %v5653, 0.0
        %v5775 = vsel %vm5743, %v5652, 0.0
        %v5776 = vsel %vm5744, %v5651, 0.0
        %5777 = vst [vmem:[#allocation2] sm:$0xff] %v5745
        %5778 = vst [vmem:[#allocation2 + $0x8] sm:$0xff] %v5746
        %5779 = vst [vmem:[#allocation2 + $0x10] sm:$0xff] %v5747
        %5780 = vst [vmem:[#allocation2 + $0x18] sm:$0xff] %v5748
        %5781 = vst [vmem:[#allocation2 + $0x20] sm:$0xff] %v5749
        %5782 = vst [vmem:[#allocation2 + $0x28] sm:$0xff] %v5750
        %5783 = vst [vmem:[#allocation2 + $0x30] sm:$0xff] %v5751
        %5784 = vst [vmem:[#allocation2 + $0x38] sm:$0xff] %v5752
        %5785 = vst [vmem:[#allocation2 + $0x40] sm:$0xff] %v5753
        %5786 = vst [vmem:[#allocation2 + $0x48] sm:$0xff] %v5754
        %5787 = vst [vmem:[#allocation2 + $0x50] sm:$0xff] %v5755
        %5788 = vst [vmem:[#allocation2 + $0x58] sm:$0xff] %v5756
        %5789 = vst [vmem:[#allocation2 + $0x60] sm:$0xff] %v5757
        %5790 = vst [vmem:[#allocation2 + $0x68] sm:$0xff] %v5758
        %5791 = vst [vmem:[#allocation2 + $0x70] sm:$0xff] %v5759
        %5792 = vst [vmem:[#allocation2 + $0x78] sm:$0xff] %v5760
        %5793 = vst [vmem:[#allocation2 + $0x80] sm:$0xff] %v5761
        %5794 = vst [vmem:[#allocation2 + $0x88] sm:$0xff] %v5762
        %5795 = vst [vmem:[#allocation2 + $0x90] sm:$0xff] %v5763
        %5796 = vst [vmem:[#allocation2 + $0x98] sm:$0xff] %v5764
        %5797 = vst [vmem:[#allocation2 + $0xa0] sm:$0xff] %v5765
        %5798 = vst [vmem:[#allocation2 + $0xa8] sm:$0xff] %v5766
        %5799 = vst [vmem:[#allocation2 + $0xb0] sm:$0xff] %v5767
        %5800 = vst [vmem:[#allocation2 + $0xb8] sm:$0xff] %v5768
        %5801 = vst [vmem:[#allocation2 + $0xc0] sm:$0xff] %v5769
        %5802 = vst [vmem:[#allocation2 + $0xc8] sm:$0xff] %v5770
        %5803 = vst [vmem:[#allocation2 + $0xd0] sm:$0xff] %v5771
        %5804 = vst [vmem:[#allocation2 + $0xd8] sm:$0xff] %v5772
        %5805 = vst [vmem:[#allocation2 + $0xe0] sm:$0xff] %v5773
        %5806 = vst [vmem:[#allocation2 + $0xe8] sm:$0xff] %v5774
        %5807 = vst [vmem:[#allocation2 + $0xf0] sm:$0xff] %v5775
        %5808 = vst [vmem:[#allocation2 + $0xf8] sm:$0xff] %v5776
        %v5809 = vand.u32 %v5585, 1
        %v5810 = vand.u32 %v5586, 1
        %v5811 = vand.u32 %v5587, 1
        %v5812 = vand.u32 %v5588, 1
        %v5813 = vand.u32 %v5589, 1
        %v5814 = vand.u32 %v5590, 1
        %v5815 = vand.u32 %v5591, 1
        %v5816 = vand.u32 %v5592, 1
        %v5817 = vand.u32 %v5593, 1
        %v5818 = vand.u32 %v5594, 1
        %v5819 = vand.u32 %v5595, 1
        %v5820 = vand.u32 %v5596, 1
        %v5821 = vand.u32 %v5597, 1
        %v5822 = vand.u32 %v5598, 1
        %v5823 = vand.u32 %v5599, 1
        %v5824 = vand.u32 %v5600, 1
        %v5825 = vand.u32 %v5601, 1
        %v5826 = vand.u32 %v5602, 1
        %v5827 = vand.u32 %v5603, 1
        %v5828 = vand.u32 %v5604, 1
        %v5829 = vand.u32 %v5605, 1
        %v5830 = vand.u32 %v5606, 1
        %v5831 = vand.u32 %v5607, 1
        %v5832 = vand.u32 %v5608, 1
        %v5833 = vand.u32 %v5609, 1
        %v5834 = vand.u32 %v5610, 1
        %v5835 = vand.u32 %v5611, 1
        %v5836 = vand.u32 %v5612, 1
        %v5837 = vand.u32 %v5613, 1
        %v5838 = vand.u32 %v5614, 1
        %v5839 = vand.u32 %v5615, 1
        %v5840 = vand.u32 %v5616, 1
        %vm5841 = vcmp.eq.s32.totalorder %v5809, 1
        %vm5842 = vcmp.eq.s32.totalorder %v5810, 1
        %vm5843 = vcmp.eq.s32.totalorder %v5811, 1
        %vm5844 = vcmp.eq.s32.totalorder %v5812, 1
        %vm5845 = vcmp.eq.s32.totalorder %v5813, 1
        %vm5846 = vcmp.eq.s32.totalorder %v5814, 1
        %vm5847 = vcmp.eq.s32.totalorder %v5815, 1
        %vm5848 = vcmp.eq.s32.totalorder %v5816, 1
        %vm5849 = vcmp.eq.s32.totalorder %v5817, 1
        %vm5850 = vcmp.eq.s32.totalorder %v5818, 1
        %vm5851 = vcmp.eq.s32.totalorder %v5819, 1
        %vm5852 = vcmp.eq.s32.totalorder %v5820, 1
        %vm5853 = vcmp.eq.s32.totalorder %v5821, 1
        %vm5854 = vcmp.eq.s32.totalorder %v5822, 1
        %vm5855 = vcmp.eq.s32.totalorder %v5823, 1
        %vm5856 = vcmp.eq.s32.totalorder %v5824, 1
        %vm5857 = vcmp.eq.s32.totalorder %v5825, 1
        %vm5858 = vcmp.eq.s32.totalorder %v5826, 1
        %vm5859 = vcmp.eq.s32.totalorder %v5827, 1
        %vm5860 = vcmp.eq.s32.totalorder %v5828, 1
        %vm5861 = vcmp.eq.s32.totalorder %v5829, 1
        %vm5862 = vcmp.eq.s32.totalorder %v5830, 1
        %vm5863 = vcmp.eq.s32.totalorder %v5831, 1
        %vm5864 = vcmp.eq.s32.totalorder %v5832, 1
        %vm5865 = vcmp.eq.s32.totalorder %v5833, 1
        %vm5866 = vcmp.eq.s32.totalorder %v5834, 1
        %vm5867 = vcmp.eq.s32.totalorder %v5835, 1
        %vm5868 = vcmp.eq.s32.totalorder %v5836, 1
        %vm5869 = vcmp.eq.s32.totalorder %v5837, 1
        %vm5870 = vcmp.eq.s32.totalorder %v5838, 1
        %vm5871 = vcmp.eq.s32.totalorder %v5839, 1
        %vm5872 = vcmp.eq.s32.totalorder %v5840, 1
        %v5873 = vsel %vm5841, %v5583, 0.0
        %v5874 = vsel %vm5842, %v5584, 0.0
        %v5875 = vsel %vm5843, %v5553, 0.0
        %v5876 = vsel %vm5844, %v5554, 0.0
        %v5877 = vsel %vm5845, %v5555, 0.0
        %v5878 = vsel %vm5846, %v5556, 0.0
        %v5879 = vsel %vm5847, %v5557, 0.0
        %v5880 = vsel %vm5848, %v5558, 0.0
        %v5881 = vsel %vm5849, %v5559, 0.0
        %v5882 = vsel %vm5850, %v5560, 0.0
        %v5883 = vsel %vm5851, %v5561, 0.0
        %v5884 = vsel %vm5852, %v5562, 0.0
        %v5885 = vsel %vm5853, %v5563, 0.0
        %v5886 = vsel %vm5854, %v5564, 0.0
        %v5887 = vsel %vm5855, %v5565, 0.0
        %v5888 = vsel %vm5856, %v5566, 0.0
        %v5889 = vsel %vm5857, %v5567, 0.0
        %v5890 = vsel %vm5858, %v5568, 0.0
        %v5891 = vsel %vm5859, %v5569, 0.0
        %v5892 = vsel %vm5860, %v5570, 0.0
        %v5893 = vsel %vm5861, %v5571, 0.0
        %v5894 = vsel %vm5862, %v5572, 0.0
        %v5895 = vsel %vm5863, %v5573, 0.0
        %v5896 = vsel %vm5864, %v5574, 0.0
        %v5897 = vsel %vm5865, %v5575, 0.0
        %v5898 = vsel %vm5866, %v5576, 0.0
        %v5899 = vsel %vm5867, %v5577, 0.0
        %v5900 = vsel %vm5868, %v5578, 0.0
        %v5901 = vsel %vm5869, %v5579, 0.0
        %v5902 = vsel %vm5870, %v5580, 0.0
        %v5903 = vsel %vm5871, %v5581, 0.0
        %v5904 = vsel %vm5872, %v5582, 0.0
        %5905 = vrot.lane.b32.xlu0 %v5873, 8
        %v5906 = vpop.permute.xlu0 %5905
        %5907 = vrot.lane.b32.xlu0 %v5874, 8
        %v5908 = vpop.permute.xlu0 %5907
        %5909 = vrot.lane.b32.xlu0 %v5875, 8
        %v5910 = vpop.permute.xlu0 %5909
        %5911 = vrot.lane.b32.xlu0 %v5876, 8
        %v5912 = vpop.permute.xlu0 %5911
        %5913 = vrot.lane.b32.xlu0 %v5877, 8
        %v5914 = vpop.permute.xlu0 %5913
        %5915 = vrot.lane.b32.xlu0 %v5878, 8
        %v5916 = vpop.permute.xlu0 %5915
        %5917 = vrot.lane.b32.xlu0 %v5879, 8
        %v5918 = vpop.permute.xlu0 %5917
        %5919 = vrot.lane.b32.xlu0 %v5880, 8
        %v5920 = vpop.permute.xlu0 %5919
        %5921 = vrot.lane.b32.xlu0 %v5881, 8
        %v5922 = vpop.permute.xlu0 %5921
        %5923 = vrot.lane.b32.xlu0 %v5882, 8
        %v5924 = vpop.permute.xlu0 %5923
        %5925 = vrot.lane.b32.xlu0 %v5883, 8
        %v5926 = vpop.permute.xlu0 %5925
        %5927 = vrot.lane.b32.xlu0 %v5884, 8
        %v5928 = vpop.permute.xlu0 %5927
        %5929 = vrot.lane.b32.xlu0 %v5885, 8
        %v5930 = vpop.permute.xlu0 %5929
        %5931 = vrot.lane.b32.xlu0 %v5886, 8
        %v5932 = vpop.permute.xlu0 %5931
        %5933 = vrot.lane.b32.xlu0 %v5887, 8
        %v5934 = vpop.permute.xlu0 %5933
        %5935 = vrot.lane.b32.xlu0 %v5888, 8
        %v5936 = vpop.permute.xlu0 %5935
        %5937 = vrot.lane.b32.xlu0 %v5889, 8
        %v5938 = vpop.permute.xlu0 %5937
        %5939 = vrot.lane.b32.xlu0 %v5890, 8
        %v5940 = vpop.permute.xlu0 %5939
        %5941 = vrot.lane.b32.xlu0 %v5891, 8
        %v5942 = vpop.permute.xlu0 %5941
        %5943 = vrot.lane.b32.xlu0 %v5892, 8
        %v5944 = vpop.permute.xlu0 %5943
        %5945 = vrot.lane.b32.xlu0 %v5893, 8
        %v5946 = vpop.permute.xlu0 %5945
        %5947 = vrot.lane.b32.xlu0 %v5894, 8
        %v5948 = vpop.permute.xlu0 %5947
        %5949 = vrot.lane.b32.xlu0 %v5895, 8
        %v5950 = vpop.permute.xlu0 %5949
        %5951 = vrot.lane.b32.xlu0 %v5896, 8
        %v5952 = vpop.permute.xlu0 %5951
        %5953 = vrot.lane.b32.xlu0 %v5897, 8
        %v5954 = vpop.permute.xlu0 %5953
        %5955 = vrot.lane.b32.xlu0 %v5898, 8
        %v5956 = vpop.permute.xlu0 %5955
        %5957 = vrot.lane.b32.xlu0 %v5899, 8
        %v5958 = vpop.permute.xlu0 %5957
        %5959 = vrot.lane.b32.xlu0 %v5900, 8
        %v5960 = vpop.permute.xlu0 %5959
        %5961 = vrot.lane.b32.xlu0 %v5901, 8
        %v5962 = vpop.permute.xlu0 %5961
        %5963 = vrot.lane.b32.xlu0 %v5902, 8
        %v5964 = vpop.permute.xlu0 %5963
        %5965 = vrot.lane.b32.xlu0 %v5903, 8
        %v5966 = vpop.permute.xlu0 %5965
        %5967 = vrot.lane.b32.xlu0 %v5904, 8
        %v5968 = vpop.permute.xlu0 %5967
        %v5969 = vld [vmem:[#allocation2] sm:$0xff]
        %v5970 = vld [vmem:[#allocation2 + $0x8] sm:$0xff]
        %v5971 = vld [vmem:[#allocation2 + $0x10] sm:$0xff]
        %v5972 = vld [vmem:[#allocation2 + $0x18] sm:$0xff]
        %v5973 = vld [vmem:[#allocation2 + $0x20] sm:$0xff]
        %v5974 = vld [vmem:[#allocation2 + $0x28] sm:$0xff]
        %v5975 = vld [vmem:[#allocation2 + $0x30] sm:$0xff]
        %v5976 = vld [vmem:[#allocation2 + $0x38] sm:$0xff]
        %v5977 = vld [vmem:[#allocation2 + $0x40] sm:$0xff]
        %v5978 = vld [vmem:[#allocation2 + $0x48] sm:$0xff]
        %v5979 = vld [vmem:[#allocation2 + $0x50] sm:$0xff]
        %v5980 = vld [vmem:[#allocation2 + $0x58] sm:$0xff]
        %v5981 = vld [vmem:[#allocation2 + $0x60] sm:$0xff]
        %v5982 = vld [vmem:[#allocation2 + $0x68] sm:$0xff]
        %v5983 = vld [vmem:[#allocation2 + $0x70] sm:$0xff]
        %v5984 = vld [vmem:[#allocation2 + $0x78] sm:$0xff]
        %v5985 = vld [vmem:[#allocation2 + $0x80] sm:$0xff]
        %v5986 = vld [vmem:[#allocation2 + $0x88] sm:$0xff]
        %v5987 = vld [vmem:[#allocation2 + $0x90] sm:$0xff]
        %v5988 = vld [vmem:[#allocation2 + $0x98] sm:$0xff]
        %v5989 = vld [vmem:[#allocation2 + $0xa0] sm:$0xff]
        %v5990 = vld [vmem:[#allocation2 + $0xa8] sm:$0xff]
        %v5991 = vld [vmem:[#allocation2 + $0xb0] sm:$0xff]
        %v5992 = vld [vmem:[#allocation2 + $0xb8] sm:$0xff]
        %v5993 = vld [vmem:[#allocation2 + $0xc0] sm:$0xff]
        %v5994 = vld [vmem:[#allocation2 + $0xc8] sm:$0xff]
        %v5995 = vld [vmem:[#allocation2 + $0xd0] sm:$0xff]
        %v5996 = vld [vmem:[#allocation2 + $0xd8] sm:$0xff]
        %v5997 = vld [vmem:[#allocation2 + $0xe0] sm:$0xff]
        %v5998 = vld [vmem:[#allocation2 + $0xe8] sm:$0xff]
        %v5999 = vld [vmem:[#allocation2 + $0xf0] sm:$0xff]
        %v6000 = vld [vmem:[#allocation2 + $0xf8] sm:$0xff]
        %v6001 = vadd.f32 %v5969, %v5906
        %v6002 = vadd.f32 %v5970, %v5908
        %v6003 = vadd.f32 %v5971, %v5910
        %v6004 = vadd.f32 %v5972, %v5912
        %v6005 = vadd.f32 %v5973, %v5914
        %v6006 = vadd.f32 %v5974, %v5916
        %v6007 = vadd.f32 %v5975, %v5918
        %v6008 = vadd.f32 %v5976, %v5920
        %v6009 = vadd.f32 %v5977, %v5922
        %v6010 = vadd.f32 %v5978, %v5924
        %v6011 = vadd.f32 %v5979, %v5926
        %v6012 = vadd.f32 %v5980, %v5928
        %v6013 = vadd.f32 %v5981, %v5930
        %v6014 = vadd.f32 %v5982, %v5932
        %v6015 = vadd.f32 %v5983, %v5934
        %v6016 = vadd.f32 %v5984, %v5936
        %v6017 = vadd.f32 %v5985, %v5938
        %v6018 = vadd.f32 %v5986, %v5940
        %v6019 = vadd.f32 %v5987, %v5942
        %v6020 = vadd.f32 %v5988, %v5944
        %v6021 = vadd.f32 %v5989, %v5946
        %v6022 = vadd.f32 %v5990, %v5948
        %v6023 = vadd.f32 %v5991, %v5950
        %v6024 = vadd.f32 %v5992, %v5952
        %v6025 = vadd.f32 %v5993, %v5954
        %v6026 = vadd.f32 %v5994, %v5956
        %v6027 = vadd.f32 %v5995, %v5958
        %v6028 = vadd.f32 %v5996, %v5960
        %v6029 = vadd.f32 %v5997, %v5962
        %v6030 = vadd.f32 %v5998, %v5964
        %v6031 = vadd.f32 %v5999, %v5966
        %v6032 = vadd.f32 %v6000, %v5968
        %6033 = vst [vmem:[#allocation2] sm:$0xff] %v6001
        %6034 = vst [vmem:[#allocation2 + $0x8] sm:$0xff] %v6002
        %6035 = vst [vmem:[#allocation2 + $0x10] sm:$0xff] %v6003
        %6036 = vst [vmem:[#allocation2 + $0x18] sm:$0xff] %v6004
        %6037 = vst [vmem:[#allocation2 + $0x20] sm:$0xff] %v6005
        %6038 = vst [vmem:[#allocation2 + $0x28] sm:$0xff] %v6006
        %6039 = vst [vmem:[#allocation2 + $0x30] sm:$0xff] %v6007
        %6040 = vst [vmem:[#allocation2 + $0x38] sm:$0xff] %v6008
        %6041 = vst [vmem:[#allocation2 + $0x40] sm:$0xff] %v6009
        %6042 = vst [vmem:[#allocation2 + $0x48] sm:$0xff] %v6010
        %6043 = vst [vmem:[#allocation2 + $0x50] sm:$0xff] %v6011
        %6044 = vst [vmem:[#allocation2 + $0x58] sm:$0xff] %v6012
        %6045 = vst [vmem:[#allocation2 + $0x60] sm:$0xff] %v6013
        %6046 = vst [vmem:[#allocation2 + $0x68] sm:$0xff] %v6014
        %6047 = vst [vmem:[#allocation2 + $0x70] sm:$0xff] %v6015
        %6048 = vst [vmem:[#allocation2 + $0x78] sm:$0xff] %v6016
        %6049 = vst [vmem:[#allocation2 + $0x80] sm:$0xff] %v6017
        %6050 = vst [vmem:[#allocation2 + $0x88] sm:$0xff] %v6018
        %6051 = vst [vmem:[#allocation2 + $0x90] sm:$0xff] %v6019
        %6052 = vst [vmem:[#allocation2 + $0x98] sm:$0xff] %v6020
        %6053 = vst [vmem:[#allocation2 + $0xa0] sm:$0xff] %v6021
        %6054 = vst [vmem:[#allocation2 + $0xa8] sm:$0xff] %v6022
        %6055 = vst [vmem:[#allocation2 + $0xb0] sm:$0xff] %v6023
        %6056 = vst [vmem:[#allocation2 + $0xb8] sm:$0xff] %v6024
        %6057 = vst [vmem:[#allocation2 + $0xc0] sm:$0xff] %v6025
        %6058 = vst [vmem:[#allocation2 + $0xc8] sm:$0xff] %v6026
        %6059 = vst [vmem:[#allocation2 + $0xd0] sm:$0xff] %v6027
        %6060 = vst [vmem:[#allocation2 + $0xd8] sm:$0xff] %v6028
        %6061 = vst [vmem:[#allocation2 + $0xe0] sm:$0xff] %v6029
        %6062 = vst [vmem:[#allocation2 + $0xe8] sm:$0xff] %v6030
        %6063 = vst [vmem:[#allocation2 + $0xf0] sm:$0xff] %v6031
        %6064 = vst [vmem:[#allocation2 + $0xf8] sm:$0xff] %v6032
        %v6065 = vrot.slane %v5553, 1
        %v6066 = vrot.slane %v5554, 1
        %v6067 = vrot.slane %v5555, 1
        %v6068 = vrot.slane %v5556, 1
        %v6069 = vrot.slane %v5557, 1
        %v6070 = vrot.slane %v5558, 1
        %v6071 = vrot.slane %v5559, 1
        %v6072 = vrot.slane %v5560, 1
        %v6073 = vrot.slane %v5561, 1
        %v6074 = vrot.slane %v5562, 1
        %v6075 = vrot.slane %v5563, 1
        %v6076 = vrot.slane %v5564, 1
        %v6077 = vrot.slane %v5565, 1
        %v6078 = vrot.slane %v5566, 1
        %v6079 = vrot.slane %v5567, 1
        %v6080 = vrot.slane %v5568, 1
        %v6081 = vrot.slane %v5569, 1
        %v6082 = vrot.slane %v5570, 1
        %v6083 = vrot.slane %v5571, 1
        %v6084 = vrot.slane %v5572, 1
        %v6085 = vrot.slane %v5573, 1
        %v6086 = vrot.slane %v5574, 1
        %v6087 = vrot.slane %v5575, 1
        %v6088 = vrot.slane %v5576, 1
        %v6089 = vrot.slane %v5577, 1
        %v6090 = vrot.slane %v5578, 1
        %v6091 = vrot.slane %v5579, 1
        %v6092 = vrot.slane %v5580, 1
        %v6093 = vrot.slane %v5581, 1
        %v6094 = vrot.slane %v5582, 1
        %v6095 = vrot.slane %v5583, 1
        %v6096 = vrot.slane %v5584, 1
        %v6097 = vsel %vm867, %v6095, %v6096
        %v6098 = vsel %vm867, %v6094, %v6095
        %v6099 = vsel %vm867, %v6093, %v6094
        %v6100 = vsel %vm867, %v6092, %v6093
        %v6101 = vsel %vm867, %v6091, %v6092
        %v6102 = vsel %vm867, %v6090, %v6091
        %v6103 = vsel %vm867, %v6089, %v6090
        %v6104 = vsel %vm867, %v6088, %v6089
        %v6105 = vsel %vm867, %v6087, %v6088
        %v6106 = vsel %vm867, %v6086, %v6087
        %v6107 = vsel %vm867, %v6085, %v6086
        %v6108 = vsel %vm867, %v6084, %v6085
        %v6109 = vsel %vm867, %v6083, %v6084
        %v6110 = vsel %vm867, %v6082, %v6083
        %v6111 = vsel %vm867, %v6081, %v6082
        %v6112 = vsel %vm867, %v6080, %v6081
        %v6113 = vsel %vm867, %v6079, %v6080
        %v6114 = vsel %vm867, %v6078, %v6079
        %v6115 = vsel %vm867, %v6077, %v6078
        %v6116 = vsel %vm867, %v6076, %v6077
        %v6117 = vsel %vm867, %v6075, %v6076
        %v6118 = vsel %vm867, %v6074, %v6075
        %v6119 = vsel %vm867, %v6073, %v6074
        %v6120 = vsel %vm867, %v6072, %v6073
        %v6121 = vsel %vm867, %v6071, %v6072
        %v6122 = vsel %vm867, %v6070, %v6071
        %v6123 = vsel %vm867, %v6069, %v6070
        %v6124 = vsel %vm867, %v6068, %v6069
        %v6125 = vsel %vm867, %v6067, %v6068
        %v6126 = vsel %vm867, %v6066, %v6067
        %v6127 = vsel %vm867, %v6065, %v6066
        %v6128 = vsel %vm867, %v6096, %v6065
        %v6129 = vand.u32 %v5585, 9
        %v6130 = vand.u32 %v5586, 9
        %v6131 = vand.u32 %v5587, 9
        %v6132 = vand.u32 %v5588, 9
        %v6133 = vand.u32 %v5589, 9
        %v6134 = vand.u32 %v5590, 9
        %v6135 = vand.u32 %v5591, 9
        %v6136 = vand.u32 %v5592, 9
        %v6137 = vand.u32 %v5593, 9
        %v6138 = vand.u32 %v5594, 9
        %v6139 = vand.u32 %v5595, 9
        %v6140 = vand.u32 %v5596, 9
        %v6141 = vand.u32 %v5597, 9
        %v6142 = vand.u32 %v5598, 9
        %v6143 = vand.u32 %v5599, 9
        %v6144 = vand.u32 %v5600, 9
        %v6145 = vand.u32 %v5601, 9
        %v6146 = vand.u32 %v5602, 9
        %v6147 = vand.u32 %v5603, 9
        %v6148 = vand.u32 %v5604, 9
        %v6149 = vand.u32 %v5605, 9
        %v6150 = vand.u32 %v5606, 9
        %v6151 = vand.u32 %v5607, 9
        %v6152 = vand.u32 %v5608, 9
        %v6153 = vand.u32 %v5609, 9
        %v6154 = vand.u32 %v5610, 9
        %v6155 = vand.u32 %v5611, 9
        %v6156 = vand.u32 %v5612, 9
        %v6157 = vand.u32 %v5613, 9
        %v6158 = vand.u32 %v5614, 9
        %v6159 = vand.u32 %v5615, 9
        %v6160 = vand.u32 %v5616, 9
        %vm6161 = vcmp.eq.s32.totalorder %v6129, 9
        %vm6162 = vcmp.eq.s32.totalorder %v6130, 9
        %vm6163 = vcmp.eq.s32.totalorder %v6131, 9
        %vm6164 = vcmp.eq.s32.totalorder %v6132, 9
        %vm6165 = vcmp.eq.s32.totalorder %v6133, 9
        %vm6166 = vcmp.eq.s32.totalorder %v6134, 9
        %vm6167 = vcmp.eq.s32.totalorder %v6135, 9
        %vm6168 = vcmp.eq.s32.totalorder %v6136, 9
        %vm6169 = vcmp.eq.s32.totalorder %v6137, 9
        %vm6170 = vcmp.eq.s32.totalorder %v6138, 9
        %vm6171 = vcmp.eq.s32.totalorder %v6139, 9
        %vm6172 = vcmp.eq.s32.totalorder %v6140, 9
        %vm6173 = vcmp.eq.s32.totalorder %v6141, 9
        %vm6174 = vcmp.eq.s32.totalorder %v6142, 9
        %vm6175 = vcmp.eq.s32.totalorder %v6143, 9
        %vm6176 = vcmp.eq.s32.totalorder %v6144, 9
        %vm6177 = vcmp.eq.s32.totalorder %v6145, 9
        %vm6178 = vcmp.eq.s32.totalorder %v6146, 9
        %vm6179 = vcmp.eq.s32.totalorder %v6147, 9
        %vm6180 = vcmp.eq.s32.totalorder %v6148, 9
        %vm6181 = vcmp.eq.s32.totalorder %v6149, 9
        %vm6182 = vcmp.eq.s32.totalorder %v6150, 9
        %vm6183 = vcmp.eq.s32.totalorder %v6151, 9
        %vm6184 = vcmp.eq.s32.totalorder %v6152, 9
        %vm6185 = vcmp.eq.s32.totalorder %v6153, 9
        %vm6186 = vcmp.eq.s32.totalorder %v6154, 9
        %vm6187 = vcmp.eq.s32.totalorder %v6155, 9
        %vm6188 = vcmp.eq.s32.totalorder %v6156, 9
        %vm6189 = vcmp.eq.s32.totalorder %v6157, 9
        %vm6190 = vcmp.eq.s32.totalorder %v6158, 9
        %vm6191 = vcmp.eq.s32.totalorder %v6159, 9
        %vm6192 = vcmp.eq.s32.totalorder %v6160, 9
        %v6193 = vsel %vm6161, %v6097, 0.0
        %v6194 = vsel %vm6162, %v6128, 0.0
        %v6195 = vsel %vm6163, %v6127, 0.0
        %v6196 = vsel %vm6164, %v6126, 0.0
        %v6197 = vsel %vm6165, %v6125, 0.0
        %v6198 = vsel %vm6166, %v6124, 0.0
        %v6199 = vsel %vm6167, %v6123, 0.0
        %v6200 = vsel %vm6168, %v6122, 0.0
        %v6201 = vsel %vm6169, %v6121, 0.0
        %v6202 = vsel %vm6170, %v6120, 0.0
        %v6203 = vsel %vm6171, %v6119, 0.0
        %v6204 = vsel %vm6172, %v6118, 0.0
        %v6205 = vsel %vm6173, %v6117, 0.0
        %v6206 = vsel %vm6174, %v6116, 0.0
        %v6207 = vsel %vm6175, %v6115, 0.0
        %v6208 = vsel %vm6176, %v6114, 0.0
        %v6209 = vsel %vm6177, %v6113, 0.0
        %v6210 = vsel %vm6178, %v6112, 0.0
        %v6211 = vsel %vm6179, %v6111, 0.0
        %v6212 = vsel %vm6180, %v6110, 0.0
        %v6213 = vsel %vm6181, %v6109, 0.0
        %v6214 = vsel %vm6182, %v6108, 0.0
        %v6215 = vsel %vm6183, %v6107, 0.0
        %v6216 = vsel %vm6184, %v6106, 0.0
        %v6217 = vsel %vm6185, %v6105, 0.0
        %v6218 = vsel %vm6186, %v6104, 0.0
        %v6219 = vsel %vm6187, %v6103, 0.0
        %v6220 = vsel %vm6188, %v6102, 0.0
        %v6221 = vsel %vm6189, %v6101, 0.0
        %v6222 = vsel %vm6190, %v6100, 0.0
        %v6223 = vsel %vm6191, %v6099, 0.0
        %v6224 = vsel %vm6192, %v6098, 0.0
        %6225 = vrot.lane.b32.xlu0 %v6193, 16
        %v6226 = vpop.permute.xlu0 %6225
        %6227 = vrot.lane.b32.xlu0 %v6194, 16
        %v6228 = vpop.permute.xlu0 %6227
        %6229 = vrot.lane.b32.xlu0 %v6195, 16
        %v6230 = vpop.permute.xlu0 %6229
        %6231 = vrot.lane.b32.xlu0 %v6196, 16
        %v6232 = vpop.permute.xlu0 %6231
        %6233 = vrot.lane.b32.xlu0 %v6197, 16
        %v6234 = vpop.permute.xlu0 %6233
        %6235 = vrot.lane.b32.xlu0 %v6198, 16
        %v6236 = vpop.permute.xlu0 %6235
        %6237 = vrot.lane.b32.xlu0 %v6199, 16
        %v6238 = vpop.permute.xlu0 %6237
        %6239 = vrot.lane.b32.xlu0 %v6200, 16
        %v6240 = vpop.permute.xlu0 %6239
        %6241 = vrot.lane.b32.xlu0 %v6201, 16
        %v6242 = vpop.permute.xlu0 %6241
        %6243 = vrot.lane.b32.xlu0 %v6202, 16
        %v6244 = vpop.permute.xlu0 %6243
        %6245 = vrot.lane.b32.xlu0 %v6203, 16
        %v6246 = vpop.permute.xlu0 %6245
        %6247 = vrot.lane.b32.xlu0 %v6204, 16
        %v6248 = vpop.permute.xlu0 %6247
        %6249 = vrot.lane.b32.xlu0 %v6205, 16
        %v6250 = vpop.permute.xlu0 %6249
        %6251 = vrot.lane.b32.xlu0 %v6206, 16
        %v6252 = vpop.permute.xlu0 %6251
        %6253 = vrot.lane.b32.xlu0 %v6207, 16
        %v6254 = vpop.permute.xlu0 %6253
        %6255 = vrot.lane.b32.xlu0 %v6208, 16
        %v6256 = vpop.permute.xlu0 %6255
        %6257 = vrot.lane.b32.xlu0 %v6209, 16
        %v6258 = vpop.permute.xlu0 %6257
        %6259 = vrot.lane.b32.xlu0 %v6210, 16
        %v6260 = vpop.permute.xlu0 %6259
        %6261 = vrot.lane.b32.xlu0 %v6211, 16
        %v6262 = vpop.permute.xlu0 %6261
        %6263 = vrot.lane.b32.xlu0 %v6212, 16
        %v6264 = vpop.permute.xlu0 %6263
        %6265 = vrot.lane.b32.xlu0 %v6213, 16
        %v6266 = vpop.permute.xlu0 %6265
        %6267 = vrot.lane.b32.xlu0 %v6214, 16
        %v6268 = vpop.permute.xlu0 %6267
        %6269 = vrot.lane.b32.xlu0 %v6215, 16
        %v6270 = vpop.permute.xlu0 %6269
        %6271 = vrot.lane.b32.xlu0 %v6216, 16
        %v6272 = vpop.permute.xlu0 %6271
        %6273 = vrot.lane.b32.xlu0 %v6217, 16
        %v6274 = vpop.permute.xlu0 %6273
        %6275 = vrot.lane.b32.xlu0 %v6218, 16
        %v6276 = vpop.permute.xlu0 %6275
        %6277 = vrot.lane.b32.xlu0 %v6219, 16
        %v6278 = vpop.permute.xlu0 %6277
        %6279 = vrot.lane.b32.xlu0 %v6220, 16
        %v6280 = vpop.permute.xlu0 %6279
        %6281 = vrot.lane.b32.xlu0 %v6221, 16
        %v6282 = vpop.permute.xlu0 %6281
        %6283 = vrot.lane.b32.xlu0 %v6222, 16
        %v6284 = vpop.permute.xlu0 %6283
        %6285 = vrot.lane.b32.xlu0 %v6223, 16
        %v6286 = vpop.permute.xlu0 %6285
        %6287 = vrot.lane.b32.xlu0 %v6224, 16
        %v6288 = vpop.permute.xlu0 %6287
        %v6289 = vld [vmem:[#allocation2] sm:$0xff]
        %v6290 = vld [vmem:[#allocation2 + $0x8] sm:$0xff]
        %v6291 = vld [vmem:[#allocation2 + $0x10] sm:$0xff]
        %v6292 = vld [vmem:[#allocation2 + $0x18] sm:$0xff]
        %v6293 = vld [vmem:[#allocation2 + $0x20] sm:$0xff]
        %v6294 = vld [vmem:[#allocation2 + $0x28] sm:$0xff]
        %v6295 = vld [vmem:[#allocation2 + $0x30] sm:$0xff]
        %v6296 = vld [vmem:[#allocation2 + $0x38] sm:$0xff]
        %v6297 = vld [vmem:[#allocation2 + $0x40] sm:$0xff]
        %v6298 = vld [vmem:[#allocation2 + $0x48] sm:$0xff]
        %v6299 = vld [vmem:[#allocation2 + $0x50] sm:$0xff]
        %v6300 = vld [vmem:[#allocation2 + $0x58] sm:$0xff]
        %v6301 = vld [vmem:[#allocation2 + $0x60] sm:$0xff]
        %v6302 = vld [vmem:[#allocation2 + $0x68] sm:$0xff]
        %v6303 = vld [vmem:[#allocation2 + $0x70] sm:$0xff]
        %v6304 = vld [vmem:[#allocation2 + $0x78] sm:$0xff]
        %v6305 = vld [vmem:[#allocation2 + $0x80] sm:$0xff]
        %v6306 = vld [vmem:[#allocation2 + $0x88] sm:$0xff]
        %v6307 = vld [vmem:[#allocation2 + $0x90] sm:$0xff]
        %v6308 = vld [vmem:[#allocation2 + $0x98] sm:$0xff]
        %v6309 = vld [vmem:[#allocation2 + $0xa0] sm:$0xff]
        %v6310 = vld [vmem:[#allocation2 + $0xa8] sm:$0xff]
        %v6311 = vld [vmem:[#allocation2 + $0xb0] sm:$0xff]
        %v6312 = vld [vmem:[#allocation2 + $0xb8] sm:$0xff]
        %v6313 = vld [vmem:[#allocation2 + $0xc0] sm:$0xff]
        %v6314 = vld [vmem:[#allocation2 + $0xc8] sm:$0xff]
        %v6315 = vld [vmem:[#allocation2 + $0xd0] sm:$0xff]
        %v6316 = vld [vmem:[#allocation2 + $0xd8] sm:$0xff]
        %v6317 = vld [vmem:[#allocation2 + $0xe0] sm:$0xff]
        %v6318 = vld [vmem:[#allocation2 + $0xe8] sm:$0xff]
        %v6319 = vld [vmem:[#allocation2 + $0xf0] sm:$0xff]
        %v6320 = vld [vmem:[#allocation2 + $0xf8] sm:$0xff]
        %v6321 = vadd.f32 %v6289, %v6226
        %v6322 = vadd.f32 %v6290, %v6228
        %v6323 = vadd.f32 %v6291, %v6230
        %v6324 = vadd.f32 %v6292, %v6232
        %v6325 = vadd.f32 %v6293, %v6234
        %v6326 = vadd.f32 %v6294, %v6236
        %v6327 = vadd.f32 %v6295, %v6238
        %v6328 = vadd.f32 %v6296, %v6240
        %v6329 = vadd.f32 %v6297, %v6242
        %v6330 = vadd.f32 %v6298, %v6244
        %v6331 = vadd.f32 %v6299, %v6246
        %v6332 = vadd.f32 %v6300, %v6248
        %v6333 = vadd.f32 %v6301, %v6250
        %v6334 = vadd.f32 %v6302, %v6252
        %v6335 = vadd.f32 %v6303, %v6254
        %v6336 = vadd.f32 %v6304, %v6256
        %v6337 = vadd.f32 %v6305, %v6258
        %v6338 = vadd.f32 %v6306, %v6260
        %v6339 = vadd.f32 %v6307, %v6262
        %v6340 = vadd.f32 %v6308, %v6264
        %v6341 = vadd.f32 %v6309, %v6266
        %v6342 = vadd.f32 %v6310, %v6268
        %v6343 = vadd.f32 %v6311, %v6270
        %v6344 = vadd.f32 %v6312, %v6272
        %v6345 = vadd.f32 %v6313, %v6274
        %v6346 = vadd.f32 %v6314, %v6276
        %v6347 = vadd.f32 %v6315, %v6278
        %v6348 = vadd.f32 %v6316, %v6280
        %v6349 = vadd.f32 %v6317, %v6282
        %v6350 = vadd.f32 %v6318, %v6284
        %v6351 = vadd.f32 %v6319, %v6286
        %v6352 = vadd.f32 %v6320, %v6288
        %6353 = vst [vmem:[#allocation2] sm:$0xff] %v6321
        %6354 = vst [vmem:[#allocation2 + $0x8] sm:$0xff] %v6322
        %6355 = vst [vmem:[#allocation2 + $0x10] sm:$0xff] %v6323
        %6356 = vst [vmem:[#allocation2 + $0x18] sm:$0xff] %v6324
        %6357 = vst [vmem:[#allocation2 + $0x20] sm:$0xff] %v6325
        %6358 = vst [vmem:[#allocation2 + $0x28] sm:$0xff] %v6326
        %6359 = vst [vmem:[#allocation2 + $0x30] sm:$0xff] %v6327
        %6360 = vst [vmem:[#allocation2 + $0x38] sm:$0xff] %v6328
        %6361 = vst [vmem:[#allocation2 + $0x40] sm:$0xff] %v6329
        %6362 = vst [vmem:[#allocation2 + $0x48] sm:$0xff] %v6330
        %6363 = vst [vmem:[#allocation2 + $0x50] sm:$0xff] %v6331
        %6364 = vst [vmem:[#allocation2 + $0x58] sm:$0xff] %v6332
        %6365 = vst [vmem:[#allocation2 + $0x60] sm:$0xff] %v6333
        %6366 = vst [vmem:[#allocation2 + $0x68] sm:$0xff] %v6334
        %6367 = vst [vmem:[#allocation2 + $0x70] sm:$0xff] %v6335
        %6368 = vst [vmem:[#allocation2 + $0x78] sm:$0xff] %v6336
        %6369 = vst [vmem:[#allocation2 + $0x80] sm:$0xff] %v6337
        %6370 = vst [vmem:[#allocation2 + $0x88] sm:$0xff] %v6338
        %6371 = vst [vmem:[#allocation2 + $0x90] sm:$0xff] %v6339
        %6372 = vst [vmem:[#allocation2 + $0x98] sm:$0xff] %v6340
        %6373 = vst [vmem:[#allocation2 + $0xa0] sm:$0xff] %v6341
        %6374 = vst [vmem:[#allocation2 + $0xa8] sm:$0xff] %v6342
        %6375 = vst [vmem:[#allocation2 + $0xb0] sm:$0xff] %v6343
        %6376 = vst [vmem:[#allocation2 + $0xb8] sm:$0xff] %v6344
        %6377 = vst [vmem:[#allocation2 + $0xc0] sm:$0xff] %v6345
        %6378 = vst [vmem:[#allocation2 + $0xc8] sm:$0xff] %v6346
        %6379 = vst [vmem:[#allocation2 + $0xd0] sm:$0xff] %v6347
        %6380 = vst [vmem:[#allocation2 + $0xd8] sm:$0xff] %v6348
        %6381 = vst [vmem:[#allocation2 + $0xe0] sm:$0xff] %v6349
        %6382 = vst [vmem:[#allocation2 + $0xe8] sm:$0xff] %v6350
        %6383 = vst [vmem:[#allocation2 + $0xf0] sm:$0xff] %v6351
        %6384 = vst [vmem:[#allocation2 + $0xf8] sm:$0xff] %v6352
        %v6385 = vand.u32 %v5585, 4
        %v6386 = vand.u32 %v5586, 4
        %v6387 = vand.u32 %v5587, 4
        %v6388 = vand.u32 %v5588, 4
        %v6389 = vand.u32 %v5589, 4
        %v6390 = vand.u32 %v5590, 4
        %v6391 = vand.u32 %v5591, 4
        %v6392 = vand.u32 %v5592, 4
        %v6393 = vand.u32 %v5593, 4
        %v6394 = vand.u32 %v5594, 4
        %v6395 = vand.u32 %v5595, 4
        %v6396 = vand.u32 %v5596, 4
        %v6397 = vand.u32 %v5597, 4
        %v6398 = vand.u32 %v5598, 4
        %v6399 = vand.u32 %v5599, 4
        %v6400 = vand.u32 %v5600, 4
        %v6401 = vand.u32 %v5601, 4
        %v6402 = vand.u32 %v5602, 4
        %v6403 = vand.u32 %v5603, 4
        %v6404 = vand.u32 %v5604, 4
        %v6405 = vand.u32 %v5605, 4
        %v6406 = vand.u32 %v5606, 4
        %v6407 = vand.u32 %v5607, 4
        %v6408 = vand.u32 %v5608, 4
        %v6409 = vand.u32 %v5609, 4
        %v6410 = vand.u32 %v5610, 4
        %v6411 = vand.u32 %v5611, 4
        %v6412 = vand.u32 %v5612, 4
        %v6413 = vand.u32 %v5613, 4
        %v6414 = vand.u32 %v5614, 4
        %v6415 = vand.u32 %v5615, 4
        %v6416 = vand.u32 %v5616, 4
        %vm6417 = vcmp.eq.s32.totalorder %v6385, 4
        %vm6418 = vcmp.eq.s32.totalorder %v6386, 4
        %vm6419 = vcmp.eq.s32.totalorder %v6387, 4
        %vm6420 = vcmp.eq.s32.totalorder %v6388, 4
        %vm6421 = vcmp.eq.s32.totalorder %v6389, 4
        %vm6422 = vcmp.eq.s32.totalorder %v6390, 4
        %vm6423 = vcmp.eq.s32.totalorder %v6391, 4
        %vm6424 = vcmp.eq.s32.totalorder %v6392, 4
        %vm6425 = vcmp.eq.s32.totalorder %v6393, 4
        %vm6426 = vcmp.eq.s32.totalorder %v6394, 4
        %vm6427 = vcmp.eq.s32.totalorder %v6395, 4
        %vm6428 = vcmp.eq.s32.totalorder %v6396, 4
        %vm6429 = vcmp.eq.s32.totalorder %v6397, 4
        %vm6430 = vcmp.eq.s32.totalorder %v6398, 4
        %vm6431 = vcmp.eq.s32.totalorder %v6399, 4
        %vm6432 = vcmp.eq.s32.totalorder %v6400, 4
        %vm6433 = vcmp.eq.s32.totalorder %v6401, 4
        %vm6434 = vcmp.eq.s32.totalorder %v6402, 4
        %vm6435 = vcmp.eq.s32.totalorder %v6403, 4
        %vm6436 = vcmp.eq.s32.totalorder %v6404, 4
        %vm6437 = vcmp.eq.s32.totalorder %v6405, 4
        %vm6438 = vcmp.eq.s32.totalorder %v6406, 4
        %vm6439 = vcmp.eq.s32.totalorder %v6407, 4
        %vm6440 = vcmp.eq.s32.totalorder %v6408, 4
        %vm6441 = vcmp.eq.s32.totalorder %v6409, 4
        %vm6442 = vcmp.eq.s32.totalorder %v6410, 4
        %vm6443 = vcmp.eq.s32.totalorder %v6411, 4
        %vm6444 = vcmp.eq.s32.totalorder %v6412, 4
        %vm6445 = vcmp.eq.s32.totalorder %v6413, 4
        %vm6446 = vcmp.eq.s32.totalorder %v6414, 4
        %vm6447 = vcmp.eq.s32.totalorder %v6415, 4
        %vm6448 = vcmp.eq.s32.totalorder %v6416, 4
        %v6449 = vsel %vm6417, %v5680, 0.0
        %v6450 = vsel %vm6418, %v5679, 0.0
        %v6451 = vsel %vm6419, %v5678, 0.0
        %v6452 = vsel %vm6420, %v5677, 0.0
        %v6453 = vsel %vm6421, %v5676, 0.0
        %v6454 = vsel %vm6422, %v5675, 0.0
        %v6455 = vsel %vm6423, %v5674, 0.0
        %v6456 = vsel %vm6424, %v5673, 0.0
        %v6457 = vsel %vm6425, %v5672, 0.0
        %v6458 = vsel %vm6426, %v5671, 0.0
        %v6459 = vsel %vm6427, %v5670, 0.0
        %v6460 = vsel %vm6428, %v5669, 0.0
        %v6461 = vsel %vm6429, %v5668, 0.0
        %v6462 = vsel %vm6430, %v5667, 0.0
        %v6463 = vsel %vm6431, %v5666, 0.0
        %v6464 = vsel %vm6432, %v5665, 0.0
        %v6465 = vsel %vm6433, %v5664, 0.0
        %v6466 = vsel %vm6434, %v5663, 0.0
        %v6467 = vsel %vm6435, %v5662, 0.0
        %v6468 = vsel %vm6436, %v5661, 0.0
        %v6469 = vsel %vm6437, %v5660, 0.0
        %v6470 = vsel %vm6438, %v5659, 0.0
        %v6471 = vsel %vm6439, %v5658, 0.0
        %v6472 = vsel %vm6440, %v5657, 0.0
        %v6473 = vsel %vm6441, %v5656, 0.0
        %v6474 = vsel %vm6442, %v5655, 0.0
        %v6475 = vsel %vm6443, %v5654, 0.0
        %v6476 = vsel %vm6444, %v5653, 0.0
        %v6477 = vsel %vm6445, %v5652, 0.0
        %v6478 = vsel %vm6446, %v5651, 0.0
        %v6479 = vsel %vm6447, %v5650, 0.0
        %v6480 = vsel %vm6448, %v5649, 0.0
        %6481 = vrot.lane.b32.xlu0 %v6449, 24
        %v6482 = vpop.permute.xlu0 %6481
        %6483 = vrot.lane.b32.xlu0 %v6450, 24
        %v6484 = vpop.permute.xlu0 %6483
        %6485 = vrot.lane.b32.xlu0 %v6451, 24
        %v6486 = vpop.permute.xlu0 %6485
        %6487 = vrot.lane.b32.xlu0 %v6452, 24
        %v6488 = vpop.permute.xlu0 %6487
        %6489 = vrot.lane.b32.xlu0 %v6453, 24
        %v6490 = vpop.permute.xlu0 %6489
        %6491 = vrot.lane.b32.xlu0 %v6454, 24
        %v6492 = vpop.permute.xlu0 %6491
        %6493 = vrot.lane.b32.xlu0 %v6455, 24
        %v6494 = vpop.permute.xlu0 %6493
        %6495 = vrot.lane.b32.xlu0 %v6456, 24
        %v6496 = vpop.permute.xlu0 %6495
        %6497 = vrot.lane.b32.xlu0 %v6457, 24
        %v6498 = vpop.permute.xlu0 %6497
        %6499 = vrot.lane.b32.xlu0 %v6458, 24
        %v6500 = vpop.permute.xlu0 %6499
        %6501 = vrot.lane.b32.xlu0 %v6459, 24
        %v6502 = vpop.permute.xlu0 %6501
        %6503 = vrot.lane.b32.xlu0 %v6460, 24
        %v6504 = vpop.permute.xlu0 %6503
        %6505 = vrot.lane.b32.xlu0 %v6461, 24
        %v6506 = vpop.permute.xlu0 %6505
        %6507 = vrot.lane.b32.xlu0 %v6462, 24
        %v6508 = vpop.permute.xlu0 %6507
        %6509 = vrot.lane.b32.xlu0 %v6463, 24
        %v6510 = vpop.permute.xlu0 %6509
        %6511 = vrot.lane.b32.xlu0 %v6464, 24
        %v6512 = vpop.permute.xlu0 %6511
        %6513 = vrot.lane.b32.xlu0 %v6465, 24
        %v6514 = vpop.permute.xlu0 %6513
        %6515 = vrot.lane.b32.xlu0 %v6466, 24
        %v6516 = vpop.permute.xlu0 %6515
        %6517 = vrot.lane.b32.xlu0 %v6467, 24
        %v6518 = vpop.permute.xlu0 %6517
        %6519 = vrot.lane.b32.xlu0 %v6468, 24
        %v6520 = vpop.permute.xlu0 %6519
        %6521 = vrot.lane.b32.xlu0 %v6469, 24
        %v6522 = vpop.permute.xlu0 %6521
        %6523 = vrot.lane.b32.xlu0 %v6470, 24
        %v6524 = vpop.permute.xlu0 %6523
        %6525 = vrot.lane.b32.xlu0 %v6471, 24
        %v6526 = vpop.permute.xlu0 %6525
        %6527 = vrot.lane.b32.xlu0 %v6472, 24
        %v6528 = vpop.permute.xlu0 %6527
        %6529 = vrot.lane.b32.xlu0 %v6473, 24
        %v6530 = vpop.permute.xlu0 %6529
        %6531 = vrot.lane.b32.xlu0 %v6474, 24
        %v6532 = vpop.permute.xlu0 %6531
        %6533 = vrot.lane.b32.xlu0 %v6475, 24
        %v6534 = vpop.permute.xlu0 %6533
        %6535 = vrot.lane.b32.xlu0 %v6476, 24
        %v6536 = vpop.permute.xlu0 %6535
        %6537 = vrot.lane.b32.xlu0 %v6477, 24
        %v6538 = vpop.permute.xlu0 %6537
        %6539 = vrot.lane.b32.xlu0 %v6478, 24
        %v6540 = vpop.permute.xlu0 %6539
        %6541 = vrot.lane.b32.xlu0 %v6479, 24
        %v6542 = vpop.permute.xlu0 %6541
        %6543 = vrot.lane.b32.xlu0 %v6480, 24
        %v6544 = vpop.permute.xlu0 %6543
        %v6545 = vld [vmem:[#allocation2] sm:$0xff]
        %v6546 = vld [vmem:[#allocation2 + $0x8] sm:$0xff]
        %v6547 = vld [vmem:[#allocation2 + $0x10] sm:$0xff]
        %v6548 = vld [vmem:[#allocation2 + $0x18] sm:$0xff]
        %v6549 = vld [vmem:[#allocation2 + $0x20] sm:$0xff]
        %v6550 = vld [vmem:[#allocation2 + $0x28] sm:$0xff]
        %v6551 = vld [vmem:[#allocation2 + $0x30] sm:$0xff]
        %v6552 = vld [vmem:[#allocation2 + $0x38] sm:$0xff]
        %v6553 = vld [vmem:[#allocation2 + $0x40] sm:$0xff]
        %v6554 = vld [vmem:[#allocation2 + $0x48] sm:$0xff]
        %v6555 = vld [vmem:[#allocation2 + $0x50] sm:$0xff]
        %v6556 = vld [vmem:[#allocation2 + $0x58] sm:$0xff]
        %v6557 = vld [vmem:[#allocation2 + $0x60] sm:$0xff]
        %v6558 = vld [vmem:[#allocation2 + $0x68] sm:$0xff]
        %v6559 = vld [vmem:[#allocation2 + $0x70] sm:$0xff]
        %v6560 = vld [vmem:[#allocation2 + $0x78] sm:$0xff]
        %v6561 = vld [vmem:[#allocation2 + $0x80] sm:$0xff]
        %v6562 = vld [vmem:[#allocation2 + $0x88] sm:$0xff]
        %v6563 = vld [vmem:[#allocation2 + $0x90] sm:$0xff]
        %v6564 = vld [vmem:[#allocation2 + $0x98] sm:$0xff]
        %v6565 = vld [vmem:[#allocation2 + $0xa0] sm:$0xff]
        %v6566 = vld [vmem:[#allocation2 + $0xa8] sm:$0xff]
        %v6567 = vld [vmem:[#allocation2 + $0xb0] sm:$0xff]
        %v6568 = vld [vmem:[#allocation2 + $0xb8] sm:$0xff]
        %v6569 = vld [vmem:[#allocation2 + $0xc0] sm:$0xff]
        %v6570 = vld [vmem:[#allocation2 + $0xc8] sm:$0xff]
        %v6571 = vld [vmem:[#allocation2 + $0xd0] sm:$0xff]
        %v6572 = vld [vmem:[#allocation2 + $0xd8] sm:$0xff]
        %v6573 = vld [vmem:[#allocation2 + $0xe0] sm:$0xff]
        %v6574 = vld [vmem:[#allocation2 + $0xe8] sm:$0xff]
        %v6575 = vld [vmem:[#allocation2 + $0xf0] sm:$0xff]
        %v6576 = vld [vmem:[#allocation2 + $0xf8] sm:$0xff]
        %v6577 = vadd.f32 %v6545, %v6482
        %v6578 = vadd.f32 %v6546, %v6484
        %v6579 = vadd.f32 %v6547, %v6486
        %v6580 = vadd.f32 %v6548, %v6488
        %v6581 = vadd.f32 %v6549, %v6490
        %v6582 = vadd.f32 %v6550, %v6492
        %v6583 = vadd.f32 %v6551, %v6494
        %v6584 = vadd.f32 %v6552, %v6496
        %v6585 = vadd.f32 %v6553, %v6498
        %v6586 = vadd.f32 %v6554, %v6500
        %v6587 = vadd.f32 %v6555, %v6502
        %v6588 = vadd.f32 %v6556, %v6504
        %v6589 = vadd.f32 %v6557, %v6506
        %v6590 = vadd.f32 %v6558, %v6508
        %v6591 = vadd.f32 %v6559, %v6510
        %v6592 = vadd.f32 %v6560, %v6512
        %v6593 = vadd.f32 %v6561, %v6514
        %v6594 = vadd.f32 %v6562, %v6516
        %v6595 = vadd.f32 %v6563, %v6518
        %v6596 = vadd.f32 %v6564, %v6520
        %v6597 = vadd.f32 %v6565, %v6522
        %v6598 = vadd.f32 %v6566, %v6524
        %v6599 = vadd.f32 %v6567, %v6526
        %v6600 = vadd.f32 %v6568, %v6528
        %v6601 = vadd.f32 %v6569, %v6530
        %v6602 = vadd.f32 %v6570, %v6532
        %v6603 = vadd.f32 %v6571, %v6534
        %v6604 = vadd.f32 %v6572, %v6536
        %v6605 = vadd.f32 %v6573, %v6538
        %v6606 = vadd.f32 %v6574, %v6540
        %v6607 = vadd.f32 %v6575, %v6542
        %v6608 = vadd.f32 %v6576, %v6544
        %6609 = vst [vmem:[#allocation2] sm:$0xff] %v6577
        %6610 = vst [vmem:[#allocation2 + $0x8] sm:$0xff] %v6578
        %6611 = vst [vmem:[#allocation2 + $0x10] sm:$0xff] %v6579
        %6612 = vst [vmem:[#allocation2 + $0x18] sm:$0xff] %v6580
        %6613 = vst [vmem:[#allocation2 + $0x20] sm:$0xff] %v6581
        %6614 = vst [vmem:[#allocation2 + $0x28] sm:$0xff] %v6582
        %6615 = vst [vmem:[#allocation2 + $0x30] sm:$0xff] %v6583
        %6616 = vst [vmem:[#allocation2 + $0x38] sm:$0xff] %v6584
        %6617 = vst [vmem:[#allocation2 + $0x40] sm:$0xff] %v6585
        %6618 = vst [vmem:[#allocation2 + $0x48] sm:$0xff] %v6586
        %6619 = vst [vmem:[#allocation2 + $0x50] sm:$0xff] %v6587
        %6620 = vst [vmem:[#allocation2 + $0x58] sm:$0xff] %v6588
        %6621 = vst [vmem:[#allocation2 + $0x60] sm:$0xff] %v6589
        %6622 = vst [vmem:[#allocation2 + $0x68] sm:$0xff] %v6590
        %6623 = vst [vmem:[#allocation2 + $0x70] sm:$0xff] %v6591
        %6624 = vst [vmem:[#allocation2 + $0x78] sm:$0xff] %v6592
        %6625 = vst [vmem:[#allocation2 + $0x80] sm:$0xff] %v6593
        %6626 = vst [vmem:[#allocation2 + $0x88] sm:$0xff] %v6594
        %6627 = vst [vmem:[#allocation2 + $0x90] sm:$0xff] %v6595
        %6628 = vst [vmem:[#allocation2 + $0x98] sm:$0xff] %v6596
        %6629 = vst [vmem:[#allocation2 + $0xa0] sm:$0xff] %v6597
        %6630 = vst [vmem:[#allocation2 + $0xa8] sm:$0xff] %v6598
        %6631 = vst [vmem:[#allocation2 + $0xb0] sm:$0xff] %v6599
        %6632 = vst [vmem:[#allocation2 + $0xb8] sm:$0xff] %v6600
        %6633 = vst [vmem:[#allocation2 + $0xc0] sm:$0xff] %v6601
        %6634 = vst [vmem:[#allocation2 + $0xc8] sm:$0xff] %v6602
        %6635 = vst [vmem:[#allocation2 + $0xd0] sm:$0xff] %v6603
        %6636 = vst [vmem:[#allocation2 + $0xd8] sm:$0xff] %v6604
        %6637 = vst [vmem:[#allocation2 + $0xe0] sm:$0xff] %v6605
        %6638 = vst [vmem:[#allocation2 + $0xe8] sm:$0xff] %v6606
        %6639 = vst [vmem:[#allocation2 + $0xf0] sm:$0xff] %v6607
        %6640 = vst [vmem:[#allocation2 + $0xf8] sm:$0xff] %v6608
        %6641 = vrot.lane.b32.xlu0 %v5553, 32
        %v6642 = vpop.permute.xlu0 %6641
        %6643 = vrot.lane.b32.xlu0 %v5554, 32
        %v6644 = vpop.permute.xlu0 %6643
        %6645 = vrot.lane.b32.xlu0 %v5555, 32
        %v6646 = vpop.permute.xlu0 %6645
        %6647 = vrot.lane.b32.xlu0 %v5556, 32
        %v6648 = vpop.permute.xlu0 %6647
        %6649 = vrot.lane.b32.xlu0 %v5557, 32
        %v6650 = vpop.permute.xlu0 %6649
        %6651 = vrot.lane.b32.xlu0 %v5558, 32
        %v6652 = vpop.permute.xlu0 %6651
        %6653 = vrot.lane.b32.xlu0 %v5559, 32
        %v6654 = vpop.permute.xlu0 %6653
        %6655 = vrot.lane.b32.xlu0 %v5560, 32
        %v6656 = vpop.permute.xlu0 %6655
        %6657 = vrot.lane.b32.xlu0 %v5561, 32
        %v6658 = vpop.permute.xlu0 %6657
        %6659 = vrot.lane.b32.xlu0 %v5562, 32
        %v6660 = vpop.permute.xlu0 %6659
        %6661 = vrot.lane.b32.xlu0 %v5563, 32
        %v6662 = vpop.permute.xlu0 %6661
        %6663 = vrot.lane.b32.xlu0 %v5564, 32
        %v6664 = vpop.permute.xlu0 %6663
        %6665 = vrot.lane.b32.xlu0 %v5565, 32
        %v6666 = vpop.permute.xlu0 %6665
        %6667 = vrot.lane.b32.xlu0 %v5566, 32
        %v6668 = vpop.permute.xlu0 %6667
        %6669 = vrot.lane.b32.xlu0 %v5567, 32
        %v6670 = vpop.permute.xlu0 %6669
        %6671 = vrot.lane.b32.xlu0 %v5568, 32
        %v6672 = vpop.permute.xlu0 %6671
        %6673 = vrot.lane.b32.xlu0 %v5569, 32
        %v6674 = vpop.permute.xlu0 %6673
        %6675 = vrot.lane.b32.xlu0 %v5570, 32
        %v6676 = vpop.permute.xlu0 %6675
        %6677 = vrot.lane.b32.xlu0 %v5571, 32
        %v6678 = vpop.permute.xlu0 %6677
        %6679 = vrot.lane.b32.xlu0 %v5572, 32
        %v6680 = vpop.permute.xlu0 %6679
        %6681 = vrot.lane.b32.xlu0 %v5573, 32
        %v6682 = vpop.permute.xlu0 %6681
        %6683 = vrot.lane.b32.xlu0 %v5574, 32
        %v6684 = vpop.permute.xlu0 %6683
        %6685 = vrot.lane.b32.xlu0 %v5575, 32
        %v6686 = vpop.permute.xlu0 %6685
        %6687 = vrot.lane.b32.xlu0 %v5576, 32
        %v6688 = vpop.permute.xlu0 %6687
        %6689 = vrot.lane.b32.xlu0 %v5577, 32
        %v6690 = vpop.permute.xlu0 %6689
        %6691 = vrot.lane.b32.xlu0 %v5578, 32
        %v6692 = vpop.permute.xlu0 %6691
        %6693 = vrot.lane.b32.xlu0 %v5579, 32
        %v6694 = vpop.permute.xlu0 %6693
        %6695 = vrot.lane.b32.xlu0 %v5580, 32
        %v6696 = vpop.permute.xlu0 %6695
        %6697 = vrot.lane.b32.xlu0 %v5581, 32
        %v6698 = vpop.permute.xlu0 %6697
        %6699 = vrot.lane.b32.xlu0 %v5582, 32
        %v6700 = vpop.permute.xlu0 %6699
        %6701 = vrot.lane.b32.xlu0 %v5583, 32
        %v6702 = vpop.permute.xlu0 %6701
        %6703 = vrot.lane.b32.xlu0 %v5584, 32
        %v6704 = vpop.permute.xlu0 %6703
        %v6705 = vld [vmem:[#allocation2] sm:$0xff]
        %v6706 = vld [vmem:[#allocation2 + $0x8] sm:$0xff]
        %v6707 = vld [vmem:[#allocation2 + $0x10] sm:$0xff]
        %v6708 = vld [vmem:[#allocation2 + $0x18] sm:$0xff]
        %v6709 = vld [vmem:[#allocation2 + $0x20] sm:$0xff]
        %v6710 = vld [vmem:[#allocation2 + $0x28] sm:$0xff]
        %v6711 = vld [vmem:[#allocation2 + $0x30] sm:$0xff]
        %v6712 = vld [vmem:[#allocation2 + $0x38] sm:$0xff]
        %v6713 = vld [vmem:[#allocation2 + $0x40] sm:$0xff]
        %v6714 = vld [vmem:[#allocation2 + $0x48] sm:$0xff]
        %v6715 = vld [vmem:[#allocation2 + $0x50] sm:$0xff]
        %v6716 = vld [vmem:[#allocation2 + $0x58] sm:$0xff]
        %v6717 = vld [vmem:[#allocation2 + $0x60] sm:$0xff]
        %v6718 = vld [vmem:[#allocation2 + $0x68] sm:$0xff]
        %v6719 = vld [vmem:[#allocation2 + $0x70] sm:$0xff]
        %v6720 = vld [vmem:[#allocation2 + $0x78] sm:$0xff]
        %v6721 = vld [vmem:[#allocation2 + $0x80] sm:$0xff]
        %v6722 = vld [vmem:[#allocation2 + $0x88] sm:$0xff]
        %v6723 = vld [vmem:[#allocation2 + $0x90] sm:$0xff]
        %v6724 = vld [vmem:[#allocation2 + $0x98] sm:$0xff]
        %v6725 = vld [vmem:[#allocation2 + $0xa0] sm:$0xff]
        %v6726 = vld [vmem:[#allocation2 + $0xa8] sm:$0xff]
        %v6727 = vld [vmem:[#allocation2 + $0xb0] sm:$0xff]
        %v6728 = vld [vmem:[#allocation2 + $0xb8] sm:$0xff]
        %v6729 = vld [vmem:[#allocation2 + $0xc0] sm:$0xff]
        %v6730 = vld [vmem:[#allocation2 + $0xc8] sm:$0xff]
        %v6731 = vld [vmem:[#allocation2 + $0xd0] sm:$0xff]
        %v6732 = vld [vmem:[#allocation2 + $0xd8] sm:$0xff]
        %v6733 = vld [vmem:[#allocation2 + $0xe0] sm:$0xff]
        %v6734 = vld [vmem:[#allocation2 + $0xe8] sm:$0xff]
        %v6735 = vld [vmem:[#allocation2 + $0xf0] sm:$0xff]
        %v6736 = vld [vmem:[#allocation2 + $0xf8] sm:$0xff]
        %v6737 = vadd.f32 %v6705, %v6642
        %v6738 = vadd.f32 %v6706, %v6644
        %v6739 = vadd.f32 %v6707, %v6646
        %v6740 = vadd.f32 %v6708, %v6648
        %v6741 = vadd.f32 %v6709, %v6650
        %v6742 = vadd.f32 %v6710, %v6652
        %v6743 = vadd.f32 %v6711, %v6654
        %v6744 = vadd.f32 %v6712, %v6656
        %v6745 = vadd.f32 %v6713, %v6658
        %v6746 = vadd.f32 %v6714, %v6660
        %v6747 = vadd.f32 %v6715, %v6662
        %v6748 = vadd.f32 %v6716, %v6664
        %v6749 = vadd.f32 %v6717, %v6666
        %v6750 = vadd.f32 %v6718, %v6668
        %v6751 = vadd.f32 %v6719, %v6670
        %v6752 = vadd.f32 %v6720, %v6672
        %v6753 = vadd.f32 %v6721, %v6674
        %v6754 = vadd.f32 %v6722, %v6676
        %v6755 = vadd.f32 %v6723, %v6678
        %v6756 = vadd.f32 %v6724, %v6680
        %v6757 = vadd.f32 %v6725, %v6682
        %v6758 = vadd.f32 %v6726, %v6684
        %v6759 = vadd.f32 %v6727, %v6686
        %v6760 = vadd.f32 %v6728, %v6688
        %v6761 = vadd.f32 %v6729, %v6690
        %v6762 = vadd.f32 %v6730, %v6692
        %v6763 = vadd.f32 %v6731, %v6694
        %v6764 = vadd.f32 %v6732, %v6696
        %v6765 = vadd.f32 %v6733, %v6698
        %v6766 = vadd.f32 %v6734, %v6700
        %v6767 = vadd.f32 %v6735, %v6702
        %v6768 = vadd.f32 %v6736, %v6704
        %6769 = vst [vmem:[#allocation2] sm:$0xff] %v6737
        %6770 = vst [vmem:[#allocation2 + $0x8] sm:$0xff] %v6738
        %6771 = vst [vmem:[#allocation2 + $0x10] sm:$0xff] %v6739
        %6772 = vst [vmem:[#allocation2 + $0x18] sm:$0xff] %v6740
        %6773 = vst [vmem:[#allocation2 + $0x20] sm:$0xff] %v6741
        %6774 = vst [vmem:[#allocation2 + $0x28] sm:$0xff] %v6742
        %6775 = vst [vmem:[#allocation2 + $0x30] sm:$0xff] %v6743
        %6776 = vst [vmem:[#allocation2 + $0x38] sm:$0xff] %v6744
        %6777 = vst [vmem:[#allocation2 + $0x40] sm:$0xff] %v6745
        %6778 = vst [vmem:[#allocation2 + $0x48] sm:$0xff] %v6746
        %6779 = vst [vmem:[#allocation2 + $0x50] sm:$0xff] %v6747
        %6780 = vst [vmem:[#allocation2 + $0x58] sm:$0xff] %v6748
        %6781 = vst [vmem:[#allocation2 + $0x60] sm:$0xff] %v6749
        %6782 = vst [vmem:[#allocation2 + $0x68] sm:$0xff] %v6750
        %6783 = vst [vmem:[#allocation2 + $0x70] sm:$0xff] %v6751
        %6784 = vst [vmem:[#allocation2 + $0x78] sm:$0xff] %v6752
        %6785 = vst [vmem:[#allocation2 + $0x80] sm:$0xff] %v6753
        %6786 = vst [vmem:[#allocation2 + $0x88] sm:$0xff] %v6754
        %6787 = vst [vmem:[#allocation2 + $0x90] sm:$0xff] %v6755
        %6788 = vst [vmem:[#allocation2 + $0x98] sm:$0xff] %v6756
        %6789 = vst [vmem:[#allocation2 + $0xa0] sm:$0xff] %v6757
        %6790 = vst [vmem:[#allocation2 + $0xa8] sm:$0xff] %v6758
        %6791 = vst [vmem:[#allocation2 + $0xb0] sm:$0xff] %v6759
        %6792 = vst [vmem:[#allocation2 + $0xb8] sm:$0xff] %v6760
        %6793 = vst [vmem:[#allocation2 + $0xc0] sm:$0xff] %v6761
        %6794 = vst [vmem:[#allocation2 + $0xc8] sm:$0xff] %v6762
        %6795 = vst [vmem:[#allocation2 + $0xd0] sm:$0xff] %v6763
        %6796 = vst [vmem:[#allocation2 + $0xd8] sm:$0xff] %v6764
        %6797 = vst [vmem:[#allocation2 + $0xe0] sm:$0xff] %v6765
        %6798 = vst [vmem:[#allocation2 + $0xe8] sm:$0xff] %v6766
        %6799 = vst [vmem:[#allocation2 + $0xf0] sm:$0xff] %v6767
        %6800 = vst [vmem:[#allocation2 + $0xf8] sm:$0xff] %v6768
        %v6801 = vand.u32 %v5585, 8
        %v6802 = vand.u32 %v5586, 8
        %v6803 = vand.u32 %v5587, 8
        %v6804 = vand.u32 %v5588, 8
        %v6805 = vand.u32 %v5589, 8
        %v6806 = vand.u32 %v5590, 8
        %v6807 = vand.u32 %v5591, 8
        %v6808 = vand.u32 %v5592, 8
        %v6809 = vand.u32 %v5593, 8
        %v6810 = vand.u32 %v5594, 8
        %v6811 = vand.u32 %v5595, 8
        %v6812 = vand.u32 %v5596, 8
        %v6813 = vand.u32 %v5597, 8
        %v6814 = vand.u32 %v5598, 8
        %v6815 = vand.u32 %v5599, 8
        %v6816 = vand.u32 %v5600, 8
        %v6817 = vand.u32 %v5601, 8
        %v6818 = vand.u32 %v5602, 8
        %v6819 = vand.u32 %v5603, 8
        %v6820 = vand.u32 %v5604, 8
        %v6821 = vand.u32 %v5605, 8
        %v6822 = vand.u32 %v5606, 8
        %v6823 = vand.u32 %v5607, 8
        %v6824 = vand.u32 %v5608, 8
        %v6825 = vand.u32 %v5609, 8
        %v6826 = vand.u32 %v5610, 8
        %v6827 = vand.u32 %v5611, 8
        %v6828 = vand.u32 %v5612, 8
        %v6829 = vand.u32 %v5613, 8
        %v6830 = vand.u32 %v5614, 8
        %v6831 = vand.u32 %v5615, 8
        %v6832 = vand.u32 %v5616, 8
        %vm6833 = vcmp.eq.s32.totalorder %v6801, 8
        %vm6834 = vcmp.eq.s32.totalorder %v6802, 8
        %vm6835 = vcmp.eq.s32.totalorder %v6803, 8
        %vm6836 = vcmp.eq.s32.totalorder %v6804, 8
        %vm6837 = vcmp.eq.s32.totalorder %v6805, 8
        %vm6838 = vcmp.eq.s32.totalorder %v6806, 8
        %vm6839 = vcmp.eq.s32.totalorder %v6807, 8
        %vm6840 = vcmp.eq.s32.totalorder %v6808, 8
        %vm6841 = vcmp.eq.s32.totalorder %v6809, 8
        %vm6842 = vcmp.eq.s32.totalorder %v6810, 8
        %vm6843 = vcmp.eq.s32.totalorder %v6811, 8
        %vm6844 = vcmp.eq.s32.totalorder %v6812, 8
        %vm6845 = vcmp.eq.s32.totalorder %v6813, 8
        %vm6846 = vcmp.eq.s32.totalorder %v6814, 8
        %vm6847 = vcmp.eq.s32.totalorder %v6815, 8
        %vm6848 = vcmp.eq.s32.totalorder %v6816, 8
        %vm6849 = vcmp.eq.s32.totalorder %v6817, 8
        %vm6850 = vcmp.eq.s32.totalorder %v6818, 8
        %vm6851 = vcmp.eq.s32.totalorder %v6819, 8
        %vm6852 = vcmp.eq.s32.totalorder %v6820, 8
        %vm6853 = vcmp.eq.s32.totalorder %v6821, 8
        %vm6854 = vcmp.eq.s32.totalorder %v6822, 8
        %vm6855 = vcmp.eq.s32.totalorder %v6823, 8
        %vm6856 = vcmp.eq.s32.totalorder %v6824, 8
        %vm6857 = vcmp.eq.s32.totalorder %v6825, 8
        %vm6858 = vcmp.eq.s32.totalorder %v6826, 8
        %vm6859 = vcmp.eq.s32.totalorder %v6827, 8
        %vm6860 = vcmp.eq.s32.totalorder %v6828, 8
        %vm6861 = vcmp.eq.s32.totalorder %v6829, 8
        %vm6862 = vcmp.eq.s32.totalorder %v6830, 8
        %vm6863 = vcmp.eq.s32.totalorder %v6831, 8
        %vm6864 = vcmp.eq.s32.totalorder %v6832, 8
        %v6865 = vsel %vm6833, %v6127, 0.0
        %v6866 = vsel %vm6834, %v6126, 0.0
        %v6867 = vsel %vm6835, %v6125, 0.0
        %v6868 = vsel %vm6836, %v6124, 0.0
        %v6869 = vsel %vm6837, %v6123, 0.0
        %v6870 = vsel %vm6838, %v6122, 0.0
        %v6871 = vsel %vm6839, %v6121, 0.0
        %v6872 = vsel %vm6840, %v6120, 0.0
        %v6873 = vsel %vm6841, %v6119, 0.0
        %v6874 = vsel %vm6842, %v6118, 0.0
        %v6875 = vsel %vm6843, %v6117, 0.0
        %v6876 = vsel %vm6844, %v6116, 0.0
        %v6877 = vsel %vm6845, %v6115, 0.0
        %v6878 = vsel %vm6846, %v6114, 0.0
        %v6879 = vsel %vm6847, %v6113, 0.0
        %v6880 = vsel %vm6848, %v6112, 0.0
        %v6881 = vsel %vm6849, %v6111, 0.0
        %v6882 = vsel %vm6850, %v6110, 0.0
        %v6883 = vsel %vm6851, %v6109, 0.0
        %v6884 = vsel %vm6852, %v6108, 0.0
        %v6885 = vsel %vm6853, %v6107, 0.0
        %v6886 = vsel %vm6854, %v6106, 0.0
        %v6887 = vsel %vm6855, %v6105, 0.0
        %v6888 = vsel %vm6856, %v6104, 0.0
        %v6889 = vsel %vm6857, %v6103, 0.0
        %v6890 = vsel %vm6858, %v6102, 0.0
        %v6891 = vsel %vm6859, %v6101, 0.0
        %v6892 = vsel %vm6860, %v6100, 0.0
        %v6893 = vsel %vm6861, %v6099, 0.0
        %v6894 = vsel %vm6862, %v6098, 0.0
        %v6895 = vsel %vm6863, %v6097, 0.0
        %v6896 = vsel %vm6864, %v6128, 0.0
        %6897 = vrot.lane.b32.xlu0 %v6865, 40
        %v6898 = vpop.permute.xlu0 %6897
        %6899 = vrot.lane.b32.xlu0 %v6866, 40
        %v6900 = vpop.permute.xlu0 %6899
        %6901 = vrot.lane.b32.xlu0 %v6867, 40
        %v6902 = vpop.permute.xlu0 %6901
        %6903 = vrot.lane.b32.xlu0 %v6868, 40
        %v6904 = vpop.permute.xlu0 %6903
        %6905 = vrot.lane.b32.xlu0 %v6869, 40
        %v6906 = vpop.permute.xlu0 %6905
        %6907 = vrot.lane.b32.xlu0 %v6870, 40
        %v6908 = vpop.permute.xlu0 %6907
        %6909 = vrot.lane.b32.xlu0 %v6871, 40
        %v6910 = vpop.permute.xlu0 %6909
        %6911 = vrot.lane.b32.xlu0 %v6872, 40
        %v6912 = vpop.permute.xlu0 %6911
        %6913 = vrot.lane.b32.xlu0 %v6873, 40
        %v6914 = vpop.permute.xlu0 %6913
        %6915 = vrot.lane.b32.xlu0 %v6874, 40
        %v6916 = vpop.permute.xlu0 %6915
        %6917 = vrot.lane.b32.xlu0 %v6875, 40
        %v6918 = vpop.permute.xlu0 %6917
        %6919 = vrot.lane.b32.xlu0 %v6876, 40
        %v6920 = vpop.permute.xlu0 %6919
        %6921 = vrot.lane.b32.xlu0 %v6877, 40
        %v6922 = vpop.permute.xlu0 %6921
        %6923 = vrot.lane.b32.xlu0 %v6878, 40
        %v6924 = vpop.permute.xlu0 %6923
        %6925 = vrot.lane.b32.xlu0 %v6879, 40
        %v6926 = vpop.permute.xlu0 %6925
        %6927 = vrot.lane.b32.xlu0 %v6880, 40
        %v6928 = vpop.permute.xlu0 %6927
        %6929 = vrot.lane.b32.xlu0 %v6881, 40
        %v6930 = vpop.permute.xlu0 %6929
        %6931 = vrot.lane.b32.xlu0 %v6882, 40
        %v6932 = vpop.permute.xlu0 %6931
        %6933 = vrot.lane.b32.xlu0 %v6883, 40
        %v6934 = vpop.permute.xlu0 %6933
        %6935 = vrot.lane.b32.xlu0 %v6884, 40
        %v6936 = vpop.permute.xlu0 %6935
        %6937 = vrot.lane.b32.xlu0 %v6885, 40
        %v6938 = vpop.permute.xlu0 %6937
        %6939 = vrot.lane.b32.xlu0 %v6886, 40
        %v6940 = vpop.permute.xlu0 %6939
        %6941 = vrot.lane.b32.xlu0 %v6887, 40
        %v6942 = vpop.permute.xlu0 %6941
        %6943 = vrot.lane.b32.xlu0 %v6888, 40
        %v6944 = vpop.permute.xlu0 %6943
        %6945 = vrot.lane.b32.xlu0 %v6889, 40
        %v6946 = vpop.permute.xlu0 %6945
        %6947 = vrot.lane.b32.xlu0 %v6890, 40
        %v6948 = vpop.permute.xlu0 %6947
        %6949 = vrot.lane.b32.xlu0 %v6891, 40
        %v6950 = vpop.permute.xlu0 %6949
        %6951 = vrot.lane.b32.xlu0 %v6892, 40
        %v6952 = vpop.permute.xlu0 %6951
        %6953 = vrot.lane.b32.xlu0 %v6893, 40
        %v6954 = vpop.permute.xlu0 %6953
        %6955 = vrot.lane.b32.xlu0 %v6894, 40
        %v6956 = vpop.permute.xlu0 %6955
        %6957 = vrot.lane.b32.xlu0 %v6895, 40
        %v6958 = vpop.permute.xlu0 %6957
        %6959 = vrot.lane.b32.xlu0 %v6896, 40
        %v6960 = vpop.permute.xlu0 %6959
        %v6961 = vld [vmem:[#allocation2] sm:$0xff]
        %v6962 = vld [vmem:[#allocation2 + $0x8] sm:$0xff]
        %v6963 = vld [vmem:[#allocation2 + $0x10] sm:$0xff]
        %v6964 = vld [vmem:[#allocation2 + $0x18] sm:$0xff]
        %v6965 = vld [vmem:[#allocation2 + $0x20] sm:$0xff]
        %v6966 = vld [vmem:[#allocation2 + $0x28] sm:$0xff]
        %v6967 = vld [vmem:[#allocation2 + $0x30] sm:$0xff]
        %v6968 = vld [vmem:[#allocation2 + $0x38] sm:$0xff]
        %v6969 = vld [vmem:[#allocation2 + $0x40] sm:$0xff]
        %v6970 = vld [vmem:[#allocation2 + $0x48] sm:$0xff]
        %v6971 = vld [vmem:[#allocation2 + $0x50] sm:$0xff]
        %v6972 = vld [vmem:[#allocation2 + $0x58] sm:$0xff]
        %v6973 = vld [vmem:[#allocation2 + $0x60] sm:$0xff]
        %v6974 = vld [vmem:[#allocation2 + $0x68] sm:$0xff]
        %v6975 = vld [vmem:[#allocation2 + $0x70] sm:$0xff]
        %v6976 = vld [vmem:[#allocation2 + $0x78] sm:$0xff]
        %v6977 = vld [vmem:[#allocation2 + $0x80] sm:$0xff]
        %v6978 = vld [vmem:[#allocation2 + $0x88] sm:$0xff]
        %v6979 = vld [vmem:[#allocation2 + $0x90] sm:$0xff]
        %v6980 = vld [vmem:[#allocation2 + $0x98] sm:$0xff]
        %v6981 = vld [vmem:[#allocation2 + $0xa0] sm:$0xff]
        %v6982 = vld [vmem:[#allocation2 + $0xa8] sm:$0xff]
        %v6983 = vld [vmem:[#allocation2 + $0xb0] sm:$0xff]
        %v6984 = vld [vmem:[#allocation2 + $0xb8] sm:$0xff]
        %v6985 = vld [vmem:[#allocation2 + $0xc0] sm:$0xff]
        %v6986 = vld [vmem:[#allocation2 + $0xc8] sm:$0xff]
        %v6987 = vld [vmem:[#allocation2 + $0xd0] sm:$0xff]
        %v6988 = vld [vmem:[#allocation2 + $0xd8] sm:$0xff]
        %v6989 = vld [vmem:[#allocation2 + $0xe0] sm:$0xff]
        %v6990 = vld [vmem:[#allocation2 + $0xe8] sm:$0xff]
        %v6991 = vld [vmem:[#allocation2 + $0xf0] sm:$0xff]
        %v6992 = vld [vmem:[#allocation2 + $0xf8] sm:$0xff]
        %v6993 = vadd.f32 %v6961, %v6898
        %v6994 = vadd.f32 %v6962, %v6900
        %v6995 = vadd.f32 %v6963, %v6902
        %v6996 = vadd.f32 %v6964, %v6904
        %v6997 = vadd.f32 %v6965, %v6906
        %v6998 = vadd.f32 %v6966, %v6908
        %v6999 = vadd.f32 %v6967, %v6910
        %v7000 = vadd.f32 %v6968, %v6912
        %v7001 = vadd.f32 %v6969, %v6914
        %v7002 = vadd.f32 %v6970, %v6916
        %v7003 = vadd.f32 %v6971, %v6918
        %v7004 = vadd.f32 %v6972, %v6920
        %v7005 = vadd.f32 %v6973, %v6922
        %v7006 = vadd.f32 %v6974, %v6924
        %v7007 = vadd.f32 %v6975, %v6926
        %v7008 = vadd.f32 %v6976, %v6928
        %v7009 = vadd.f32 %v6977, %v6930
        %v7010 = vadd.f32 %v6978, %v6932
        %v7011 = vadd.f32 %v6979, %v6934
        %v7012 = vadd.f32 %v6980, %v6936
        %v7013 = vadd.f32 %v6981, %v6938
        %v7014 = vadd.f32 %v6982, %v6940
        %v7015 = vadd.f32 %v6983, %v6942
        %v7016 = vadd.f32 %v6984, %v6944
        %v7017 = vadd.f32 %v6985, %v6946
        %v7018 = vadd.f32 %v6986, %v6948
        %v7019 = vadd.f32 %v6987, %v6950
        %v7020 = vadd.f32 %v6988, %v6952
        %v7021 = vadd.f32 %v6989, %v6954
        %v7022 = vadd.f32 %v6990, %v6956
        %v7023 = vadd.f32 %v6991, %v6958
        %v7024 = vadd.f32 %v6992, %v6960
        %7025 = vst [vmem:[#allocation2] sm:$0xff] %v6993
        %7026 = vst [vmem:[#allocation2 + $0x8] sm:$0xff] %v6994
        %7027 = vst [vmem:[#allocation2 + $0x10] sm:$0xff] %v6995
        %7028 = vst [vmem:[#allocation2 + $0x18] sm:$0xff] %v6996
        %7029 = vst [vmem:[#allocation2 + $0x20] sm:$0xff] %v6997
        %7030 = vst [vmem:[#allocation2 + $0x28] sm:$0xff] %v6998
        %7031 = vst [vmem:[#allocation2 + $0x30] sm:$0xff] %v6999
        %7032 = vst [vmem:[#allocation2 + $0x38] sm:$0xff] %v7000
        %7033 = vst [vmem:[#allocation2 + $0x40] sm:$0xff] %v7001
        %7034 = vst [vmem:[#allocation2 + $0x48] sm:$0xff] %v7002
        %7035 = vst [vmem:[#allocation2 + $0x50] sm:$0xff] %v7003
        %7036 = vst [vmem:[#allocation2 + $0x58] sm:$0xff] %v7004
        %7037 = vst [vmem:[#allocation2 + $0x60] sm:$0xff] %v7005
        %7038 = vst [vmem:[#allocation2 + $0x68] sm:$0xff] %v7006
        %7039 = vst [vmem:[#allocation2 + $0x70] sm:$0xff] %v7007
        %7040 = vst [vmem:[#allocation2 + $0x78] sm:$0xff] %v7008
        %7041 = vst [vmem:[#allocation2 + $0x80] sm:$0xff] %v7009
        %7042 = vst [vmem:[#allocation2 + $0x88] sm:$0xff] %v7010
        %7043 = vst [vmem:[#allocation2 + $0x90] sm:$0xff] %v7011
        %7044 = vst [vmem:[#allocation2 + $0x98] sm:$0xff] %v7012
        %7045 = vst [vmem:[#allocation2 + $0xa0] sm:$0xff] %v7013
        %7046 = vst [vmem:[#allocation2 + $0xa8] sm:$0xff] %v7014
        %7047 = vst [vmem:[#allocation2 + $0xb0] sm:$0xff] %v7015
        %7048 = vst [vmem:[#allocation2 + $0xb8] sm:$0xff] %v7016
        %7049 = vst [vmem:[#allocation2 + $0xc0] sm:$0xff] %v7017
        %7050 = vst [vmem:[#allocation2 + $0xc8] sm:$0xff] %v7018
        %7051 = vst [vmem:[#allocation2 + $0xd0] sm:$0xff] %v7019
        %7052 = vst [vmem:[#allocation2 + $0xd8] sm:$0xff] %v7020
        %7053 = vst [vmem:[#allocation2 + $0xe0] sm:$0xff] %v7021
        %7054 = vst [vmem:[#allocation2 + $0xe8] sm:$0xff] %v7022
        %7055 = vst [vmem:[#allocation2 + $0xf0] sm:$0xff] %v7023
        %7056 = vst [vmem:[#allocation2 + $0xf8] sm:$0xff] %v7024
        %v7057 = vand.u32 %v5585, 6
        %v7058 = vand.u32 %v5586, 6
        %v7059 = vand.u32 %v5587, 6
        %v7060 = vand.u32 %v5588, 6
        %v7061 = vand.u32 %v5589, 6
        %v7062 = vand.u32 %v5590, 6
        %v7063 = vand.u32 %v5591, 6
        %v7064 = vand.u32 %v5592, 6
        %v7065 = vand.u32 %v5593, 6
        %v7066 = vand.u32 %v5594, 6
        %v7067 = vand.u32 %v5595, 6
        %v7068 = vand.u32 %v5596, 6
        %v7069 = vand.u32 %v5597, 6
        %v7070 = vand.u32 %v5598, 6
        %v7071 = vand.u32 %v5599, 6
        %v7072 = vand.u32 %v5600, 6
        %v7073 = vand.u32 %v5601, 6
        %v7074 = vand.u32 %v5602, 6
        %v7075 = vand.u32 %v5603, 6
        %v7076 = vand.u32 %v5604, 6
        %v7077 = vand.u32 %v5605, 6
        %v7078 = vand.u32 %v5606, 6
        %v7079 = vand.u32 %v5607, 6
        %v7080 = vand.u32 %v5608, 6
        %v7081 = vand.u32 %v5609, 6
        %v7082 = vand.u32 %v5610, 6
        %v7083 = vand.u32 %v5611, 6
        %v7084 = vand.u32 %v5612, 6
        %v7085 = vand.u32 %v5613, 6
        %v7086 = vand.u32 %v5614, 6
        %v7087 = vand.u32 %v5615, 6
        %v7088 = vand.u32 %v5616, 6
        %vm7089 = vcmp.eq.s32.totalorder %v7057, 6
        %vm7090 = vcmp.eq.s32.totalorder %v7058, 6
        %vm7091 = vcmp.eq.s32.totalorder %v7059, 6
        %vm7092 = vcmp.eq.s32.totalorder %v7060, 6
        %vm7093 = vcmp.eq.s32.totalorder %v7061, 6
        %vm7094 = vcmp.eq.s32.totalorder %v7062, 6
        %vm7095 = vcmp.eq.s32.totalorder %v7063, 6
        %vm7096 = vcmp.eq.s32.totalorder %v7064, 6
        %vm7097 = vcmp.eq.s32.totalorder %v7065, 6
        %vm7098 = vcmp.eq.s32.totalorder %v7066, 6
        %vm7099 = vcmp.eq.s32.totalorder %v7067, 6
        %vm7100 = vcmp.eq.s32.totalorder %v7068, 6
        %vm7101 = vcmp.eq.s32.totalorder %v7069, 6
        %vm7102 = vcmp.eq.s32.totalorder %v7070, 6
        %vm7103 = vcmp.eq.s32.totalorder %v7071, 6
        %vm7104 = vcmp.eq.s32.totalorder %v7072, 6
        %vm7105 = vcmp.eq.s32.totalorder %v7073, 6
        %vm7106 = vcmp.eq.s32.totalorder %v7074, 6
        %vm7107 = vcmp.eq.s32.totalorder %v7075, 6
        %vm7108 = vcmp.eq.s32.totalorder %v7076, 6
        %vm7109 = vcmp.eq.s32.totalorder %v7077, 6
        %vm7110 = vcmp.eq.s32.totalorder %v7078, 6
        %vm7111 = vcmp.eq.s32.totalorder %v7079, 6
        %vm7112 = vcmp.eq.s32.totalorder %v7080, 6
        %vm7113 = vcmp.eq.s32.totalorder %v7081, 6
        %vm7114 = vcmp.eq.s32.totalorder %v7082, 6
        %vm7115 = vcmp.eq.s32.totalorder %v7083, 6
        %vm7116 = vcmp.eq.s32.totalorder %v7084, 6
        %vm7117 = vcmp.eq.s32.totalorder %v7085, 6
        %vm7118 = vcmp.eq.s32.totalorder %v7086, 6
        %vm7119 = vcmp.eq.s32.totalorder %v7087, 6
        %vm7120 = vcmp.eq.s32.totalorder %v7088, 6
        %v7121 = vsel %vm7089, %v5678, 0.0
        %v7122 = vsel %vm7090, %v5677, 0.0
        %v7123 = vsel %vm7091, %v5676, 0.0
        %v7124 = vsel %vm7092, %v5675, 0.0
        %v7125 = vsel %vm7093, %v5674, 0.0
        %v7126 = vsel %vm7094, %v5673, 0.0
        %v7127 = vsel %vm7095, %v5672, 0.0
        %v7128 = vsel %vm7096, %v5671, 0.0
        %v7129 = vsel %vm7097, %v5670, 0.0
        %v7130 = vsel %vm7098, %v5669, 0.0
        %v7131 = vsel %vm7099, %v5668, 0.0
        %v7132 = vsel %vm7100, %v5667, 0.0
        %v7133 = vsel %vm7101, %v5666, 0.0
        %v7134 = vsel %vm7102, %v5665, 0.0
        %v7135 = vsel %vm7103, %v5664, 0.0
        %v7136 = vsel %vm7104, %v5663, 0.0
        %v7137 = vsel %vm7105, %v5662, 0.0
        %v7138 = vsel %vm7106, %v5661, 0.0
        %v7139 = vsel %vm7107, %v5660, 0.0
        %v7140 = vsel %vm7108, %v5659, 0.0
        %v7141 = vsel %vm7109, %v5658, 0.0
        %v7142 = vsel %vm7110, %v5657, 0.0
        %v7143 = vsel %vm7111, %v5656, 0.0
        %v7144 = vsel %vm7112, %v5655, 0.0
        %v7145 = vsel %vm7113, %v5654, 0.0
        %v7146 = vsel %vm7114, %v5653, 0.0
        %v7147 = vsel %vm7115, %v5652, 0.0
        %v7148 = vsel %vm7116, %v5651, 0.0
        %v7149 = vsel %vm7117, %v5650, 0.0
        %v7150 = vsel %vm7118, %v5649, 0.0
        %v7151 = vsel %vm7119, %v5680, 0.0
        %v7152 = vsel %vm7120, %v5679, 0.0
        %7153 = vrot.lane.b32.xlu0 %v7121, 48
        %v7154 = vpop.permute.xlu0 %7153
        %7155 = vrot.lane.b32.xlu0 %v7122, 48
        %v7156 = vpop.permute.xlu0 %7155
        %7157 = vrot.lane.b32.xlu0 %v7123, 48
        %v7158 = vpop.permute.xlu0 %7157
        %7159 = vrot.lane.b32.xlu0 %v7124, 48
        %v7160 = vpop.permute.xlu0 %7159
        %7161 = vrot.lane.b32.xlu0 %v7125, 48
        %v7162 = vpop.permute.xlu0 %7161
        %7163 = vrot.lane.b32.xlu0 %v7126, 48
        %v7164 = vpop.permute.xlu0 %7163
        %7165 = vrot.lane.b32.xlu0 %v7127, 48
        %v7166 = vpop.permute.xlu0 %7165
        %7167 = vrot.lane.b32.xlu0 %v7128, 48
        %v7168 = vpop.permute.xlu0 %7167
        %7169 = vrot.lane.b32.xlu0 %v7129, 48
        %v7170 = vpop.permute.xlu0 %7169
        %7171 = vrot.lane.b32.xlu0 %v7130, 48
        %v7172 = vpop.permute.xlu0 %7171
        %7173 = vrot.lane.b32.xlu0 %v7131, 48
        %v7174 = vpop.permute.xlu0 %7173
        %7175 = vrot.lane.b32.xlu0 %v7132, 48
        %v7176 = vpop.permute.xlu0 %7175
        %7177 = vrot.lane.b32.xlu0 %v7133, 48
        %v7178 = vpop.permute.xlu0 %7177
        %7179 = vrot.lane.b32.xlu0 %v7134, 48
        %v7180 = vpop.permute.xlu0 %7179
        %7181 = vrot.lane.b32.xlu0 %v7135, 48
        %v7182 = vpop.permute.xlu0 %7181
        %7183 = vrot.lane.b32.xlu0 %v7136, 48
        %v7184 = vpop.permute.xlu0 %7183
        %7185 = vrot.lane.b32.xlu0 %v7137, 48
        %v7186 = vpop.permute.xlu0 %7185
        %7187 = vrot.lane.b32.xlu0 %v7138, 48
        %v7188 = vpop.permute.xlu0 %7187
        %7189 = vrot.lane.b32.xlu0 %v7139, 48
        %v7190 = vpop.permute.xlu0 %7189
        %7191 = vrot.lane.b32.xlu0 %v7140, 48
        %v7192 = vpop.permute.xlu0 %7191
        %7193 = vrot.lane.b32.xlu0 %v7141, 48
        %v7194 = vpop.permute.xlu0 %7193
        %7195 = vrot.lane.b32.xlu0 %v7142, 48
        %v7196 = vpop.permute.xlu0 %7195
        %7197 = vrot.lane.b32.xlu0 %v7143, 48
        %v7198 = vpop.permute.xlu0 %7197
        %7199 = vrot.lane.b32.xlu0 %v7144, 48
        %v7200 = vpop.permute.xlu0 %7199
        %7201 = vrot.lane.b32.xlu0 %v7145, 48
        %v7202 = vpop.permute.xlu0 %7201
        %7203 = vrot.lane.b32.xlu0 %v7146, 48
        %v7204 = vpop.permute.xlu0 %7203
        %7205 = vrot.lane.b32.xlu0 %v7147, 48
        %v7206 = vpop.permute.xlu0 %7205
        %7207 = vrot.lane.b32.xlu0 %v7148, 48
        %v7208 = vpop.permute.xlu0 %7207
        %7209 = vrot.lane.b32.xlu0 %v7149, 48
        %v7210 = vpop.permute.xlu0 %7209
        %7211 = vrot.lane.b32.xlu0 %v7150, 48
        %v7212 = vpop.permute.xlu0 %7211
        %7213 = vrot.lane.b32.xlu0 %v7151, 48
        %v7214 = vpop.permute.xlu0 %7213
        %7215 = vrot.lane.b32.xlu0 %v7152, 48
        %v7216 = vpop.permute.xlu0 %7215
        %v7217 = vld [vmem:[#allocation2] sm:$0xff]
        %v7218 = vld [vmem:[#allocation2 + $0x8] sm:$0xff]
        %v7219 = vld [vmem:[#allocation2 + $0x10] sm:$0xff]
        %v7220 = vld [vmem:[#allocation2 + $0x18] sm:$0xff]
        %v7221 = vld [vmem:[#allocation2 + $0x20] sm:$0xff]
        %v7222 = vld [vmem:[#allocation2 + $0x28] sm:$0xff]
        %v7223 = vld [vmem:[#allocation2 + $0x30] sm:$0xff]
        %v7224 = vld [vmem:[#allocation2 + $0x38] sm:$0xff]
        %v7225 = vld [vmem:[#allocation2 + $0x40] sm:$0xff]
        %v7226 = vld [vmem:[#allocation2 + $0x48] sm:$0xff]
        %v7227 = vld [vmem:[#allocation2 + $0x50] sm:$0xff]
        %v7228 = vld [vmem:[#allocation2 + $0x58] sm:$0xff]
        %v7229 = vld [vmem:[#allocation2 + $0x60] sm:$0xff]
        %v7230 = vld [vmem:[#allocation2 + $0x68] sm:$0xff]
        %v7231 = vld [vmem:[#allocation2 + $0x70] sm:$0xff]
        %v7232 = vld [vmem:[#allocation2 + $0x78] sm:$0xff]
        %v7233 = vld [vmem:[#allocation2 + $0x80] sm:$0xff]
        %v7234 = vld [vmem:[#allocation2 + $0x88] sm:$0xff]
        %v7235 = vld [vmem:[#allocation2 + $0x90] sm:$0xff]
        %v7236 = vld [vmem:[#allocation2 + $0x98] sm:$0xff]
        %v7237 = vld [vmem:[#allocation2 + $0xa0] sm:$0xff]
        %v7238 = vld [vmem:[#allocation2 + $0xa8] sm:$0xff]
        %v7239 = vld [vmem:[#allocation2 + $0xb0] sm:$0xff]
        %v7240 = vld [vmem:[#allocation2 + $0xb8] sm:$0xff]
        %v7241 = vld [vmem:[#allocation2 + $0xc0] sm:$0xff]
        %v7242 = vld [vmem:[#allocation2 + $0xc8] sm:$0xff]
        %v7243 = vld [vmem:[#allocation2 + $0xd0] sm:$0xff]
        %v7244 = vld [vmem:[#allocation2 + $0xd8] sm:$0xff]
        %v7245 = vld [vmem:[#allocation2 + $0xe0] sm:$0xff]
        %v7246 = vld [vmem:[#allocation2 + $0xe8] sm:$0xff]
        %v7247 = vld [vmem:[#allocation2 + $0xf0] sm:$0xff]
        %v7248 = vld [vmem:[#allocation2 + $0xf8] sm:$0xff]
        %v7249 = vadd.f32 %v7217, %v7154
        %v7250 = vadd.f32 %v7218, %v7156
        %v7251 = vadd.f32 %v7219, %v7158
        %v7252 = vadd.f32 %v7220, %v7160
        %v7253 = vadd.f32 %v7221, %v7162
        %v7254 = vadd.f32 %v7222, %v7164
        %v7255 = vadd.f32 %v7223, %v7166
        %v7256 = vadd.f32 %v7224, %v7168
        %v7257 = vadd.f32 %v7225, %v7170
        %v7258 = vadd.f32 %v7226, %v7172
        %v7259 = vadd.f32 %v7227, %v7174
        %v7260 = vadd.f32 %v7228, %v7176
        %v7261 = vadd.f32 %v7229, %v7178
        %v7262 = vadd.f32 %v7230, %v7180
        %v7263 = vadd.f32 %v7231, %v7182
        %v7264 = vadd.f32 %v7232, %v7184
        %v7265 = vadd.f32 %v7233, %v7186
        %v7266 = vadd.f32 %v7234, %v7188
        %v7267 = vadd.f32 %v7235, %v7190
        %v7268 = vadd.f32 %v7236, %v7192
        %v7269 = vadd.f32 %v7237, %v7194
        %v7270 = vadd.f32 %v7238, %v7196
        %v7271 = vadd.f32 %v7239, %v7198
        %v7272 = vadd.f32 %v7240, %v7200
        %v7273 = vadd.f32 %v7241, %v7202
        %v7274 = vadd.f32 %v7242, %v7204
        %v7275 = vadd.f32 %v7243, %v7206
        %v7276 = vadd.f32 %v7244, %v7208
        %v7277 = vadd.f32 %v7245, %v7210
        %v7278 = vadd.f32 %v7246, %v7212
        %v7279 = vadd.f32 %v7247, %v7214
        %v7280 = vadd.f32 %v7248, %v7216
        %7281 = vst [vmem:[#allocation2] sm:$0xff] %v7249
        %7282 = vst [vmem:[#allocation2 + $0x8] sm:$0xff] %v7250
        %7283 = vst [vmem:[#allocation2 + $0x10] sm:$0xff] %v7251
        %7284 = vst [vmem:[#allocation2 + $0x18] sm:$0xff] %v7252
        %7285 = vst [vmem:[#allocation2 + $0x20] sm:$0xff] %v7253
        %7286 = vst [vmem:[#allocation2 + $0x28] sm:$0xff] %v7254
        %7287 = vst [vmem:[#allocation2 + $0x30] sm:$0xff] %v7255
        %7288 = vst [vmem:[#allocation2 + $0x38] sm:$0xff] %v7256
        %7289 = vst [vmem:[#allocation2 + $0x40] sm:$0xff] %v7257
        %7290 = vst [vmem:[#allocation2 + $0x48] sm:$0xff] %v7258
        %7291 = vst [vmem:[#allocation2 + $0x50] sm:$0xff] %v7259
        %7292 = vst [vmem:[#allocation2 + $0x58] sm:$0xff] %v7260
        %7293 = vst [vmem:[#allocation2 + $0x60] sm:$0xff] %v7261
        %7294 = vst [vmem:[#allocation2 + $0x68] sm:$0xff] %v7262
        %7295 = vst [vmem:[#allocation2 + $0x70] sm:$0xff] %v7263
        %7296 = vst [vmem:[#allocation2 + $0x78] sm:$0xff] %v7264
        %7297 = vst [vmem:[#allocation2 + $0x80] sm:$0xff] %v7265
        %7298 = vst [vmem:[#allocation2 + $0x88] sm:$0xff] %v7266
        %7299 = vst [vmem:[#allocation2 + $0x90] sm:$0xff] %v7267
        %7300 = vst [vmem:[#allocation2 + $0x98] sm:$0xff] %v7268
        %7301 = vst [vmem:[#allocation2 + $0xa0] sm:$0xff] %v7269
        %7302 = vst [vmem:[#allocation2 + $0xa8] sm:$0xff] %v7270
        %7303 = vst [vmem:[#allocation2 + $0xb0] sm:$0xff] %v7271
        %7304 = vst [vmem:[#allocation2 + $0xb8] sm:$0xff] %v7272
        %7305 = vst [vmem:[#allocation2 + $0xc0] sm:$0xff] %v7273
        %7306 = vst [vmem:[#allocation2 + $0xc8] sm:$0xff] %v7274
        %7307 = vst [vmem:[#allocation2 + $0xd0] sm:$0xff] %v7275
        %7308 = vst [vmem:[#allocation2 + $0xd8] sm:$0xff] %v7276
        %7309 = vst [vmem:[#allocation2 + $0xe0] sm:$0xff] %v7277
        %7310 = vst [vmem:[#allocation2 + $0xe8] sm:$0xff] %v7278
        %7311 = vst [vmem:[#allocation2 + $0xf0] sm:$0xff] %v7279
        %7312 = vst [vmem:[#allocation2 + $0xf8] sm:$0xff] %v7280
        %v7313 = vand.u32 %v5585, 2
        %v7314 = vand.u32 %v5586, 2
        %v7315 = vand.u32 %v5587, 2
        %v7316 = vand.u32 %v5588, 2
        %v7317 = vand.u32 %v5589, 2
        %v7318 = vand.u32 %v5590, 2
        %v7319 = vand.u32 %v5591, 2
        %v7320 = vand.u32 %v5592, 2
        %v7321 = vand.u32 %v5593, 2
        %v7322 = vand.u32 %v5594, 2
        %v7323 = vand.u32 %v5595, 2
        %v7324 = vand.u32 %v5596, 2
        %v7325 = vand.u32 %v5597, 2
        %v7326 = vand.u32 %v5598, 2
        %v7327 = vand.u32 %v5599, 2
        %v7328 = vand.u32 %v5600, 2
        %v7329 = vand.u32 %v5601, 2
        %v7330 = vand.u32 %v5602, 2
        %v7331 = vand.u32 %v5603, 2
        %v7332 = vand.u32 %v5604, 2
        %v7333 = vand.u32 %v5605, 2
        %v7334 = vand.u32 %v5606, 2
        %v7335 = vand.u32 %v5607, 2
        %v7336 = vand.u32 %v5608, 2
        %v7337 = vand.u32 %v5609, 2
        %v7338 = vand.u32 %v5610, 2
        %v7339 = vand.u32 %v5611, 2
        %v7340 = vand.u32 %v5612, 2
        %v7341 = vand.u32 %v5613, 2
        %v7342 = vand.u32 %v5614, 2
        %v7343 = vand.u32 %v5615, 2
        %v7344 = vand.u32 %v5616, 2
        %vm7345 = vcmp.eq.s32.totalorder %v7313, 2
        %vm7346 = vcmp.eq.s32.totalorder %v7314, 2
        %vm7347 = vcmp.eq.s32.totalorder %v7315, 2
        %vm7348 = vcmp.eq.s32.totalorder %v7316, 2
        %vm7349 = vcmp.eq.s32.totalorder %v7317, 2
        %vm7350 = vcmp.eq.s32.totalorder %v7318, 2
        %vm7351 = vcmp.eq.s32.totalorder %v7319, 2
        %vm7352 = vcmp.eq.s32.totalorder %v7320, 2
        %vm7353 = vcmp.eq.s32.totalorder %v7321, 2
        %vm7354 = vcmp.eq.s32.totalorder %v7322, 2
        %vm7355 = vcmp.eq.s32.totalorder %v7323, 2
        %vm7356 = vcmp.eq.s32.totalorder %v7324, 2
        %vm7357 = vcmp.eq.s32.totalorder %v7325, 2
        %vm7358 = vcmp.eq.s32.totalorder %v7326, 2
        %vm7359 = vcmp.eq.s32.totalorder %v7327, 2
        %vm7360 = vcmp.eq.s32.totalorder %v7328, 2
        %vm7361 = vcmp.eq.s32.totalorder %v7329, 2
        %vm7362 = vcmp.eq.s32.totalorder %v7330, 2
        %vm7363 = vcmp.eq.s32.totalorder %v7331, 2
        %vm7364 = vcmp.eq.s32.totalorder %v7332, 2
        %vm7365 = vcmp.eq.s32.totalorder %v7333, 2
        %vm7366 = vcmp.eq.s32.totalorder %v7334, 2
        %vm7367 = vcmp.eq.s32.totalorder %v7335, 2
        %vm7368 = vcmp.eq.s32.totalorder %v7336, 2
        %vm7369 = vcmp.eq.s32.totalorder %v7337, 2
        %vm7370 = vcmp.eq.s32.totalorder %v7338, 2
        %vm7371 = vcmp.eq.s32.totalorder %v7339, 2
        %vm7372 = vcmp.eq.s32.totalorder %v7340, 2
        %vm7373 = vcmp.eq.s32.totalorder %v7341, 2
        %vm7374 = vcmp.eq.s32.totalorder %v7342, 2
        %vm7375 = vcmp.eq.s32.totalorder %v7343, 2
        %vm7376 = vcmp.eq.s32.totalorder %v7344, 2
        %v7377 = vsel %vm7345, %v5555, 0.0
        %v7378 = vsel %vm7346, %v5556, 0.0
        %v7379 = vsel %vm7347, %v5557, 0.0
        %v7380 = vsel %vm7348, %v5558, 0.0
        %v7381 = vsel %vm7349, %v5559, 0.0
        %v7382 = vsel %vm7350, %v5560, 0.0
        %v7383 = vsel %vm7351, %v5561, 0.0
        %v7384 = vsel %vm7352, %v5562, 0.0
        %v7385 = vsel %vm7353, %v5563, 0.0
        %v7386 = vsel %vm7354, %v5564, 0.0
        %v7387 = vsel %vm7355, %v5565, 0.0
        %v7388 = vsel %vm7356, %v5566, 0.0
        %v7389 = vsel %vm7357, %v5567, 0.0
        %v7390 = vsel %vm7358, %v5568, 0.0
        %v7391 = vsel %vm7359, %v5569, 0.0
        %v7392 = vsel %vm7360, %v5570, 0.0
        %v7393 = vsel %vm7361, %v5571, 0.0
        %v7394 = vsel %vm7362, %v5572, 0.0
        %v7395 = vsel %vm7363, %v5573, 0.0
        %v7396 = vsel %vm7364, %v5574, 0.0
        %v7397 = vsel %vm7365, %v5575, 0.0
        %v7398 = vsel %vm7366, %v5576, 0.0
        %v7399 = vsel %vm7367, %v5577, 0.0
        %v7400 = vsel %vm7368, %v5578, 0.0
        %v7401 = vsel %vm7369, %v5579, 0.0
        %v7402 = vsel %vm7370, %v5580, 0.0
        %v7403 = vsel %vm7371, %v5581, 0.0
        %v7404 = vsel %vm7372, %v5582, 0.0
        %v7405 = vsel %vm7373, %v5583, 0.0
        %v7406 = vsel %vm7374, %v5584, 0.0
        %v7407 = vsel %vm7375, %v5553, 0.0
        %v7408 = vsel %vm7376, %v5554, 0.0
        %7409 = vrot.lane.b32.xlu0 %v7377, 56
        %v7410 = vpop.permute.xlu0 %7409
        %7411 = vrot.lane.b32.xlu0 %v7378, 56
        %v7412 = vpop.permute.xlu0 %7411
        %7413 = vrot.lane.b32.xlu0 %v7379, 56
        %v7414 = vpop.permute.xlu0 %7413
        %7415 = vrot.lane.b32.xlu0 %v7380, 56
        %v7416 = vpop.permute.xlu0 %7415
        %7417 = vrot.lane.b32.xlu0 %v7381, 56
        %v7418 = vpop.permute.xlu0 %7417
        %7419 = vrot.lane.b32.xlu0 %v7382, 56
        %v7420 = vpop.permute.xlu0 %7419
        %7421 = vrot.lane.b32.xlu0 %v7383, 56
        %v7422 = vpop.permute.xlu0 %7421
        %7423 = vrot.lane.b32.xlu0 %v7384, 56
        %v7424 = vpop.permute.xlu0 %7423
        %7425 = vrot.lane.b32.xlu0 %v7385, 56
        %v7426 = vpop.permute.xlu0 %7425
        %7427 = vrot.lane.b32.xlu0 %v7386, 56
        %v7428 = vpop.permute.xlu0 %7427
        %7429 = vrot.lane.b32.xlu0 %v7387, 56
        %v7430 = vpop.permute.xlu0 %7429
        %7431 = vrot.lane.b32.xlu0 %v7388, 56
        %v7432 = vpop.permute.xlu0 %7431
        %7433 = vrot.lane.b32.xlu0 %v7389, 56
        %v7434 = vpop.permute.xlu0 %7433
        %7435 = vrot.lane.b32.xlu0 %v7390, 56
        %v7436 = vpop.permute.xlu0 %7435
        %7437 = vrot.lane.b32.xlu0 %v7391, 56
        %v7438 = vpop.permute.xlu0 %7437
        %7439 = vrot.lane.b32.xlu0 %v7392, 56
        %v7440 = vpop.permute.xlu0 %7439
        %7441 = vrot.lane.b32.xlu0 %v7393, 56
        %v7442 = vpop.permute.xlu0 %7441
        %7443 = vrot.lane.b32.xlu0 %v7394, 56
        %v7444 = vpop.permute.xlu0 %7443
        %7445 = vrot.lane.b32.xlu0 %v7395, 56
        %v7446 = vpop.permute.xlu0 %7445
        %7447 = vrot.lane.b32.xlu0 %v7396, 56
        %v7448 = vpop.permute.xlu0 %7447
        %7449 = vrot.lane.b32.xlu0 %v7397, 56
        %v7450 = vpop.permute.xlu0 %7449
        %7451 = vrot.lane.b32.xlu0 %v7398, 56
        %v7452 = vpop.permute.xlu0 %7451
        %7453 = vrot.lane.b32.xlu0 %v7399, 56
        %v7454 = vpop.permute.xlu0 %7453
        %7455 = vrot.lane.b32.xlu0 %v7400, 56
        %v7456 = vpop.permute.xlu0 %7455
        %7457 = vrot.lane.b32.xlu0 %v7401, 56
        %v7458 = vpop.permute.xlu0 %7457
        %7459 = vrot.lane.b32.xlu0 %v7402, 56
        %v7460 = vpop.permute.xlu0 %7459
        %7461 = vrot.lane.b32.xlu0 %v7403, 56
        %v7462 = vpop.permute.xlu0 %7461
        %7463 = vrot.lane.b32.xlu0 %v7404, 56
        %v7464 = vpop.permute.xlu0 %7463
        %7465 = vrot.lane.b32.xlu0 %v7405, 56
        %v7466 = vpop.permute.xlu0 %7465
        %7467 = vrot.lane.b32.xlu0 %v7406, 56
        %v7468 = vpop.permute.xlu0 %7467
        %7469 = vrot.lane.b32.xlu0 %v7407, 56
        %v7470 = vpop.permute.xlu0 %7469
        %7471 = vrot.lane.b32.xlu0 %v7408, 56
        %v7472 = vpop.permute.xlu0 %7471
        %v7473 = vld [vmem:[#allocation2] sm:$0xff]
        %v7474 = vld [vmem:[#allocation2 + $0x8] sm:$0xff]
        %v7475 = vld [vmem:[#allocation2 + $0x10] sm:$0xff]
        %v7476 = vld [vmem:[#allocation2 + $0x18] sm:$0xff]
        %v7477 = vld [vmem:[#allocation2 + $0x20] sm:$0xff]
        %v7478 = vld [vmem:[#allocation2 + $0x28] sm:$0xff]
        %v7479 = vld [vmem:[#allocation2 + $0x30] sm:$0xff]
        %v7480 = vld [vmem:[#allocation2 + $0x38] sm:$0xff]
        %v7481 = vld [vmem:[#allocation2 + $0x40] sm:$0xff]
        %v7482 = vld [vmem:[#allocation2 + $0x48] sm:$0xff]
        %v7483 = vld [vmem:[#allocation2 + $0x50] sm:$0xff]
        %v7484 = vld [vmem:[#allocation2 + $0x58] sm:$0xff]
        %v7485 = vld [vmem:[#allocation2 + $0x60] sm:$0xff]
        %v7486 = vld [vmem:[#allocation2 + $0x68] sm:$0xff]
        %v7487 = vld [vmem:[#allocation2 + $0x70] sm:$0xff]
        %v7488 = vld [vmem:[#allocation2 + $0x78] sm:$0xff]
        %v7489 = vld [vmem:[#allocation2 + $0x80] sm:$0xff]
        %v7490 = vld [vmem:[#allocation2 + $0x88] sm:$0xff]
        %v7491 = vld [vmem:[#allocation2 + $0x90] sm:$0xff]
        %v7492 = vld [vmem:[#allocation2 + $0x98] sm:$0xff]
        %v7493 = vld [vmem:[#allocation2 + $0xa0] sm:$0xff]
        %v7494 = vld [vmem:[#allocation2 + $0xa8] sm:$0xff]
        %v7495 = vld [vmem:[#allocation2 + $0xb0] sm:$0xff]
        %v7496 = vld [vmem:[#allocation2 + $0xb8] sm:$0xff]
        %v7497 = vld [vmem:[#allocation2 + $0xc0] sm:$0xff]
        %v7498 = vld [vmem:[#allocation2 + $0xc8] sm:$0xff]
        %v7499 = vld [vmem:[#allocation2 + $0xd0] sm:$0xff]
        %v7500 = vld [vmem:[#allocation2 + $0xd8] sm:$0xff]
        %v7501 = vld [vmem:[#allocation2 + $0xe0] sm:$0xff]
        %v7502 = vld [vmem:[#allocation2 + $0xe8] sm:$0xff]
        %v7503 = vld [vmem:[#allocation2 + $0xf0] sm:$0xff]
        %v7504 = vld [vmem:[#allocation2 + $0xf8] sm:$0xff]
        %v7505 = vadd.f32 %v7473, %v7410
        %v7506 = vadd.f32 %v7474, %v7412
        %v7507 = vadd.f32 %v7475, %v7414
        %v7508 = vadd.f32 %v7476, %v7416
        %v7509 = vadd.f32 %v7477, %v7418
        %v7510 = vadd.f32 %v7478, %v7420
        %v7511 = vadd.f32 %v7479, %v7422
        %v7512 = vadd.f32 %v7480, %v7424
        %v7513 = vadd.f32 %v7481, %v7426
        %v7514 = vadd.f32 %v7482, %v7428
        %v7515 = vadd.f32 %v7483, %v7430
        %v7516 = vadd.f32 %v7484, %v7432
        %v7517 = vadd.f32 %v7485, %v7434
        %v7518 = vadd.f32 %v7486, %v7436
        %v7519 = vadd.f32 %v7487, %v7438
        %v7520 = vadd.f32 %v7488, %v7440
        %v7521 = vadd.f32 %v7489, %v7442
        %v7522 = vadd.f32 %v7490, %v7444
        %v7523 = vadd.f32 %v7491, %v7446
        %v7524 = vadd.f32 %v7492, %v7448
        %v7525 = vadd.f32 %v7493, %v7450
        %v7526 = vadd.f32 %v7494, %v7452
        %v7527 = vadd.f32 %v7495, %v7454
        %v7528 = vadd.f32 %v7496, %v7456
        %v7529 = vadd.f32 %v7497, %v7458
        %v7530 = vadd.f32 %v7498, %v7460
        %v7531 = vadd.f32 %v7499, %v7462
        %v7532 = vadd.f32 %v7500, %v7464
        %v7533 = vadd.f32 %v7501, %v7466
        %v7534 = vadd.f32 %v7502, %v7468
        %v7535 = vadd.f32 %v7503, %v7470
        %v7536 = vadd.f32 %v7504, %v7472
        %7537 = vst [vmem:[#allocation2] sm:$0xff] %v7505
        %7538 = vst [vmem:[#allocation2 + $0x8] sm:$0xff] %v7506
        %7539 = vst [vmem:[#allocation2 + $0x10] sm:$0xff] %v7507
        %7540 = vst [vmem:[#allocation2 + $0x18] sm:$0xff] %v7508
        %7541 = vst [vmem:[#allocation2 + $0x20] sm:$0xff] %v7509
        %7542 = vst [vmem:[#allocation2 + $0x28] sm:$0xff] %v7510
        %7543 = vst [vmem:[#allocation2 + $0x30] sm:$0xff] %v7511
        %7544 = vst [vmem:[#allocation2 + $0x38] sm:$0xff] %v7512
        %7545 = vst [vmem:[#allocation2 + $0x40] sm:$0xff] %v7513
        %7546 = vst [vmem:[#allocation2 + $0x48] sm:$0xff] %v7514
        %7547 = vst [vmem:[#allocation2 + $0x50] sm:$0xff] %v7515
        %7548 = vst [vmem:[#allocation2 + $0x58] sm:$0xff] %v7516
        %7549 = vst [vmem:[#allocation2 + $0x60] sm:$0xff] %v7517
        %7550 = vst [vmem:[#allocation2 + $0x68] sm:$0xff] %v7518
        %7551 = vst [vmem:[#allocation2 + $0x70] sm:$0xff] %v7519
        %7552 = vst [vmem:[#allocation2 + $0x78] sm:$0xff] %v7520
        %7553 = vst [vmem:[#allocation2 + $0x80] sm:$0xff] %v7521
        %7554 = vst [vmem:[#allocation2 + $0x88] sm:$0xff] %v7522
        %7555 = vst [vmem:[#allocation2 + $0x90] sm:$0xff] %v7523
        %7556 = vst [vmem:[#allocation2 + $0x98] sm:$0xff] %v7524
        %7557 = vst [vmem:[#allocation2 + $0xa0] sm:$0xff] %v7525
        %7558 = vst [vmem:[#allocation2 + $0xa8] sm:$0xff] %v7526
        %7559 = vst [vmem:[#allocation2 + $0xb0] sm:$0xff] %v7527
        %7560 = vst [vmem:[#allocation2 + $0xb8] sm:$0xff] %v7528
        %7561 = vst [vmem:[#allocation2 + $0xc0] sm:$0xff] %v7529
        %7562 = vst [vmem:[#allocation2 + $0xc8] sm:$0xff] %v7530
        %7563 = vst [vmem:[#allocation2 + $0xd0] sm:$0xff] %v7531
        %7564 = vst [vmem:[#allocation2 + $0xd8] sm:$0xff] %v7532
        %7565 = vst [vmem:[#allocation2 + $0xe0] sm:$0xff] %v7533
        %7566 = vst [vmem:[#allocation2 + $0xe8] sm:$0xff] %v7534
        %7567 = vst [vmem:[#allocation2 + $0xf0] sm:$0xff] %v7535
        %7568 = vst [vmem:[#allocation2 + $0xf8] sm:$0xff] %v7536
        %v7569 = vand.u32 %v5585, 10
        %v7570 = vand.u32 %v5586, 10
        %v7571 = vand.u32 %v5587, 10
        %v7572 = vand.u32 %v5588, 10
        %v7573 = vand.u32 %v5589, 10
        %v7574 = vand.u32 %v5590, 10
        %v7575 = vand.u32 %v5591, 10
        %v7576 = vand.u32 %v5592, 10
        %v7577 = vand.u32 %v5593, 10
        %v7578 = vand.u32 %v5594, 10
        %v7579 = vand.u32 %v5595, 10
        %v7580 = vand.u32 %v5596, 10
        %v7581 = vand.u32 %v5597, 10
        %v7582 = vand.u32 %v5598, 10
        %v7583 = vand.u32 %v5599, 10
        %v7584 = vand.u32 %v5600, 10
        %v7585 = vand.u32 %v5601, 10
        %v7586 = vand.u32 %v5602, 10
        %v7587 = vand.u32 %v5603, 10
        %v7588 = vand.u32 %v5604, 10
        %v7589 = vand.u32 %v5605, 10
        %v7590 = vand.u32 %v5606, 10
        %v7591 = vand.u32 %v5607, 10
        %v7592 = vand.u32 %v5608, 10
        %v7593 = vand.u32 %v5609, 10
        %v7594 = vand.u32 %v5610, 10
        %v7595 = vand.u32 %v5611, 10
        %v7596 = vand.u32 %v5612, 10
        %v7597 = vand.u32 %v5613, 10
        %v7598 = vand.u32 %v5614, 10
        %v7599 = vand.u32 %v5615, 10
        %v7600 = vand.u32 %v5616, 10
        %vm7601 = vcmp.eq.s32.totalorder %v7569, 10
        %vm7602 = vcmp.eq.s32.totalorder %v7570, 10
        %vm7603 = vcmp.eq.s32.totalorder %v7571, 10
        %vm7604 = vcmp.eq.s32.totalorder %v7572, 10
        %vm7605 = vcmp.eq.s32.totalorder %v7573, 10
        %vm7606 = vcmp.eq.s32.totalorder %v7574, 10
        %vm7607 = vcmp.eq.s32.totalorder %v7575, 10
        %vm7608 = vcmp.eq.s32.totalorder %v7576, 10
        %vm7609 = vcmp.eq.s32.totalorder %v7577, 10
        %vm7610 = vcmp.eq.s32.totalorder %v7578, 10
        %vm7611 = vcmp.eq.s32.totalorder %v7579, 10
        %vm7612 = vcmp.eq.s32.totalorder %v7580, 10
        %vm7613 = vcmp.eq.s32.totalorder %v7581, 10
        %vm7614 = vcmp.eq.s32.totalorder %v7582, 10
        %vm7615 = vcmp.eq.s32.totalorder %v7583, 10
        %vm7616 = vcmp.eq.s32.totalorder %v7584, 10
        %vm7617 = vcmp.eq.s32.totalorder %v7585, 10
        %vm7618 = vcmp.eq.s32.totalorder %v7586, 10
        %vm7619 = vcmp.eq.s32.totalorder %v7587, 10
        %vm7620 = vcmp.eq.s32.totalorder %v7588, 10
        %vm7621 = vcmp.eq.s32.totalorder %v7589, 10
        %vm7622 = vcmp.eq.s32.totalorder %v7590, 10
        %vm7623 = vcmp.eq.s32.totalorder %v7591, 10
        %vm7624 = vcmp.eq.s32.totalorder %v7592, 10
        %vm7625 = vcmp.eq.s32.totalorder %v7593, 10
        %vm7626 = vcmp.eq.s32.totalorder %v7594, 10
        %vm7627 = vcmp.eq.s32.totalorder %v7595, 10
        %vm7628 = vcmp.eq.s32.totalorder %v7596, 10
        %vm7629 = vcmp.eq.s32.totalorder %v7597, 10
        %vm7630 = vcmp.eq.s32.totalorder %v7598, 10
        %vm7631 = vcmp.eq.s32.totalorder %v7599, 10
        %vm7632 = vcmp.eq.s32.totalorder %v7600, 10
        %v7633 = vsel %vm7601, %v6125, 0.0
        %v7634 = vsel %vm7602, %v6124, 0.0
        %v7635 = vsel %vm7603, %v6123, 0.0
        %v7636 = vsel %vm7604, %v6122, 0.0
        %v7637 = vsel %vm7605, %v6121, 0.0
        %v7638 = vsel %vm7606, %v6120, 0.0
        %v7639 = vsel %vm7607, %v6119, 0.0
        %v7640 = vsel %vm7608, %v6118, 0.0
        %v7641 = vsel %vm7609, %v6117, 0.0
        %v7642 = vsel %vm7610, %v6116, 0.0
        %v7643 = vsel %vm7611, %v6115, 0.0
        %v7644 = vsel %vm7612, %v6114, 0.0
        %v7645 = vsel %vm7613, %v6113, 0.0
        %v7646 = vsel %vm7614, %v6112, 0.0
        %v7647 = vsel %vm7615, %v6111, 0.0
        %v7648 = vsel %vm7616, %v6110, 0.0
        %v7649 = vsel %vm7617, %v6109, 0.0
        %v7650 = vsel %vm7618, %v6108, 0.0
        %v7651 = vsel %vm7619, %v6107, 0.0
        %v7652 = vsel %vm7620, %v6106, 0.0
        %v7653 = vsel %vm7621, %v6105, 0.0
        %v7654 = vsel %vm7622, %v6104, 0.0
        %v7655 = vsel %vm7623, %v6103, 0.0
        %v7656 = vsel %vm7624, %v6102, 0.0
        %v7657 = vsel %vm7625, %v6101, 0.0
        %v7658 = vsel %vm7626, %v6100, 0.0
        %v7659 = vsel %vm7627, %v6099, 0.0
        %v7660 = vsel %vm7628, %v6098, 0.0
        %v7661 = vsel %vm7629, %v6097, 0.0
        %v7662 = vsel %vm7630, %v6128, 0.0
        %v7663 = vsel %vm7631, %v6127, 0.0
        %v7664 = vsel %vm7632, %v6126, 0.0
        %7665 = vrot.lane.b32.xlu0 %v7633, 64
        %v7666 = vpop.permute.xlu0 %7665
        %7667 = vrot.lane.b32.xlu0 %v7634, 64
        %v7668 = vpop.permute.xlu0 %7667
        %7669 = vrot.lane.b32.xlu0 %v7635, 64
        %v7670 = vpop.permute.xlu0 %7669
        %7671 = vrot.lane.b32.xlu0 %v7636, 64
        %v7672 = vpop.permute.xlu0 %7671
        %7673 = vrot.lane.b32.xlu0 %v7637, 64
        %v7674 = vpop.permute.xlu0 %7673
        %7675 = vrot.lane.b32.xlu0 %v7638, 64
        %v7676 = vpop.permute.xlu0 %7675
        %7677 = vrot.lane.b32.xlu0 %v7639, 64
        %v7678 = vpop.permute.xlu0 %7677
        %7679 = vrot.lane.b32.xlu0 %v7640, 64
        %v7680 = vpop.permute.xlu0 %7679
        %7681 = vrot.lane.b32.xlu0 %v7641, 64
        %v7682 = vpop.permute.xlu0 %7681
        %7683 = vrot.lane.b32.xlu0 %v7642, 64
        %v7684 = vpop.permute.xlu0 %7683
        %7685 = vrot.lane.b32.xlu0 %v7643, 64
        %v7686 = vpop.permute.xlu0 %7685
        %7687 = vrot.lane.b32.xlu0 %v7644, 64
        %v7688 = vpop.permute.xlu0 %7687
        %7689 = vrot.lane.b32.xlu0 %v7645, 64
        %v7690 = vpop.permute.xlu0 %7689
        %7691 = vrot.lane.b32.xlu0 %v7646, 64
        %v7692 = vpop.permute.xlu0 %7691
        %7693 = vrot.lane.b32.xlu0 %v7647, 64
        %v7694 = vpop.permute.xlu0 %7693
        %7695 = vrot.lane.b32.xlu0 %v7648, 64
        %v7696 = vpop.permute.xlu0 %7695
        %7697 = vrot.lane.b32.xlu0 %v7649, 64
        %v7698 = vpop.permute.xlu0 %7697
        %7699 = vrot.lane.b32.xlu0 %v7650, 64
        %v7700 = vpop.permute.xlu0 %7699
        %7701 = vrot.lane.b32.xlu0 %v7651, 64
        %v7702 = vpop.permute.xlu0 %7701
        %7703 = vrot.lane.b32.xlu0 %v7652, 64
        %v7704 = vpop.permute.xlu0 %7703
        %7705 = vrot.lane.b32.xlu0 %v7653, 64
        %v7706 = vpop.permute.xlu0 %7705
        %7707 = vrot.lane.b32.xlu0 %v7654, 64
        %v7708 = vpop.permute.xlu0 %7707
        %7709 = vrot.lane.b32.xlu0 %v7655, 64
        %v7710 = vpop.permute.xlu0 %7709
        %7711 = vrot.lane.b32.xlu0 %v7656, 64
        %v7712 = vpop.permute.xlu0 %7711
        %7713 = vrot.lane.b32.xlu0 %v7657, 64
        %v7714 = vpop.permute.xlu0 %7713
        %7715 = vrot.lane.b32.xlu0 %v7658, 64
        %v7716 = vpop.permute.xlu0 %7715
        %7717 = vrot.lane.b32.xlu0 %v7659, 64
        %v7718 = vpop.permute.xlu0 %7717
        %7719 = vrot.lane.b32.xlu0 %v7660, 64
        %v7720 = vpop.permute.xlu0 %7719
        %7721 = vrot.lane.b32.xlu0 %v7661, 64
        %v7722 = vpop.permute.xlu0 %7721
        %7723 = vrot.lane.b32.xlu0 %v7662, 64
        %v7724 = vpop.permute.xlu0 %7723
        %7725 = vrot.lane.b32.xlu0 %v7663, 64
        %v7726 = vpop.permute.xlu0 %7725
        %7727 = vrot.lane.b32.xlu0 %v7664, 64
        %v7728 = vpop.permute.xlu0 %7727
        %v7729 = vld [vmem:[#allocation2] sm:$0xff]
        %v7730 = vld [vmem:[#allocation2 + $0x8] sm:$0xff]
        %v7731 = vld [vmem:[#allocation2 + $0x10] sm:$0xff]
        %v7732 = vld [vmem:[#allocation2 + $0x18] sm:$0xff]
        %v7733 = vld [vmem:[#allocation2 + $0x20] sm:$0xff]
        %v7734 = vld [vmem:[#allocation2 + $0x28] sm:$0xff]
        %v7735 = vld [vmem:[#allocation2 + $0x30] sm:$0xff]
        %v7736 = vld [vmem:[#allocation2 + $0x38] sm:$0xff]
        %v7737 = vld [vmem:[#allocation2 + $0x40] sm:$0xff]
        %v7738 = vld [vmem:[#allocation2 + $0x48] sm:$0xff]
        %v7739 = vld [vmem:[#allocation2 + $0x50] sm:$0xff]
        %v7740 = vld [vmem:[#allocation2 + $0x58] sm:$0xff]
        %v7741 = vld [vmem:[#allocation2 + $0x60] sm:$0xff]
        %v7742 = vld [vmem:[#allocation2 + $0x68] sm:$0xff]
        %v7743 = vld [vmem:[#allocation2 + $0x70] sm:$0xff]
        %v7744 = vld [vmem:[#allocation2 + $0x78] sm:$0xff]
        %v7745 = vld [vmem:[#allocation2 + $0x80] sm:$0xff]
        %v7746 = vld [vmem:[#allocation2 + $0x88] sm:$0xff]
        %v7747 = vld [vmem:[#allocation2 + $0x90] sm:$0xff]
        %v7748 = vld [vmem:[#allocation2 + $0x98] sm:$0xff]
        %v7749 = vld [vmem:[#allocation2 + $0xa0] sm:$0xff]
        %v7750 = vld [vmem:[#allocation2 + $0xa8] sm:$0xff]
        %v7751 = vld [vmem:[#allocation2 + $0xb0] sm:$0xff]
        %v7752 = vld [vmem:[#allocation2 + $0xb8] sm:$0xff]
        %v7753 = vld [vmem:[#allocation2 + $0xc0] sm:$0xff]
        %v7754 = vld [vmem:[#allocation2 + $0xc8] sm:$0xff]
        %v7755 = vld [vmem:[#allocation2 + $0xd0] sm:$0xff]
        %v7756 = vld [vmem:[#allocation2 + $0xd8] sm:$0xff]
        %v7757 = vld [vmem:[#allocation2 + $0xe0] sm:$0xff]
        %v7758 = vld [vmem:[#allocation2 + $0xe8] sm:$0xff]
        %v7759 = vld [vmem:[#allocation2 + $0xf0] sm:$0xff]
        %v7760 = vld [vmem:[#allocation2 + $0xf8] sm:$0xff]
        %v7761 = vadd.f32 %v7729, %v7666
        %v7762 = vadd.f32 %v7730, %v7668
        %v7763 = vadd.f32 %v7731, %v7670
        %v7764 = vadd.f32 %v7732, %v7672
        %v7765 = vadd.f32 %v7733, %v7674
        %v7766 = vadd.f32 %v7734, %v7676
        %v7767 = vadd.f32 %v7735, %v7678
        %v7768 = vadd.f32 %v7736, %v7680
        %v7769 = vadd.f32 %v7737, %v7682
        %v7770 = vadd.f32 %v7738, %v7684
        %v7771 = vadd.f32 %v7739, %v7686
        %v7772 = vadd.f32 %v7740, %v7688
        %v7773 = vadd.f32 %v7741, %v7690
        %v7774 = vadd.f32 %v7742, %v7692
        %v7775 = vadd.f32 %v7743, %v7694
        %v7776 = vadd.f32 %v7744, %v7696
        %v7777 = vadd.f32 %v7745, %v7698
        %v7778 = vadd.f32 %v7746, %v7700
        %v7779 = vadd.f32 %v7747, %v7702
        %v7780 = vadd.f32 %v7748, %v7704
        %v7781 = vadd.f32 %v7749, %v7706
        %v7782 = vadd.f32 %v7750, %v7708
        %v7783 = vadd.f32 %v7751, %v7710
        %v7784 = vadd.f32 %v7752, %v7712
        %v7785 = vadd.f32 %v7753, %v7714
        %v7786 = vadd.f32 %v7754, %v7716
        %v7787 = vadd.f32 %v7755, %v7718
        %v7788 = vadd.f32 %v7756, %v7720
        %v7789 = vadd.f32 %v7757, %v7722
        %v7790 = vadd.f32 %v7758, %v7724
        %v7791 = vadd.f32 %v7759, %v7726
        %v7792 = vadd.f32 %v7760, %v7728
        %7793 = vst [vmem:[#allocation2] sm:$0xff] %v7761
        %7794 = vst [vmem:[#allocation2 + $0x8] sm:$0xff] %v7762
        %7795 = vst [vmem:[#allocation2 + $0x10] sm:$0xff] %v7763
        %7796 = vst [vmem:[#allocation2 + $0x18] sm:$0xff] %v7764
        %7797 = vst [vmem:[#allocation2 + $0x20] sm:$0xff] %v7765
        %7798 = vst [vmem:[#allocation2 + $0x28] sm:$0xff] %v7766
        %7799 = vst [vmem:[#allocation2 + $0x30] sm:$0xff] %v7767
        %7800 = vst [vmem:[#allocation2 + $0x38] sm:$0xff] %v7768
        %7801 = vst [vmem:[#allocation2 + $0x40] sm:$0xff] %v7769
        %7802 = vst [vmem:[#allocation2 + $0x48] sm:$0xff] %v7770
        %7803 = vst [vmem:[#allocation2 + $0x50] sm:$0xff] %v7771
        %7804 = vst [vmem:[#allocation2 + $0x58] sm:$0xff] %v7772
        %7805 = vst [vmem:[#allocation2 + $0x60] sm:$0xff] %v7773
        %7806 = vst [vmem:[#allocation2 + $0x68] sm:$0xff] %v7774
        %7807 = vst [vmem:[#allocation2 + $0x70] sm:$0xff] %v7775
        %7808 = vst [vmem:[#allocation2 + $0x78] sm:$0xff] %v7776
        %7809 = vst [vmem:[#allocation2 + $0x80] sm:$0xff] %v7777
        %7810 = vst [vmem:[#allocation2 + $0x88] sm:$0xff] %v7778
        %7811 = vst [vmem:[#allocation2 + $0x90] sm:$0xff] %v7779
        %7812 = vst [vmem:[#allocation2 + $0x98] sm:$0xff] %v7780
        %7813 = vst [vmem:[#allocation2 + $0xa0] sm:$0xff] %v7781
        %7814 = vst [vmem:[#allocation2 + $0xa8] sm:$0xff] %v7782
        %7815 = vst [vmem:[#allocation2 + $0xb0] sm:$0xff] %v7783
        %7816 = vst [vmem:[#allocation2 + $0xb8] sm:$0xff] %v7784
        %7817 = vst [vmem:[#allocation2 + $0xc0] sm:$0xff] %v7785
        %7818 = vst [vmem:[#allocation2 + $0xc8] sm:$0xff] %v7786
        %7819 = vst [vmem:[#allocation2 + $0xd0] sm:$0xff] %v7787
        %7820 = vst [vmem:[#allocation2 + $0xd8] sm:$0xff] %v7788
        %7821 = vst [vmem:[#allocation2 + $0xe0] sm:$0xff] %v7789
        %7822 = vst [vmem:[#allocation2 + $0xe8] sm:$0xff] %v7790
        %7823 = vst [vmem:[#allocation2 + $0xf0] sm:$0xff] %v7791
        %7824 = vst [vmem:[#allocation2 + $0xf8] sm:$0xff] %v7792
        %v7825 = vld [vmem:[#allocation2] sm:$0xff]
        %v7826 = vld [vmem:[#allocation2 + $0x8] sm:$0xff]
        %v7827 = vld [vmem:[#allocation2 + $0x10] sm:$0xff]
        %v7828 = vld [vmem:[#allocation2 + $0x18] sm:$0xff]
        %v7829 = vld [vmem:[#allocation2 + $0x20] sm:$0xff]
        %v7830 = vld [vmem:[#allocation2 + $0x28] sm:$0xff]
        %v7831 = vld [vmem:[#allocation2 + $0x30] sm:$0xff]
        %v7832 = vld [vmem:[#allocation2 + $0x38] sm:$0xff]
        %v7833 = vld [vmem:[#allocation2 + $0x40] sm:$0xff]
        %v7834 = vld [vmem:[#allocation2 + $0x48] sm:$0xff]
        %v7835 = vld [vmem:[#allocation2 + $0x50] sm:$0xff]
        %v7836 = vld [vmem:[#allocation2 + $0x58] sm:$0xff]
        %v7837 = vld [vmem:[#allocation2 + $0x60] sm:$0xff]
        %v7838 = vld [vmem:[#allocation2 + $0x68] sm:$0xff]
        %v7839 = vld [vmem:[#allocation2 + $0x70] sm:$0xff]
        %v7840 = vld [vmem:[#allocation2 + $0x78] sm:$0xff]
        %v7841 = vld [vmem:[#allocation2 + $0x80] sm:$0xff]
        %v7842 = vld [vmem:[#allocation2 + $0x88] sm:$0xff]
        %v7843 = vld [vmem:[#allocation2 + $0x90] sm:$0xff]
        %v7844 = vld [vmem:[#allocation2 + $0x98] sm:$0xff]
        %v7845 = vld [vmem:[#allocation2 + $0xa0] sm:$0xff]
        %v7846 = vld [vmem:[#allocation2 + $0xa8] sm:$0xff]
        %v7847 = vld [vmem:[#allocation2 + $0xb0] sm:$0xff]
        %v7848 = vld [vmem:[#allocation2 + $0xb8] sm:$0xff]
        %v7849 = vld [vmem:[#allocation2 + $0xc0] sm:$0xff]
        %v7850 = vld [vmem:[#allocation2 + $0xc8] sm:$0xff]
        %v7851 = vld [vmem:[#allocation2 + $0xd0] sm:$0xff]
        %v7852 = vld [vmem:[#allocation2 + $0xd8] sm:$0xff]
        %v7853 = vld [vmem:[#allocation2 + $0xe0] sm:$0xff]
        %v7854 = vld [vmem:[#allocation2 + $0xe8] sm:$0xff]
        %v7855 = vld [vmem:[#allocation2 + $0xf0] sm:$0xff]
        %v7856 = vld [vmem:[#allocation2 + $0xf8] sm:$0xff]
        %v7857 = vpack.c.bf16 %v7826, %v7825
        %v7858 = vpack.c.bf16 %v7828, %v7827
        %v7859 = vpack.c.bf16 %v7830, %v7829
        %v7860 = vpack.c.bf16 %v7832, %v7831
        %v7861 = vpack.c.bf16 %v7834, %v7833
        %v7862 = vpack.c.bf16 %v7836, %v7835
        %v7863 = vpack.c.bf16 %v7838, %v7837
        %v7864 = vpack.c.bf16 %v7840, %v7839
        %v7865 = vpack.c.bf16 %v7842, %v7841
        %v7866 = vpack.c.bf16 %v7844, %v7843
        %v7867 = vpack.c.bf16 %v7846, %v7845
        %v7868 = vpack.c.bf16 %v7848, %v7847
        %v7869 = vpack.c.bf16 %v7850, %v7849
        %v7870 = vpack.c.bf16 %v7852, %v7851
        %v7871 = vpack.c.bf16 %v7854, %v7853
        %v7872 = vpack.c.bf16 %v7856, %v7855
        %s7873 = scalar_lea.vmem [#allocation8], 128
        %v7874 = vld [vmem:[%s7873] sm:$0xf]
        %v7875 = vld [vmem:[%s7873 + $0x4] sm:$0xf]
        %v7876 = vld [vmem:[%s7873 + $0x8] sm:$0xf]
        %v7877 = vld [vmem:[%s7873 + $0xc] sm:$0xf]
        %v7878 = vld [vmem:[%s7873 + $0x10] sm:$0xf]
        %v7879 = vld [vmem:[%s7873 + $0x14] sm:$0xf]
        %v7880 = vld [vmem:[%s7873 + $0x18] sm:$0xf]
        %v7881 = vld [vmem:[%s7873 + $0x1c] sm:$0xf]
        %v7882 = vld [vmem:[%s7873 + $0x20] sm:$0xf]
        %v7883 = vld [vmem:[%s7873 + $0x24] sm:$0xf]
        %v7884 = vld [vmem:[%s7873 + $0x28] sm:$0xf]
        %v7885 = vld [vmem:[%s7873 + $0x2c] sm:$0xf]
        %v7886 = vld [vmem:[%s7873 + $0x30] sm:$0xf]
        %v7887 = vld [vmem:[%s7873 + $0x34] sm:$0xf]
        %v7888 = vld [vmem:[%s7873 + $0x38] sm:$0xf]
        %v7889 = vld [vmem:[%s7873 + $0x3c] sm:$0xf]
        %v7890 = vld [vmem:[#allocation10 + $0x2] sm:$0x1]
        %v7891 = vlaneseq
        %v7892 = vshrl.u32 %v7891, 7
        %v7893 = vsub.s32 0, %v7892
        %v7894 = vrot.slane %v7890, %v7893
        %v7911 = vunpack.c.l.b16 %v7874
        %v7912 = vunpack.c.l.b16 %v7875
        %v7913 = vunpack.c.l.b16 %v7876
        %v7914 = vunpack.c.l.b16 %v7877
        %v7915 = vunpack.c.l.b16 %v7878
        %v7916 = vunpack.c.l.b16 %v7879
        %v7917 = vunpack.c.l.b16 %v7880
        %v7918 = vunpack.c.l.b16 %v7881
        %v7919 = vunpack.c.l.b16 %v7882
        %v7920 = vunpack.c.l.b16 %v7883
        %v7921 = vunpack.c.l.b16 %v7884
        %v7922 = vunpack.c.l.b16 %v7885
        %v7923 = vunpack.c.l.b16 %v7886
        %v7924 = vunpack.c.l.b16 %v7887
        %v7925 = vunpack.c.l.b16 %v7888
        %v7926 = vunpack.c.l.b16 %v7889
        %v7927 = vpack.c.b16 %v7912, %v7911
        %v7928 = vpack.c.b16 %v7914, %v7913
        %v7929 = vpack.c.b16 %v7916, %v7915
        %v7930 = vpack.c.b16 %v7918, %v7917
        %v7931 = vpack.c.b16 %v7920, %v7919
        %v7932 = vpack.c.b16 %v7922, %v7921
        %v7933 = vpack.c.b16 %v7924, %v7923
        %v7934 = vpack.c.b16 %v7926, %v7925
        %7943 = vmatprep.subr.bf16.mxu0 0
        %7944 = vmatpush1.bf16.msra.mxu0 %v7927
        %7945 = vmatprep.subr.bf16.mxu0 0
        %7946 = vmatpush1.bf16.msra.mxu0 %v7928
        %7947 = vmatprep.subr.bf16.mxu0 0
        %7948 = vmatpush1.bf16.msra.mxu0 %v7929
        %7949 = vmatprep.subr.bf16.mxu0 0
        %7950 = vmatpush1.bf16.msra.mxu0 %v7930
        %7951 = vmatprep.subr.bf16.mxu0 0
        %7952 = vmatpush1.bf16.msra.mxu0 %v7931
        %7953 = vmatprep.subr.bf16.mxu0 0
        %7954 = vmatpush1.bf16.msra.mxu0 %v7932
        %7955 = vmatprep.subr.bf16.mxu0 0
        %7956 = vmatpush1.bf16.msra.mxu0 %v7933
        %7957 = vmatprep.subr.bf16.mxu0 0
        %7958 = vmatpush1.bf16.msra.mxu0 %v7934
        %7959 = vmatprep.subr.bf16.mxu0 0
        %7960 = vmatpush1.bf16.msra.mxu0 0
        %7961 = vmatprep.subr.bf16.mxu0 0
        %7962 = vmatpush1.bf16.msra.mxu0 0
        %7963 = vmatprep.subr.bf16.mxu0 0
        %7964 = vmatpush1.bf16.msra.mxu0 0
        %7965 = vmatprep.subr.bf16.mxu0 0
        %7966 = vmatpush1.bf16.msra.mxu0 0
        %7967 = vmatprep.subr.bf16.mxu0 0
        %7968 = vmatpush1.bf16.msra.mxu0 0
        %7969 = vmatprep.subr.bf16.mxu0 0
        %7970 = vmatpush1.bf16.msra.mxu0 0
        %7971 = vmatprep.subr.bf16.mxu0 0
        %7972 = vmatpush1.bf16.msra.mxu0 0
        %7973 = vmatprep.subr.bf16.mxu0 0
        %7974 = vmatpush1.bf16.msra.mxu0 0
        %7975 = vmatprep.mubr.bf16.mxu0 0
        %7976 = vmatmul.mubr.bf16.gmra.mrb[0].mxu0 %v7857
        %v7977 = vpop.f32.mrb[0].mxu0
        %v7978 = vadd.f32 %v7894, %v7977
        %v7979 = vpop.f32.mrb[0].mxu0
        %v7980 = vpop.f32.mrb[0].mxu0
        %v7981 = vadd.f32 %v7894, %v7980
        %v7982 = vpop.f32.mrb[0].mxu0
        %7983 = vmatprep.mubr.bf16.mxu0 0
        %7984 = vmatmul.mubr.bf16.gmra.mrb[0].mxu0 %v7858
        %v7985 = vpop.f32.mrb[0].mxu0
        %v7986 = vadd.f32 %v7894, %v7985
        %v7987 = vpop.f32.mrb[0].mxu0
        %v7988 = vpop.f32.mrb[0].mxu0
        %v7989 = vadd.f32 %v7894, %v7988
        %v7990 = vpop.f32.mrb[0].mxu0
        %7991 = vmatprep.mubr.bf16.mxu0 0
        %7992 = vmatmul.mubr.bf16.gmra.mrb[0].mxu0 %v7859
        %v7993 = vpop.f32.mrb[0].mxu0
        %v7994 = vadd.f32 %v7894, %v7993
        %v7995 = vpop.f32.mrb[0].mxu0
        %v7996 = vpop.f32.mrb[0].mxu0
        %v7997 = vadd.f32 %v7894, %v7996
        %v7998 = vpop.f32.mrb[0].mxu0
        %7999 = vmatprep.mubr.bf16.mxu0 0
        %8000 = vmatmul.mubr.bf16.gmra.mrb[0].mxu0 %v7860
        %v8001 = vpop.f32.mrb[0].mxu0
        %v8002 = vadd.f32 %v7894, %v8001
        %v8003 = vpop.f32.mrb[0].mxu0
        %v8004 = vpop.f32.mrb[0].mxu0
        %v8005 = vadd.f32 %v7894, %v8004
        %v8006 = vpop.f32.mrb[0].mxu0
        %8007 = vmatprep.mubr.bf16.mxu0 0
        %8008 = vmatmul.mubr.bf16.gmra.mrb[0].mxu0 %v7861
        %v8009 = vpop.f32.mrb[0].mxu0
        %v8010 = vadd.f32 %v7894, %v8009
        %v8011 = vpop.f32.mrb[0].mxu0
        %v8012 = vpop.f32.mrb[0].mxu0
        %v8013 = vadd.f32 %v7894, %v8012
        %v8014 = vpop.f32.mrb[0].mxu0
        %8015 = vmatprep.mubr.bf16.mxu0 0
        %8016 = vmatmul.mubr.bf16.gmra.mrb[0].mxu0 %v7862
        %v8017 = vpop.f32.mrb[0].mxu0
        %v8018 = vadd.f32 %v7894, %v8017
        %v8019 = vpop.f32.mrb[0].mxu0
        %v8020 = vpop.f32.mrb[0].mxu0
        %v8021 = vadd.f32 %v7894, %v8020
        %v8022 = vpop.f32.mrb[0].mxu0
        %8023 = vmatprep.mubr.bf16.mxu0 0
        %8024 = vmatmul.mubr.bf16.gmra.mrb[0].mxu0 %v7863
        %v8025 = vpop.f32.mrb[0].mxu0
        %v8026 = vadd.f32 %v7894, %v8025
        %v8027 = vpop.f32.mrb[0].mxu0
        %v8028 = vpop.f32.mrb[0].mxu0
        %v8029 = vadd.f32 %v7894, %v8028
        %v8030 = vpop.f32.mrb[0].mxu0
        %8031 = vmatprep.mubr.bf16.mxu0 0
        %8032 = vmatmul.mubr.bf16.gmra.mrb[0].mxu0 %v7864
        %v8033 = vpop.f32.mrb[0].mxu0
        %v8034 = vadd.f32 %v7894, %v8033
        %v8035 = vpop.f32.mrb[0].mxu0
        %v8036 = vpop.f32.mrb[0].mxu0
        %v8037 = vadd.f32 %v7894, %v8036
        %v8038 = vpop.f32.mrb[0].mxu0
        %8039 = vmatprep.mubr.bf16.mxu0 0
        %8040 = vmatmul.mubr.bf16.gmra.mrb[0].mxu0 %v7865
        %v8041 = vpop.f32.mrb[0].mxu0
        %v8042 = vadd.f32 %v7894, %v8041
        %v8043 = vpop.f32.mrb[0].mxu0
        %v8044 = vpop.f32.mrb[0].mxu0
        %v8045 = vadd.f32 %v7894, %v8044
        %v8046 = vpop.f32.mrb[0].mxu0
        %8047 = vmatprep.mubr.bf16.mxu0 0
        %8048 = vmatmul.mubr.bf16.gmra.mrb[0].mxu0 %v7866
        %v8049 = vpop.f32.mrb[0].mxu0
        %v8050 = vadd.f32 %v7894, %v8049
        %v8051 = vpop.f32.mrb[0].mxu0
        %v8052 = vpop.f32.mrb[0].mxu0
        %v8053 = vadd.f32 %v7894, %v8052
        %v8054 = vpop.f32.mrb[0].mxu0
        %8055 = vmatprep.mubr.bf16.mxu0 0
        %8056 = vmatmul.mubr.bf16.gmra.mrb[0].mxu0 %v7867
        %v8057 = vpop.f32.mrb[0].mxu0
        %v8058 = vadd.f32 %v7894, %v8057
        %v8059 = vpop.f32.mrb[0].mxu0
        %v8060 = vpop.f32.mrb[0].mxu0
        %v8061 = vadd.f32 %v7894, %v8060
        %v8062 = vpop.f32.mrb[0].mxu0
        %8063 = vmatprep.mubr.bf16.mxu0 0
        %8064 = vmatmul.mubr.bf16.gmra.mrb[0].mxu0 %v7868
        %v8065 = vpop.f32.mrb[0].mxu0
        %v8066 = vadd.f32 %v7894, %v8065
        %v8067 = vpop.f32.mrb[0].mxu0
        %v8068 = vpop.f32.mrb[0].mxu0
        %v8069 = vadd.f32 %v7894, %v8068
        %v8070 = vpop.f32.mrb[0].mxu0
        %8071 = vmatprep.mubr.bf16.mxu0 0
        %8072 = vmatmul.mubr.bf16.gmra.mrb[0].mxu0 %v7869
        %v8073 = vpop.f32.mrb[0].mxu0
        %v8074 = vadd.f32 %v7894, %v8073
        %v8075 = vpop.f32.mrb[0].mxu0
        %v8076 = vpop.f32.mrb[0].mxu0
        %v8077 = vadd.f32 %v7894, %v8076
        %v8078 = vpop.f32.mrb[0].mxu0
        %8079 = vmatprep.mubr.bf16.mxu0 0
        %8080 = vmatmul.mubr.bf16.gmra.mrb[0].mxu0 %v7870
        %v8081 = vpop.f32.mrb[0].mxu0
        %v8082 = vadd.f32 %v7894, %v8081
        %v8083 = vpop.f32.mrb[0].mxu0
        %v8084 = vpop.f32.mrb[0].mxu0
        %v8085 = vadd.f32 %v7894, %v8084
        %v8086 = vpop.f32.mrb[0].mxu0
        %8087 = vmatprep.mubr.bf16.mxu0 0
        %8088 = vmatmul.mubr.bf16.gmra.mrb[0].mxu0 %v7871
        %v8089 = vpop.f32.mrb[0].mxu0
        %v8090 = vadd.f32 %v7894, %v8089
        %v8091 = vpop.f32.mrb[0].mxu0
        %v8092 = vpop.f32.mrb[0].mxu0
        %v8093 = vadd.f32 %v7894, %v8092
        %v8094 = vpop.f32.mrb[0].mxu0
        %8095 = vmatprep.mubr.bf16.mxu0 0
        %8096 = vmatmul.mubr.bf16.gmra.mrb[0].mxu0 %v7872
        %v8097 = vpop.f32.mrb[0].mxu0
        %v8098 = vadd.f32 %v7894, %v8097
        %v8099 = vpop.f32.mrb[0].mxu0
        %v8100 = vpop.f32.mrb[0].mxu0
        %v8101 = vadd.f32 %v7894, %v8100
        %v8102 = vpop.f32.mrb[0].mxu0
        %8103 = vdwg.mxu0
        %v8104 = vld [vmem:[#allocation3] sm:$0xff]
        %v8105 = vld [vmem:[#allocation3 + $0x8] sm:$0xff]
        %v8106 = vld [vmem:[#allocation3 + $0x10] sm:$0xff]
        %v8107 = vld [vmem:[#allocation3 + $0x18] sm:$0xff]
        %v8108 = vld [vmem:[#allocation3 + $0x20] sm:$0xff]
        %v8109 = vld [vmem:[#allocation3 + $0x28] sm:$0xff]
        %v8110 = vld [vmem:[#allocation3 + $0x30] sm:$0xff]
        %v8111 = vld [vmem:[#allocation3 + $0x38] sm:$0xff]
        %v8112 = vld [vmem:[#allocation3 + $0x40] sm:$0xff]
        %v8113 = vld [vmem:[#allocation3 + $0x48] sm:$0xff]
        %v8114 = vld [vmem:[#allocation3 + $0x50] sm:$0xff]
        %v8115 = vld [vmem:[#allocation3 + $0x58] sm:$0xff]
        %v8116 = vld [vmem:[#allocation3 + $0x60] sm:$0xff]
        %v8117 = vld [vmem:[#allocation3 + $0x68] sm:$0xff]
        %v8118 = vld [vmem:[#allocation3 + $0x70] sm:$0xff]
        %v8119 = vld [vmem:[#allocation3 + $0x78] sm:$0xff]
        %v8120 = vld [vmem:[#allocation3 + $0x80] sm:$0xff]
        %v8121 = vld [vmem:[#allocation3 + $0x88] sm:$0xff]
        %v8122 = vld [vmem:[#allocation3 + $0x90] sm:$0xff]
        %v8123 = vld [vmem:[#allocation3 + $0x98] sm:$0xff]
        %v8124 = vld [vmem:[#allocation3 + $0xa0] sm:$0xff]
        %v8125 = vld [vmem:[#allocation3 + $0xa8] sm:$0xff]
        %v8126 = vld [vmem:[#allocation3 + $0xb0] sm:$0xff]
        %v8127 = vld [vmem:[#allocation3 + $0xb8] sm:$0xff]
        %v8128 = vld [vmem:[#allocation3 + $0xc0] sm:$0xff]
        %v8129 = vld [vmem:[#allocation3 + $0xc8] sm:$0xff]
        %v8130 = vld [vmem:[#allocation3 + $0xd0] sm:$0xff]
        %v8131 = vld [vmem:[#allocation3 + $0xd8] sm:$0xff]
        %v8132 = vld [vmem:[#allocation3 + $0xe0] sm:$0xff]
        %v8133 = vld [vmem:[#allocation3 + $0xe8] sm:$0xff]
        %v8134 = vld [vmem:[#allocation3 + $0xf0] sm:$0xff]
        %v8135 = vld [vmem:[#allocation3 + $0xf8] sm:$0xff]
        %v8136 = vadd.f32 %v7978, %v8104
        %v8137 = vadd.f32 %v7981, %v8105
        %v8138 = vadd.f32 %v7986, %v8106
        %v8139 = vadd.f32 %v7989, %v8107
        %v8140 = vadd.f32 %v7994, %v8108
        %v8141 = vadd.f32 %v7997, %v8109
        %v8142 = vadd.f32 %v8002, %v8110
        %v8143 = vadd.f32 %v8005, %v8111
        %v8144 = vadd.f32 %v8010, %v8112
        %v8145 = vadd.f32 %v8013, %v8113
        %v8146 = vadd.f32 %v8018, %v8114
        %v8147 = vadd.f32 %v8021, %v8115
        %v8148 = vadd.f32 %v8026, %v8116
        %v8149 = vadd.f32 %v8029, %v8117
        %v8150 = vadd.f32 %v8034, %v8118
        %v8151 = vadd.f32 %v8037, %v8119
        %v8152 = vadd.f32 %v8042, %v8120
        %v8153 = vadd.f32 %v8045, %v8121
        %v8154 = vadd.f32 %v8050, %v8122
        %v8155 = vadd.f32 %v8053, %v8123
        %v8156 = vadd.f32 %v8058, %v8124
        %v8157 = vadd.f32 %v8061, %v8125
        %v8158 = vadd.f32 %v8066, %v8126
        %v8159 = vadd.f32 %v8069, %v8127
        %v8160 = vadd.f32 %v8074, %v8128
        %v8161 = vadd.f32 %v8077, %v8129
        %v8162 = vadd.f32 %v8082, %v8130
        %v8163 = vadd.f32 %v8085, %v8131
        %v8164 = vadd.f32 %v8090, %v8132
        %v8165 = vadd.f32 %v8093, %v8133
        %v8166 = vadd.f32 %v8098, %v8134
        %v8167 = vadd.f32 %v8101, %v8135
        %v8168 = vmax.f32 %v8136, 0.0
        %v8169 = vmax.f32 %v8137, 0.0
        %v8170 = vmax.f32 %v8138, 0.0
        %v8171 = vmax.f32 %v8139, 0.0
        %v8172 = vmax.f32 %v8140, 0.0
        %v8173 = vmax.f32 %v8141, 0.0
        %v8174 = vmax.f32 %v8142, 0.0
        %v8175 = vmax.f32 %v8143, 0.0
        %v8176 = vmax.f32 %v8144, 0.0
        %v8177 = vmax.f32 %v8145, 0.0
        %v8178 = vmax.f32 %v8146, 0.0
        %v8179 = vmax.f32 %v8147, 0.0
        %v8180 = vmax.f32 %v8148, 0.0
        %v8181 = vmax.f32 %v8149, 0.0
        %v8182 = vmax.f32 %v8150, 0.0
        %v8183 = vmax.f32 %v8151, 0.0
        %v8184 = vmax.f32 %v8152, 0.0
        %v8185 = vmax.f32 %v8153, 0.0
        %v8186 = vmax.f32 %v8154, 0.0
        %v8187 = vmax.f32 %v8155, 0.0
        %v8188 = vmax.f32 %v8156, 0.0
        %v8189 = vmax.f32 %v8157, 0.0
        %v8190 = vmax.f32 %v8158, 0.0
        %v8191 = vmax.f32 %v8159, 0.0
        %v8192 = vmax.f32 %v8160, 0.0
        %v8193 = vmax.f32 %v8161, 0.0
        %v8194 = vmax.f32 %v8162, 0.0
        %v8195 = vmax.f32 %v8163, 0.0
        %v8196 = vmax.f32 %v8164, 0.0
        %v8197 = vmax.f32 %v8165, 0.0
        %v8198 = vmax.f32 %v8166, 0.0
        %v8199 = vmax.f32 %v8167, 0.0
        %v8200 = vadd.f32 %v8168, %v8169
        %v8201 = vadd.f32 %v8200, %v8170
        %v8202 = vadd.f32 %v8201, %v8171
        %v8203 = vadd.f32 %v8202, %v8172
        %v8204 = vadd.f32 %v8203, %v8173
        %v8205 = vadd.f32 %v8204, %v8174
        %v8206 = vadd.f32 %v8205, %v8175
        %v8207 = vadd.f32 %v8206, %v8176
        %v8208 = vadd.f32 %v8207, %v8177
        %v8209 = vadd.f32 %v8208, %v8178
        %v8210 = vadd.f32 %v8209, %v8179
        %v8211 = vadd.f32 %v8210, %v8180
        %v8212 = vadd.f32 %v8211, %v8181
        %v8213 = vadd.f32 %v8212, %v8182
        %v8214 = vadd.f32 %v8213, %v8183
        %v8215 = vadd.f32 %v8214, %v8184
        %v8216 = vadd.f32 %v8215, %v8185
        %v8217 = vadd.f32 %v8216, %v8186
        %v8218 = vadd.f32 %v8217, %v8187
        %v8219 = vadd.f32 %v8218, %v8188
        %v8220 = vadd.f32 %v8219, %v8189
        %v8221 = vadd.f32 %v8220, %v8190
        %v8222 = vadd.f32 %v8221, %v8191
        %v8223 = vadd.f32 %v8222, %v8192
        %v8224 = vadd.f32 %v8223, %v8193
        %v8225 = vadd.f32 %v8224, %v8194
        %v8226 = vadd.f32 %v8225, %v8195
        %v8227 = vadd.f32 %v8226, %v8196
        %v8228 = vadd.f32 %v8227, %v8197
        %v8229 = vadd.f32 %v8228, %v8198
        %v8230 = vadd.f32 %v8229, %v8199
        %v8231 = vrot.slane %v8230, 4
        %v8232 = vadd.f32 %v8230, %v8231
        %v8233 = vrot.slane %v8232, 2
        %v8234 = vadd.f32 %v8232, %v8233
        %v8235 = vrot.slane %v8234, 1
        %v8236 = vadd.f32 %v8234, %v8235
        %v8237 = vrcp.pop 256.0
        %v8238 = vmul.f32 %v8236, %v8237
        %v8239 = vld [vmem:[%s287] sm:$0xff]
        %v8240 = vmul.f32 %v8238, %v8239
        %v8241 = vpack.c.bf16 %v8240, %v8240
        %s8242 = scalar_lea.vmem [#allocation8], 192
        %v8243 = vld [vmem:[%s8242] sm:$0xf]
        %v8244 = vld [vmem:[%s8242 + $0x4] sm:$0xf]
        %v8245 = vld [vmem:[%s8242 + $0x8] sm:$0xf]
        %v8246 = vld [vmem:[%s8242 + $0xc] sm:$0xf]
        %v8247 = vld [vmem:[%s8242 + $0x10] sm:$0xf]
        %v8248 = vld [vmem:[%s8242 + $0x14] sm:$0xf]
        %v8249 = vld [vmem:[%s8242 + $0x18] sm:$0xf]
        %v8250 = vld [vmem:[%s8242 + $0x1c] sm:$0xf]
        %v8251 = vld [vmem:[%s8242 + $0x20] sm:$0xf]
        %v8252 = vld [vmem:[%s8242 + $0x24] sm:$0xf]
        %v8253 = vld [vmem:[%s8242 + $0x28] sm:$0xf]
        %v8254 = vld [vmem:[%s8242 + $0x2c] sm:$0xf]
        %v8255 = vld [vmem:[%s8242 + $0x30] sm:$0xf]
        %v8256 = vld [vmem:[%s8242 + $0x34] sm:$0xf]
        %v8257 = vld [vmem:[%s8242 + $0x38] sm:$0xf]
        %v8258 = vld [vmem:[%s8242 + $0x3c] sm:$0xf]
        %v8259 = vld [vmem:[#allocation10 + $0x3] sm:$0x1]
        %v8260 = vlaneseq
        %v8261 = vshrl.u32 %v8260, 7
        %v8262 = vsub.s32 0, %v8261
        %v8263 = vrot.slane %v8259, %v8262
        %v8280 = vunpack.c.l.b16 %v8243
        %v8281 = vunpack.c.l.b16 %v8244
        %v8282 = vunpack.c.l.b16 %v8245
        %v8283 = vunpack.c.l.b16 %v8246
        %v8284 = vunpack.c.l.b16 %v8247
        %v8285 = vunpack.c.l.b16 %v8248
        %v8286 = vunpack.c.l.b16 %v8249
        %v8287 = vunpack.c.l.b16 %v8250
        %v8288 = vunpack.c.l.b16 %v8251
        %v8289 = vunpack.c.l.b16 %v8252
        %v8290 = vunpack.c.l.b16 %v8253
        %v8291 = vunpack.c.l.b16 %v8254
        %v8292 = vunpack.c.l.b16 %v8255
        %v8293 = vunpack.c.l.b16 %v8256
        %v8294 = vunpack.c.l.b16 %v8257
        %v8295 = vunpack.c.l.b16 %v8258
        %v8296 = vpack.c.b16 %v8281, %v8280
        %v8297 = vpack.c.b16 %v8283, %v8282
        %v8298 = vpack.c.b16 %v8285, %v8284
        %v8299 = vpack.c.b16 %v8287, %v8286
        %v8300 = vpack.c.b16 %v8289, %v8288
        %v8301 = vpack.c.b16 %v8291, %v8290
        %v8302 = vpack.c.b16 %v8293, %v8292
        %v8303 = vpack.c.b16 %v8295, %v8294
        %8312 = vmatprep.subr.bf16.mxu0 0
        %8313 = vmatpush1.bf16.msra.mxu0 %v8296
        %8314 = vmatprep.subr.bf16.mxu0 0
        %8315 = vmatpush1.bf16.msra.mxu0 %v8297
        %8316 = vmatprep.subr.bf16.mxu0 0
        %8317 = vmatpush1.bf16.msra.mxu0 %v8298
        %8318 = vmatprep.subr.bf16.mxu0 0
        %8319 = vmatpush1.bf16.msra.mxu0 %v8299
        %8320 = vmatprep.subr.bf16.mxu0 0
        %8321 = vmatpush1.bf16.msra.mxu0 %v8300
        %8322 = vmatprep.subr.bf16.mxu0 0
        %8323 = vmatpush1.bf16.msra.mxu0 %v8301
        %8324 = vmatprep.subr.bf16.mxu0 0
        %8325 = vmatpush1.bf16.msra.mxu0 %v8302
        %8326 = vmatprep.subr.bf16.mxu0 0
        %8327 = vmatpush1.bf16.msra.mxu0 %v8303
        %8328 = vmatprep.subr.bf16.mxu0 0
        %8329 = vmatpush1.bf16.msra.mxu0 0
        %8330 = vmatprep.subr.bf16.mxu0 0
        %8331 = vmatpush1.bf16.msra.mxu0 0
        %8332 = vmatprep.subr.bf16.mxu0 0
        %8333 = vmatpush1.bf16.msra.mxu0 0
        %8334 = vmatprep.subr.bf16.mxu0 0
        %8335 = vmatpush1.bf16.msra.mxu0 0
        %8336 = vmatprep.subr.bf16.mxu0 0
        %8337 = vmatpush1.bf16.msra.mxu0 0
        %8338 = vmatprep.subr.bf16.mxu0 0
        %8339 = vmatpush1.bf16.msra.mxu0 0
        %8340 = vmatprep.subr.bf16.mxu0 0
        %8341 = vmatpush1.bf16.msra.mxu0 0
        %8342 = vmatprep.subr.bf16.mxu0 0
        %8343 = vmatpush1.bf16.msra.mxu0 0
        %8344 = vmatprep.mubr.bf16.mxu0 0
        %8345 = vmatmul.mubr.bf16.gmra.mrb[0].mxu0 %v8241
        %v8346 = vpop.f32.mrb[0].mxu0
        %v8347 = vadd.f32 %v8263, %v8346
        %v8348 = vpop.f32.mrb[0].mxu0
        %v8349 = vpop.f32.mrb[0].mxu0
        %v8350 = vpop.f32.mrb[0].mxu0
        %8351 = vdwg.mxu0
        %8352 = vst [vmem:[%s318] sm:$0xff] %v8347
        %s8353 = sand.u32 %s147, 1
        %s8354 = scalar_lea.sflag [#allocation7], %s8353
        %s8355 = sand.u32 %s147, 1
        %s8356 = smul.addr %s8355, 8
        %s8357 = scalar_lea.vmem [#allocation14], %s8356
        // Predicated region
        $region61: #{tpu_custom_call.1} parent=39 // pred_check
          %p8358 = pneg %p157
        $region62: #{tpu_custom_call.1} parent=39 // pred_check_branch
          %8360 = sbr.rel (%p8358) target = $region64
        $region63: #{tpu_custom_call.1} parent=39 // pred_region
          %s8362 = ssub.s32 128, 128
          %8363 = vsyncadd %s8354, %s8362
          %s8364 = smul.addr %s24, 128
          %s8365 = scalar_lea.hbm %s5, %s8364
          %s8367 = sshll.u32 %s8357, 4
          %s8368 = int_to_ptr.vmem [resolvable:$true] %s8367
          %8370 = dma.vmem_to_hbm [thread:$0]  %s8368, 128, %s8365, %s8354
        $region64: #{tpu_custom_call.1} parent=39 // pred_fallthru
          _
      $region40: #{tpu_custom_call.1} parent=5 // pred_fallthru
        _
      %p8371 = scmp.le.s32.totalorder 2, %s19
      // Predicated region
      $region65: #{tpu_custom_call.1} parent=5 // pred_check
        %p8372 = pneg %p8371
      $region66: #{tpu_custom_call.1} parent=5 // pred_check_branch
        %8374 = sbr.rel (%p8372) target = $region68
      $region67: #{tpu_custom_call.1} parent=5 // pred_region
        %s8375 = ssub.s32 %s19, 2
        // Predicated region
        $region69: #{tpu_custom_call.1} parent=67 // pred_check
          %p8376 = pneg %p163
        $region70: #{tpu_custom_call.1} parent=67 // pred_check_branch
          %8378 = sbr.rel (%p8376) target = $region72
        $region71: #{tpu_custom_call.1} parent=67 // pred_region
          %s8379 = sand.u32 %s148, 1
          %s8380 = scalar_lea.sflag [#allocation7], %s8379
          %s8381 = sand.u32 %s148, 1
          %s8382 = smul.addr %s8381, 8
          %s8383 = scalar_lea.vmem [#allocation14], %s8382
          %8384 = dma.done %s8380, 128
        $region72: #{tpu_custom_call.1} parent=67 // pred_fallthru
          _
      $region68: #{tpu_custom_call.1} parent=5 // pred_fallthru
        _
    $region6: #{tpu_custom_call.1} parent=1 // loop_footer
      %s23 = sadd.s32 1, %s19
    $region7: #{tpu_custom_call.1} parent=1 // loop_footer_branch
      %18 = sbr.rel target = $region3
    $region8: #{tpu_custom_call.1} parent=1 // loop_exit
      _
    %8385 = vsyncpa [#allocation6], 1
    %s8386 = scalar_lea.sflag [#allocation6], 1
    %8387 = vsyncpa %s8386, 1
    %8388 = vsyncpa [#allocation9], 1
    %8389 = vsyncpa [#allocation12], 1
    %8390 = vsyncpa [#allocation7], 1
    %s8391 = scalar_lea.sflag [#allocation7], 1
    %8392 = vsyncpa %s8391, 1

</llo_original>
